<compile_context>
chip_gen: v7x
topology: tpu7x:2x2x1
jax: 0.10.0
libtpu: 0.0.40
codegen_flags: <defaults>
</compile_context>

<pallas_src>
import numpy as np
import jax
import jax.numpy as jnp
from jax.experimental import pallas as pl
from jax.experimental.pallas import tpu as pltpu


def _interp_matrix(out_size, in_size):
    """PyTorch bilinear align_corners=True interpolation matrix (out, in), np.f32."""
    A = np.zeros((out_size, in_size), dtype=np.float32)
    if out_size == 1:
        A[:, 0] = 1.0
        return A
    scale = (in_size - 1) / (out_size - 1)
    for i in range(out_size):
        src = i * scale
        lo = int(np.floor(src))
        hi = min(lo + 1, in_size - 1)
        w_hi = src - lo
        A[i, lo] += 1.0 - w_hi
        A[i, hi] += w_hi
    return A


# ---------------------------------------------------------------------------
# Kernel 1: bilinear upsample (align_corners=True), channels folded into lanes,
#           result emitted zero-padded for the following 3x3 conv.
# ---------------------------------------------------------------------------
def _make_upsample_kernel(Hout, Wout, Cx):
    def kernel(x_ref, ah_ref, awc_ref, o_ref):
        # x_ref:   (1, Hin, Win*Cx)          NHWC rows with channels packed in lanes
        # ah_ref:  (Hout, Hin)               H-interp matrix
        # awc_ref: (Win*Cx, Wout*Cx)         W-interp matrix (x) I_Cx
        # o_ref:   (1, Hout+3, (Wout+2)*Cx)  zero-padded upsampled activation
        t = jnp.dot(ah_ref[...], x_ref[0], preferred_element_type=jnp.float32)
        up = jnp.dot(t, awc_ref[...], preferred_element_type=jnp.float32)
        o_ref[...] = jnp.zeros_like(o_ref)
        o_ref[0, 1:Hout + 1, Cx:(Wout + 1) * Cx] = up.astype(o_ref.dtype)

    return kernel


# ---------------------------------------------------------------------------
# Kernel 2: fused channel-concat + conv0(3x3) + LeakyReLU + conv1(3x3) + LeakyReLU.
# Works on a flattened padded raster so every conv tap is a contiguous 2-D slice.
# ---------------------------------------------------------------------------
def _make_fused_conv_kernel(H, W, Cx, Cs, Co):
    Wp = W + 2                  # padded row length
    M = H * Wp                  # "wide raster": H row-groups, each W valid + 2 junk cols
    taps = [(dy, dx) for dy in range(3) for dx in range(3)]

    def kernel(xup_ref, skip_ref, mask_ref, w0u_ref, w0s_ref, b0_ref,
               w1_ref, b1_ref, o_ref, pad1_ref):
        # xup_ref/skip_ref: (1, (H+3)*Wp, Cx|Cs) zero-padded NHWC, rows flattened
        # mask_ref:         (M, 1)               1.0 on valid cols, 0.0 on junk cols
        # w0u/w0s:          (9, Cx|Cs, Co) bf16  conv0 weights split for fused concat
        # w1:               (9, Co, Co)    bf16
        # b0/b1:            (1, Co)        f32
        # o_ref:            (1, Co, M)           channel-major (lane-dense) output
        # pad1_ref:         VMEM ((H+3)*Wp, Co)  conv0 output re-padded for conv1

        # ---- conv0 (+ fused channel concat: two accumulated dots per tap) ----
        acc0 = jnp.zeros((M, Co), jnp.float32)
        for k, (dy, dx) in enumerate(taps):
            off = dy * Wp + dx
            xw = xup_ref[0, off:off + M, :].astype(jnp.bfloat16)
            sw = skip_ref[0, off:off + M, :].astype(jnp.bfloat16)
            acc0 += jnp.dot(xw, w0u_ref[k], preferred_element_type=jnp.float32)
            acc0 += jnp.dot(sw, w0s_ref[k], preferred_element_type=jnp.float32)
        acc0 = acc0 + b0_ref[...]
        h0 = jnp.where(acc0 >= 0.0, acc0, 0.2 * acc0)       # LeakyReLU(0.2), f32
        h0 = h0 * mask_ref[...]                              # junk cols -> conv1 zero pad

        # ---- stage conv0 activation as conv1's zero-padded input (VMEM only) ----
        pad1_ref[...] = jnp.zeros_like(pad1_ref)
        pad1_ref[Wp + 1:Wp + 1 + M, :] = h0

        # ---- conv1 ----
        acc1 = jnp.zeros((M, Co), jnp.float32)
        for k, (dy, dx) in enumerate(taps):
            off = dy * Wp + dx
            hw = pad1_ref[off:off + M, :].astype(jnp.bfloat16)
            acc1 += jnp.dot(hw, w1_ref[k], preferred_element_type=jnp.float32)
        acc1 = acc1 + b1_ref[...]
        y = jnp.where(acc1 >= 0.0, acc1, 0.2 * acc1)

        # Channel-major store: lane dim = M (dense), already NCHW-ordered.
        o_ref[0] = y.T.astype(o_ref.dtype)

    return kernel


# ---------------------------------------------------------------------------
# UpConv module
# ---------------------------------------------------------------------------
def init_upconv_params(key, in_ch, out_ch):
    k0, k1, k2, k3 = jax.random.split(key, 4)
    s0 = 1.0 / np.sqrt(in_ch * 9)
    s1 = 1.0 / np.sqrt(out_ch * 9)
    return {
        "w0": jax.random.uniform(k0, (3, 3, in_ch, out_ch), jnp.float32, -s0, s0),
        "b0": jax.random.uniform(k1, (out_ch,), jnp.float32, -s0, s0),
        "w1": jax.random.uniform(k2, (3, 3, out_ch, out_ch), jnp.float32, -s1, s1),
        "b1": jax.random.uniform(k3, (out_ch,), jnp.float32, -s1, s1),
    }


def upconv_forward(params, x, skipped_x):
    """x, skipped_x: NCHW (PyTorch convention). Returns NCHW."""
    N, Cx, Hin, Win = x.shape
    Ns, Cs, Hout, Wout = skipped_x.shape
    Co = params["w0"].shape[-1]
    Cin = params["w0"].shape[2]
    assert Ns == N and Cin == Cx + Cs

    Wp = Wout + 2                      # padded row length
    Hp = Hout + 3                      # 1 top pad, 1 bottom pad, +1 safety row
    Mp = Hp * Wp                       # flattened padded rows
    M = Hout * Wp                      # flattened output rows (incl. 2 junk cols/row)

    # ---- Stage 1: vectorized bilinear upsample (align_corners=True) ----------
    ah = jnp.asarray(_interp_matrix(Hout, Hin))                         # (Hout, Hin)
    aw_np = _interp_matrix(Wout, Win)                                   # (Wout, Win)
    awc = jnp.asarray(np.kron(aw_np, np.eye(Cx, dtype=np.float32)).T)   # (Win*Cx, Wout*Cx)

    x_nhwc = jnp.transpose(x, (0, 2, 3, 1)).reshape(N, Hin, Win * Cx)

    xup_pad = pl.pallas_call(
        _make_upsample_kernel(Hout, Wout, Cx),
        out_shape=jax.ShapeDtypeStruct((N, Hp, Wp * Cx), jnp.float32),
        grid=(N,),
        in_specs=[
            pl.BlockSpec((1, Hin, Win * Cx), lambda n: (n, 0, 0)),
            pl.BlockSpec((Hout, Hin), lambda n: (0, 0)),
            pl.BlockSpec((Win * Cx, Wout * Cx), lambda n: (0, 0)),
        ],
        out_specs=pl.BlockSpec((1, Hp, Wp * Cx), lambda n: (n, 0, 0)),
        compiler_params=pltpu.CompilerParams(dimension_semantics=("parallel",)),
    )(x_nhwc, ah, awc)

    # ---- Stage 2: fused concat + conv0 + lrelu + conv1 + lrelu ---------------
    up_flat = xup_pad.reshape(N, Mp, Cx)                                # free reshape
    skip_nhwc = jnp.transpose(skipped_x, (0, 2, 3, 1))
    skip_flat = jnp.pad(skip_nhwc, ((0, 0), (1, 2), (1, 1), (0, 0))).reshape(N, Mp, Cs)

    colmask = np.ones((Hout, Wp, 1), np.float32)
    colmask[:, Wout:, :] = 0.0
    colmask = jnp.asarray(colmask.reshape(M, 1))

    w0, w1 = params["w0"], params["w1"]
    w0u = w0[:, :, :Cx, :].reshape(9, Cx, Co).astype(jnp.bfloat16)      # x_up part
    w0s = w0[:, :, Cx:, :].reshape(9, Cs, Co).astype(jnp.bfloat16)      # skip part
    w1k = w1.reshape(9, Co, Co).astype(jnp.bfloat16)
    b0 = params["b0"].reshape(1, Co).astype(jnp.float32)
    b1 = params["b1"].reshape(1, Co).astype(jnp.float32)

    out_wide = pl.pallas_call(
        _make_fused_conv_kernel(Hout, Wout, Cx, Cs, Co),
        out_shape=jax.ShapeDtypeStruct((N, Co, M), jnp.float32),
        grid=(N,),
        in_specs=[
            pl.BlockSpec((1, Mp, Cx), lambda n: (n, 0, 0)),
            pl.BlockSpec((1, Mp, Cs), lambda n: (n, 0, 0)),
            pl.BlockSpec((M, 1), lambda n: (0, 0)),
            pl.BlockSpec((9, Cx, Co), lambda n: (0, 0, 0)),
            pl.BlockSpec((9, Cs, Co), lambda n: (0, 0, 0)),
            pl.BlockSpec((1, Co), lambda n: (0, 0)),
            pl.BlockSpec((9, Co, Co), lambda n: (0, 0, 0)),
            pl.BlockSpec((1, Co), lambda n: (0, 0)),
        ],
        out_specs=pl.BlockSpec((1, Co, M), lambda n: (n, 0, 0)),
        scratch_shapes=[pltpu.VMEM((Mp, Co), jnp.float32)],
        compiler_params=pltpu.CompilerParams(dimension_semantics=("parallel",)),
    )(up_flat, skip_flat, colmask, w0u, w0s, b0, w1k, b1)

    # Output is already channel-major (NCHW flattened over padded rows):
    # free reshape + crop of the 2 junk columns per row.
    return out_wide.reshape(N, Co, Hout, Wp)[:, :, :, :Wout]


# ---------------------------------------------------------------------------
# Pure-JAX reference (uses the same bf16-rounded weights as the kernel path).
# ---------------------------------------------------------------------------
def reference_forward(params, x, skipped_x):
    Hs, Ws = skipped_x.shape[2], skipped_x.shape[3]
    ah = jnp.asarray(_interp_matrix(Hs, x.shape[2]))
    aw = jnp.asarray(_interp_matrix(Ws, x.shape[3]))
    x_up = jnp.einsum("oh,nchw,pw->ncop", ah, x, aw,
                      precision=jax.lax.Precision.HIGHEST)
    concat = jnp.concatenate([x_up, skipped_x], axis=1)

    def conv(h_nchw, w_hwio, b):
        w = w_hwio.astype(jnp.bfloat16).astype(jnp.float32)
        out = jax.lax.conv_general_dilated(
            h_nchw, w, window_strides=(1, 1), padding="SAME",
            dimension_numbers=("NCHW", "HWIO", "NCHW"),
            precision=jax.lax.Precision.HIGHEST)
        out = out + b.reshape(1, -1, 1, 1)
        return jnp.where(out >= 0, out, 0.2 * out)

    h = conv(concat, params["w0"], params["b0"])
    h = conv(h, params["w1"], params["b1"])
    return h


if __name__ == "__main__":
    key = jax.random.PRNGKey(0)
    kx, ks, kp = jax.random.split(key, 3)

    # Decoder feature x (N,4,8,8) upsampled to the skip's (N,4,16,16);
    # concatenated channels => in_ch = 8, out_ch = 8.
    x = jax.random.normal(kx, (2, 4, 8, 8), jnp.float32)
    skipped_x = jax.random.normal(ks, (2, 4, 16, 16), jnp.float32)
    params = init_upconv_params(kp, in_ch=8, out_ch=8)

    fwd = jax.jit(upconv_forward)
    out = jax.block_until_ready(fwd(params, x, skipped_x))

    ref = reference_forward(params, x, skipped_x)
    assert out.shape == (2, 8, 16, 16), out.shape
    # bf16 MXU operands (f32 accumulation) in the kernel vs f32 activations in the
    # reference -> tolerance is loosened accordingly (typical |diff| ~ 3e-3).
    assert jnp.allclose(out, ref, atol=5e-2, rtol=5e-2), "mismatch vs reference"

    print("KERNEL_OK")
</pallas_src>

<mosaic_0001>
module attributes {stable_mosaic.version = 11 : i64} {
  func.func @kernel(%arg0: i32, %arg1: memref<1x8x32xf32, #tpu.memory_space<vmem>>, %arg2: memref<16x8xf32, #tpu.memory_space<vmem>>, %arg3: memref<32x64xf32, #tpu.memory_space<vmem>>, %arg4: memref<1x19x72xf32, #tpu.memory_space<vmem>>) attributes {dimension_semantics = [#tpu.dimension_semantics<parallel>], iteration_bounds = array<i64: 2>, scalar_prefetch = 0 : i64, scratch_operands = 0 : i64, tpu.core_type = #tpu.core_type<tc>, window_params = [{transform_indices = @transform_0, window_bounds = array<i64: 1, 8, 32>}, {pipeline_mode = #tpu.pipeline_mode<synchronous>, transform_indices = @transform_1, window_bounds = array<i64: 16, 8>}, {pipeline_mode = #tpu.pipeline_mode<synchronous>, transform_indices = @transform_2, window_bounds = array<i64: 32, 64>}, {transform_indices = @transform_3, window_bounds = array<i64: 1, 19, 72>}]} {
    %c0 = arith.constant 0 : index
    %c0_0 = arith.constant 0 : index
    %0 = vector.load %arg2[%c0, %c0_0] : memref<16x8xf32, #tpu.memory_space<vmem>>, vector<16x8xf32>
    %c0_1 = arith.constant 0 : index
    %c0_2 = arith.constant 0 : index
    %c0_3 = arith.constant 0 : index
    %1 = vector.load %arg1[%c0_1, %c0_2, %c0_3] : memref<1x8x32xf32, #tpu.memory_space<vmem>>, vector<1x8x32xf32>
    %2 = vector.shape_cast %1 : vector<1x8x32xf32> to vector<8x32xf32>
    %cst = arith.constant dense<0.000000e+00> : vector<16x32xf32>
    %3 = tpu.matmul %0, %2, %cst {dimension_numbers = #tpu.dot_dimension_numbers<[1], [0], [0], [1], [0, 0, 1, 1], [], []>} : vector<16x8xf32>, vector<8x32xf32>, vector<16x32xf32> -> vector<16x32xf32>
    %c0_4 = arith.constant 0 : index
    %c0_5 = arith.constant 0 : index
    %4 = vector.load %arg3[%c0_4, %c0_5] : memref<32x64xf32, #tpu.memory_space<vmem>>, vector<32x64xf32>
    %cst_6 = arith.constant dense<0.000000e+00> : vector<16x64xf32>
    %5 = tpu.matmul %3, %4, %cst_6 {dimension_numbers = #tpu.dot_dimension_numbers<[1], [0], [0], [1], [0, 0, 1, 1], [], []>} : vector<16x32xf32>, vector<32x64xf32>, vector<16x64xf32> -> vector<16x64xf32>
    %cst_7 = arith.constant 0.000000e+00 : f32
    %6 = vector.broadcast %cst_7 : f32 to vector<1x19x72xf32>
    %c0_8 = arith.constant 0 : index
    %c0_9 = arith.constant 0 : index
    %c0_10 = arith.constant 0 : index
    %7 = vector.load %arg4[%c0_8, %c0_9, %c0_10] : memref<1x19x72xf32, #tpu.memory_space<vmem>>, vector<1x19x72xf32>
    tpu.vector_store %arg4[%c0_8, %c0_9, %c0_10], %6 {strides = array<i32>} : memref<1x19x72xf32, #tpu.memory_space<vmem>>, vector<1x19x72xf32>,
    %c0_11 = arith.constant 0 : index
    %c1 = arith.constant 1 : index
    %c4 = arith.constant 4 : index
    %8 = vector.load %arg4[%c0_11, %c1, %c4] : memref<1x19x72xf32, #tpu.memory_space<vmem>>, vector<1x16x64xf32>
    %9 = vector.shape_cast %8 : vector<1x16x64xf32> to vector<16x64xf32>
    %10 = vector.shape_cast %5 : vector<16x64xf32> to vector<1x16x64xf32>
    tpu.vector_store %arg4[%c0_11, %c1, %c4], %10 {strides = array<i32>} : memref<1x19x72xf32, #tpu.memory_space<vmem>>, vector<1x16x64xf32>,
    return
  }
  func.func @transform_0(%arg0: i32) -> (i32, i32, i32) {
    %c0_i32 = arith.constant 0 : i32
    %c0_i32_0 = arith.constant 0 : i32
    %c0_i32_1 = arith.constant 0 : i32
    return %arg0, %c0_i32, %c0_i32_0 : i32, i32, i32
  }
  func.func @transform_1(%arg0: i32) -> (i32, i32) {
    %c0_i32 = arith.constant 0 : i32
    %c0_i32_0 = arith.constant 0 : i32
    %c0_i32_1 = arith.constant 0 : i32
    return %c0_i32, %c0_i32_0 : i32, i32
  }
  func.func @transform_2(%arg0: i32) -> (i32, i32) {
    %c0_i32 = arith.constant 0 : i32
    %c0_i32_0 = arith.constant 0 : i32
    %c0_i32_1 = arith.constant 0 : i32
    return %c0_i32, %c0_i32_0 : i32, i32
  }
  func.func @transform_3(%arg0: i32) -> (i32, i32, i32) {
    %c0_i32 = arith.constant 0 : i32
    %c0_i32_0 = arith.constant 0 : i32
    %c0_i32_1 = arith.constant 0 : i32
    return %arg0, %c0_i32, %c0_i32_0 : i32, i32, i32
  }
}

module attributes {stable_mosaic.version = 11 : i64} {
  func.func @kernel(%arg0: i32, %arg1: memref<1x342x4xf32, #tpu.memory_space<vmem>>, %arg2: memref<1x342x4xf32, #tpu.memory_space<vmem>>, %arg3: memref<288x1xf32, #tpu.memory_space<vmem>>, %arg4: memref<9x4x8xbf16, #tpu.memory_space<vmem>>, %arg5: memref<9x4x8xbf16, #tpu.memory_space<vmem>>, %arg6: memref<1x8xf32, #tpu.memory_space<vmem>>, %arg7: memref<9x8x8xbf16, #tpu.memory_space<vmem>>, %arg8: memref<1x8xf32, #tpu.memory_space<vmem>>, %arg9: memref<1x8x288xf32, #tpu.memory_space<vmem>>, %arg10: memref<342x8xf32, #tpu.memory_space<vmem>>) attributes {dimension_semantics = [#tpu.dimension_semantics<parallel>], iteration_bounds = array<i64: 2>, scalar_prefetch = 0 : i64, scratch_operands = 1 : i64, tpu.core_type = #tpu.core_type<tc>, window_params = [{transform_indices = @transform_0, window_bounds = array<i64: 1, 342, 4>}, {transform_indices = @transform_1, window_bounds = array<i64: 1, 342, 4>}, {pipeline_mode = #tpu.pipeline_mode<synchronous>, transform_indices = @transform_2, window_bounds = array<i64: 288, 1>}, {pipeline_mode = #tpu.pipeline_mode<synchronous>, transform_indices = @transform_3, window_bounds = array<i64: 9, 4, 8>}, {pipeline_mode = #tpu.pipeline_mode<synchronous>, transform_indices = @transform_4, window_bounds = array<i64: 9, 4, 8>}, {pipeline_mode = #tpu.pipeline_mode<synchronous>, transform_indices = @transform_5, window_bounds = array<i64: 1, 8>}, {pipeline_mode = #tpu.pipeline_mode<synchronous>, transform_indices = @transform_6, window_bounds = array<i64: 9, 8, 8>}, {pipeline_mode = #tpu.pipeline_mode<synchronous>, transform_indices = @transform_7, window_bounds = array<i64: 1, 8>}, {transform_indices = @transform_8, window_bounds = array<i64: 1, 8, 288>}]} {
    %cst = arith.constant 0.000000e+00 : f32
    %0 = vector.broadcast %cst : f32 to vector<288x8xf32>
    %c0 = arith.constant 0 : index
    %c0_0 = arith.constant 0 : index
    %c0_1 = arith.constant 0 : index
    %1 = vector.load %arg1[%c0, %c0_0, %c0_1] : memref<1x342x4xf32, #tpu.memory_space<vmem>>, vector<1x288x4xf32>
    %2 = vector.shape_cast %1 : vector<1x288x4xf32> to vector<288x4xf32>
    %3 = arith.truncf %2 : vector<288x4xf32> to vector<288x4xbf16>
    %c0_2 = arith.constant 0 : index
    %c0_3 = arith.constant 0 : index
    %c0_4 = arith.constant 0 : index
    %4 = vector.load %arg2[%c0_2, %c0_3, %c0_4] : memref<1x342x4xf32, #tpu.memory_space<vmem>>, vector<1x288x4xf32>
    %5 = vector.shape_cast %4 : vector<1x288x4xf32> to vector<288x4xf32>
    %6 = arith.truncf %5 : vector<288x4xf32> to vector<288x4xbf16>
    %c0_5 = arith.constant 0 : index
    %c0_6 = arith.constant 0 : index
    %c0_7 = arith.constant 0 : index
    %7 = vector.load %arg4[%c0_5, %c0_6, %c0_7] : memref<9x4x8xbf16, #tpu.memory_space<vmem>>, vector<1x4x8xbf16>
    %8 = vector.shape_cast %7 : vector<1x4x8xbf16> to vector<4x8xbf16>
    %cst_8 = arith.constant dense<0.000000e+00> : vector<288x8xf32>
    %9 = tpu.matmul %3, %8, %cst_8 {dimension_numbers = #tpu.dot_dimension_numbers<[1], [0], [0], [1], [0, 0, 1, 1], [], []>} : vector<288x4xbf16>, vector<4x8xbf16>, vector<288x8xf32> -> vector<288x8xf32>
    %10 = arith.addf %0, %9 : vector<288x8xf32>
    %c0_9 = arith.constant 0 : index
    %c0_10 = arith.constant 0 : index
    %c0_11 = arith.constant 0 : index
    %11 = vector.load %arg5[%c0_9, %c0_10, %c0_11] : memref<9x4x8xbf16, #tpu.memory_space<vmem>>, vector<1x4x8xbf16>
    %12 = vector.shape_cast %11 : vector<1x4x8xbf16> to vector<4x8xbf16>
    %cst_12 = arith.constant dense<0.000000e+00> : vector<288x8xf32>
    %13 = tpu.matmul %6, %12, %cst_12 {dimension_numbers = #tpu.dot_dimension_numbers<[1], [0], [0], [1], [0, 0, 1, 1], [], []>} : vector<288x4xbf16>, vector<4x8xbf16>, vector<288x8xf32> -> vector<288x8xf32>
    %14 = arith.addf %10, %13 : vector<288x8xf32>
    %c0_13 = arith.constant 0 : index
    %c1 = arith.constant 1 : index
    %c0_14 = arith.constant 0 : index
    %15 = vector.load %arg1[%c0_13, %c1, %c0_14] : memref<1x342x4xf32, #tpu.memory_space<vmem>>, vector<1x288x4xf32>
    %16 = vector.shape_cast %15 : vector<1x288x4xf32> to vector<288x4xf32>
    %17 = arith.truncf %16 : vector<288x4xf32> to vector<288x4xbf16>
    %c0_15 = arith.constant 0 : index
    %c1_16 = arith.constant 1 : index
    %c0_17 = arith.constant 0 : index
    %18 = vector.load %arg2[%c0_15, %c1_16, %c0_17] : memref<1x342x4xf32, #tpu.memory_space<vmem>>, vector<1x288x4xf32>
    %19 = vector.shape_cast %18 : vector<1x288x4xf32> to vector<288x4xf32>
    %20 = arith.truncf %19 : vector<288x4xf32> to vector<288x4xbf16>
    %c1_18 = arith.constant 1 : index
    %c0_19 = arith.constant 0 : index
    %c0_20 = arith.constant 0 : index
    %21 = vector.load %arg4[%c1_18, %c0_19, %c0_20] : memref<9x4x8xbf16, #tpu.memory_space<vmem>>, vector<1x4x8xbf16>
    %22 = vector.shape_cast %21 : vector<1x4x8xbf16> to vector<4x8xbf16>
    %cst_21 = arith.constant dense<0.000000e+00> : vector<288x8xf32>
    %23 = tpu.matmul %17, %22, %cst_21 {dimension_numbers = #tpu.dot_dimension_numbers<[1], [0], [0], [1], [0, 0, 1, 1], [], []>} : vector<288x4xbf16>, vector<4x8xbf16>, vector<288x8xf32> -> vector<288x8xf32>
    %24 = arith.addf %14, %23 : vector<288x8xf32>
    %c1_22 = arith.constant 1 : index
    %c0_23 = arith.constant 0 : index
    %c0_24 = arith.constant 0 : index
    %25 = vector.load %arg5[%c1_22, %c0_23, %c0_24] : memref<9x4x8xbf16, #tpu.memory_space<vmem>>, vector<1x4x8xbf16>
    %26 = vector.shape_cast %25 : vector<1x4x8xbf16> to vector<4x8xbf16>
    %cst_25 = arith.constant dense<0.000000e+00> : vector<288x8xf32>
    %27 = tpu.matmul %20, %26, %cst_25 {dimension_numbers = #tpu.dot_dimension_numbers<[1], [0], [0], [1], [0, 0, 1, 1], [], []>} : vector<288x4xbf16>, vector<4x8xbf16>, vector<288x8xf32> -> vector<288x8xf32>
    %28 = arith.addf %24, %27 : vector<288x8xf32>
    %c0_26 = arith.constant 0 : index
    %c2 = arith.constant 2 : index
    %c0_27 = arith.constant 0 : index
    %29 = vector.load %arg1[%c0_26, %c2, %c0_27] : memref<1x342x4xf32, #tpu.memory_space<vmem>>, vector<1x288x4xf32>
    %30 = vector.shape_cast %29 : vector<1x288x4xf32> to vector<288x4xf32>
    %31 = arith.truncf %30 : vector<288x4xf32> to vector<288x4xbf16>
    %c0_28 = arith.constant 0 : index
    %c2_29 = arith.constant 2 : index
    %c0_30 = arith.constant 0 : index
    %32 = vector.load %arg2[%c0_28, %c2_29, %c0_30] : memref<1x342x4xf32, #tpu.memory_space<vmem>>, vector<1x288x4xf32>
    %33 = vector.shape_cast %32 : vector<1x288x4xf32> to vector<288x4xf32>
    %34 = arith.truncf %33 : vector<288x4xf32> to vector<288x4xbf16>
    %c2_31 = arith.constant 2 : index
    %c0_32 = arith.constant 0 : index
    %c0_33 = arith.constant 0 : index
    %35 = vector.load %arg4[%c2_31, %c0_32, %c0_33] : memref<9x4x8xbf16, #tpu.memory_space<vmem>>, vector<1x4x8xbf16>
    %36 = vector.shape_cast %35 : vector<1x4x8xbf16> to vector<4x8xbf16>
    %cst_34 = arith.constant dense<0.000000e+00> : vector<288x8xf32>
    %37 = tpu.matmul %31, %36, %cst_34 {dimension_numbers = #tpu.dot_dimension_numbers<[1], [0], [0], [1], [0, 0, 1, 1], [], []>} : vector<288x4xbf16>, vector<4x8xbf16>, vector<288x8xf32> -> vector<288x8xf32>
    %38 = arith.addf %28, %37 : vector<288x8xf32>
    %c2_35 = arith.constant 2 : index
    %c0_36 = arith.constant 0 : index
    %c0_37 = arith.constant 0 : index
    %39 = vector.load %arg5[%c2_35, %c0_36, %c0_37] : memref<9x4x8xbf16, #tpu.memory_space<vmem>>, vector<1x4x8xbf16>
    %40 = vector.shape_cast %39 : vector<1x4x8xbf16> to vector<4x8xbf16>
    %cst_38 = arith.constant dense<0.000000e+00> : vector<288x8xf32>
    %41 = tpu.matmul %34, %40, %cst_38 {dimension_numbers = #tpu.dot_dimension_numbers<[1], [0], [0], [1], [0, 0, 1, 1], [], []>} : vector<288x4xbf16>, vector<4x8xbf16>, vector<288x8xf32> -> vector<288x8xf32>
    %42 = arith.addf %38, %41 : vector<288x8xf32>
    %c0_39 = arith.constant 0 : index
    %c18 = arith.constant 18 : index
    %c0_40 = arith.constant 0 : index
    %43 = vector.load %arg1[%c0_39, %c18, %c0_40] : memref<1x342x4xf32, #tpu.memory_space<vmem>>, vector<1x288x4xf32>
    %44 = vector.shape_cast %43 : vector<1x288x4xf32> to vector<288x4xf32>
    %45 = arith.truncf %44 : vector<288x4xf32> to vector<288x4xbf16>
    %c0_41 = arith.constant 0 : index
    %c18_42 = arith.constant 18 : index
    %c0_43 = arith.constant 0 : index
    %46 = vector.load %arg2[%c0_41, %c18_42, %c0_43] : memref<1x342x4xf32, #tpu.memory_space<vmem>>, vector<1x288x4xf32>
    %47 = vector.shape_cast %46 : vector<1x288x4xf32> to vector<288x4xf32>
    %48 = arith.truncf %47 : vector<288x4xf32> to vector<288x4xbf16>
    %c3 = arith.constant 3 : index
    %c0_44 = arith.constant 0 : index
    %c0_45 = arith.constant 0 : index
    %49 = vector.load %arg4[%c3, %c0_44, %c0_45] : memref<9x4x8xbf16, #tpu.memory_space<vmem>>, vector<1x4x8xbf16>
    %50 = vector.shape_cast %49 : vector<1x4x8xbf16> to vector<4x8xbf16>
    %cst_46 = arith.constant dense<0.000000e+00> : vector<288x8xf32>
    %51 = tpu.matmul %45, %50, %cst_46 {dimension_numbers = #tpu.dot_dimension_numbers<[1], [0], [0], [1], [0, 0, 1, 1], [], []>} : vector<288x4xbf16>, vector<4x8xbf16>, vector<288x8xf32> -> vector<288x8xf32>
    %52 = arith.addf %42, %51 : vector<288x8xf32>
    %c3_47 = arith.constant 3 : index
    %c0_48 = arith.constant 0 : index
    %c0_49 = arith.constant 0 : index
    %53 = vector.load %arg5[%c3_47, %c0_48, %c0_49] : memref<9x4x8xbf16, #tpu.memory_space<vmem>>, vector<1x4x8xbf16>
    %54 = vector.shape_cast %53 : vector<1x4x8xbf16> to vector<4x8xbf16>
    %cst_50 = arith.constant dense<0.000000e+00> : vector<288x8xf32>
    %55 = tpu.matmul %48, %54, %cst_50 {dimension_numbers = #tpu.dot_dimension_numbers<[1], [0], [0], [1], [0, 0, 1, 1], [], []>} : vector<288x4xbf16>, vector<4x8xbf16>, vector<288x8xf32> -> vector<288x8xf32>
    %56 = arith.addf %52, %55 : vector<288x8xf32>
    %c0_51 = arith.constant 0 : index
    %c19 = arith.constant 19 : index
    %c0_52 = arith.constant 0 : index
    %57 = vector.load %arg1[%c0_51, %c19, %c0_52] : memref<1x342x4xf32, #tpu.memory_space<vmem>>, vector<1x288x4xf32>
    %58 = vector.shape_cast %57 : vector<1x288x4xf32> to vector<288x4xf32>
    %59 = arith.truncf %58 : vector<288x4xf32> to vector<288x4xbf16>
    %c0_53 = arith.constant 0 : index
    %c19_54 = arith.constant 19 : index
    %c0_55 = arith.constant 0 : index
    %60 = vector.load %arg2[%c0_53, %c19_54, %c0_55] : memref<1x342x4xf32, #tpu.memory_space<vmem>>, vector<1x288x4xf32>
    %61 = vector.shape_cast %60 : vector<1x288x4xf32> to vector<288x4xf32>
    %62 = arith.truncf %61 : vector<288x4xf32> to vector<288x4xbf16>
    %c4 = arith.constant 4 : index
    %c0_56 = arith.constant 0 : index
    %c0_57 = arith.constant 0 : index
    %63 = vector.load %arg4[%c4, %c0_56, %c0_57] : memref<9x4x8xbf16, #tpu.memory_space<vmem>>, vector<1x4x8xbf16>
    %64 = vector.shape_cast %63 : vector<1x4x8xbf16> to vector<4x8xbf16>
    %cst_58 = arith.constant dense<0.000000e+00> : vector<288x8xf32>
    %65 = tpu.matmul %59, %64, %cst_58 {dimension_numbers = #tpu.dot_dimension_numbers<[1], [0], [0], [1], [0, 0, 1, 1], [], []>} : vector<288x4xbf16>, vector<4x8xbf16>, vector<288x8xf32> -> vector<288x8xf32>
    %66 = arith.addf %56, %65 : vector<288x8xf32>
    %c4_59 = arith.constant 4 : index
    %c0_60 = arith.constant 0 : index
    %c0_61 = arith.constant 0 : index
    %67 = vector.load %arg5[%c4_59, %c0_60, %c0_61] : memref<9x4x8xbf16, #tpu.memory_space<vmem>>, vector<1x4x8xbf16>
    %68 = vector.shape_cast %67 : vector<1x4x8xbf16> to vector<4x8xbf16>
    %cst_62 = arith.constant dense<0.000000e+00> : vector<288x8xf32>
    %69 = tpu.matmul %62, %68, %cst_62 {dimension_numbers = #tpu.dot_dimension_numbers<[1], [0], [0], [1], [0, 0, 1, 1], [], []>} : vector<288x4xbf16>, vector<4x8xbf16>, vector<288x8xf32> -> vector<288x8xf32>
    %70 = arith.addf %66, %69 : vector<288x8xf32>
    %c0_63 = arith.constant 0 : index
    %c20 = arith.constant 20 : index
    %c0_64 = arith.constant 0 : index
    %71 = vector.load %arg1[%c0_63, %c20, %c0_64] : memref<1x342x4xf32, #tpu.memory_space<vmem>>, vector<1x288x4xf32>
    %72 = vector.shape_cast %71 : vector<1x288x4xf32> to vector<288x4xf32>
    %73 = arith.truncf %72 : vector<288x4xf32> to vector<288x4xbf16>
    %c0_65 = arith.constant 0 : index
    %c20_66 = arith.constant 20 : index
    %c0_67 = arith.constant 0 : index
    %74 = vector.load %arg2[%c0_65, %c20_66, %c0_67] : memref<1x342x4xf32, #tpu.memory_space<vmem>>, vector<1x288x4xf32>
    %75 = vector.shape_cast %74 : vector<1x288x4xf32> to vector<288x4xf32>
    %76 = arith.truncf %75 : vector<288x4xf32> to vector<288x4xbf16>
    %c5 = arith.constant 5 : index
    %c0_68 = arith.constant 0 : index
    %c0_69 = arith.constant 0 : index
    %77 = vector.load %arg4[%c5, %c0_68, %c0_69] : memref<9x4x8xbf16, #tpu.memory_space<vmem>>, vector<1x4x8xbf16>
    %78 = vector.shape_cast %77 : vector<1x4x8xbf16> to vector<4x8xbf16>
    %cst_70 = arith.constant dense<0.000000e+00> : vector<288x8xf32>
    %79 = tpu.matmul %73, %78, %cst_70 {dimension_numbers = #tpu.dot_dimension_numbers<[1], [0], [0], [1], [0, 0, 1, 1], [], []>} : vector<288x4xbf16>, vector<4x8xbf16>, vector<288x8xf32> -> vector<288x8xf32>
    %80 = arith.addf %70, %79 : vector<288x8xf32>
    %c5_71 = arith.constant 5 : index
    %c0_72 = arith.constant 0 : index
    %c0_73 = arith.constant 0 : index
    %81 = vector.load %arg5[%c5_71, %c0_72, %c0_73] : memref<9x4x8xbf16, #tpu.memory_space<vmem>>, vector<1x4x8xbf16>
    %82 = vector.shape_cast %81 : vector<1x4x8xbf16> to vector<4x8xbf16>
    %cst_74 = arith.constant dense<0.000000e+00> : vector<288x8xf32>
    %83 = tpu.matmul %76, %82, %cst_74 {dimension_numbers = #tpu.dot_dimension_numbers<[1], [0], [0], [1], [0, 0, 1, 1], [], []>} : vector<288x4xbf16>, vector<4x8xbf16>, vector<288x8xf32> -> vector<288x8xf32>
    %84 = arith.addf %80, %83 : vector<288x8xf32>
    %c0_75 = arith.constant 0 : index
    %c36 = arith.constant 36 : index
    %c0_76 = arith.constant 0 : index
    %85 = vector.load %arg1[%c0_75, %c36, %c0_76] : memref<1x342x4xf32, #tpu.memory_space<vmem>>, vector<1x288x4xf32>
    %86 = vector.shape_cast %85 : vector<1x288x4xf32> to vector<288x4xf32>
    %87 = arith.truncf %86 : vector<288x4xf32> to vector<288x4xbf16>
    %c0_77 = arith.constant 0 : index
    %c36_78 = arith.constant 36 : index
    %c0_79 = arith.constant 0 : index
    %88 = vector.load %arg2[%c0_77, %c36_78, %c0_79] : memref<1x342x4xf32, #tpu.memory_space<vmem>>, vector<1x288x4xf32>
    %89 = vector.shape_cast %88 : vector<1x288x4xf32> to vector<288x4xf32>
    %90 = arith.truncf %89 : vector<288x4xf32> to vector<288x4xbf16>
    %c6 = arith.constant 6 : index
    %c0_80 = arith.constant 0 : index
    %c0_81 = arith.constant 0 : index
    %91 = vector.load %arg4[%c6, %c0_80, %c0_81] : memref<9x4x8xbf16, #tpu.memory_space<vmem>>, vector<1x4x8xbf16>
    %92 = vector.shape_cast %91 : vector<1x4x8xbf16> to vector<4x8xbf16>
    %cst_82 = arith.constant dense<0.000000e+00> : vector<288x8xf32>
    %93 = tpu.matmul %87, %92, %cst_82 {dimension_numbers = #tpu.dot_dimension_numbers<[1], [0], [0], [1], [0, 0, 1, 1], [], []>} : vector<288x4xbf16>, vector<4x8xbf16>, vector<288x8xf32> -> vector<288x8xf32>
    %94 = arith.addf %84, %93 : vector<288x8xf32>
    %c6_83 = arith.constant 6 : index
    %c0_84 = arith.constant 0 : index
    %c0_85 = arith.constant 0 : index
    %95 = vector.load %arg5[%c6_83, %c0_84, %c0_85] : memref<9x4x8xbf16, #tpu.memory_space<vmem>>, vector<1x4x8xbf16>
    %96 = vector.shape_cast %95 : vector<1x4x8xbf16> to vector<4x8xbf16>
    %cst_86 = arith.constant dense<0.000000e+00> : vector<288x8xf32>
    %97 = tpu.matmul %90, %96, %cst_86 {dimension_numbers = #tpu.dot_dimension_numbers<[1], [0], [0], [1], [0, 0, 1, 1], [], []>} : vector<288x4xbf16>, vector<4x8xbf16>, vector<288x8xf32> -> vector<288x8xf32>
    %98 = arith.addf %94, %97 : vector<288x8xf32>
    %c0_87 = arith.constant 0 : index
    %c37 = arith.constant 37 : index
    %c0_88 = arith.constant 0 : index
    %99 = vector.load %arg1[%c0_87, %c37, %c0_88] : memref<1x342x4xf32, #tpu.memory_space<vmem>>, vector<1x288x4xf32>
    %100 = vector.shape_cast %99 : vector<1x288x4xf32> to vector<288x4xf32>
    %101 = arith.truncf %100 : vector<288x4xf32> to vector<288x4xbf16>
    %c0_89 = arith.constant 0 : index
    %c37_90 = arith.constant 37 : index
    %c0_91 = arith.constant 0 : index
    %102 = vector.load %arg2[%c0_89, %c37_90, %c0_91] : memref<1x342x4xf32, #tpu.memory_space<vmem>>, vector<1x288x4xf32>
    %103 = vector.shape_cast %102 : vector<1x288x4xf32> to vector<288x4xf32>
    %104 = arith.truncf %103 : vector<288x4xf32> to vector<288x4xbf16>
    %c7 = arith.constant 7 : index
    %c0_92 = arith.constant 0 : index
    %c0_93 = arith.constant 0 : index
    %105 = vector.load %arg4[%c7, %c0_92, %c0_93] : memref<9x4x8xbf16, #tpu.memory_space<vmem>>, vector<1x4x8xbf16>
    %106 = vector.shape_cast %105 : vector<1x4x8xbf16> to vector<4x8xbf16>
    %cst_94 = arith.constant dense<0.000000e+00> : vector<288x8xf32>
    %107 = tpu.matmul %101, %106, %cst_94 {dimension_numbers = #tpu.dot_dimension_numbers<[1], [0], [0], [1], [0, 0, 1, 1], [], []>} : vector<288x4xbf16>, vector<4x8xbf16>, vector<288x8xf32> -> vector<288x8xf32>
    %108 = arith.addf %98, %107 : vector<288x8xf32>
    %c7_95 = arith.constant 7 : index
    %c0_96 = arith.constant 0 : index
    %c0_97 = arith.constant 0 : index
    %109 = vector.load %arg5[%c7_95, %c0_96, %c0_97] : memref<9x4x8xbf16, #tpu.memory_space<vmem>>, vector<1x4x8xbf16>
    %110 = vector.shape_cast %109 : vector<1x4x8xbf16> to vector<4x8xbf16>
    %cst_98 = arith.constant dense<0.000000e+00> : vector<288x8xf32>
    %111 = tpu.matmul %104, %110, %cst_98 {dimension_numbers = #tpu.dot_dimension_numbers<[1], [0], [0], [1], [0, 0, 1, 1], [], []>} : vector<288x4xbf16>, vector<4x8xbf16>, vector<288x8xf32> -> vector<288x8xf32>
    %112 = arith.addf %108, %111 : vector<288x8xf32>
    %c0_99 = arith.constant 0 : index
    %c38 = arith.constant 38 : index
    %c0_100 = arith.constant 0 : index
    %113 = vector.load %arg1[%c0_99, %c38, %c0_100] : memref<1x342x4xf32, #tpu.memory_space<vmem>>, vector<1x288x4xf32>
    %114 = vector.shape_cast %113 : vector<1x288x4xf32> to vector<288x4xf32>
    %115 = arith.truncf %114 : vector<288x4xf32> to vector<288x4xbf16>
    %c0_101 = arith.constant 0 : index
    %c38_102 = arith.constant 38 : index
    %c0_103 = arith.constant 0 : index
    %116 = vector.load %arg2[%c0_101, %c38_102, %c0_103] : memref<1x342x4xf32, #tpu.memory_space<vmem>>, vector<1x288x4xf32>
    %117 = vector.shape_cast %116 : vector<1x288x4xf32> to vector<288x4xf32>
    %118 = arith.truncf %117 : vector<288x4xf32> to vector<288x4xbf16>
    %c8 = arith.constant 8 : index
    %c0_104 = arith.constant 0 : index
    %c0_105 = arith.constant 0 : index
    %119 = vector.load %arg4[%c8, %c0_104, %c0_105] : memref<9x4x8xbf16, #tpu.memory_space<vmem>>, vector<1x4x8xbf16>
    %120 = vector.shape_cast %119 : vector<1x4x8xbf16> to vector<4x8xbf16>
    %cst_106 = arith.constant dense<0.000000e+00> : vector<288x8xf32>
    %121 = tpu.matmul %115, %120, %cst_106 {dimension_numbers = #tpu.dot_dimension_numbers<[1], [0], [0], [1], [0, 0, 1, 1], [], []>} : vector<288x4xbf16>, vector<4x8xbf16>, vector<288x8xf32> -> vector<288x8xf32>
    %122 = arith.addf %112, %121 : vector<288x8xf32>
    %c8_107 = arith.constant 8 : index
    %c0_108 = arith.constant 0 : index
    %c0_109 = arith.constant 0 : index
    %123 = vector.load %arg5[%c8_107, %c0_108, %c0_109] : memref<9x4x8xbf16, #tpu.memory_space<vmem>>, vector<1x4x8xbf16>
    %124 = vector.shape_cast %123 : vector<1x4x8xbf16> to vector<4x8xbf16>
    %cst_110 = arith.constant dense<0.000000e+00> : vector<288x8xf32>
    %125 = tpu.matmul %118, %124, %cst_110 {dimension_numbers = #tpu.dot_dimension_numbers<[1], [0], [0], [1], [0, 0, 1, 1], [], []>} : vector<288x4xbf16>, vector<4x8xbf16>, vector<288x8xf32> -> vector<288x8xf32>
    %126 = arith.addf %122, %125 : vector<288x8xf32>
    %c0_111 = arith.constant 0 : index
    %c0_112 = arith.constant 0 : index
    %127 = vector.load %arg6[%c0_111, %c0_112] : memref<1x8xf32, #tpu.memory_space<vmem>>, vector<1x8xf32>
    %128 = vector.broadcast %127 : vector<1x8xf32> to vector<288x8xf32>
    %129 = arith.addf %126, %128 : vector<288x8xf32>
    %cst_113 = arith.constant 0.000000e+00 : f32
    %130 = vector.broadcast %cst_113 : f32 to vector<288x8xf32>
    %131 = arith.cmpf oge, %129, %130 : vector<288x8xf32>
    %cst_114 = arith.constant 2.000000e-01 : f32
    %132 = vector.broadcast %cst_114 : f32 to vector<288x8xf32>
    %133 = arith.mulf %132, %129 : vector<288x8xf32>
    %134 = arith.select %131, %129, %133 : vector<288x8xi1>, vector<288x8xf32>
    %c0_115 = arith.constant 0 : index
    %c0_116 = arith.constant 0 : index
    %135 = vector.load %arg3[%c0_115, %c0_116] : memref<288x1xf32, #tpu.memory_space<vmem>>, vector<288x1xf32>
    %136 = vector.broadcast %135 : vector<288x1xf32> to vector<288x8xf32>
    %137 = arith.mulf %134, %136 : vector<288x8xf32>
    %cst_117 = arith.constant 0.000000e+00 : f32
    %138 = vector.broadcast %cst_117 : f32 to vector<342x8xf32>
    %c0_118 = arith.constant 0 : index
    %c0_119 = arith.constant 0 : index
    %139 = vector.load %arg10[%c0_118, %c0_119] : memref<342x8xf32, #tpu.memory_space<vmem>>, vector<342x8xf32>
    tpu.vector_store %arg10[%c0_118, %c0_119], %138 {strides = array<i32>} : memref<342x8xf32, #tpu.memory_space<vmem>>, vector<342x8xf32>,
    %c19_120 = arith.constant 19 : index
    %c0_121 = arith.constant 0 : index
    %140 = vector.load %arg10[%c19_120, %c0_121] : memref<342x8xf32, #tpu.memory_space<vmem>>, vector<288x8xf32>
    tpu.vector_store %arg10[%c19_120, %c0_121], %137 {strides = array<i32>} : memref<342x8xf32, #tpu.memory_space<vmem>>, vector<288x8xf32>,
    %cst_122 = arith.constant 0.000000e+00 : f32
    %141 = vector.broadcast %cst_122 : f32 to vector<288x8xf32>
    %c0_123 = arith.constant 0 : index
    %c0_124 = arith.constant 0 : index
    %142 = vector.load %arg10[%c0_123, %c0_124] : memref<342x8xf32, #tpu.memory_space<vmem>>, vector<288x8xf32>
    %143 = arith.truncf %142 : vector<288x8xf32> to vector<288x8xbf16>
    %c0_125 = arith.constant 0 : index
    %c0_126 = arith.constant 0 : index
    %c0_127 = arith.constant 0 : index
    %144 = vector.load %arg7[%c0_125, %c0_126, %c0_127] : memref<9x8x8xbf16, #tpu.memory_space<vmem>>, vector<1x8x8xbf16>
    %145 = vector.shape_cast %144 : vector<1x8x8xbf16> to vector<8x8xbf16>
    %cst_128 = arith.constant dense<0.000000e+00> : vector<288x8xf32>
    %146 = tpu.matmul %143, %145, %cst_128 {dimension_numbers = #tpu.dot_dimension_numbers<[1], [0], [0], [1], [0, 0, 1, 1], [], []>} : vector<288x8xbf16>, vector<8x8xbf16>, vector<288x8xf32> -> vector<288x8xf32>
    %147 = arith.addf %141, %146 : vector<288x8xf32>
    %c1_129 = arith.constant 1 : index
    %c0_130 = arith.constant 0 : index
    %148 = vector.load %arg10[%c1_129, %c0_130] : memref<342x8xf32, #tpu.memory_space<vmem>>, vector<288x8xf32>
    %149 = arith.truncf %148 : vector<288x8xf32> to vector<288x8xbf16>
    %c1_131 = arith.constant 1 : index
    %c0_132 = arith.constant 0 : index
    %c0_133 = arith.constant 0 : index
    %150 = vector.load %arg7[%c1_131, %c0_132, %c0_133] : memref<9x8x8xbf16, #tpu.memory_space<vmem>>, vector<1x8x8xbf16>
    %151 = vector.shape_cast %150 : vector<1x8x8xbf16> to vector<8x8xbf16>
    %cst_134 = arith.constant dense<0.000000e+00> : vector<288x8xf32>
    %152 = tpu.matmul %149, %151, %cst_134 {dimension_numbers = #tpu.dot_dimension_numbers<[1], [0], [0], [1], [0, 0, 1, 1], [], []>} : vector<288x8xbf16>, vector<8x8xbf16>, vector<288x8xf32> -> vector<288x8xf32>
    %153 = arith.addf %147, %152 : vector<288x8xf32>
    %c2_135 = arith.constant 2 : index
    %c0_136 = arith.constant 0 : index
    %154 = vector.load %arg10[%c2_135, %c0_136] : memref<342x8xf32, #tpu.memory_space<vmem>>, vector<288x8xf32>
    %155 = arith.truncf %154 : vector<288x8xf32> to vector<288x8xbf16>
    %c2_137 = arith.constant 2 : index
    %c0_138 = arith.constant 0 : index
    %c0_139 = arith.constant 0 : index
    %156 = vector.load %arg7[%c2_137, %c0_138, %c0_139] : memref<9x8x8xbf16, #tpu.memory_space<vmem>>, vector<1x8x8xbf16>
    %157 = vector.shape_cast %156 : vector<1x8x8xbf16> to vector<8x8xbf16>
    %cst_140 = arith.constant dense<0.000000e+00> : vector<288x8xf32>
    %158 = tpu.matmul %155, %157, %cst_140 {dimension_numbers = #tpu.dot_dimension_numbers<[1], [0], [0], [1], [0, 0, 1, 1], [], []>} : vector<288x8xbf16>, vector<8x8xbf16>, vector<288x8xf32> -> vector<288x8xf32>
    %159 = arith.addf %153, %158 : vector<288x8xf32>
    %c18_141 = arith.constant 18 : index
    %c0_142 = arith.constant 0 : index
    %160 = vector.load %arg10[%c18_141, %c0_142] : memref<342x8xf32, #tpu.memory_space<vmem>>, vector<288x8xf32>
    %161 = arith.truncf %160 : vector<288x8xf32> to vector<288x8xbf16>
    %c3_143 = arith.constant 3 : index
    %c0_144 = arith.constant 0 : index
    %c0_145 = arith.constant 0 : index
    %162 = vector.load %arg7[%c3_143, %c0_144, %c0_145] : memref<9x8x8xbf16, #tpu.memory_space<vmem>>, vector<1x8x8xbf16>
    %163 = vector.shape_cast %162 : vector<1x8x8xbf16> to vector<8x8xbf16>
    %cst_146 = arith.constant dense<0.000000e+00> : vector<288x8xf32>
    %164 = tpu.matmul %161, %163, %cst_146 {dimension_numbers = #tpu.dot_dimension_numbers<[1], [0], [0], [1], [0, 0, 1, 1], [], []>} : vector<288x8xbf16>, vector<8x8xbf16>, vector<288x8xf32> -> vector<288x8xf32>
    %165 = arith.addf %159, %164 : vector<288x8xf32>
    %c19_147 = arith.constant 19 : index
    %c0_148 = arith.constant 0 : index
    %166 = vector.load %arg10[%c19_147, %c0_148] : memref<342x8xf32, #tpu.memory_space<vmem>>, vector<288x8xf32>
    %167 = arith.truncf %166 : vector<288x8xf32> to vector<288x8xbf16>
    %c4_149 = arith.constant 4 : index
    %c0_150 = arith.constant 0 : index
    %c0_151 = arith.constant 0 : index
    %168 = vector.load %arg7[%c4_149, %c0_150, %c0_151] : memref<9x8x8xbf16, #tpu.memory_space<vmem>>, vector<1x8x8xbf16>
    %169 = vector.shape_cast %168 : vector<1x8x8xbf16> to vector<8x8xbf16>
    %cst_152 = arith.constant dense<0.000000e+00> : vector<288x8xf32>
    %170 = tpu.matmul %167, %169, %cst_152 {dimension_numbers = #tpu.dot_dimension_numbers<[1], [0], [0], [1], [0, 0, 1, 1], [], []>} : vector<288x8xbf16>, vector<8x8xbf16>, vector<288x8xf32> -> vector<288x8xf32>
    %171 = arith.addf %165, %170 : vector<288x8xf32>
    %c20_153 = arith.constant 20 : index
    %c0_154 = arith.constant 0 : index
    %172 = vector.load %arg10[%c20_153, %c0_154] : memref<342x8xf32, #tpu.memory_space<vmem>>, vector<288x8xf32>
    %173 = arith.truncf %172 : vector<288x8xf32> to vector<288x8xbf16>
    %c5_155 = arith.constant 5 : index
    %c0_156 = arith.constant 0 : index
    %c0_157 = arith.constant 0 : index
    %174 = vector.load %arg7[%c5_155, %c0_156, %c0_157] : memref<9x8x8xbf16, #tpu.memory_space<vmem>>, vector<1x8x8xbf16>
    %175 = vector.shape_cast %174 : vector<1x8x8xbf16> to vector<8x8xbf16>
    %cst_158 = arith.constant dense<0.000000e+00> : vector<288x8xf32>
    %176 = tpu.matmul %173, %175, %cst_158 {dimension_numbers = #tpu.dot_dimension_numbers<[1], [0], [0], [1], [0, 0, 1, 1], [], []>} : vector<288x8xbf16>, vector<8x8xbf16>, vector<288x8xf32> -> vector<288x8xf32>
    %177 = arith.addf %171, %176 : vector<288x8xf32>
    %c36_159 = arith.constant 36 : index
    %c0_160 = arith.constant 0 : index
    %178 = vector.load %arg10[%c36_159, %c0_160] : memref<342x8xf32, #tpu.memory_space<vmem>>, vector<288x8xf32>
    %179 = arith.truncf %178 : vector<288x8xf32> to vector<288x8xbf16>
    %c6_161 = arith.constant 6 : index
    %c0_162 = arith.constant 0 : index
    %c0_163 = arith.constant 0 : index
    %180 = vector.load %arg7[%c6_161, %c0_162, %c0_163] : memref<9x8x8xbf16, #tpu.memory_space<vmem>>, vector<1x8x8xbf16>
    %181 = vector.shape_cast %180 : vector<1x8x8xbf16> to vector<8x8xbf16>
    %cst_164 = arith.constant dense<0.000000e+00> : vector<288x8xf32>
    %182 = tpu.matmul %179, %181, %cst_164 {dimension_numbers = #tpu.dot_dimension_numbers<[1], [0], [0], [1], [0, 0, 1, 1], [], []>} : vector<288x8xbf16>, vector<8x8xbf16>, vector<288x8xf32> -> vector<288x8xf32>
    %183 = arith.addf %177, %182 : vector<288x8xf32>
    %c37_165 = arith.constant 37 : index
    %c0_166 = arith.constant 0 : index
    %184 = vector.load %arg10[%c37_165, %c0_166] : memref<342x8xf32, #tpu.memory_space<vmem>>, vector<288x8xf32>
    %185 = arith.truncf %184 : vector<288x8xf32> to vector<288x8xbf16>
    %c7_167 = arith.constant 7 : index
    %c0_168 = arith.constant 0 : index
    %c0_169 = arith.constant 0 : index
    %186 = vector.load %arg7[%c7_167, %c0_168, %c0_169] : memref<9x8x8xbf16, #tpu.memory_space<vmem>>, vector<1x8x8xbf16>
    %187 = vector.shape_cast %186 : vector<1x8x8xbf16> to vector<8x8xbf16>
    %cst_170 = arith.constant dense<0.000000e+00> : vector<288x8xf32>
    %188 = tpu.matmul %185, %187, %cst_170 {dimension_numbers = #tpu.dot_dimension_numbers<[1], [0], [0], [1], [0, 0, 1, 1], [], []>} : vector<288x8xbf16>, vector<8x8xbf16>, vector<288x8xf32> -> vector<288x8xf32>
    %189 = arith.addf %183, %188 : vector<288x8xf32>
    %c38_171 = arith.constant 38 : index
    %c0_172 = arith.constant 0 : index
    %190 = vector.load %arg10[%c38_171, %c0_172] : memref<342x8xf32, #tpu.memory_space<vmem>>, vector<288x8xf32>
    %191 = arith.truncf %190 : vector<288x8xf32> to vector<288x8xbf16>
    %c8_173 = arith.constant 8 : index
    %c0_174 = arith.constant 0 : index
    %c0_175 = arith.constant 0 : index
    %192 = vector.load %arg7[%c8_173, %c0_174, %c0_175] : memref<9x8x8xbf16, #tpu.memory_space<vmem>>, vector<1x8x8xbf16>
    %193 = vector.shape_cast %192 : vector<1x8x8xbf16> to vector<8x8xbf16>
    %cst_176 = arith.constant dense<0.000000e+00> : vector<288x8xf32>
    %194 = tpu.matmul %191, %193, %cst_176 {dimension_numbers = #tpu.dot_dimension_numbers<[1], [0], [0], [1], [0, 0, 1, 1], [], []>} : vector<288x8xbf16>, vector<8x8xbf16>, vector<288x8xf32> -> vector<288x8xf32>
    %195 = arith.addf %189, %194 : vector<288x8xf32>
    %c0_177 = arith.constant 0 : index
    %c0_178 = arith.constant 0 : index
    %196 = vector.load %arg8[%c0_177, %c0_178] : memref<1x8xf32, #tpu.memory_space<vmem>>, vector<1x8xf32>
    %197 = vector.broadcast %196 : vector<1x8xf32> to vector<288x8xf32>
    %198 = arith.addf %195, %197 : vector<288x8xf32>
    %cst_179 = arith.constant 0.000000e+00 : f32
    %199 = vector.broadcast %cst_179 : f32 to vector<288x8xf32>
    %200 = arith.cmpf oge, %198, %199 : vector<288x8xf32>
    %cst_180 = arith.constant 2.000000e-01 : f32
    %201 = vector.broadcast %cst_180 : f32 to vector<288x8xf32>
    %202 = arith.mulf %201, %198 : vector<288x8xf32>
    %203 = arith.select %200, %198, %202 : vector<288x8xi1>, vector<288x8xf32>
    %204 = tpu.transpose %203, [1, 0] : vector<288x8xf32> -> vector<8x288xf32>
    %c0_181 = arith.constant 0 : index
    %c0_182 = arith.constant 0 : index
    %c0_183 = arith.constant 0 : index
    %205 = vector.load %arg9[%c0_181, %c0_182, %c0_183] : memref<1x8x288xf32, #tpu.memory_space<vmem>>, vector<1x8x288xf32>
    %206 = vector.shape_cast %205 : vector<1x8x288xf32> to vector<8x288xf32>
    %207 = vector.shape_cast %204 : vector<8x288xf32> to vector<1x8x288xf32>
    tpu.vector_store %arg9[%c0_181, %c0_182, %c0_183], %207 {strides = array<i32>} : memref<1x8x288xf32, #tpu.memory_space<vmem>>, vector<1x8x288xf32>,
    return
  }
  func.func @transform_0(%arg0: i32) -> (i32, i32, i32) {
    %c0_i32 = arith.constant 0 : i32
    %c0_i32_0 = arith.constant 0 : i32
    %c0_i32_1 = arith.constant 0 : i32
    return %arg0, %c0_i32, %c0_i32_0 : i32, i32, i32
  }
  func.func @transform_1(%arg0: i32) -> (i32, i32, i32) {
    %c0_i32 = arith.constant 0 : i32
    %c0_i32_0 = arith.constant 0 : i32
    %c0_i32_1 = arith.constant 0 : i32
    return %arg0, %c0_i32, %c0_i32_0 : i32, i32, i32
  }
  func.func @transform_2(%arg0: i32) -> (i32, i32) {
    %c0_i32 = arith.constant 0 : i32
    %c0_i32_0 = arith.constant 0 : i32
    %c0_i32_1 = arith.constant 0 : i32
    return %c0_i32, %c0_i32_0 : i32, i32
  }
  func.func @transform_3(%arg0: i32) -> (i32, i32, i32) {
    %c0_i32 = arith.constant 0 : i32
    %c0_i32_0 = arith.constant 0 : i32
    %c0_i32_1 = arith.constant 0 : i32
    %c0_i32_2 = arith.constant 0 : i32
    return %c0_i32, %c0_i32_0, %c0_i32_1 : i32, i32, i32
  }
  func.func @transform_4(%arg0: i32) -> (i32, i32, i32) {
    %c0_i32 = arith.constant 0 : i32
    %c0_i32_0 = arith.constant 0 : i32
    %c0_i32_1 = arith.constant 0 : i32
    %c0_i32_2 = arith.constant 0 : i32
    return %c0_i32, %c0_i32_0, %c0_i32_1 : i32, i32, i32
  }
  func.func @transform_5(%arg0: i32) -> (i32, i32) {
    %c0_i32 = arith.constant 0 : i32
    %c0_i32_0 = arith.constant 0 : i32
    %c0_i32_1 = arith.constant 0 : i32
    return %c0_i32, %c0_i32_0 : i32, i32
  }
  func.func @transform_6(%arg0: i32) -> (i32, i32, i32) {
    %c0_i32 = arith.constant 0 : i32
    %c0_i32_0 = arith.constant 0 : i32
    %c0_i32_1 = arith.constant 0 : i32
    %c0_i32_2 = arith.constant 0 : i32
    return %c0_i32, %c0_i32_0, %c0_i32_1 : i32, i32, i32
  }
  func.func @transform_7(%arg0: i32) -> (i32, i32) {
    %c0_i32 = arith.constant 0 : i32
    %c0_i32_0 = arith.constant 0 : i32
    %c0_i32_1 = arith.constant 0 : i32
    return %c0_i32, %c0_i32_0 : i32, i32
  }
  func.func @transform_8(%arg0: i32) -> (i32, i32, i32) {
    %c0_i32 = arith.constant 0 : i32
    %c0_i32_0 = arith.constant 0 : i32
    %c0_i32_1 = arith.constant 0 : i32
    return %arg0, %c0_i32, %c0_i32_0 : i32, i32, i32
  }
}

</mosaic_0001>

<llo_original>
// kernel: upconv_forward.2
$region0: #{upconv_forward.2}
  #allocation0 [shape = 'u32[]', space=smem, size = 0x4, offset = 0x4, fixed_abs, tag = 'smem constant byte address 0x4 - core index']
  #allocation1 [shape = 'u32[144,128]{1,0:T(1,128)}', space=vmem, size = 0x12000, scoped, tag = 'internal scratch']
  %s0 = inlined_call_operand.vmem [shape: f32[2,8,32], index: 0, kind: input, shape index: {}]
  %s1 = inlined_call_operand.vmem [shape: f32[16,8], index: 1, kind: input, shape index: {}]
  %s2 = inlined_call_operand.vmem [shape: f32[32,64], index: 2, kind: input, shape index: {}]
  %s3 = inlined_call_operand.vmem [shape: f32[2,19,72], index: 3, kind: output, shape index: {}]
  %s4 = sld [smem:[#allocation0]]
  $region45: #{upconv_forward.2} parent=0
    _
  %s6 = ssub.s32 1, %s4
  %s7 = scalar_select 0, %s6, %s4
  loop: start=0, step=1, limit=4
  $region2: #{upconv_forward.2} parent=0 // loop_pre_header
    _
  $region3: #{upconv_forward.2} parent=0 // loop_header
    %s9 = sphi 0, %s13
    %p10 = scmp.ge.s32.totalorder %s9, 4
    %s19 = sphi 0, %s21
    %s22 = sphi 0, %s19
    %s23 = sphi 0, %s22
    %s39 = sphi 0, %s23
    %s43 = sphi 0, %s43
    %s45 = sphi 0, %s43
    %s46 = sphi 0, %s45
    %s60 = sphi 0, %s46
    %s64 = sphi 0, %s64
    %s66 = sphi 0, %s64
    %s67 = sphi 0, %s66
    %s81 = sphi 0, %s67
    %s87 = sphi 0, %s89
    %s90 = sphi 0, %s87
    %s91 = sphi 0, %s90
    %s107 = sphi 0, %s91
  $region4: #{upconv_forward.2} parent=0 // loop_header_branch
    %12 = sbr.rel (%p10) target = $region8
  $region5: #{upconv_forward.2} parent=0 // loop_body
    %s14 = ssub.s32 %s9, 1
    %s15 = ssub.s32 %s9, 2
    %s16 = sadd.s32 %s9, 1
    %s17 = ssub.s32 %s9, %s16
    %p18 = scmp.eq.s32.totalorder %s17, 0
    %s20 = sadd.s32 %s19, 1
    %s21 = scalar_select %p18, %s19, %s20
    %p24 = pneg %p18
    %p25 = scmp.eq.s32.totalorder %s9, 1
    %p26 = por %p24, %p25
    %p27 = scmp.ne.s32.totalorder %s19, %s22
    %p28 = scmp.eq.s32.totalorder %s9, 0
    %p29 = por %p27, %p28
    %p30 = scmp.ne.s32.totalorder %s19, %s22
    %p31 = scmp.eq.s32.totalorder %s14, 1
    %p32 = por %p30, %p31
    %p33 = scmp.ne.s32.totalorder %s22, %s23
    %p34 = scmp.eq.s32.totalorder %s14, 0
    %p35 = por %p33, %p34
    %p36 = scmp.ne.s32.totalorder %s22, %s23
    %p37 = scmp.eq.s32.totalorder %s15, 1
    %p38 = por %p36, %p37
    %p40 = scmp.ne.s32.totalorder %s23, %s39
    %p41 = scmp.eq.s32.totalorder %s15, 0
    %p42 = por %p40, %p41
    %s44 = sadd.s32 %s43, 1
    %p47 = scmp.eq.s32.totalorder %s9, 1
    %p48 = scmp.ne.s32.totalorder %s43, %s45
    %p49 = scmp.eq.s32.totalorder %s9, 0
    %p50 = por %p48, %p49
    %p51 = scmp.ne.s32.totalorder %s43, %s45
    %p52 = scmp.eq.s32.totalorder %s14, 1
    %p53 = por %p51, %p52
    %p54 = scmp.ne.s32.totalorder %s45, %s46
    %p55 = scmp.eq.s32.totalorder %s14, 0
    %p56 = por %p54, %p55
    %p57 = scmp.ne.s32.totalorder %s45, %s46
    %p58 = scmp.eq.s32.totalorder %s15, 1
    %p59 = por %p57, %p58
    %p61 = scmp.ne.s32.totalorder %s46, %s60
    %p62 = scmp.eq.s32.totalorder %s15, 0
    %p63 = por %p61, %p62
    %s65 = sadd.s32 %s64, 1
    %p68 = scmp.eq.s32.totalorder %s9, 1
    %p69 = scmp.ne.s32.totalorder %s64, %s66
    %p70 = scmp.eq.s32.totalorder %s9, 0
    %p71 = por %p69, %p70
    %p72 = scmp.ne.s32.totalorder %s64, %s66
    %p73 = scmp.eq.s32.totalorder %s14, 1
    %p74 = por %p72, %p73
    %p75 = scmp.ne.s32.totalorder %s66, %s67
    %p76 = scmp.eq.s32.totalorder %s14, 0
    %p77 = por %p75, %p76
    %p78 = scmp.ne.s32.totalorder %s66, %s67
    %p79 = scmp.eq.s32.totalorder %s15, 1
    %p80 = por %p78, %p79
    %p82 = scmp.ne.s32.totalorder %s67, %s81
    %p83 = scmp.eq.s32.totalorder %s15, 0
    %p84 = por %p82, %p83
    %s85 = ssub.s32 %s9, %s16
    %p86 = scmp.eq.s32.totalorder %s85, 0
    %s88 = sadd.s32 %s87, 1
    %s89 = scalar_select %p86, %s87, %s88
    %p92 = pneg %p86
    %p93 = scmp.eq.s32.totalorder %s9, 1
    %p94 = por %p92, %p93
    %p95 = scmp.ne.s32.totalorder %s87, %s90
    %p96 = scmp.eq.s32.totalorder %s9, 0
    %p97 = por %p95, %p96
    %p98 = scmp.ne.s32.totalorder %s87, %s90
    %p99 = scmp.eq.s32.totalorder %s14, 1
    %p100 = por %p98, %p99
    %p101 = scmp.ne.s32.totalorder %s90, %s91
    %p102 = scmp.eq.s32.totalorder %s14, 0
    %p103 = por %p101, %p102
    %p104 = scmp.ne.s32.totalorder %s90, %s91
    %p105 = scmp.eq.s32.totalorder %s15, 1
    %p106 = por %p104, %p105
    %p108 = scmp.ne.s32.totalorder %s91, %s107
    %p109 = scmp.eq.s32.totalorder %s15, 0
    %p110 = por %p108, %p109
    %p111 = scmp.le.s32.totalorder 1, %s9
    %p112 = scmp.lt.s32.totalorder %s9, 3
    %p113 = pnand %p111, %p112
    %p114 = pneg %p113
    // Predicated region
    $region9: #{upconv_forward.2} parent=5 // pred_check
      _
    $region10: #{upconv_forward.2} parent=5 // pred_check_branch
      %116 = sbr.rel (%p113) target = $region12
    $region11: #{upconv_forward.2} parent=5 // pred_region
      %s117 = ssub.s32 %s9, 1
      // Predicated region
      $region13: #{upconv_forward.2} parent=11 // pred_check
        %p118 = pneg %p56
      $region14: #{upconv_forward.2} parent=11 // pred_check_branch
        %120 = sbr.rel (%p118) target = $region16
      $region15: #{upconv_forward.2} parent=11 // pred_region
        _
      $region16: #{upconv_forward.2} parent=11 // pred_fallthru
        _
      // Predicated region
      $region17: #{upconv_forward.2} parent=11 // pred_check
        %p121 = pneg %p77
      $region18: #{upconv_forward.2} parent=11 // pred_check_branch
        %123 = sbr.rel (%p121) target = $region20
      $region19: #{upconv_forward.2} parent=11 // pred_region
        _
      $region20: #{upconv_forward.2} parent=11 // pred_fallthru
        _
    $region12: #{upconv_forward.2} parent=5 // pred_fallthru
      _
    %p124 = scmp.lt.s32.totalorder %s9, 2
    // Predicated region
    $region21: #{upconv_forward.2} parent=5 // pred_check
      %p125 = pneg %p124
    $region22: #{upconv_forward.2} parent=5 // pred_check_branch
      %127 = sbr.rel (%p125) target = $region24
    $region23: #{upconv_forward.2} parent=5 // pred_region
      // Predicated region
      $region25: #{upconv_forward.2} parent=23 // pred_check
        %p128 = pneg %p29
      $region26: #{upconv_forward.2} parent=23 // pred_check_branch
        %130 = sbr.rel (%p128) target = $region28
      $region27: #{upconv_forward.2} parent=23 // pred_region
        %p131 = scmp.lt.s32.totalorder %s9, 1
        %s132 = scalar_select %p131, %s9, 1
        %s133 = smul.addr %s132, 8
        %s134 = scalar_lea.vmem %s0, %s133
      $region28: #{upconv_forward.2} parent=23 // pred_fallthru
        _
    $region24: #{upconv_forward.2} parent=5 // pred_fallthru
      _
    %p135 = scmp.le.s32.totalorder 1, %s9
    %p136 = scmp.lt.s32.totalorder %s9, 3
    %p137 = pnand %p135, %p136
    %p138 = pneg %p137
    // Predicated region
    $region29: #{upconv_forward.2} parent=5 // pred_check
      _
    $region30: #{upconv_forward.2} parent=5 // pred_check_branch
      %140 = sbr.rel (%p137) target = $region32
    $region31: #{upconv_forward.2} parent=5 // pred_region
      %s141 = ssub.s32 %s9, 1
      %p142 = scmp.lt.s32.totalorder %s14, 1
      %s143 = scalar_select %p142, %s14, 1
      %s144 = smul.addr %s143, 8
      %s145 = scalar_lea.vmem %s0, %s144
      %p146 = pneg %p35
      %p147 = pneg %p32
      %p148 = pneg %p56
      %p149 = pneg %p53
      %p150 = pneg %p77
      %p151 = pneg %p74
      %p152 = pneg %p103
      %p153 = pneg %p100
      %p154 = scmp.lt.s32.totalorder %s14, 1
      %s155 = scalar_select %p154, %s14, 1
      %s156 = smul.addr %s155, 3
      %s157 = smul.addr %s156, 8
      %s158 = scalar_lea.vmem %s3, %s157
      %p159 = scmp.lt.s32.totalorder %s14, 1
      %s160 = scalar_select %p159, %s14, 1
      %s161 = smul.addr %s160, 8
      %s162 = scalar_lea.vmem %s0, %s161
      %p163 = scmp.lt.s32.totalorder %s14, 1
      %s164 = scalar_select %p163, %s14, 1
      %s165 = smul.addr %s164, 3
      %s166 = smul.addr %s165, 8
      %s167 = scalar_lea.vmem %s3, %s166
      %v168 = vld [vmem:[%s1] sm:$0xff]
      %v169 = vld [vmem:[%s1 + $0x8] sm:$0xff]
      %v170 = vld [vmem:[%s162] sm:$0xff]
      %vm171 = vcmask 64512
      %v173 = vsel %vm171, %v168, 0
      %v176 = vsel %vm171, %v169, 0
      %178 = vmatprep.subr.mxu0 0.0
      %179 = vmatpush1.msra.mxu0 %v170
      %180 = vmatprep.subr.mxu0 0.0
      %181 = vmatpush1.msra.mxu0 0.0
      %182 = vmatprep.subr.mxu0 0.0
      %183 = vmatpush1.msra.mxu0 0.0
      %184 = vmatprep.subr.mxu0 0.0
      %185 = vmatpush1.msra.mxu0 0.0
      %186 = vmatprep.subr.mxu0 0.0
      %187 = vmatpush1.msra.mxu0 0.0
      %188 = vmatprep.subr.mxu0 0.0
      %189 = vmatpush1.msra.mxu0 0.0
      %190 = vmatprep.subr.mxu0 0.0
      %191 = vmatpush1.msra.mxu0 0.0
      %192 = vmatprep.subr.mxu0 0.0
      %193 = vmatpush1.msra.mxu0 0.0
      %194 = vmatprep.subr.mxu0 0.0
      %195 = vmatpush1.msra.mxu0 0.0
      %196 = vmatprep.subr.mxu0 0.0
      %197 = vmatpush1.msra.mxu0 0.0
      %198 = vmatprep.subr.mxu0 0.0
      %199 = vmatpush1.msra.mxu0 0.0
      %200 = vmatprep.subr.mxu0 0.0
      %201 = vmatpush1.msra.mxu0 0.0
      %202 = vmatprep.subr.mxu0 0.0
      %203 = vmatpush1.msra.mxu0 0.0
      %204 = vmatprep.subr.mxu0 0.0
      %205 = vmatpush1.msra.mxu0 0.0
      %206 = vmatprep.subr.mxu0 0.0
      %207 = vmatpush1.msra.mxu0 0.0
      %208 = vmatprep.subr.mxu0 0.0
      %209 = vmatpush1.msra.mxu0 0.0
      %210 = vmatprep.subr.mxu0 0.0
      %211 = vmatpush1.msra.mxu0 0.0
      %212 = vmatprep.subr.mxu0 0.0
      %213 = vmatpush1.msra.mxu0 0.0
      %214 = vmatprep.subr.mxu0 0.0
      %215 = vmatpush1.msra.mxu0 0.0
      %216 = vmatprep.subr.mxu0 0.0
      %217 = vmatpush1.msra.mxu0 0.0
      %218 = vmatprep.subr.mxu0 0.0
      %219 = vmatpush1.msra.mxu0 0.0
      %220 = vmatprep.subr.mxu0 0.0
      %221 = vmatpush1.msra.mxu0 0.0
      %222 = vmatprep.subr.mxu0 0.0
      %223 = vmatpush1.msra.mxu0 0.0
      %224 = vmatprep.subr.mxu0 0.0
      %225 = vmatpush1.msra.mxu0 0.0
      %226 = vmatprep.subr.mxu0 0.0
      %227 = vmatpush1.msra.mxu0 0.0
      %228 = vmatprep.subr.mxu0 0.0
      %229 = vmatpush1.msra.mxu0 0.0
      %230 = vmatprep.subr.mxu0 0.0
      %231 = vmatpush1.msra.mxu0 0.0
      %232 = vmatprep.subr.mxu0 0.0
      %233 = vmatpush1.msra.mxu0 0.0
      %234 = vmatprep.subr.mxu0 0.0
      %235 = vmatpush1.msra.mxu0 0.0
      %236 = vmatprep.subr.mxu0 0.0
      %237 = vmatpush1.msra.mxu0 0.0
      %238 = vmatprep.subr.mxu0 0.0
      %239 = vmatpush1.msra.mxu0 0.0
      %240 = vmatprep.subr.mxu0 0.0
      %241 = vmatpush1.msra.mxu0 0.0
      %242 = vmatprep.mubr.f32.mxu0 0.0
      %243 = vmatmul.mubr.f32.gmra.mrb[0].mxu0 %v173
      %v244 = vpop.f32.mrb[0].mxu0
      %v245 = vadd.f32 0.0, %v244
      %v246 = vpop.f32.mrb[0].mxu0
      %247 = vmatprep.mubr.f32.mxu0 0.0
      %248 = vmatmul.mubr.f32.gmra.mrb[0].mxu0 %v176
      %v249 = vpop.f32.mrb[0].mxu0
      %v250 = vadd.f32 0.0, %v249
      %v251 = vpop.f32.mrb[0].mxu0
      %252 = vdwg.mxu0
      %v253 = vld [vmem:[%s2] sm:$0xff]
      %v254 = vld [vmem:[%s2 + $0x8] sm:$0xff]
      %v255 = vld [vmem:[%s2 + $0x10] sm:$0xff]
      %v256 = vld [vmem:[%s2 + $0x18] sm:$0xff]
      %vm257 = vcmask 261120
      %v259 = vsel %vm257, %v245, 0
      %v262 = vsel %vm257, %v250, 0
      %264 = vmatprep.subr.mxu0 0.0
      %265 = vmatpush1.msra.mxu0 %v253
      %266 = vmatprep.subr.mxu0 0.0
      %267 = vmatpush1.msra.mxu0 %v254
      %268 = vmatprep.subr.mxu0 0.0
      %269 = vmatpush1.msra.mxu0 %v255
      %270 = vmatprep.subr.mxu0 0.0
      %271 = vmatpush1.msra.mxu0 %v256
      %272 = vmatprep.subr.mxu0 0.0
      %273 = vmatpush1.msra.mxu0 0.0
      %274 = vmatprep.subr.mxu0 0.0
      %275 = vmatpush1.msra.mxu0 0.0
      %276 = vmatprep.subr.mxu0 0.0
      %277 = vmatpush1.msra.mxu0 0.0
      %278 = vmatprep.subr.mxu0 0.0
      %279 = vmatpush1.msra.mxu0 0.0
      %280 = vmatprep.subr.mxu0 0.0
      %281 = vmatpush1.msra.mxu0 0.0
      %282 = vmatprep.subr.mxu0 0.0
      %283 = vmatpush1.msra.mxu0 0.0
      %284 = vmatprep.subr.mxu0 0.0
      %285 = vmatpush1.msra.mxu0 0.0
      %286 = vmatprep.subr.mxu0 0.0
      %287 = vmatpush1.msra.mxu0 0.0
      %288 = vmatprep.subr.mxu0 0.0
      %289 = vmatpush1.msra.mxu0 0.0
      %290 = vmatprep.subr.mxu0 0.0
      %291 = vmatpush1.msra.mxu0 0.0
      %292 = vmatprep.subr.mxu0 0.0
      %293 = vmatpush1.msra.mxu0 0.0
      %294 = vmatprep.subr.mxu0 0.0
      %295 = vmatpush1.msra.mxu0 0.0
      %296 = vmatprep.subr.mxu0 0.0
      %297 = vmatpush1.msra.mxu0 0.0
      %298 = vmatprep.subr.mxu0 0.0
      %299 = vmatpush1.msra.mxu0 0.0
      %300 = vmatprep.subr.mxu0 0.0
      %301 = vmatpush1.msra.mxu0 0.0
      %302 = vmatprep.subr.mxu0 0.0
      %303 = vmatpush1.msra.mxu0 0.0
      %304 = vmatprep.subr.mxu0 0.0
      %305 = vmatpush1.msra.mxu0 0.0
      %306 = vmatprep.subr.mxu0 0.0
      %307 = vmatpush1.msra.mxu0 0.0
      %308 = vmatprep.subr.mxu0 0.0
      %309 = vmatpush1.msra.mxu0 0.0
      %310 = vmatprep.subr.mxu0 0.0
      %311 = vmatpush1.msra.mxu0 0.0
      %312 = vmatprep.subr.mxu0 0.0
      %313 = vmatpush1.msra.mxu0 0.0
      %314 = vmatprep.subr.mxu0 0.0
      %315 = vmatpush1.msra.mxu0 0.0
      %316 = vmatprep.subr.mxu0 0.0
      %317 = vmatpush1.msra.mxu0 0.0
      %318 = vmatprep.subr.mxu0 0.0
      %319 = vmatpush1.msra.mxu0 0.0
      %320 = vmatprep.subr.mxu0 0.0
      %321 = vmatpush1.msra.mxu0 0.0
      %322 = vmatprep.subr.mxu0 0.0
      %323 = vmatpush1.msra.mxu0 0.0
      %324 = vmatprep.subr.mxu0 0.0
      %325 = vmatpush1.msra.mxu0 0.0
      %326 = vmatprep.subr.mxu0 0.0
      %327 = vmatpush1.msra.mxu0 0.0
      %328 = vmatprep.mubr.f32.mxu0 0.0
      %329 = vmatmul.mubr.f32.gmra.mrb[0].mxu0 %v259
      %v330 = vpop.f32.mrb[0].mxu0
      %v331 = vadd.f32 0.0, %v330
      %v332 = vpop.f32.mrb[0].mxu0
      %333 = vmatprep.mubr.f32.mxu0 0.0
      %334 = vmatmul.mubr.f32.gmra.mrb[0].mxu0 %v262
      %v335 = vpop.f32.mrb[0].mxu0
      %v336 = vadd.f32 0.0, %v335
      %v337 = vpop.f32.mrb[0].mxu0
      %338 = vdwg.mxu0
      %vm339 = vcmask 588800
      %340 = vst.msk [vmem:[%s167] sm:$0xff] %vm339, 0.0
      %341 = vst.msk [vmem:[%s167 + $0x8] sm:$0xff] %vm339, 0.0
      %vm342 = vcmask 583680
      %343 = vst.msk [vmem:[%s167 + $0x10] sm:$0x7] %vm342, 0.0
      %346 = vrot.lane.b32.xlu0 %v331, 4
      %v347 = vpop.permute.xlu0 %346
      %348 = vrot.lane.b32.xlu0 %v336, 4
      %v349 = vpop.permute.xlu0 %348
      %vm352 = vcmask 556064
      %353 = vst.msk [vmem:[%s167 + $0x1] sm:$0xff] %vm352, %v347
      %354 = vst.msk [vmem:[%s167 + $0x9] sm:$0xff] %vm352, %v349
      %p355 = scmp.lt.s32.totalorder %s14, 1
      %s356 = scalar_select %p355, %s14, 1
      %s357 = smul.addr %s356, 3
      %s358 = smul.addr %s357, 8
      %s359 = scalar_lea.vmem %s3, %s358
      // Predicated region
      $region33: #{upconv_forward.2} parent=31 // pred_check
        %p360 = pneg %p100
      $region34: #{upconv_forward.2} parent=31 // pred_check_branch
        %362 = sbr.rel (%p360) target = $region36
      $region35: #{upconv_forward.2} parent=31 // pred_region
        _
      $region36: #{upconv_forward.2} parent=31 // pred_fallthru
        _
    $region32: #{upconv_forward.2} parent=5 // pred_fallthru
      _
    %p363 = scmp.le.s32.totalorder 2, %s9
    // Predicated region
    $region37: #{upconv_forward.2} parent=5 // pred_check
      %p364 = pneg %p363
    $region38: #{upconv_forward.2} parent=5 // pred_check_branch
      %366 = sbr.rel (%p364) target = $region40
    $region39: #{upconv_forward.2} parent=5 // pred_region
      %s367 = ssub.s32 %s9, 2
      // Predicated region
      $region41: #{upconv_forward.2} parent=39 // pred_check
        %p368 = pneg %p106
      $region42: #{upconv_forward.2} parent=39 // pred_check_branch
        %370 = sbr.rel (%p368) target = $region44
      $region43: #{upconv_forward.2} parent=39 // pred_region
        %p371 = scmp.lt.s32.totalorder %s15, 1
        %s372 = scalar_select %p371, %s15, 1
        %s373 = smul.addr %s372, 3
        %s374 = smul.addr %s373, 8
        %s375 = scalar_lea.vmem %s3, %s374
      $region44: #{upconv_forward.2} parent=39 // pred_fallthru
        _
    $region40: #{upconv_forward.2} parent=5 // pred_fallthru
      _
  $region6: #{upconv_forward.2} parent=0 // loop_footer
    %s13 = sadd.s32 1, %s9
  $region7: #{upconv_forward.2} parent=0 // loop_footer_branch
    %8 = sbr.rel target = $region3
  $region8: #{upconv_forward.2} parent=0 // loop_exit
    _

// kernel: upconv_forward.3
$region0: #{upconv_forward.3}
  #allocation0 [shape = 'u32[]', space=smem, size = 0x4, offset = 0x4, fixed_abs, tag = 'smem constant byte address 0x4 - core index']
  #allocation1 [shape = 'u32[144,128]{1,0:T(1,128)}', space=vmem, size = 0x12000, scoped, tag = 'internal scratch']
  #allocation2 [shape = 'f32[342,8]{1,0:T(8,128)}', space=vmem, size = 0x2b000, scoped, tag = 'scratch operand']
  %s0 = inlined_call_operand.vmem [shape: f32[2,342,4], index: 0, kind: input, shape index: {}]
  %s1 = inlined_call_operand.vmem [shape: f32[2,342,4], index: 1, kind: input, shape index: {}]
  %s2 = inlined_call_operand.vmem [shape: f32[288,1], index: 2, kind: input, shape index: {}]
  %s3 = inlined_call_operand.vmem [shape: bf16[9,4,8], index: 3, kind: input, shape index: {}]
  %s4 = inlined_call_operand.vmem [shape: bf16[9,4,8], index: 4, kind: input, shape index: {}]
  %s5 = inlined_call_operand.vmem [shape: f32[1,8], index: 5, kind: input, shape index: {}]
  %s6 = inlined_call_operand.vmem [shape: bf16[9,8,8], index: 6, kind: input, shape index: {}]
  %s7 = inlined_call_operand.vmem [shape: f32[1,8], index: 7, kind: input, shape index: {}]
  %s8 = inlined_call_operand.vmem [shape: f32[2,8,288], index: 8, kind: output, shape index: {}]
  %s9 = sld [smem:[#allocation0]]
  $region65: #{upconv_forward.3} parent=0
    _
  %s11 = ssub.s32 1, %s9
  %s12 = scalar_select 0, %s11, %s9
  loop: start=0, step=1, limit=4
  $region2: #{upconv_forward.3} parent=0 // loop_pre_header
    _
  $region3: #{upconv_forward.3} parent=0 // loop_header
    %s14 = sphi 0, %s18
    %p15 = scmp.ge.s32.totalorder %s14, 4
    %s24 = sphi 0, %s26
    %s27 = sphi 0, %s24
    %s28 = sphi 0, %s27
    %s44 = sphi 0, %s28
    %s50 = sphi 0, %s52
    %s53 = sphi 0, %s50
    %s54 = sphi 0, %s53
    %s70 = sphi 0, %s54
    %s74 = sphi 0, %s74
    %s76 = sphi 0, %s74
    %s77 = sphi 0, %s76
    %s91 = sphi 0, %s77
    %s95 = sphi 0, %s95
    %s97 = sphi 0, %s95
    %s98 = sphi 0, %s97
    %s112 = sphi 0, %s98
    %s116 = sphi 0, %s116
    %s118 = sphi 0, %s116
    %s119 = sphi 0, %s118
    %s133 = sphi 0, %s119
    %s137 = sphi 0, %s137
    %s139 = sphi 0, %s137
    %s140 = sphi 0, %s139
    %s154 = sphi 0, %s140
    %s158 = sphi 0, %s158
    %s160 = sphi 0, %s158
    %s161 = sphi 0, %s160
    %s175 = sphi 0, %s161
    %s179 = sphi 0, %s179
    %s181 = sphi 0, %s179
    %s182 = sphi 0, %s181
    %s196 = sphi 0, %s182
    %s202 = sphi 0, %s204
    %s205 = sphi 0, %s202
    %s206 = sphi 0, %s205
    %s222 = sphi 0, %s206
  $region4: #{upconv_forward.3} parent=0 // loop_header_branch
    %17 = sbr.rel (%p15) target = $region8
  $region5: #{upconv_forward.3} parent=0 // loop_body
    %s19 = ssub.s32 %s14, 1
    %s20 = ssub.s32 %s14, 2
    %s21 = sadd.s32 %s14, 1
    %s22 = ssub.s32 %s14, %s21
    %p23 = scmp.eq.s32.totalorder %s22, 0
    %s25 = sadd.s32 %s24, 1
    %s26 = scalar_select %p23, %s24, %s25
    %p29 = pneg %p23
    %p30 = scmp.eq.s32.totalorder %s14, 1
    %p31 = por %p29, %p30
    %p32 = scmp.ne.s32.totalorder %s24, %s27
    %p33 = scmp.eq.s32.totalorder %s14, 0
    %p34 = por %p32, %p33
    %p35 = scmp.ne.s32.totalorder %s24, %s27
    %p36 = scmp.eq.s32.totalorder %s19, 1
    %p37 = por %p35, %p36
    %p38 = scmp.ne.s32.totalorder %s27, %s28
    %p39 = scmp.eq.s32.totalorder %s19, 0
    %p40 = por %p38, %p39
    %p41 = scmp.ne.s32.totalorder %s27, %s28
    %p42 = scmp.eq.s32.totalorder %s20, 1
    %p43 = por %p41, %p42
    %p45 = scmp.ne.s32.totalorder %s28, %s44
    %p46 = scmp.eq.s32.totalorder %s20, 0
    %p47 = por %p45, %p46
    %s48 = ssub.s32 %s14, %s21
    %p49 = scmp.eq.s32.totalorder %s48, 0
    %s51 = sadd.s32 %s50, 1
    %s52 = scalar_select %p49, %s50, %s51
    %p55 = pneg %p49
    %p56 = scmp.eq.s32.totalorder %s14, 1
    %p57 = por %p55, %p56
    %p58 = scmp.ne.s32.totalorder %s50, %s53
    %p59 = scmp.eq.s32.totalorder %s14, 0
    %p60 = por %p58, %p59
    %p61 = scmp.ne.s32.totalorder %s50, %s53
    %p62 = scmp.eq.s32.totalorder %s19, 1
    %p63 = por %p61, %p62
    %p64 = scmp.ne.s32.totalorder %s53, %s54
    %p65 = scmp.eq.s32.totalorder %s19, 0
    %p66 = por %p64, %p65
    %p67 = scmp.ne.s32.totalorder %s53, %s54
    %p68 = scmp.eq.s32.totalorder %s20, 1
    %p69 = por %p67, %p68
    %p71 = scmp.ne.s32.totalorder %s54, %s70
    %p72 = scmp.eq.s32.totalorder %s20, 0
    %p73 = por %p71, %p72
    %s75 = sadd.s32 %s74, 1
    %p78 = scmp.eq.s32.totalorder %s14, 1
    %p79 = scmp.ne.s32.totalorder %s74, %s76
    %p80 = scmp.eq.s32.totalorder %s14, 0
    %p81 = por %p79, %p80
    %p82 = scmp.ne.s32.totalorder %s74, %s76
    %p83 = scmp.eq.s32.totalorder %s19, 1
    %p84 = por %p82, %p83
    %p85 = scmp.ne.s32.totalorder %s76, %s77
    %p86 = scmp.eq.s32.totalorder %s19, 0
    %p87 = por %p85, %p86
    %p88 = scmp.ne.s32.totalorder %s76, %s77
    %p89 = scmp.eq.s32.totalorder %s20, 1
    %p90 = por %p88, %p89
    %p92 = scmp.ne.s32.totalorder %s77, %s91
    %p93 = scmp.eq.s32.totalorder %s20, 0
    %p94 = por %p92, %p93
    %s96 = sadd.s32 %s95, 1
    %p99 = scmp.eq.s32.totalorder %s14, 1
    %p100 = scmp.ne.s32.totalorder %s95, %s97
    %p101 = scmp.eq.s32.totalorder %s14, 0
    %p102 = por %p100, %p101
    %p103 = scmp.ne.s32.totalorder %s95, %s97
    %p104 = scmp.eq.s32.totalorder %s19, 1
    %p105 = por %p103, %p104
    %p106 = scmp.ne.s32.totalorder %s97, %s98
    %p107 = scmp.eq.s32.totalorder %s19, 0
    %p108 = por %p106, %p107
    %p109 = scmp.ne.s32.totalorder %s97, %s98
    %p110 = scmp.eq.s32.totalorder %s20, 1
    %p111 = por %p109, %p110
    %p113 = scmp.ne.s32.totalorder %s98, %s112
    %p114 = scmp.eq.s32.totalorder %s20, 0
    %p115 = por %p113, %p114
    %s117 = sadd.s32 %s116, 1
    %p120 = scmp.eq.s32.totalorder %s14, 1
    %p121 = scmp.ne.s32.totalorder %s116, %s118
    %p122 = scmp.eq.s32.totalorder %s14, 0
    %p123 = por %p121, %p122
    %p124 = scmp.ne.s32.totalorder %s116, %s118
    %p125 = scmp.eq.s32.totalorder %s19, 1
    %p126 = por %p124, %p125
    %p127 = scmp.ne.s32.totalorder %s118, %s119
    %p128 = scmp.eq.s32.totalorder %s19, 0
    %p129 = por %p127, %p128
    %p130 = scmp.ne.s32.totalorder %s118, %s119
    %p131 = scmp.eq.s32.totalorder %s20, 1
    %p132 = por %p130, %p131
    %p134 = scmp.ne.s32.totalorder %s119, %s133
    %p135 = scmp.eq.s32.totalorder %s20, 0
    %p136 = por %p134, %p135
    %s138 = sadd.s32 %s137, 1
    %p141 = scmp.eq.s32.totalorder %s14, 1
    %p142 = scmp.ne.s32.totalorder %s137, %s139
    %p143 = scmp.eq.s32.totalorder %s14, 0
    %p144 = por %p142, %p143
    %p145 = scmp.ne.s32.totalorder %s137, %s139
    %p146 = scmp.eq.s32.totalorder %s19, 1
    %p147 = por %p145, %p146
    %p148 = scmp.ne.s32.totalorder %s139, %s140
    %p149 = scmp.eq.s32.totalorder %s19, 0
    %p150 = por %p148, %p149
    %p151 = scmp.ne.s32.totalorder %s139, %s140
    %p152 = scmp.eq.s32.totalorder %s20, 1
    %p153 = por %p151, %p152
    %p155 = scmp.ne.s32.totalorder %s140, %s154
    %p156 = scmp.eq.s32.totalorder %s20, 0
    %p157 = por %p155, %p156
    %s159 = sadd.s32 %s158, 1
    %p162 = scmp.eq.s32.totalorder %s14, 1
    %p163 = scmp.ne.s32.totalorder %s158, %s160
    %p164 = scmp.eq.s32.totalorder %s14, 0
    %p165 = por %p163, %p164
    %p166 = scmp.ne.s32.totalorder %s158, %s160
    %p167 = scmp.eq.s32.totalorder %s19, 1
    %p168 = por %p166, %p167
    %p169 = scmp.ne.s32.totalorder %s160, %s161
    %p170 = scmp.eq.s32.totalorder %s19, 0
    %p171 = por %p169, %p170
    %p172 = scmp.ne.s32.totalorder %s160, %s161
    %p173 = scmp.eq.s32.totalorder %s20, 1
    %p174 = por %p172, %p173
    %p176 = scmp.ne.s32.totalorder %s161, %s175
    %p177 = scmp.eq.s32.totalorder %s20, 0
    %p178 = por %p176, %p177
    %s180 = sadd.s32 %s179, 1
    %p183 = scmp.eq.s32.totalorder %s14, 1
    %p184 = scmp.ne.s32.totalorder %s179, %s181
    %p185 = scmp.eq.s32.totalorder %s14, 0
    %p186 = por %p184, %p185
    %p187 = scmp.ne.s32.totalorder %s179, %s181
    %p188 = scmp.eq.s32.totalorder %s19, 1
    %p189 = por %p187, %p188
    %p190 = scmp.ne.s32.totalorder %s181, %s182
    %p191 = scmp.eq.s32.totalorder %s19, 0
    %p192 = por %p190, %p191
    %p193 = scmp.ne.s32.totalorder %s181, %s182
    %p194 = scmp.eq.s32.totalorder %s20, 1
    %p195 = por %p193, %p194
    %p197 = scmp.ne.s32.totalorder %s182, %s196
    %p198 = scmp.eq.s32.totalorder %s20, 0
    %p199 = por %p197, %p198
    %s200 = ssub.s32 %s14, %s21
    %p201 = scmp.eq.s32.totalorder %s200, 0
    %s203 = sadd.s32 %s202, 1
    %s204 = scalar_select %p201, %s202, %s203
    %p207 = pneg %p201
    %p208 = scmp.eq.s32.totalorder %s14, 1
    %p209 = por %p207, %p208
    %p210 = scmp.ne.s32.totalorder %s202, %s205
    %p211 = scmp.eq.s32.totalorder %s14, 0
    %p212 = por %p210, %p211
    %p213 = scmp.ne.s32.totalorder %s202, %s205
    %p214 = scmp.eq.s32.totalorder %s19, 1
    %p215 = por %p213, %p214
    %p216 = scmp.ne.s32.totalorder %s205, %s206
    %p217 = scmp.eq.s32.totalorder %s19, 0
    %p218 = por %p216, %p217
    %p219 = scmp.ne.s32.totalorder %s205, %s206
    %p220 = scmp.eq.s32.totalorder %s20, 1
    %p221 = por %p219, %p220
    %p223 = scmp.ne.s32.totalorder %s206, %s222
    %p224 = scmp.eq.s32.totalorder %s20, 0
    %p225 = por %p223, %p224
    %p226 = scmp.le.s32.totalorder 1, %s14
    %p227 = scmp.lt.s32.totalorder %s14, 3
    %p228 = pnand %p226, %p227
    %p229 = pneg %p228
    // Predicated region
    $region9: #{upconv_forward.3} parent=5 // pred_check
      _
    $region10: #{upconv_forward.3} parent=5 // pred_check_branch
      %231 = sbr.rel (%p228) target = $region12
    $region11: #{upconv_forward.3} parent=5 // pred_region
      %s232 = ssub.s32 %s14, 1
      // Predicated region
      $region13: #{upconv_forward.3} parent=11 // pred_check
        %p233 = pneg %p87
      $region14: #{upconv_forward.3} parent=11 // pred_check_branch
        %235 = sbr.rel (%p233) target = $region16
      $region15: #{upconv_forward.3} parent=11 // pred_region
        _
      $region16: #{upconv_forward.3} parent=11 // pred_fallthru
        _
      // Predicated region
      $region17: #{upconv_forward.3} parent=11 // pred_check
        %p236 = pneg %p108
      $region18: #{upconv_forward.3} parent=11 // pred_check_branch
        %238 = sbr.rel (%p236) target = $region20
      $region19: #{upconv_forward.3} parent=11 // pred_region
        _
      $region20: #{upconv_forward.3} parent=11 // pred_fallthru
        _
      // Predicated region
      $region21: #{upconv_forward.3} parent=11 // pred_check
        %p239 = pneg %p129
      $region22: #{upconv_forward.3} parent=11 // pred_check_branch
        %241 = sbr.rel (%p239) target = $region24
      $region23: #{upconv_forward.3} parent=11 // pred_region
        _
      $region24: #{upconv_forward.3} parent=11 // pred_fallthru
        _
      // Predicated region
      $region25: #{upconv_forward.3} parent=11 // pred_check
        %p242 = pneg %p150
      $region26: #{upconv_forward.3} parent=11 // pred_check_branch
        %244 = sbr.rel (%p242) target = $region28
      $region27: #{upconv_forward.3} parent=11 // pred_region
        _
      $region28: #{upconv_forward.3} parent=11 // pred_fallthru
        _
      // Predicated region
      $region29: #{upconv_forward.3} parent=11 // pred_check
        %p245 = pneg %p171
      $region30: #{upconv_forward.3} parent=11 // pred_check_branch
        %247 = sbr.rel (%p245) target = $region32
      $region31: #{upconv_forward.3} parent=11 // pred_region
        _
      $region32: #{upconv_forward.3} parent=11 // pred_fallthru
        _
      // Predicated region
      $region33: #{upconv_forward.3} parent=11 // pred_check
        %p248 = pneg %p192
      $region34: #{upconv_forward.3} parent=11 // pred_check_branch
        %250 = sbr.rel (%p248) target = $region36
      $region35: #{upconv_forward.3} parent=11 // pred_region
        _
      $region36: #{upconv_forward.3} parent=11 // pred_fallthru
        _
    $region12: #{upconv_forward.3} parent=5 // pred_fallthru
      _
    %p251 = scmp.lt.s32.totalorder %s14, 2
    // Predicated region
    $region37: #{upconv_forward.3} parent=5 // pred_check
      %p252 = pneg %p251
    $region38: #{upconv_forward.3} parent=5 // pred_check_branch
      %254 = sbr.rel (%p252) target = $region40
    $region39: #{upconv_forward.3} parent=5 // pred_region
      // Predicated region
      $region41: #{upconv_forward.3} parent=39 // pred_check
        %p255 = pneg %p34
      $region42: #{upconv_forward.3} parent=39 // pred_check_branch
        %257 = sbr.rel (%p255) target = $region44
      $region43: #{upconv_forward.3} parent=39 // pred_region
        %p258 = scmp.lt.s32.totalorder %s14, 1
        %s259 = scalar_select %p258, %s14, 1
        %s260 = smul.addr %s259, 43
        %s261 = smul.addr %s260, 8
        %s262 = scalar_lea.vmem %s0, %s261
      $region44: #{upconv_forward.3} parent=39 // pred_fallthru
        _
      // Predicated region
      $region45: #{upconv_forward.3} parent=39 // pred_check
        %p263 = pneg %p60
      $region46: #{upconv_forward.3} parent=39 // pred_check_branch
        %265 = sbr.rel (%p263) target = $region48
      $region47: #{upconv_forward.3} parent=39 // pred_region
        %p266 = scmp.lt.s32.totalorder %s14, 1
        %s267 = scalar_select %p266, %s14, 1
        %s268 = smul.addr %s267, 43
        %s269 = smul.addr %s268, 8
        %s270 = scalar_lea.vmem %s1, %s269
      $region48: #{upconv_forward.3} parent=39 // pred_fallthru
        _
    $region40: #{upconv_forward.3} parent=5 // pred_fallthru
      _
    %p271 = scmp.le.s32.totalorder 1, %s14
    %p272 = scmp.lt.s32.totalorder %s14, 3
    %p273 = pnand %p271, %p272
    %p274 = pneg %p273
    // Predicated region
    $region49: #{upconv_forward.3} parent=5 // pred_check
      _
    $region50: #{upconv_forward.3} parent=5 // pred_check_branch
      %276 = sbr.rel (%p273) target = $region52
    $region51: #{upconv_forward.3} parent=5 // pred_region
      %s277 = ssub.s32 %s14, 1
      %p278 = scmp.lt.s32.totalorder %s19, 1
      %s279 = scalar_select %p278, %s19, 1
      %s280 = smul.addr %s279, 43
      %s281 = smul.addr %s280, 8
      %s282 = scalar_lea.vmem %s0, %s281
      %p283 = pneg %p40
      %p284 = pneg %p37
      %p285 = scmp.lt.s32.totalorder %s19, 1
      %s286 = scalar_select %p285, %s19, 1
      %s287 = smul.addr %s286, 43
      %s288 = smul.addr %s287, 8
      %s289 = scalar_lea.vmem %s1, %s288
      %p290 = pneg %p66
      %p291 = pneg %p63
      %p292 = pneg %p87
      %p293 = pneg %p84
      %p294 = pneg %p108
      %p295 = pneg %p105
      %p296 = pneg %p129
      %p297 = pneg %p126
      %p298 = pneg %p150
      %p299 = pneg %p147
      %p300 = pneg %p171
      %p301 = pneg %p168
      %p302 = pneg %p192
      %p303 = pneg %p189
      %p304 = pneg %p218
      %p305 = pneg %p215
      %p306 = scmp.lt.s32.totalorder %s19, 1
      %s307 = scalar_select %p306, %s19, 1
      %s308 = smul.addr %s307, 3
      %s309 = smul.addr %s308, 8
      %s310 = scalar_lea.vmem %s8, %s309
      %p311 = scmp.lt.s32.totalorder %s19, 1
      %s312 = scalar_select %p311, %s19, 1
      %s313 = smul.addr %s312, 43
      %s314 = smul.addr %s313, 8
      %s315 = scalar_lea.vmem %s0, %s314
      %p316 = scmp.lt.s32.totalorder %s19, 1
      %s317 = scalar_select %p316, %s19, 1
      %s318 = smul.addr %s317, 43
      %s319 = smul.addr %s318, 8
      %s320 = scalar_lea.vmem %s1, %s319
      %p321 = scmp.lt.s32.totalorder %s19, 1
      %s322 = scalar_select %p321, %s19, 1
      %s323 = smul.addr %s322, 3
      %s324 = smul.addr %s323, 8
      %s325 = scalar_lea.vmem %s8, %s324
      %v327 = vld [vmem:[%s315] sm:$0xff]
      %v328 = vld [vmem:[%s315 + $0x8] sm:$0xff]
      %v329 = vld [vmem:[%s315 + $0x10] sm:$0xff]
      %v330 = vld [vmem:[%s315 + $0x18] sm:$0xff]
      %v331 = vld [vmem:[%s315 + $0x20] sm:$0xff]
      %v332 = vld [vmem:[%s315 + $0x28] sm:$0xff]
      %v333 = vld [vmem:[%s315 + $0x30] sm:$0xff]
      %v334 = vld [vmem:[%s315 + $0x38] sm:$0xff]
      %v335 = vld [vmem:[%s315 + $0x40] sm:$0xff]
      %v336 = vld [vmem:[%s315 + $0x48] sm:$0xff]
      %v337 = vld [vmem:[%s315 + $0x50] sm:$0xff]
      %v338 = vld [vmem:[%s315 + $0x58] sm:$0xff]
      %v339 = vld [vmem:[%s315 + $0x60] sm:$0xff]
      %v340 = vld [vmem:[%s315 + $0x68] sm:$0xff]
      %v341 = vld [vmem:[%s315 + $0x70] sm:$0xff]
      %v342 = vld [vmem:[%s315 + $0x78] sm:$0xff]
      %v343 = vld [vmem:[%s315 + $0x80] sm:$0xff]
      %v344 = vld [vmem:[%s315 + $0x88] sm:$0xff]
      %v345 = vld [vmem:[%s315 + $0x90] sm:$0xff]
      %v346 = vld [vmem:[%s315 + $0x98] sm:$0xff]
      %v347 = vld [vmem:[%s315 + $0xa0] sm:$0xff]
      %v348 = vld [vmem:[%s315 + $0xa8] sm:$0xff]
      %v349 = vld [vmem:[%s315 + $0xb0] sm:$0xff]
      %v350 = vld [vmem:[%s315 + $0xb8] sm:$0xff]
      %v351 = vld [vmem:[%s315 + $0xc0] sm:$0xff]
      %v352 = vld [vmem:[%s315 + $0xc8] sm:$0xff]
      %v353 = vld [vmem:[%s315 + $0xd0] sm:$0xff]
      %v354 = vld [vmem:[%s315 + $0xd8] sm:$0xff]
      %v355 = vld [vmem:[%s315 + $0xe0] sm:$0xff]
      %v356 = vld [vmem:[%s315 + $0xe8] sm:$0xff]
      %v357 = vld [vmem:[%s315 + $0xf0] sm:$0xff]
      %v358 = vld [vmem:[%s315 + $0xf8] sm:$0xff]
      %v359 = vld [vmem:[%s315 + $0x100] sm:$0xff]
      %v360 = vld [vmem:[%s315 + $0x108] sm:$0xff]
      %v361 = vld [vmem:[%s315 + $0x110] sm:$0xff]
      %v362 = vld [vmem:[%s315 + $0x118] sm:$0xff]
      %v363 = vpack.c.bf16 %v328, %v327
      %v364 = vpack.c.bf16 %v330, %v329
      %v365 = vpack.c.bf16 %v332, %v331
      %v366 = vpack.c.bf16 %v334, %v333
      %v367 = vpack.c.bf16 %v336, %v335
      %v368 = vpack.c.bf16 %v338, %v337
      %v369 = vpack.c.bf16 %v340, %v339
      %v370 = vpack.c.bf16 %v342, %v341
      %v371 = vpack.c.bf16 %v344, %v343
      %v372 = vpack.c.bf16 %v346, %v345
      %v373 = vpack.c.bf16 %v348, %v347
      %v374 = vpack.c.bf16 %v350, %v349
      %v375 = vpack.c.bf16 %v352, %v351
      %v376 = vpack.c.bf16 %v354, %v353
      %v377 = vpack.c.bf16 %v356, %v355
      %v378 = vpack.c.bf16 %v358, %v357
      %v379 = vpack.c.bf16 %v360, %v359
      %v380 = vpack.c.bf16 %v362, %v361
      %v381 = vld [vmem:[%s320] sm:$0xff]
      %v382 = vld [vmem:[%s320 + $0x8] sm:$0xff]
      %v383 = vld [vmem:[%s320 + $0x10] sm:$0xff]
      %v384 = vld [vmem:[%s320 + $0x18] sm:$0xff]
      %v385 = vld [vmem:[%s320 + $0x20] sm:$0xff]
      %v386 = vld [vmem:[%s320 + $0x28] sm:$0xff]
      %v387 = vld [vmem:[%s320 + $0x30] sm:$0xff]
      %v388 = vld [vmem:[%s320 + $0x38] sm:$0xff]
      %v389 = vld [vmem:[%s320 + $0x40] sm:$0xff]
      %v390 = vld [vmem:[%s320 + $0x48] sm:$0xff]
      %v391 = vld [vmem:[%s320 + $0x50] sm:$0xff]
      %v392 = vld [vmem:[%s320 + $0x58] sm:$0xff]
      %v393 = vld [vmem:[%s320 + $0x60] sm:$0xff]
      %v394 = vld [vmem:[%s320 + $0x68] sm:$0xff]
      %v395 = vld [vmem:[%s320 + $0x70] sm:$0xff]
      %v396 = vld [vmem:[%s320 + $0x78] sm:$0xff]
      %v397 = vld [vmem:[%s320 + $0x80] sm:$0xff]
      %v398 = vld [vmem:[%s320 + $0x88] sm:$0xff]
      %v399 = vld [vmem:[%s320 + $0x90] sm:$0xff]
      %v400 = vld [vmem:[%s320 + $0x98] sm:$0xff]
      %v401 = vld [vmem:[%s320 + $0xa0] sm:$0xff]
      %v402 = vld [vmem:[%s320 + $0xa8] sm:$0xff]
      %v403 = vld [vmem:[%s320 + $0xb0] sm:$0xff]
      %v404 = vld [vmem:[%s320 + $0xb8] sm:$0xff]
      %v405 = vld [vmem:[%s320 + $0xc0] sm:$0xff]
      %v406 = vld [vmem:[%s320 + $0xc8] sm:$0xff]
      %v407 = vld [vmem:[%s320 + $0xd0] sm:$0xff]
      %v408 = vld [vmem:[%s320 + $0xd8] sm:$0xff]
      %v409 = vld [vmem:[%s320 + $0xe0] sm:$0xff]
      %v410 = vld [vmem:[%s320 + $0xe8] sm:$0xff]
      %v411 = vld [vmem:[%s320 + $0xf0] sm:$0xff]
      %v412 = vld [vmem:[%s320 + $0xf8] sm:$0xff]
      %v413 = vld [vmem:[%s320 + $0x100] sm:$0xff]
      %v414 = vld [vmem:[%s320 + $0x108] sm:$0xff]
      %v415 = vld [vmem:[%s320 + $0x110] sm:$0xff]
      %v416 = vld [vmem:[%s320 + $0x118] sm:$0xff]
      %v417 = vpack.c.bf16 %v382, %v381
      %v418 = vpack.c.bf16 %v384, %v383
      %v419 = vpack.c.bf16 %v386, %v385
      %v420 = vpack.c.bf16 %v388, %v387
      %v421 = vpack.c.bf16 %v390, %v389
      %v422 = vpack.c.bf16 %v392, %v391
      %v423 = vpack.c.bf16 %v394, %v393
      %v424 = vpack.c.bf16 %v396, %v395
      %v425 = vpack.c.bf16 %v398, %v397
      %v426 = vpack.c.bf16 %v400, %v399
      %v427 = vpack.c.bf16 %v402, %v401
      %v428 = vpack.c.bf16 %v404, %v403
      %v429 = vpack.c.bf16 %v406, %v405
      %v430 = vpack.c.bf16 %v408, %v407
      %v431 = vpack.c.bf16 %v410, %v409
      %v432 = vpack.c.bf16 %v412, %v411
      %v433 = vpack.c.bf16 %v414, %v413
      %v434 = vpack.c.bf16 %v416, %v415
      %v435 = vld [vmem:[%s3] sm:$0x3]
      %v436 = vld [vmem:[%s4] sm:$0x3]
      %vm437 = vcmask 31744
      %v439 = vsel %vm437, %v417, 0
      %v442 = vsel %vm437, %v418, 0
      %v445 = vsel %vm437, %v419, 0
      %v448 = vsel %vm437, %v420, 0
      %v451 = vsel %vm437, %v421, 0
      %v454 = vsel %vm437, %v422, 0
      %v457 = vsel %vm437, %v423, 0
      %v460 = vsel %vm437, %v424, 0
      %v463 = vsel %vm437, %v425, 0
      %v466 = vsel %vm437, %v426, 0
      %v469 = vsel %vm437, %v427, 0
      %v472 = vsel %vm437, %v428, 0
      %v475 = vsel %vm437, %v429, 0
      %v478 = vsel %vm437, %v430, 0
      %v481 = vsel %vm437, %v431, 0
      %v484 = vsel %vm437, %v432, 0
      %v487 = vsel %vm437, %v433, 0
      %v490 = vsel %vm437, %v434, 0
      %vm492 = vcmask 1041408
      %v494 = vsel %vm492, %v436, 0
      %496 = vmatprep.subr.bf16.mxu0 0
      %497 = vmatpush1.bf16.msra.mxu0 %v494
      %498 = vmatprep.subr.bf16.mxu0 0
      %499 = vmatpush1.bf16.msra.mxu0 0
      %500 = vmatprep.subr.bf16.mxu0 0
      %501 = vmatpush1.bf16.msra.mxu0 0
      %502 = vmatprep.subr.bf16.mxu0 0
      %503 = vmatpush1.bf16.msra.mxu0 0
      %504 = vmatprep.subr.bf16.mxu0 0
      %505 = vmatpush1.bf16.msra.mxu0 0
      %506 = vmatprep.subr.bf16.mxu0 0
      %507 = vmatpush1.bf16.msra.mxu0 0
      %508 = vmatprep.subr.bf16.mxu0 0
      %509 = vmatpush1.bf16.msra.mxu0 0
      %510 = vmatprep.subr.bf16.mxu0 0
      %511 = vmatpush1.bf16.msra.mxu0 0
      %512 = vmatprep.subr.bf16.mxu0 0
      %513 = vmatpush1.bf16.msra.mxu0 0
      %514 = vmatprep.subr.bf16.mxu0 0
      %515 = vmatpush1.bf16.msra.mxu0 0
      %516 = vmatprep.subr.bf16.mxu0 0
      %517 = vmatpush1.bf16.msra.mxu0 0
      %518 = vmatprep.subr.bf16.mxu0 0
      %519 = vmatpush1.bf16.msra.mxu0 0
      %520 = vmatprep.subr.bf16.mxu0 0
      %521 = vmatpush1.bf16.msra.mxu0 0
      %522 = vmatprep.subr.bf16.mxu0 0
      %523 = vmatpush1.bf16.msra.mxu0 0
      %524 = vmatprep.subr.bf16.mxu0 0
      %525 = vmatpush1.bf16.msra.mxu0 0
      %526 = vmatprep.subr.bf16.mxu0 0
      %527 = vmatpush1.bf16.msra.mxu0 0
      %528 = vmatprep.mubr.bf16.mxu0 0
      %529 = vmatmul.mubr.bf16.gmra.mrb[0].mxu0 %v439
      %v530 = vpop.f32.mrb[0].mxu0
      %v531 = vadd.f32 0.0, %v530
      %v532 = vpop.f32.mrb[0].mxu0
      %v533 = vpop.f32.mrb[0].mxu0
      %v534 = vadd.f32 0.0, %v533
      %v535 = vpop.f32.mrb[0].mxu0
      %536 = vmatprep.mubr.bf16.mxu0 0
      %537 = vmatmul.mubr.bf16.gmra.mrb[0].mxu0 %v442
      %v538 = vpop.f32.mrb[0].mxu0
      %v539 = vadd.f32 0.0, %v538
      %v540 = vpop.f32.mrb[0].mxu0
      %v541 = vpop.f32.mrb[0].mxu0
      %v542 = vadd.f32 0.0, %v541
      %v543 = vpop.f32.mrb[0].mxu0
      %544 = vmatprep.mubr.bf16.mxu0 0
      %545 = vmatmul.mubr.bf16.gmra.mrb[0].mxu0 %v445
      %v546 = vpop.f32.mrb[0].mxu0
      %v547 = vadd.f32 0.0, %v546
      %v548 = vpop.f32.mrb[0].mxu0
      %v549 = vpop.f32.mrb[0].mxu0
      %v550 = vadd.f32 0.0, %v549
      %v551 = vpop.f32.mrb[0].mxu0
      %552 = vmatprep.mubr.bf16.mxu0 0
      %553 = vmatmul.mubr.bf16.gmra.mrb[0].mxu0 %v448
      %v554 = vpop.f32.mrb[0].mxu0
      %v555 = vadd.f32 0.0, %v554
      %v556 = vpop.f32.mrb[0].mxu0
      %v557 = vpop.f32.mrb[0].mxu0
      %v558 = vadd.f32 0.0, %v557
      %v559 = vpop.f32.mrb[0].mxu0
      %560 = vmatprep.mubr.bf16.mxu0 0
      %561 = vmatmul.mubr.bf16.gmra.mrb[0].mxu0 %v451
      %v562 = vpop.f32.mrb[0].mxu0
      %v563 = vadd.f32 0.0, %v562
      %v564 = vpop.f32.mrb[0].mxu0
      %v565 = vpop.f32.mrb[0].mxu0
      %v566 = vadd.f32 0.0, %v565
      %v567 = vpop.f32.mrb[0].mxu0
      %568 = vmatprep.mubr.bf16.mxu0 0
      %569 = vmatmul.mubr.bf16.gmra.mrb[0].mxu0 %v454
      %v570 = vpop.f32.mrb[0].mxu0
      %v571 = vadd.f32 0.0, %v570
      %v572 = vpop.f32.mrb[0].mxu0
      %v573 = vpop.f32.mrb[0].mxu0
      %v574 = vadd.f32 0.0, %v573
      %v575 = vpop.f32.mrb[0].mxu0
      %576 = vmatprep.mubr.bf16.mxu0 0
      %577 = vmatmul.mubr.bf16.gmra.mrb[0].mxu0 %v457
      %v578 = vpop.f32.mrb[0].mxu0
      %v579 = vadd.f32 0.0, %v578
      %v580 = vpop.f32.mrb[0].mxu0
      %v581 = vpop.f32.mrb[0].mxu0
      %v582 = vadd.f32 0.0, %v581
      %v583 = vpop.f32.mrb[0].mxu0
      %584 = vmatprep.mubr.bf16.mxu0 0
      %585 = vmatmul.mubr.bf16.gmra.mrb[0].mxu0 %v460
      %v586 = vpop.f32.mrb[0].mxu0
      %v587 = vadd.f32 0.0, %v586
      %v588 = vpop.f32.mrb[0].mxu0
      %v589 = vpop.f32.mrb[0].mxu0
      %v590 = vadd.f32 0.0, %v589
      %v591 = vpop.f32.mrb[0].mxu0
      %592 = vmatprep.mubr.bf16.mxu0 0
      %593 = vmatmul.mubr.bf16.gmra.mrb[0].mxu0 %v463
      %v594 = vpop.f32.mrb[0].mxu0
      %v595 = vadd.f32 0.0, %v594
      %v596 = vpop.f32.mrb[0].mxu0
      %v597 = vpop.f32.mrb[0].mxu0
      %v598 = vadd.f32 0.0, %v597
      %v599 = vpop.f32.mrb[0].mxu0
      %600 = vmatprep.mubr.bf16.mxu0 0
      %601 = vmatmul.mubr.bf16.gmra.mrb[0].mxu0 %v466
      %v602 = vpop.f32.mrb[0].mxu0
      %v603 = vadd.f32 0.0, %v602
      %v604 = vpop.f32.mrb[0].mxu0
      %v605 = vpop.f32.mrb[0].mxu0
      %v606 = vadd.f32 0.0, %v605
      %v607 = vpop.f32.mrb[0].mxu0
      %608 = vmatprep.mubr.bf16.mxu0 0
      %609 = vmatmul.mubr.bf16.gmra.mrb[0].mxu0 %v469
      %v610 = vpop.f32.mrb[0].mxu0
      %v611 = vadd.f32 0.0, %v610
      %v612 = vpop.f32.mrb[0].mxu0
      %v613 = vpop.f32.mrb[0].mxu0
      %v614 = vadd.f32 0.0, %v613
      %v615 = vpop.f32.mrb[0].mxu0
      %616 = vmatprep.mubr.bf16.mxu0 0
      %617 = vmatmul.mubr.bf16.gmra.mrb[0].mxu0 %v472
      %v618 = vpop.f32.mrb[0].mxu0
      %v619 = vadd.f32 0.0, %v618
      %v620 = vpop.f32.mrb[0].mxu0
      %v621 = vpop.f32.mrb[0].mxu0
      %v622 = vadd.f32 0.0, %v621
      %v623 = vpop.f32.mrb[0].mxu0
      %624 = vmatprep.mubr.bf16.mxu0 0
      %625 = vmatmul.mubr.bf16.gmra.mrb[0].mxu0 %v475
      %v626 = vpop.f32.mrb[0].mxu0
      %v627 = vadd.f32 0.0, %v626
      %v628 = vpop.f32.mrb[0].mxu0
      %v629 = vpop.f32.mrb[0].mxu0
      %v630 = vadd.f32 0.0, %v629
      %v631 = vpop.f32.mrb[0].mxu0
      %632 = vmatprep.mubr.bf16.mxu0 0
      %633 = vmatmul.mubr.bf16.gmra.mrb[0].mxu0 %v478
      %v634 = vpop.f32.mrb[0].mxu0
      %v635 = vadd.f32 0.0, %v634
      %v636 = vpop.f32.mrb[0].mxu0
      %v637 = vpop.f32.mrb[0].mxu0
      %v638 = vadd.f32 0.0, %v637
      %v639 = vpop.f32.mrb[0].mxu0
      %640 = vmatprep.mubr.bf16.mxu0 0
      %641 = vmatmul.mubr.bf16.gmra.mrb[0].mxu0 %v481
      %v642 = vpop.f32.mrb[0].mxu0
      %v643 = vadd.f32 0.0, %v642
      %v644 = vpop.f32.mrb[0].mxu0
      %v645 = vpop.f32.mrb[0].mxu0
      %v646 = vadd.f32 0.0, %v645
      %v647 = vpop.f32.mrb[0].mxu0
      %648 = vmatprep.mubr.bf16.mxu0 0
      %649 = vmatmul.mubr.bf16.gmra.mrb[0].mxu0 %v484
      %v650 = vpop.f32.mrb[0].mxu0
      %v651 = vadd.f32 0.0, %v650
      %v652 = vpop.f32.mrb[0].mxu0
      %v653 = vpop.f32.mrb[0].mxu0
      %v654 = vadd.f32 0.0, %v653
      %v655 = vpop.f32.mrb[0].mxu0
      %656 = vmatprep.mubr.bf16.mxu0 0
      %657 = vmatmul.mubr.bf16.gmra.mrb[0].mxu0 %v487
      %v658 = vpop.f32.mrb[0].mxu0
      %v659 = vadd.f32 0.0, %v658
      %v660 = vpop.f32.mrb[0].mxu0
      %v661 = vpop.f32.mrb[0].mxu0
      %v662 = vadd.f32 0.0, %v661
      %v663 = vpop.f32.mrb[0].mxu0
      %664 = vmatprep.mubr.bf16.mxu0 0
      %665 = vmatmul.mubr.bf16.gmra.mrb[0].mxu0 %v490
      %v666 = vpop.f32.mrb[0].mxu0
      %v667 = vadd.f32 0.0, %v666
      %v668 = vpop.f32.mrb[0].mxu0
      %v669 = vpop.f32.mrb[0].mxu0
      %v670 = vadd.f32 0.0, %v669
      %v671 = vpop.f32.mrb[0].mxu0
      %672 = vdwg.mxu0
      %v674 = vsel %vm437, %v363, 0
      %v677 = vsel %vm437, %v364, 0
      %v680 = vsel %vm437, %v365, 0
      %v683 = vsel %vm437, %v366, 0
      %v686 = vsel %vm437, %v367, 0
      %v689 = vsel %vm437, %v368, 0
      %v692 = vsel %vm437, %v369, 0
      %v695 = vsel %vm437, %v370, 0
      %v698 = vsel %vm437, %v371, 0
      %v701 = vsel %vm437, %v372, 0
      %v704 = vsel %vm437, %v373, 0
      %v707 = vsel %vm437, %v374, 0
      %v710 = vsel %vm437, %v375, 0
      %v713 = vsel %vm437, %v376, 0
      %v716 = vsel %vm437, %v377, 0
      %v719 = vsel %vm437, %v378, 0
      %v722 = vsel %vm437, %v379, 0
      %v725 = vsel %vm437, %v380, 0
      %v728 = vsel %vm492, %v435, 0
      %730 = vmatprep.subr.bf16.mxu0 0
      %731 = vmatpush1.bf16.msra.mxu0 %v728
      %732 = vmatprep.subr.bf16.mxu0 0
      %733 = vmatpush1.bf16.msra.mxu0 0
      %734 = vmatprep.subr.bf16.mxu0 0
      %735 = vmatpush1.bf16.msra.mxu0 0
      %736 = vmatprep.subr.bf16.mxu0 0
      %737 = vmatpush1.bf16.msra.mxu0 0
      %738 = vmatprep.subr.bf16.mxu0 0
      %739 = vmatpush1.bf16.msra.mxu0 0
      %740 = vmatprep.subr.bf16.mxu0 0
      %741 = vmatpush1.bf16.msra.mxu0 0
      %742 = vmatprep.subr.bf16.mxu0 0
      %743 = vmatpush1.bf16.msra.mxu0 0
      %744 = vmatprep.subr.bf16.mxu0 0
      %745 = vmatpush1.bf16.msra.mxu0 0
      %746 = vmatprep.subr.bf16.mxu0 0
      %747 = vmatpush1.bf16.msra.mxu0 0
      %748 = vmatprep.subr.bf16.mxu0 0
      %749 = vmatpush1.bf16.msra.mxu0 0
      %750 = vmatprep.subr.bf16.mxu0 0
      %751 = vmatpush1.bf16.msra.mxu0 0
      %752 = vmatprep.subr.bf16.mxu0 0
      %753 = vmatpush1.bf16.msra.mxu0 0
      %754 = vmatprep.subr.bf16.mxu0 0
      %755 = vmatpush1.bf16.msra.mxu0 0
      %756 = vmatprep.subr.bf16.mxu0 0
      %757 = vmatpush1.bf16.msra.mxu0 0
      %758 = vmatprep.subr.bf16.mxu0 0
      %759 = vmatpush1.bf16.msra.mxu0 0
      %760 = vmatprep.subr.bf16.mxu0 0
      %761 = vmatpush1.bf16.msra.mxu0 0
      %762 = vmatprep.mubr.bf16.mxu0 0
      %763 = vmatmul.mubr.bf16.gmra.mrb[0].mxu0 %v674
      %v764 = vpop.f32.mrb[0].mxu0
      %v765 = vadd.f32 %v531, %v764
      %v766 = vpop.f32.mrb[0].mxu0
      %v767 = vpop.f32.mrb[0].mxu0
      %v768 = vadd.f32 %v534, %v767
      %v769 = vpop.f32.mrb[0].mxu0
      %770 = vmatprep.mubr.bf16.mxu0 0
      %771 = vmatmul.mubr.bf16.gmra.mrb[0].mxu0 %v677
      %v772 = vpop.f32.mrb[0].mxu0
      %v773 = vadd.f32 %v539, %v772
      %v774 = vpop.f32.mrb[0].mxu0
      %v775 = vpop.f32.mrb[0].mxu0
      %v776 = vadd.f32 %v542, %v775
      %v777 = vpop.f32.mrb[0].mxu0
      %778 = vmatprep.mubr.bf16.mxu0 0
      %779 = vmatmul.mubr.bf16.gmra.mrb[0].mxu0 %v680
      %v780 = vpop.f32.mrb[0].mxu0
      %v781 = vadd.f32 %v547, %v780
      %v782 = vpop.f32.mrb[0].mxu0
      %v783 = vpop.f32.mrb[0].mxu0
      %v784 = vadd.f32 %v550, %v783
      %v785 = vpop.f32.mrb[0].mxu0
      %786 = vmatprep.mubr.bf16.mxu0 0
      %787 = vmatmul.mubr.bf16.gmra.mrb[0].mxu0 %v683
      %v788 = vpop.f32.mrb[0].mxu0
      %v789 = vadd.f32 %v555, %v788
      %v790 = vpop.f32.mrb[0].mxu0
      %v791 = vpop.f32.mrb[0].mxu0
      %v792 = vadd.f32 %v558, %v791
      %v793 = vpop.f32.mrb[0].mxu0
      %794 = vmatprep.mubr.bf16.mxu0 0
      %795 = vmatmul.mubr.bf16.gmra.mrb[0].mxu0 %v686
      %v796 = vpop.f32.mrb[0].mxu0
      %v797 = vadd.f32 %v563, %v796
      %v798 = vpop.f32.mrb[0].mxu0
      %v799 = vpop.f32.mrb[0].mxu0
      %v800 = vadd.f32 %v566, %v799
      %v801 = vpop.f32.mrb[0].mxu0
      %802 = vmatprep.mubr.bf16.mxu0 0
      %803 = vmatmul.mubr.bf16.gmra.mrb[0].mxu0 %v689
      %v804 = vpop.f32.mrb[0].mxu0
      %v805 = vadd.f32 %v571, %v804
      %v806 = vpop.f32.mrb[0].mxu0
      %v807 = vpop.f32.mrb[0].mxu0
      %v808 = vadd.f32 %v574, %v807
      %v809 = vpop.f32.mrb[0].mxu0
      %810 = vmatprep.mubr.bf16.mxu0 0
      %811 = vmatmul.mubr.bf16.gmra.mrb[0].mxu0 %v692
      %v812 = vpop.f32.mrb[0].mxu0
      %v813 = vadd.f32 %v579, %v812
      %v814 = vpop.f32.mrb[0].mxu0
      %v815 = vpop.f32.mrb[0].mxu0
      %v816 = vadd.f32 %v582, %v815
      %v817 = vpop.f32.mrb[0].mxu0
      %818 = vmatprep.mubr.bf16.mxu0 0
      %819 = vmatmul.mubr.bf16.gmra.mrb[0].mxu0 %v695
      %v820 = vpop.f32.mrb[0].mxu0
      %v821 = vadd.f32 %v587, %v820
      %v822 = vpop.f32.mrb[0].mxu0
      %v823 = vpop.f32.mrb[0].mxu0
      %v824 = vadd.f32 %v590, %v823
      %v825 = vpop.f32.mrb[0].mxu0
      %826 = vmatprep.mubr.bf16.mxu0 0
      %827 = vmatmul.mubr.bf16.gmra.mrb[0].mxu0 %v698
      %v828 = vpop.f32.mrb[0].mxu0
      %v829 = vadd.f32 %v595, %v828
      %v830 = vpop.f32.mrb[0].mxu0
      %v831 = vpop.f32.mrb[0].mxu0
      %v832 = vadd.f32 %v598, %v831
      %v833 = vpop.f32.mrb[0].mxu0
      %834 = vmatprep.mubr.bf16.mxu0 0
      %835 = vmatmul.mubr.bf16.gmra.mrb[0].mxu0 %v701
      %v836 = vpop.f32.mrb[0].mxu0
      %v837 = vadd.f32 %v603, %v836
      %v838 = vpop.f32.mrb[0].mxu0
      %v839 = vpop.f32.mrb[0].mxu0
      %v840 = vadd.f32 %v606, %v839
      %v841 = vpop.f32.mrb[0].mxu0
      %842 = vmatprep.mubr.bf16.mxu0 0
      %843 = vmatmul.mubr.bf16.gmra.mrb[0].mxu0 %v704
      %v844 = vpop.f32.mrb[0].mxu0
      %v845 = vadd.f32 %v611, %v844
      %v846 = vpop.f32.mrb[0].mxu0
      %v847 = vpop.f32.mrb[0].mxu0
      %v848 = vadd.f32 %v614, %v847
      %v849 = vpop.f32.mrb[0].mxu0
      %850 = vmatprep.mubr.bf16.mxu0 0
      %851 = vmatmul.mubr.bf16.gmra.mrb[0].mxu0 %v707
      %v852 = vpop.f32.mrb[0].mxu0
      %v853 = vadd.f32 %v619, %v852
      %v854 = vpop.f32.mrb[0].mxu0
      %v855 = vpop.f32.mrb[0].mxu0
      %v856 = vadd.f32 %v622, %v855
      %v857 = vpop.f32.mrb[0].mxu0
      %858 = vmatprep.mubr.bf16.mxu0 0
      %859 = vmatmul.mubr.bf16.gmra.mrb[0].mxu0 %v710
      %v860 = vpop.f32.mrb[0].mxu0
      %v861 = vadd.f32 %v627, %v860
      %v862 = vpop.f32.mrb[0].mxu0
      %v863 = vpop.f32.mrb[0].mxu0
      %v864 = vadd.f32 %v630, %v863
      %v865 = vpop.f32.mrb[0].mxu0
      %866 = vmatprep.mubr.bf16.mxu0 0
      %867 = vmatmul.mubr.bf16.gmra.mrb[0].mxu0 %v713
      %v868 = vpop.f32.mrb[0].mxu0
      %v869 = vadd.f32 %v635, %v868
      %v870 = vpop.f32.mrb[0].mxu0
      %v871 = vpop.f32.mrb[0].mxu0
      %v872 = vadd.f32 %v638, %v871
      %v873 = vpop.f32.mrb[0].mxu0
      %874 = vmatprep.mubr.bf16.mxu0 0
      %875 = vmatmul.mubr.bf16.gmra.mrb[0].mxu0 %v716
      %v876 = vpop.f32.mrb[0].mxu0
      %v877 = vadd.f32 %v643, %v876
      %v878 = vpop.f32.mrb[0].mxu0
      %v879 = vpop.f32.mrb[0].mxu0
      %v880 = vadd.f32 %v646, %v879
      %v881 = vpop.f32.mrb[0].mxu0
      %882 = vmatprep.mubr.bf16.mxu0 0
      %883 = vmatmul.mubr.bf16.gmra.mrb[0].mxu0 %v719
      %v884 = vpop.f32.mrb[0].mxu0
      %v885 = vadd.f32 %v651, %v884
      %v886 = vpop.f32.mrb[0].mxu0
      %v887 = vpop.f32.mrb[0].mxu0
      %v888 = vadd.f32 %v654, %v887
      %v889 = vpop.f32.mrb[0].mxu0
      %890 = vmatprep.mubr.bf16.mxu0 0
      %891 = vmatmul.mubr.bf16.gmra.mrb[0].mxu0 %v722
      %v892 = vpop.f32.mrb[0].mxu0
      %v893 = vadd.f32 %v659, %v892
      %v894 = vpop.f32.mrb[0].mxu0
      %v895 = vpop.f32.mrb[0].mxu0
      %v896 = vadd.f32 %v662, %v895
      %v897 = vpop.f32.mrb[0].mxu0
      %898 = vmatprep.mubr.bf16.mxu0 0
      %899 = vmatmul.mubr.bf16.gmra.mrb[0].mxu0 %v725
      %v900 = vpop.f32.mrb[0].mxu0
      %v901 = vadd.f32 %v667, %v900
      %v902 = vpop.f32.mrb[0].mxu0
      %v903 = vpop.f32.mrb[0].mxu0
      %v904 = vadd.f32 %v670, %v903
      %v905 = vpop.f32.mrb[0].mxu0
      %906 = vdwg.mxu0
      %v907 = vld [vmem:[%s315 + $0x1] sm:$0xff]
      %v908 = vld [vmem:[%s315 + $0x9] sm:$0xff]
      %v909 = vld [vmem:[%s315 + $0x11] sm:$0xff]
      %v910 = vld [vmem:[%s315 + $0x19] sm:$0xff]
      %v911 = vld [vmem:[%s315 + $0x21] sm:$0xff]
      %v912 = vld [vmem:[%s315 + $0x29] sm:$0xff]
      %v913 = vld [vmem:[%s315 + $0x31] sm:$0xff]
      %v914 = vld [vmem:[%s315 + $0x39] sm:$0xff]
      %v915 = vld [vmem:[%s315 + $0x41] sm:$0xff]
      %v916 = vld [vmem:[%s315 + $0x49] sm:$0xff]
      %v917 = vld [vmem:[%s315 + $0x51] sm:$0xff]
      %v918 = vld [vmem:[%s315 + $0x59] sm:$0xff]
      %v919 = vld [vmem:[%s315 + $0x61] sm:$0xff]
      %v920 = vld [vmem:[%s315 + $0x69] sm:$0xff]
      %v921 = vld [vmem:[%s315 + $0x71] sm:$0xff]
      %v922 = vld [vmem:[%s315 + $0x79] sm:$0xff]
      %v923 = vld [vmem:[%s315 + $0x81] sm:$0xff]
      %v924 = vld [vmem:[%s315 + $0x89] sm:$0xff]
      %v925 = vld [vmem:[%s315 + $0x91] sm:$0xff]
      %v926 = vld [vmem:[%s315 + $0x99] sm:$0xff]
      %v927 = vld [vmem:[%s315 + $0xa1] sm:$0xff]
      %v928 = vld [vmem:[%s315 + $0xa9] sm:$0xff]
      %v929 = vld [vmem:[%s315 + $0xb1] sm:$0xff]
      %v930 = vld [vmem:[%s315 + $0xb9] sm:$0xff]
      %v931 = vld [vmem:[%s315 + $0xc1] sm:$0xff]
      %v932 = vld [vmem:[%s315 + $0xc9] sm:$0xff]
      %v933 = vld [vmem:[%s315 + $0xd1] sm:$0xff]
      %v934 = vld [vmem:[%s315 + $0xd9] sm:$0xff]
      %v935 = vld [vmem:[%s315 + $0xe1] sm:$0xff]
      %v936 = vld [vmem:[%s315 + $0xe9] sm:$0xff]
      %v937 = vld [vmem:[%s315 + $0xf1] sm:$0xff]
      %v938 = vld [vmem:[%s315 + $0xf9] sm:$0xff]
      %v939 = vld [vmem:[%s315 + $0x101] sm:$0xff]
      %v940 = vld [vmem:[%s315 + $0x109] sm:$0xff]
      %v941 = vld [vmem:[%s315 + $0x111] sm:$0xff]
      %v942 = vld [vmem:[%s315 + $0x119] sm:$0xff]
      %v943 = vpack.c.bf16 %v908, %v907
      %v944 = vpack.c.bf16 %v910, %v909
      %v945 = vpack.c.bf16 %v912, %v911
      %v946 = vpack.c.bf16 %v914, %v913
      %v947 = vpack.c.bf16 %v916, %v915
      %v948 = vpack.c.bf16 %v918, %v917
      %v949 = vpack.c.bf16 %v920, %v919
      %v950 = vpack.c.bf16 %v922, %v921
      %v951 = vpack.c.bf16 %v924, %v923
      %v952 = vpack.c.bf16 %v926, %v925
      %v953 = vpack.c.bf16 %v928, %v927
      %v954 = vpack.c.bf16 %v930, %v929
      %v955 = vpack.c.bf16 %v932, %v931
      %v956 = vpack.c.bf16 %v934, %v933
      %v957 = vpack.c.bf16 %v936, %v935
      %v958 = vpack.c.bf16 %v938, %v937
      %v959 = vpack.c.bf16 %v940, %v939
      %v960 = vpack.c.bf16 %v942, %v941
      %v961 = vld [vmem:[%s320 + $0x1] sm:$0xff]
      %v962 = vld [vmem:[%s320 + $0x9] sm:$0xff]
      %v963 = vld [vmem:[%s320 + $0x11] sm:$0xff]
      %v964 = vld [vmem:[%s320 + $0x19] sm:$0xff]
      %v965 = vld [vmem:[%s320 + $0x21] sm:$0xff]
      %v966 = vld [vmem:[%s320 + $0x29] sm:$0xff]
      %v967 = vld [vmem:[%s320 + $0x31] sm:$0xff]
      %v968 = vld [vmem:[%s320 + $0x39] sm:$0xff]
      %v969 = vld [vmem:[%s320 + $0x41] sm:$0xff]
      %v970 = vld [vmem:[%s320 + $0x49] sm:$0xff]
      %v971 = vld [vmem:[%s320 + $0x51] sm:$0xff]
      %v972 = vld [vmem:[%s320 + $0x59] sm:$0xff]
      %v973 = vld [vmem:[%s320 + $0x61] sm:$0xff]
      %v974 = vld [vmem:[%s320 + $0x69] sm:$0xff]
      %v975 = vld [vmem:[%s320 + $0x71] sm:$0xff]
      %v976 = vld [vmem:[%s320 + $0x79] sm:$0xff]
      %v977 = vld [vmem:[%s320 + $0x81] sm:$0xff]
      %v978 = vld [vmem:[%s320 + $0x89] sm:$0xff]
      %v979 = vld [vmem:[%s320 + $0x91] sm:$0xff]
      %v980 = vld [vmem:[%s320 + $0x99] sm:$0xff]
      %v981 = vld [vmem:[%s320 + $0xa1] sm:$0xff]
      %v982 = vld [vmem:[%s320 + $0xa9] sm:$0xff]
      %v983 = vld [vmem:[%s320 + $0xb1] sm:$0xff]
      %v984 = vld [vmem:[%s320 + $0xb9] sm:$0xff]
      %v985 = vld [vmem:[%s320 + $0xc1] sm:$0xff]
      %v986 = vld [vmem:[%s320 + $0xc9] sm:$0xff]
      %v987 = vld [vmem:[%s320 + $0xd1] sm:$0xff]
      %v988 = vld [vmem:[%s320 + $0xd9] sm:$0xff]
      %v989 = vld [vmem:[%s320 + $0xe1] sm:$0xff]
      %v990 = vld [vmem:[%s320 + $0xe9] sm:$0xff]
      %v991 = vld [vmem:[%s320 + $0xf1] sm:$0xff]
      %v992 = vld [vmem:[%s320 + $0xf9] sm:$0xff]
      %v993 = vld [vmem:[%s320 + $0x101] sm:$0xff]
      %v994 = vld [vmem:[%s320 + $0x109] sm:$0xff]
      %v995 = vld [vmem:[%s320 + $0x111] sm:$0xff]
      %v996 = vld [vmem:[%s320 + $0x119] sm:$0xff]
      %v997 = vpack.c.bf16 %v962, %v961
      %v998 = vpack.c.bf16 %v964, %v963
      %v999 = vpack.c.bf16 %v966, %v965
      %v1000 = vpack.c.bf16 %v968, %v967
      %v1001 = vpack.c.bf16 %v970, %v969
      %v1002 = vpack.c.bf16 %v972, %v971
      %v1003 = vpack.c.bf16 %v974, %v973
      %v1004 = vpack.c.bf16 %v976, %v975
      %v1005 = vpack.c.bf16 %v978, %v977
      %v1006 = vpack.c.bf16 %v980, %v979
      %v1007 = vpack.c.bf16 %v982, %v981
      %v1008 = vpack.c.bf16 %v984, %v983
      %v1009 = vpack.c.bf16 %v986, %v985
      %v1010 = vpack.c.bf16 %v988, %v987
      %v1011 = vpack.c.bf16 %v990, %v989
      %v1012 = vpack.c.bf16 %v992, %v991
      %v1013 = vpack.c.bf16 %v994, %v993
      %v1014 = vpack.c.bf16 %v996, %v995
      %s1015 = scalar_lea.vmem %s3, 2
      %v1016 = vld [vmem:[%s1015] sm:$0x3]
      %v1018 = vsel %vm437, %v943, 0
      %v1021 = vsel %vm437, %v944, 0
      %v1024 = vsel %vm437, %v945, 0
      %v1027 = vsel %vm437, %v946, 0
      %v1030 = vsel %vm437, %v947, 0
      %v1033 = vsel %vm437, %v948, 0
      %v1036 = vsel %vm437, %v949, 0
      %v1039 = vsel %vm437, %v950, 0
      %v1042 = vsel %vm437, %v951, 0
      %v1045 = vsel %vm437, %v952, 0
      %v1048 = vsel %vm437, %v953, 0
      %v1051 = vsel %vm437, %v954, 0
      %v1054 = vsel %vm437, %v955, 0
      %v1057 = vsel %vm437, %v956, 0
      %v1060 = vsel %vm437, %v957, 0
      %v1063 = vsel %vm437, %v958, 0
      %v1066 = vsel %vm437, %v959, 0
      %v1069 = vsel %vm437, %v960, 0
      %v1072 = vsel %vm492, %v1016, 0
      %1074 = vmatprep.subr.bf16.mxu0 0
      %1075 = vmatpush1.bf16.msra.mxu0 %v1072
      %1076 = vmatprep.subr.bf16.mxu0 0
      %1077 = vmatpush1.bf16.msra.mxu0 0
      %1078 = vmatprep.subr.bf16.mxu0 0
      %1079 = vmatpush1.bf16.msra.mxu0 0
      %1080 = vmatprep.subr.bf16.mxu0 0
      %1081 = vmatpush1.bf16.msra.mxu0 0
      %1082 = vmatprep.subr.bf16.mxu0 0
      %1083 = vmatpush1.bf16.msra.mxu0 0
      %1084 = vmatprep.subr.bf16.mxu0 0
      %1085 = vmatpush1.bf16.msra.mxu0 0
      %1086 = vmatprep.subr.bf16.mxu0 0
      %1087 = vmatpush1.bf16.msra.mxu0 0
      %1088 = vmatprep.subr.bf16.mxu0 0
      %1089 = vmatpush1.bf16.msra.mxu0 0
      %1090 = vmatprep.subr.bf16.mxu0 0
      %1091 = vmatpush1.bf16.msra.mxu0 0
      %1092 = vmatprep.subr.bf16.mxu0 0
      %1093 = vmatpush1.bf16.msra.mxu0 0
      %1094 = vmatprep.subr.bf16.mxu0 0
      %1095 = vmatpush1.bf16.msra.mxu0 0
      %1096 = vmatprep.subr.bf16.mxu0 0
      %1097 = vmatpush1.bf16.msra.mxu0 0
      %1098 = vmatprep.subr.bf16.mxu0 0
      %1099 = vmatpush1.bf16.msra.mxu0 0
      %1100 = vmatprep.subr.bf16.mxu0 0
      %1101 = vmatpush1.bf16.msra.mxu0 0
      %1102 = vmatprep.subr.bf16.mxu0 0
      %1103 = vmatpush1.bf16.msra.mxu0 0
      %1104 = vmatprep.subr.bf16.mxu0 0
      %1105 = vmatpush1.bf16.msra.mxu0 0
      %1106 = vmatprep.mubr.bf16.mxu0 0
      %1107 = vmatmul.mubr.bf16.gmra.mrb[0].mxu0 %v1018
      %v1108 = vpop.f32.mrb[0].mxu0
      %v1109 = vadd.f32 0.0, %v1108
      %v1110 = vpop.f32.mrb[0].mxu0
      %v1111 = vpop.f32.mrb[0].mxu0
      %v1112 = vadd.f32 0.0, %v1111
      %v1113 = vpop.f32.mrb[0].mxu0
      %1114 = vmatprep.mubr.bf16.mxu0 0
      %1115 = vmatmul.mubr.bf16.gmra.mrb[0].mxu0 %v1021
      %v1116 = vpop.f32.mrb[0].mxu0
      %v1117 = vadd.f32 0.0, %v1116
      %v1118 = vpop.f32.mrb[0].mxu0
      %v1119 = vpop.f32.mrb[0].mxu0
      %v1120 = vadd.f32 0.0, %v1119
      %v1121 = vpop.f32.mrb[0].mxu0
      %1122 = vmatprep.mubr.bf16.mxu0 0
      %1123 = vmatmul.mubr.bf16.gmra.mrb[0].mxu0 %v1024
      %v1124 = vpop.f32.mrb[0].mxu0
      %v1125 = vadd.f32 0.0, %v1124
      %v1126 = vpop.f32.mrb[0].mxu0
      %v1127 = vpop.f32.mrb[0].mxu0
      %v1128 = vadd.f32 0.0, %v1127
      %v1129 = vpop.f32.mrb[0].mxu0
      %1130 = vmatprep.mubr.bf16.mxu0 0
      %1131 = vmatmul.mubr.bf16.gmra.mrb[0].mxu0 %v1027
      %v1132 = vpop.f32.mrb[0].mxu0
      %v1133 = vadd.f32 0.0, %v1132
      %v1134 = vpop.f32.mrb[0].mxu0
      %v1135 = vpop.f32.mrb[0].mxu0
      %v1136 = vadd.f32 0.0, %v1135
      %v1137 = vpop.f32.mrb[0].mxu0
      %1138 = vmatprep.mubr.bf16.mxu0 0
      %1139 = vmatmul.mubr.bf16.gmra.mrb[0].mxu0 %v1030
      %v1140 = vpop.f32.mrb[0].mxu0
      %v1141 = vadd.f32 0.0, %v1140
      %v1142 = vpop.f32.mrb[0].mxu0
      %v1143 = vpop.f32.mrb[0].mxu0
      %v1144 = vadd.f32 0.0, %v1143
      %v1145 = vpop.f32.mrb[0].mxu0
      %1146 = vmatprep.mubr.bf16.mxu0 0
      %1147 = vmatmul.mubr.bf16.gmra.mrb[0].mxu0 %v1033
      %v1148 = vpop.f32.mrb[0].mxu0
      %v1149 = vadd.f32 0.0, %v1148
      %v1150 = vpop.f32.mrb[0].mxu0
      %v1151 = vpop.f32.mrb[0].mxu0
      %v1152 = vadd.f32 0.0, %v1151
      %v1153 = vpop.f32.mrb[0].mxu0
      %1154 = vmatprep.mubr.bf16.mxu0 0
      %1155 = vmatmul.mubr.bf16.gmra.mrb[0].mxu0 %v1036
      %v1156 = vpop.f32.mrb[0].mxu0
      %v1157 = vadd.f32 0.0, %v1156
      %v1158 = vpop.f32.mrb[0].mxu0
      %v1159 = vpop.f32.mrb[0].mxu0
      %v1160 = vadd.f32 0.0, %v1159
      %v1161 = vpop.f32.mrb[0].mxu0
      %1162 = vmatprep.mubr.bf16.mxu0 0
      %1163 = vmatmul.mubr.bf16.gmra.mrb[0].mxu0 %v1039
      %v1164 = vpop.f32.mrb[0].mxu0
      %v1165 = vadd.f32 0.0, %v1164
      %v1166 = vpop.f32.mrb[0].mxu0
      %v1167 = vpop.f32.mrb[0].mxu0
      %v1168 = vadd.f32 0.0, %v1167
      %v1169 = vpop.f32.mrb[0].mxu0
      %1170 = vmatprep.mubr.bf16.mxu0 0
      %1171 = vmatmul.mubr.bf16.gmra.mrb[0].mxu0 %v1042
      %v1172 = vpop.f32.mrb[0].mxu0
      %v1173 = vadd.f32 0.0, %v1172
      %v1174 = vpop.f32.mrb[0].mxu0
      %v1175 = vpop.f32.mrb[0].mxu0
      %v1176 = vadd.f32 0.0, %v1175
      %v1177 = vpop.f32.mrb[0].mxu0
      %1178 = vmatprep.mubr.bf16.mxu0 0
      %1179 = vmatmul.mubr.bf16.gmra.mrb[0].mxu0 %v1045
      %v1180 = vpop.f32.mrb[0].mxu0
      %v1181 = vadd.f32 0.0, %v1180
      %v1182 = vpop.f32.mrb[0].mxu0
      %v1183 = vpop.f32.mrb[0].mxu0
      %v1184 = vadd.f32 0.0, %v1183
      %v1185 = vpop.f32.mrb[0].mxu0
      %1186 = vmatprep.mubr.bf16.mxu0 0
      %1187 = vmatmul.mubr.bf16.gmra.mrb[0].mxu0 %v1048
      %v1188 = vpop.f32.mrb[0].mxu0
      %v1189 = vadd.f32 0.0, %v1188
      %v1190 = vpop.f32.mrb[0].mxu0
      %v1191 = vpop.f32.mrb[0].mxu0
      %v1192 = vadd.f32 0.0, %v1191
      %v1193 = vpop.f32.mrb[0].mxu0
      %1194 = vmatprep.mubr.bf16.mxu0 0
      %1195 = vmatmul.mubr.bf16.gmra.mrb[0].mxu0 %v1051
      %v1196 = vpop.f32.mrb[0].mxu0
      %v1197 = vadd.f32 0.0, %v1196
      %v1198 = vpop.f32.mrb[0].mxu0
      %v1199 = vpop.f32.mrb[0].mxu0
      %v1200 = vadd.f32 0.0, %v1199
      %v1201 = vpop.f32.mrb[0].mxu0
      %1202 = vmatprep.mubr.bf16.mxu0 0
      %1203 = vmatmul.mubr.bf16.gmra.mrb[0].mxu0 %v1054
      %v1204 = vpop.f32.mrb[0].mxu0
      %v1205 = vadd.f32 0.0, %v1204
      %v1206 = vpop.f32.mrb[0].mxu0
      %v1207 = vpop.f32.mrb[0].mxu0
      %v1208 = vadd.f32 0.0, %v1207
      %v1209 = vpop.f32.mrb[0].mxu0
      %1210 = vmatprep.mubr.bf16.mxu0 0
      %1211 = vmatmul.mubr.bf16.gmra.mrb[0].mxu0 %v1057
      %v1212 = vpop.f32.mrb[0].mxu0
      %v1213 = vadd.f32 0.0, %v1212
      %v1214 = vpop.f32.mrb[0].mxu0
      %v1215 = vpop.f32.mrb[0].mxu0
      %v1216 = vadd.f32 0.0, %v1215
      %v1217 = vpop.f32.mrb[0].mxu0
      %1218 = vmatprep.mubr.bf16.mxu0 0
      %1219 = vmatmul.mubr.bf16.gmra.mrb[0].mxu0 %v1060
      %v1220 = vpop.f32.mrb[0].mxu0
      %v1221 = vadd.f32 0.0, %v1220
      %v1222 = vpop.f32.mrb[0].mxu0
      %v1223 = vpop.f32.mrb[0].mxu0
      %v1224 = vadd.f32 0.0, %v1223
      %v1225 = vpop.f32.mrb[0].mxu0
      %1226 = vmatprep.mubr.bf16.mxu0 0
      %1227 = vmatmul.mubr.bf16.gmra.mrb[0].mxu0 %v1063
      %v1228 = vpop.f32.mrb[0].mxu0
      %v1229 = vadd.f32 0.0, %v1228
      %v1230 = vpop.f32.mrb[0].mxu0
      %v1231 = vpop.f32.mrb[0].mxu0
      %v1232 = vadd.f32 0.0, %v1231
      %v1233 = vpop.f32.mrb[0].mxu0
      %1234 = vmatprep.mubr.bf16.mxu0 0
      %1235 = vmatmul.mubr.bf16.gmra.mrb[0].mxu0 %v1066
      %v1236 = vpop.f32.mrb[0].mxu0
      %v1237 = vadd.f32 0.0, %v1236
      %v1238 = vpop.f32.mrb[0].mxu0
      %v1239 = vpop.f32.mrb[0].mxu0
      %v1240 = vadd.f32 0.0, %v1239
      %v1241 = vpop.f32.mrb[0].mxu0
      %1242 = vmatprep.mubr.bf16.mxu0 0
      %1243 = vmatmul.mubr.bf16.gmra.mrb[0].mxu0 %v1069
      %v1244 = vpop.f32.mrb[0].mxu0
      %v1245 = vadd.f32 0.0, %v1244
      %v1246 = vpop.f32.mrb[0].mxu0
      %v1247 = vpop.f32.mrb[0].mxu0
      %v1248 = vadd.f32 0.0, %v1247
      %v1249 = vpop.f32.mrb[0].mxu0
      %1250 = vdwg.mxu0
      %v1251 = vadd.f32 %v765, %v1109
      %v1252 = vadd.f32 %v768, %v1112
      %v1253 = vadd.f32 %v773, %v1117
      %v1254 = vadd.f32 %v776, %v1120
      %v1255 = vadd.f32 %v781, %v1125
      %v1256 = vadd.f32 %v784, %v1128
      %v1257 = vadd.f32 %v789, %v1133
      %v1258 = vadd.f32 %v792, %v1136
      %v1259 = vadd.f32 %v797, %v1141
      %v1260 = vadd.f32 %v800, %v1144
      %v1261 = vadd.f32 %v805, %v1149
      %v1262 = vadd.f32 %v808, %v1152
      %v1263 = vadd.f32 %v813, %v1157
      %v1264 = vadd.f32 %v816, %v1160
      %v1265 = vadd.f32 %v821, %v1165
      %v1266 = vadd.f32 %v824, %v1168
      %v1267 = vadd.f32 %v829, %v1173
      %v1268 = vadd.f32 %v832, %v1176
      %v1269 = vadd.f32 %v837, %v1181
      %v1270 = vadd.f32 %v840, %v1184
      %v1271 = vadd.f32 %v845, %v1189
      %v1272 = vadd.f32 %v848, %v1192
      %v1273 = vadd.f32 %v853, %v1197
      %v1274 = vadd.f32 %v856, %v1200
      %v1275 = vadd.f32 %v861, %v1205
      %v1276 = vadd.f32 %v864, %v1208
      %v1277 = vadd.f32 %v869, %v1213
      %v1278 = vadd.f32 %v872, %v1216
      %v1279 = vadd.f32 %v877, %v1221
      %v1280 = vadd.f32 %v880, %v1224
      %v1281 = vadd.f32 %v885, %v1229
      %v1282 = vadd.f32 %v888, %v1232
      %v1283 = vadd.f32 %v893, %v1237
      %v1284 = vadd.f32 %v896, %v1240
      %v1285 = vadd.f32 %v901, %v1245
      %v1286 = vadd.f32 %v904, %v1248
      %s1287 = scalar_lea.vmem %s4, 2
      %v1288 = vld [vmem:[%s1287] sm:$0x3]
      %v1290 = vsel %vm437, %v997, 0
      %v1293 = vsel %vm437, %v998, 0
      %v1296 = vsel %vm437, %v999, 0
      %v1299 = vsel %vm437, %v1000, 0
      %v1302 = vsel %vm437, %v1001, 0
      %v1305 = vsel %vm437, %v1002, 0
      %v1308 = vsel %vm437, %v1003, 0
      %v1311 = vsel %vm437, %v1004, 0
      %v1314 = vsel %vm437, %v1005, 0
      %v1317 = vsel %vm437, %v1006, 0
      %v1320 = vsel %vm437, %v1007, 0
      %v1323 = vsel %vm437, %v1008, 0
      %v1326 = vsel %vm437, %v1009, 0
      %v1329 = vsel %vm437, %v1010, 0
      %v1332 = vsel %vm437, %v1011, 0
      %v1335 = vsel %vm437, %v1012, 0
      %v1338 = vsel %vm437, %v1013, 0
      %v1341 = vsel %vm437, %v1014, 0
      %v1344 = vsel %vm492, %v1288, 0
      %1346 = vmatprep.subr.bf16.mxu0 0
      %1347 = vmatpush1.bf16.msra.mxu0 %v1344
      %1348 = vmatprep.subr.bf16.mxu0 0
      %1349 = vmatpush1.bf16.msra.mxu0 0
      %1350 = vmatprep.subr.bf16.mxu0 0
      %1351 = vmatpush1.bf16.msra.mxu0 0
      %1352 = vmatprep.subr.bf16.mxu0 0
      %1353 = vmatpush1.bf16.msra.mxu0 0
      %1354 = vmatprep.subr.bf16.mxu0 0
      %1355 = vmatpush1.bf16.msra.mxu0 0
      %1356 = vmatprep.subr.bf16.mxu0 0
      %1357 = vmatpush1.bf16.msra.mxu0 0
      %1358 = vmatprep.subr.bf16.mxu0 0
      %1359 = vmatpush1.bf16.msra.mxu0 0
      %1360 = vmatprep.subr.bf16.mxu0 0
      %1361 = vmatpush1.bf16.msra.mxu0 0
      %1362 = vmatprep.subr.bf16.mxu0 0
      %1363 = vmatpush1.bf16.msra.mxu0 0
      %1364 = vmatprep.subr.bf16.mxu0 0
      %1365 = vmatpush1.bf16.msra.mxu0 0
      %1366 = vmatprep.subr.bf16.mxu0 0
      %1367 = vmatpush1.bf16.msra.mxu0 0
      %1368 = vmatprep.subr.bf16.mxu0 0
      %1369 = vmatpush1.bf16.msra.mxu0 0
      %1370 = vmatprep.subr.bf16.mxu0 0
      %1371 = vmatpush1.bf16.msra.mxu0 0
      %1372 = vmatprep.subr.bf16.mxu0 0
      %1373 = vmatpush1.bf16.msra.mxu0 0
      %1374 = vmatprep.subr.bf16.mxu0 0
      %1375 = vmatpush1.bf16.msra.mxu0 0
      %1376 = vmatprep.subr.bf16.mxu0 0
      %1377 = vmatpush1.bf16.msra.mxu0 0
      %1378 = vmatprep.mubr.bf16.mxu0 0
      %1379 = vmatmul.mubr.bf16.gmra.mrb[0].mxu0 %v1290
      %v1380 = vpop.f32.mrb[0].mxu0
      %v1381 = vadd.f32 0.0, %v1380
      %v1382 = vpop.f32.mrb[0].mxu0
      %v1383 = vpop.f32.mrb[0].mxu0
      %v1384 = vadd.f32 0.0, %v1383
      %v1385 = vpop.f32.mrb[0].mxu0
      %1386 = vmatprep.mubr.bf16.mxu0 0
      %1387 = vmatmul.mubr.bf16.gmra.mrb[0].mxu0 %v1293
      %v1388 = vpop.f32.mrb[0].mxu0
      %v1389 = vadd.f32 0.0, %v1388
      %v1390 = vpop.f32.mrb[0].mxu0
      %v1391 = vpop.f32.mrb[0].mxu0
      %v1392 = vadd.f32 0.0, %v1391
      %v1393 = vpop.f32.mrb[0].mxu0
      %1394 = vmatprep.mubr.bf16.mxu0 0
      %1395 = vmatmul.mubr.bf16.gmra.mrb[0].mxu0 %v1296
      %v1396 = vpop.f32.mrb[0].mxu0
      %v1397 = vadd.f32 0.0, %v1396
      %v1398 = vpop.f32.mrb[0].mxu0
      %v1399 = vpop.f32.mrb[0].mxu0
      %v1400 = vadd.f32 0.0, %v1399
      %v1401 = vpop.f32.mrb[0].mxu0
      %1402 = vmatprep.mubr.bf16.mxu0 0
      %1403 = vmatmul.mubr.bf16.gmra.mrb[0].mxu0 %v1299
      %v1404 = vpop.f32.mrb[0].mxu0
      %v1405 = vadd.f32 0.0, %v1404
      %v1406 = vpop.f32.mrb[0].mxu0
      %v1407 = vpop.f32.mrb[0].mxu0
      %v1408 = vadd.f32 0.0, %v1407
      %v1409 = vpop.f32.mrb[0].mxu0
      %1410 = vmatprep.mubr.bf16.mxu0 0
      %1411 = vmatmul.mubr.bf16.gmra.mrb[0].mxu0 %v1302
      %v1412 = vpop.f32.mrb[0].mxu0
      %v1413 = vadd.f32 0.0, %v1412
      %v1414 = vpop.f32.mrb[0].mxu0
      %v1415 = vpop.f32.mrb[0].mxu0
      %v1416 = vadd.f32 0.0, %v1415
      %v1417 = vpop.f32.mrb[0].mxu0
      %1418 = vmatprep.mubr.bf16.mxu0 0
      %1419 = vmatmul.mubr.bf16.gmra.mrb[0].mxu0 %v1305
      %v1420 = vpop.f32.mrb[0].mxu0
      %v1421 = vadd.f32 0.0, %v1420
      %v1422 = vpop.f32.mrb[0].mxu0
      %v1423 = vpop.f32.mrb[0].mxu0
      %v1424 = vadd.f32 0.0, %v1423
      %v1425 = vpop.f32.mrb[0].mxu0
      %1426 = vmatprep.mubr.bf16.mxu0 0
      %1427 = vmatmul.mubr.bf16.gmra.mrb[0].mxu0 %v1308
      %v1428 = vpop.f32.mrb[0].mxu0
      %v1429 = vadd.f32 0.0, %v1428
      %v1430 = vpop.f32.mrb[0].mxu0
      %v1431 = vpop.f32.mrb[0].mxu0
      %v1432 = vadd.f32 0.0, %v1431
      %v1433 = vpop.f32.mrb[0].mxu0
      %1434 = vmatprep.mubr.bf16.mxu0 0
      %1435 = vmatmul.mubr.bf16.gmra.mrb[0].mxu0 %v1311
      %v1436 = vpop.f32.mrb[0].mxu0
      %v1437 = vadd.f32 0.0, %v1436
      %v1438 = vpop.f32.mrb[0].mxu0
      %v1439 = vpop.f32.mrb[0].mxu0
      %v1440 = vadd.f32 0.0, %v1439
      %v1441 = vpop.f32.mrb[0].mxu0
      %1442 = vmatprep.mubr.bf16.mxu0 0
      %1443 = vmatmul.mubr.bf16.gmra.mrb[0].mxu0 %v1314
      %v1444 = vpop.f32.mrb[0].mxu0
      %v1445 = vadd.f32 0.0, %v1444
      %v1446 = vpop.f32.mrb[0].mxu0
      %v1447 = vpop.f32.mrb[0].mxu0
      %v1448 = vadd.f32 0.0, %v1447
      %v1449 = vpop.f32.mrb[0].mxu0
      %1450 = vmatprep.mubr.bf16.mxu0 0
      %1451 = vmatmul.mubr.bf16.gmra.mrb[0].mxu0 %v1317
      %v1452 = vpop.f32.mrb[0].mxu0
      %v1453 = vadd.f32 0.0, %v1452
      %v1454 = vpop.f32.mrb[0].mxu0
      %v1455 = vpop.f32.mrb[0].mxu0
      %v1456 = vadd.f32 0.0, %v1455
      %v1457 = vpop.f32.mrb[0].mxu0
      %1458 = vmatprep.mubr.bf16.mxu0 0
      %1459 = vmatmul.mubr.bf16.gmra.mrb[0].mxu0 %v1320
      %v1460 = vpop.f32.mrb[0].mxu0
      %v1461 = vadd.f32 0.0, %v1460
      %v1462 = vpop.f32.mrb[0].mxu0
      %v1463 = vpop.f32.mrb[0].mxu0
      %v1464 = vadd.f32 0.0, %v1463
      %v1465 = vpop.f32.mrb[0].mxu0
      %1466 = vmatprep.mubr.bf16.mxu0 0
      %1467 = vmatmul.mubr.bf16.gmra.mrb[0].mxu0 %v1323
      %v1468 = vpop.f32.mrb[0].mxu0
      %v1469 = vadd.f32 0.0, %v1468
      %v1470 = vpop.f32.mrb[0].mxu0
      %v1471 = vpop.f32.mrb[0].mxu0
      %v1472 = vadd.f32 0.0, %v1471
      %v1473 = vpop.f32.mrb[0].mxu0
      %1474 = vmatprep.mubr.bf16.mxu0 0
      %1475 = vmatmul.mubr.bf16.gmra.mrb[0].mxu0 %v1326
      %v1476 = vpop.f32.mrb[0].mxu0
      %v1477 = vadd.f32 0.0, %v1476
      %v1478 = vpop.f32.mrb[0].mxu0
      %v1479 = vpop.f32.mrb[0].mxu0
      %v1480 = vadd.f32 0.0, %v1479
      %v1481 = vpop.f32.mrb[0].mxu0
      %1482 = vmatprep.mubr.bf16.mxu0 0
      %1483 = vmatmul.mubr.bf16.gmra.mrb[0].mxu0 %v1329
      %v1484 = vpop.f32.mrb[0].mxu0
      %v1485 = vadd.f32 0.0, %v1484
      %v1486 = vpop.f32.mrb[0].mxu0
      %v1487 = vpop.f32.mrb[0].mxu0
      %v1488 = vadd.f32 0.0, %v1487
      %v1489 = vpop.f32.mrb[0].mxu0
      %1490 = vmatprep.mubr.bf16.mxu0 0
      %1491 = vmatmul.mubr.bf16.gmra.mrb[0].mxu0 %v1332
      %v1492 = vpop.f32.mrb[0].mxu0
      %v1493 = vadd.f32 0.0, %v1492
      %v1494 = vpop.f32.mrb[0].mxu0
      %v1495 = vpop.f32.mrb[0].mxu0
      %v1496 = vadd.f32 0.0, %v1495
      %v1497 = vpop.f32.mrb[0].mxu0
      %1498 = vmatprep.mubr.bf16.mxu0 0
      %1499 = vmatmul.mubr.bf16.gmra.mrb[0].mxu0 %v1335
      %v1500 = vpop.f32.mrb[0].mxu0
      %v1501 = vadd.f32 0.0, %v1500
      %v1502 = vpop.f32.mrb[0].mxu0
      %v1503 = vpop.f32.mrb[0].mxu0
      %v1504 = vadd.f32 0.0, %v1503
      %v1505 = vpop.f32.mrb[0].mxu0
      %1506 = vmatprep.mubr.bf16.mxu0 0
      %1507 = vmatmul.mubr.bf16.gmra.mrb[0].mxu0 %v1338
      %v1508 = vpop.f32.mrb[0].mxu0
      %v1509 = vadd.f32 0.0, %v1508
      %v1510 = vpop.f32.mrb[0].mxu0
      %v1511 = vpop.f32.mrb[0].mxu0
      %v1512 = vadd.f32 0.0, %v1511
      %v1513 = vpop.f32.mrb[0].mxu0
      %1514 = vmatprep.mubr.bf16.mxu0 0
      %1515 = vmatmul.mubr.bf16.gmra.mrb[0].mxu0 %v1341
      %v1516 = vpop.f32.mrb[0].mxu0
      %v1517 = vadd.f32 0.0, %v1516
      %v1518 = vpop.f32.mrb[0].mxu0
      %v1519 = vpop.f32.mrb[0].mxu0
      %v1520 = vadd.f32 0.0, %v1519
      %v1521 = vpop.f32.mrb[0].mxu0
      %1522 = vdwg.mxu0
      %v1523 = vadd.f32 %v1251, %v1381
      %v1524 = vadd.f32 %v1252, %v1384
      %v1525 = vadd.f32 %v1253, %v1389
      %v1526 = vadd.f32 %v1254, %v1392
      %v1527 = vadd.f32 %v1255, %v1397
      %v1528 = vadd.f32 %v1256, %v1400
      %v1529 = vadd.f32 %v1257, %v1405
      %v1530 = vadd.f32 %v1258, %v1408
      %v1531 = vadd.f32 %v1259, %v1413
      %v1532 = vadd.f32 %v1260, %v1416
      %v1533 = vadd.f32 %v1261, %v1421
      %v1534 = vadd.f32 %v1262, %v1424
      %v1535 = vadd.f32 %v1263, %v1429
      %v1536 = vadd.f32 %v1264, %v1432
      %v1537 = vadd.f32 %v1265, %v1437
      %v1538 = vadd.f32 %v1266, %v1440
      %v1539 = vadd.f32 %v1267, %v1445
      %v1540 = vadd.f32 %v1268, %v1448
      %v1541 = vadd.f32 %v1269, %v1453
      %v1542 = vadd.f32 %v1270, %v1456
      %v1543 = vadd.f32 %v1271, %v1461
      %v1544 = vadd.f32 %v1272, %v1464
      %v1545 = vadd.f32 %v1273, %v1469
      %v1546 = vadd.f32 %v1274, %v1472
      %v1547 = vadd.f32 %v1275, %v1477
      %v1548 = vadd.f32 %v1276, %v1480
      %v1549 = vadd.f32 %v1277, %v1485
      %v1550 = vadd.f32 %v1278, %v1488
      %v1551 = vadd.f32 %v1279, %v1493
      %v1552 = vadd.f32 %v1280, %v1496
      %v1553 = vadd.f32 %v1281, %v1501
      %v1554 = vadd.f32 %v1282, %v1504
      %v1555 = vadd.f32 %v1283, %v1509
      %v1556 = vadd.f32 %v1284, %v1512
      %v1557 = vadd.f32 %v1285, %v1517
      %v1558 = vadd.f32 %v1286, %v1520
      %v1559 = vld [vmem:[%s315 + $0x2] sm:$0xff]
      %v1560 = vld [vmem:[%s315 + $0xa] sm:$0xff]
      %v1561 = vld [vmem:[%s315 + $0x12] sm:$0xff]
      %v1562 = vld [vmem:[%s315 + $0x1a] sm:$0xff]
      %v1563 = vld [vmem:[%s315 + $0x22] sm:$0xff]
      %v1564 = vld [vmem:[%s315 + $0x2a] sm:$0xff]
      %v1565 = vld [vmem:[%s315 + $0x32] sm:$0xff]
      %v1566 = vld [vmem:[%s315 + $0x3a] sm:$0xff]
      %v1567 = vld [vmem:[%s315 + $0x42] sm:$0xff]
      %v1568 = vld [vmem:[%s315 + $0x4a] sm:$0xff]
      %v1569 = vld [vmem:[%s315 + $0x52] sm:$0xff]
      %v1570 = vld [vmem:[%s315 + $0x5a] sm:$0xff]
      %v1571 = vld [vmem:[%s315 + $0x62] sm:$0xff]
      %v1572 = vld [vmem:[%s315 + $0x6a] sm:$0xff]
      %v1573 = vld [vmem:[%s315 + $0x72] sm:$0xff]
      %v1574 = vld [vmem:[%s315 + $0x7a] sm:$0xff]
      %v1575 = vld [vmem:[%s315 + $0x82] sm:$0xff]
      %v1576 = vld [vmem:[%s315 + $0x8a] sm:$0xff]
      %v1577 = vld [vmem:[%s315 + $0x92] sm:$0xff]
      %v1578 = vld [vmem:[%s315 + $0x9a] sm:$0xff]
      %v1579 = vld [vmem:[%s315 + $0xa2] sm:$0xff]
      %v1580 = vld [vmem:[%s315 + $0xaa] sm:$0xff]
      %v1581 = vld [vmem:[%s315 + $0xb2] sm:$0xff]
      %v1582 = vld [vmem:[%s315 + $0xba] sm:$0xff]
      %v1583 = vld [vmem:[%s315 + $0xc2] sm:$0xff]
      %v1584 = vld [vmem:[%s315 + $0xca] sm:$0xff]
      %v1585 = vld [vmem:[%s315 + $0xd2] sm:$0xff]
      %v1586 = vld [vmem:[%s315 + $0xda] sm:$0xff]
      %v1587 = vld [vmem:[%s315 + $0xe2] sm:$0xff]
      %v1588 = vld [vmem:[%s315 + $0xea] sm:$0xff]
      %v1589 = vld [vmem:[%s315 + $0xf2] sm:$0xff]
      %v1590 = vld [vmem:[%s315 + $0xfa] sm:$0xff]
      %v1591 = vld [vmem:[%s315 + $0x102] sm:$0xff]
      %v1592 = vld [vmem:[%s315 + $0x10a] sm:$0xff]
      %v1593 = vld [vmem:[%s315 + $0x112] sm:$0xff]
      %v1594 = vld [vmem:[%s315 + $0x11a] sm:$0xff]
      %v1595 = vpack.c.bf16 %v1560, %v1559
      %v1596 = vpack.c.bf16 %v1562, %v1561
      %v1597 = vpack.c.bf16 %v1564, %v1563
      %v1598 = vpack.c.bf16 %v1566, %v1565
      %v1599 = vpack.c.bf16 %v1568, %v1567
      %v1600 = vpack.c.bf16 %v1570, %v1569
      %v1601 = vpack.c.bf16 %v1572, %v1571
      %v1602 = vpack.c.bf16 %v1574, %v1573
      %v1603 = vpack.c.bf16 %v1576, %v1575
      %v1604 = vpack.c.bf16 %v1578, %v1577
      %v1605 = vpack.c.bf16 %v1580, %v1579
      %v1606 = vpack.c.bf16 %v1582, %v1581
      %v1607 = vpack.c.bf16 %v1584, %v1583
      %v1608 = vpack.c.bf16 %v1586, %v1585
      %v1609 = vpack.c.bf16 %v1588, %v1587
      %v1610 = vpack.c.bf16 %v1590, %v1589
      %v1611 = vpack.c.bf16 %v1592, %v1591
      %v1612 = vpack.c.bf16 %v1594, %v1593
      %v1613 = vld [vmem:[%s320 + $0x2] sm:$0xff]
      %v1614 = vld [vmem:[%s320 + $0xa] sm:$0xff]
      %v1615 = vld [vmem:[%s320 + $0x12] sm:$0xff]
      %v1616 = vld [vmem:[%s320 + $0x1a] sm:$0xff]
      %v1617 = vld [vmem:[%s320 + $0x22] sm:$0xff]
      %v1618 = vld [vmem:[%s320 + $0x2a] sm:$0xff]
      %v1619 = vld [vmem:[%s320 + $0x32] sm:$0xff]
      %v1620 = vld [vmem:[%s320 + $0x3a] sm:$0xff]
      %v1621 = vld [vmem:[%s320 + $0x42] sm:$0xff]
      %v1622 = vld [vmem:[%s320 + $0x4a] sm:$0xff]
      %v1623 = vld [vmem:[%s320 + $0x52] sm:$0xff]
      %v1624 = vld [vmem:[%s320 + $0x5a] sm:$0xff]
      %v1625 = vld [vmem:[%s320 + $0x62] sm:$0xff]
      %v1626 = vld [vmem:[%s320 + $0x6a] sm:$0xff]
      %v1627 = vld [vmem:[%s320 + $0x72] sm:$0xff]
      %v1628 = vld [vmem:[%s320 + $0x7a] sm:$0xff]
      %v1629 = vld [vmem:[%s320 + $0x82] sm:$0xff]
      %v1630 = vld [vmem:[%s320 + $0x8a] sm:$0xff]
      %v1631 = vld [vmem:[%s320 + $0x92] sm:$0xff]
      %v1632 = vld [vmem:[%s320 + $0x9a] sm:$0xff]
      %v1633 = vld [vmem:[%s320 + $0xa2] sm:$0xff]
      %v1634 = vld [vmem:[%s320 + $0xaa] sm:$0xff]
      %v1635 = vld [vmem:[%s320 + $0xb2] sm:$0xff]
      %v1636 = vld [vmem:[%s320 + $0xba] sm:$0xff]
      %v1637 = vld [vmem:[%s320 + $0xc2] sm:$0xff]
      %v1638 = vld [vmem:[%s320 + $0xca] sm:$0xff]
      %v1639 = vld [vmem:[%s320 + $0xd2] sm:$0xff]
      %v1640 = vld [vmem:[%s320 + $0xda] sm:$0xff]
      %v1641 = vld [vmem:[%s320 + $0xe2] sm:$0xff]
      %v1642 = vld [vmem:[%s320 + $0xea] sm:$0xff]
      %v1643 = vld [vmem:[%s320 + $0xf2] sm:$0xff]
      %v1644 = vld [vmem:[%s320 + $0xfa] sm:$0xff]
      %v1645 = vld [vmem:[%s320 + $0x102] sm:$0xff]
      %v1646 = vld [vmem:[%s320 + $0x10a] sm:$0xff]
      %v1647 = vld [vmem:[%s320 + $0x112] sm:$0xff]
      %v1648 = vld [vmem:[%s320 + $0x11a] sm:$0xff]
      %v1649 = vpack.c.bf16 %v1614, %v1613
      %v1650 = vpack.c.bf16 %v1616, %v1615
      %v1651 = vpack.c.bf16 %v1618, %v1617
      %v1652 = vpack.c.bf16 %v1620, %v1619
      %v1653 = vpack.c.bf16 %v1622, %v1621
      %v1654 = vpack.c.bf16 %v1624, %v1623
      %v1655 = vpack.c.bf16 %v1626, %v1625
      %v1656 = vpack.c.bf16 %v1628, %v1627
      %v1657 = vpack.c.bf16 %v1630, %v1629
      %v1658 = vpack.c.bf16 %v1632, %v1631
      %v1659 = vpack.c.bf16 %v1634, %v1633
      %v1660 = vpack.c.bf16 %v1636, %v1635
      %v1661 = vpack.c.bf16 %v1638, %v1637
      %v1662 = vpack.c.bf16 %v1640, %v1639
      %v1663 = vpack.c.bf16 %v1642, %v1641
      %v1664 = vpack.c.bf16 %v1644, %v1643
      %v1665 = vpack.c.bf16 %v1646, %v1645
      %v1666 = vpack.c.bf16 %v1648, %v1647
      %s1667 = scalar_lea.vmem %s3, 4
      %v1668 = vld [vmem:[%s1667] sm:$0x3]
      %v1670 = vsel %vm437, %v1595, 0
      %v1673 = vsel %vm437, %v1596, 0
      %v1676 = vsel %vm437, %v1597, 0
      %v1679 = vsel %vm437, %v1598, 0
      %v1682 = vsel %vm437, %v1599, 0
      %v1685 = vsel %vm437, %v1600, 0
      %v1688 = vsel %vm437, %v1601, 0
      %v1691 = vsel %vm437, %v1602, 0
      %v1694 = vsel %vm437, %v1603, 0
      %v1697 = vsel %vm437, %v1604, 0
      %v1700 = vsel %vm437, %v1605, 0
      %v1703 = vsel %vm437, %v1606, 0
      %v1706 = vsel %vm437, %v1607, 0
      %v1709 = vsel %vm437, %v1608, 0
      %v1712 = vsel %vm437, %v1609, 0
      %v1715 = vsel %vm437, %v1610, 0
      %v1718 = vsel %vm437, %v1611, 0
      %v1721 = vsel %vm437, %v1612, 0
      %v1724 = vsel %vm492, %v1668, 0
      %1726 = vmatprep.subr.bf16.mxu0 0
      %1727 = vmatpush1.bf16.msra.mxu0 %v1724
      %1728 = vmatprep.subr.bf16.mxu0 0
      %1729 = vmatpush1.bf16.msra.mxu0 0
      %1730 = vmatprep.subr.bf16.mxu0 0
      %1731 = vmatpush1.bf16.msra.mxu0 0
      %1732 = vmatprep.subr.bf16.mxu0 0
      %1733 = vmatpush1.bf16.msra.mxu0 0
      %1734 = vmatprep.subr.bf16.mxu0 0
      %1735 = vmatpush1.bf16.msra.mxu0 0
      %1736 = vmatprep.subr.bf16.mxu0 0
      %1737 = vmatpush1.bf16.msra.mxu0 0
      %1738 = vmatprep.subr.bf16.mxu0 0
      %1739 = vmatpush1.bf16.msra.mxu0 0
      %1740 = vmatprep.subr.bf16.mxu0 0
      %1741 = vmatpush1.bf16.msra.mxu0 0
      %1742 = vmatprep.subr.bf16.mxu0 0
      %1743 = vmatpush1.bf16.msra.mxu0 0
      %1744 = vmatprep.subr.bf16.mxu0 0
      %1745 = vmatpush1.bf16.msra.mxu0 0
      %1746 = vmatprep.subr.bf16.mxu0 0
      %1747 = vmatpush1.bf16.msra.mxu0 0
      %1748 = vmatprep.subr.bf16.mxu0 0
      %1749 = vmatpush1.bf16.msra.mxu0 0
      %1750 = vmatprep.subr.bf16.mxu0 0
      %1751 = vmatpush1.bf16.msra.mxu0 0
      %1752 = vmatprep.subr.bf16.mxu0 0
      %1753 = vmatpush1.bf16.msra.mxu0 0
      %1754 = vmatprep.subr.bf16.mxu0 0
      %1755 = vmatpush1.bf16.msra.mxu0 0
      %1756 = vmatprep.subr.bf16.mxu0 0
      %1757 = vmatpush1.bf16.msra.mxu0 0
      %1758 = vmatprep.mubr.bf16.mxu0 0
      %1759 = vmatmul.mubr.bf16.gmra.mrb[0].mxu0 %v1670
      %v1760 = vpop.f32.mrb[0].mxu0
      %v1761 = vadd.f32 0.0, %v1760
      %v1762 = vpop.f32.mrb[0].mxu0
      %v1763 = vpop.f32.mrb[0].mxu0
      %v1764 = vadd.f32 0.0, %v1763
      %v1765 = vpop.f32.mrb[0].mxu0
      %1766 = vmatprep.mubr.bf16.mxu0 0
      %1767 = vmatmul.mubr.bf16.gmra.mrb[0].mxu0 %v1673
      %v1768 = vpop.f32.mrb[0].mxu0
      %v1769 = vadd.f32 0.0, %v1768
      %v1770 = vpop.f32.mrb[0].mxu0
      %v1771 = vpop.f32.mrb[0].mxu0
      %v1772 = vadd.f32 0.0, %v1771
      %v1773 = vpop.f32.mrb[0].mxu0
      %1774 = vmatprep.mubr.bf16.mxu0 0
      %1775 = vmatmul.mubr.bf16.gmra.mrb[0].mxu0 %v1676
      %v1776 = vpop.f32.mrb[0].mxu0
      %v1777 = vadd.f32 0.0, %v1776
      %v1778 = vpop.f32.mrb[0].mxu0
      %v1779 = vpop.f32.mrb[0].mxu0
      %v1780 = vadd.f32 0.0, %v1779
      %v1781 = vpop.f32.mrb[0].mxu0
      %1782 = vmatprep.mubr.bf16.mxu0 0
      %1783 = vmatmul.mubr.bf16.gmra.mrb[0].mxu0 %v1679
      %v1784 = vpop.f32.mrb[0].mxu0
      %v1785 = vadd.f32 0.0, %v1784
      %v1786 = vpop.f32.mrb[0].mxu0
      %v1787 = vpop.f32.mrb[0].mxu0
      %v1788 = vadd.f32 0.0, %v1787
      %v1789 = vpop.f32.mrb[0].mxu0
      %1790 = vmatprep.mubr.bf16.mxu0 0
      %1791 = vmatmul.mubr.bf16.gmra.mrb[0].mxu0 %v1682
      %v1792 = vpop.f32.mrb[0].mxu0
      %v1793 = vadd.f32 0.0, %v1792
      %v1794 = vpop.f32.mrb[0].mxu0
      %v1795 = vpop.f32.mrb[0].mxu0
      %v1796 = vadd.f32 0.0, %v1795
      %v1797 = vpop.f32.mrb[0].mxu0
      %1798 = vmatprep.mubr.bf16.mxu0 0
      %1799 = vmatmul.mubr.bf16.gmra.mrb[0].mxu0 %v1685
      %v1800 = vpop.f32.mrb[0].mxu0
      %v1801 = vadd.f32 0.0, %v1800
      %v1802 = vpop.f32.mrb[0].mxu0
      %v1803 = vpop.f32.mrb[0].mxu0
      %v1804 = vadd.f32 0.0, %v1803
      %v1805 = vpop.f32.mrb[0].mxu0
      %1806 = vmatprep.mubr.bf16.mxu0 0
      %1807 = vmatmul.mubr.bf16.gmra.mrb[0].mxu0 %v1688
      %v1808 = vpop.f32.mrb[0].mxu0
      %v1809 = vadd.f32 0.0, %v1808
      %v1810 = vpop.f32.mrb[0].mxu0
      %v1811 = vpop.f32.mrb[0].mxu0
      %v1812 = vadd.f32 0.0, %v1811
      %v1813 = vpop.f32.mrb[0].mxu0
      %1814 = vmatprep.mubr.bf16.mxu0 0
      %1815 = vmatmul.mubr.bf16.gmra.mrb[0].mxu0 %v1691
      %v1816 = vpop.f32.mrb[0].mxu0
      %v1817 = vadd.f32 0.0, %v1816
      %v1818 = vpop.f32.mrb[0].mxu0
      %v1819 = vpop.f32.mrb[0].mxu0
      %v1820 = vadd.f32 0.0, %v1819
      %v1821 = vpop.f32.mrb[0].mxu0
      %1822 = vmatprep.mubr.bf16.mxu0 0
      %1823 = vmatmul.mubr.bf16.gmra.mrb[0].mxu0 %v1694
      %v1824 = vpop.f32.mrb[0].mxu0
      %v1825 = vadd.f32 0.0, %v1824
      %v1826 = vpop.f32.mrb[0].mxu0
      %v1827 = vpop.f32.mrb[0].mxu0
      %v1828 = vadd.f32 0.0, %v1827
      %v1829 = vpop.f32.mrb[0].mxu0
      %1830 = vmatprep.mubr.bf16.mxu0 0
      %1831 = vmatmul.mubr.bf16.gmra.mrb[0].mxu0 %v1697
      %v1832 = vpop.f32.mrb[0].mxu0
      %v1833 = vadd.f32 0.0, %v1832
      %v1834 = vpop.f32.mrb[0].mxu0
      %v1835 = vpop.f32.mrb[0].mxu0
      %v1836 = vadd.f32 0.0, %v1835
      %v1837 = vpop.f32.mrb[0].mxu0
      %1838 = vmatprep.mubr.bf16.mxu0 0
      %1839 = vmatmul.mubr.bf16.gmra.mrb[0].mxu0 %v1700
      %v1840 = vpop.f32.mrb[0].mxu0
      %v1841 = vadd.f32 0.0, %v1840
      %v1842 = vpop.f32.mrb[0].mxu0
      %v1843 = vpop.f32.mrb[0].mxu0
      %v1844 = vadd.f32 0.0, %v1843
      %v1845 = vpop.f32.mrb[0].mxu0
      %1846 = vmatprep.mubr.bf16.mxu0 0
      %1847 = vmatmul.mubr.bf16.gmra.mrb[0].mxu0 %v1703
      %v1848 = vpop.f32.mrb[0].mxu0
      %v1849 = vadd.f32 0.0, %v1848
      %v1850 = vpop.f32.mrb[0].mxu0
      %v1851 = vpop.f32.mrb[0].mxu0
      %v1852 = vadd.f32 0.0, %v1851
      %v1853 = vpop.f32.mrb[0].mxu0
      %1854 = vmatprep.mubr.bf16.mxu0 0
      %1855 = vmatmul.mubr.bf16.gmra.mrb[0].mxu0 %v1706
      %v1856 = vpop.f32.mrb[0].mxu0
      %v1857 = vadd.f32 0.0, %v1856
      %v1858 = vpop.f32.mrb[0].mxu0
      %v1859 = vpop.f32.mrb[0].mxu0
      %v1860 = vadd.f32 0.0, %v1859
      %v1861 = vpop.f32.mrb[0].mxu0
      %1862 = vmatprep.mubr.bf16.mxu0 0
      %1863 = vmatmul.mubr.bf16.gmra.mrb[0].mxu0 %v1709
      %v1864 = vpop.f32.mrb[0].mxu0
      %v1865 = vadd.f32 0.0, %v1864
      %v1866 = vpop.f32.mrb[0].mxu0
      %v1867 = vpop.f32.mrb[0].mxu0
      %v1868 = vadd.f32 0.0, %v1867
      %v1869 = vpop.f32.mrb[0].mxu0
      %1870 = vmatprep.mubr.bf16.mxu0 0
      %1871 = vmatmul.mubr.bf16.gmra.mrb[0].mxu0 %v1712
      %v1872 = vpop.f32.mrb[0].mxu0
      %v1873 = vadd.f32 0.0, %v1872
      %v1874 = vpop.f32.mrb[0].mxu0
      %v1875 = vpop.f32.mrb[0].mxu0
      %v1876 = vadd.f32 0.0, %v1875
      %v1877 = vpop.f32.mrb[0].mxu0
      %1878 = vmatprep.mubr.bf16.mxu0 0
      %1879 = vmatmul.mubr.bf16.gmra.mrb[0].mxu0 %v1715
      %v1880 = vpop.f32.mrb[0].mxu0
      %v1881 = vadd.f32 0.0, %v1880
      %v1882 = vpop.f32.mrb[0].mxu0
      %v1883 = vpop.f32.mrb[0].mxu0
      %v1884 = vadd.f32 0.0, %v1883
      %v1885 = vpop.f32.mrb[0].mxu0
      %1886 = vmatprep.mubr.bf16.mxu0 0
      %1887 = vmatmul.mubr.bf16.gmra.mrb[0].mxu0 %v1718
      %v1888 = vpop.f32.mrb[0].mxu0
      %v1889 = vadd.f32 0.0, %v1888
      %v1890 = vpop.f32.mrb[0].mxu0
      %v1891 = vpop.f32.mrb[0].mxu0
      %v1892 = vadd.f32 0.0, %v1891
      %v1893 = vpop.f32.mrb[0].mxu0
      %1894 = vmatprep.mubr.bf16.mxu0 0
      %1895 = vmatmul.mubr.bf16.gmra.mrb[0].mxu0 %v1721
      %v1896 = vpop.f32.mrb[0].mxu0
      %v1897 = vadd.f32 0.0, %v1896
      %v1898 = vpop.f32.mrb[0].mxu0
      %v1899 = vpop.f32.mrb[0].mxu0
      %v1900 = vadd.f32 0.0, %v1899
      %v1901 = vpop.f32.mrb[0].mxu0
      %1902 = vdwg.mxu0
      %v1903 = vadd.f32 %v1523, %v1761
      %v1904 = vadd.f32 %v1524, %v1764
      %v1905 = vadd.f32 %v1525, %v1769
      %v1906 = vadd.f32 %v1526, %v1772
      %v1907 = vadd.f32 %v1527, %v1777
      %v1908 = vadd.f32 %v1528, %v1780
      %v1909 = vadd.f32 %v1529, %v1785
      %v1910 = vadd.f32 %v1530, %v1788
      %v1911 = vadd.f32 %v1531, %v1793
      %v1912 = vadd.f32 %v1532, %v1796
      %v1913 = vadd.f32 %v1533, %v1801
      %v1914 = vadd.f32 %v1534, %v1804
      %v1915 = vadd.f32 %v1535, %v1809
      %v1916 = vadd.f32 %v1536, %v1812
      %v1917 = vadd.f32 %v1537, %v1817
      %v1918 = vadd.f32 %v1538, %v1820
      %v1919 = vadd.f32 %v1539, %v1825
      %v1920 = vadd.f32 %v1540, %v1828
      %v1921 = vadd.f32 %v1541, %v1833
      %v1922 = vadd.f32 %v1542, %v1836
      %v1923 = vadd.f32 %v1543, %v1841
      %v1924 = vadd.f32 %v1544, %v1844
      %v1925 = vadd.f32 %v1545, %v1849
      %v1926 = vadd.f32 %v1546, %v1852
      %v1927 = vadd.f32 %v1547, %v1857
      %v1928 = vadd.f32 %v1548, %v1860
      %v1929 = vadd.f32 %v1549, %v1865
      %v1930 = vadd.f32 %v1550, %v1868
      %v1931 = vadd.f32 %v1551, %v1873
      %v1932 = vadd.f32 %v1552, %v1876
      %v1933 = vadd.f32 %v1553, %v1881
      %v1934 = vadd.f32 %v1554, %v1884
      %v1935 = vadd.f32 %v1555, %v1889
      %v1936 = vadd.f32 %v1556, %v1892
      %v1937 = vadd.f32 %v1557, %v1897
      %v1938 = vadd.f32 %v1558, %v1900
      %s1939 = scalar_lea.vmem %s4, 4
      %v1940 = vld [vmem:[%s1939] sm:$0x3]
      %v1942 = vsel %vm437, %v1649, 0
      %v1945 = vsel %vm437, %v1650, 0
      %v1948 = vsel %vm437, %v1651, 0
      %v1951 = vsel %vm437, %v1652, 0
      %v1954 = vsel %vm437, %v1653, 0
      %v1957 = vsel %vm437, %v1654, 0
      %v1960 = vsel %vm437, %v1655, 0
      %v1963 = vsel %vm437, %v1656, 0
      %v1966 = vsel %vm437, %v1657, 0
      %v1969 = vsel %vm437, %v1658, 0
      %v1972 = vsel %vm437, %v1659, 0
      %v1975 = vsel %vm437, %v1660, 0
      %v1978 = vsel %vm437, %v1661, 0
      %v1981 = vsel %vm437, %v1662, 0
      %v1984 = vsel %vm437, %v1663, 0
      %v1987 = vsel %vm437, %v1664, 0
      %v1990 = vsel %vm437, %v1665, 0
      %v1993 = vsel %vm437, %v1666, 0
      %v1996 = vsel %vm492, %v1940, 0
      %1998 = vmatprep.subr.bf16.mxu0 0
      %1999 = vmatpush1.bf16.msra.mxu0 %v1996
      %2000 = vmatprep.subr.bf16.mxu0 0
      %2001 = vmatpush1.bf16.msra.mxu0 0
      %2002 = vmatprep.subr.bf16.mxu0 0
      %2003 = vmatpush1.bf16.msra.mxu0 0
      %2004 = vmatprep.subr.bf16.mxu0 0
      %2005 = vmatpush1.bf16.msra.mxu0 0
      %2006 = vmatprep.subr.bf16.mxu0 0
      %2007 = vmatpush1.bf16.msra.mxu0 0
      %2008 = vmatprep.subr.bf16.mxu0 0
      %2009 = vmatpush1.bf16.msra.mxu0 0
      %2010 = vmatprep.subr.bf16.mxu0 0
      %2011 = vmatpush1.bf16.msra.mxu0 0
      %2012 = vmatprep.subr.bf16.mxu0 0
      %2013 = vmatpush1.bf16.msra.mxu0 0
      %2014 = vmatprep.subr.bf16.mxu0 0
      %2015 = vmatpush1.bf16.msra.mxu0 0
      %2016 = vmatprep.subr.bf16.mxu0 0
      %2017 = vmatpush1.bf16.msra.mxu0 0
      %2018 = vmatprep.subr.bf16.mxu0 0
      %2019 = vmatpush1.bf16.msra.mxu0 0
      %2020 = vmatprep.subr.bf16.mxu0 0
      %2021 = vmatpush1.bf16.msra.mxu0 0
      %2022 = vmatprep.subr.bf16.mxu0 0
      %2023 = vmatpush1.bf16.msra.mxu0 0
      %2024 = vmatprep.subr.bf16.mxu0 0
      %2025 = vmatpush1.bf16.msra.mxu0 0
      %2026 = vmatprep.subr.bf16.mxu0 0
      %2027 = vmatpush1.bf16.msra.mxu0 0
      %2028 = vmatprep.subr.bf16.mxu0 0
      %2029 = vmatpush1.bf16.msra.mxu0 0
      %2030 = vmatprep.mubr.bf16.mxu0 0
      %2031 = vmatmul.mubr.bf16.gmra.mrb[0].mxu0 %v1942
      %v2032 = vpop.f32.mrb[0].mxu0
      %v2033 = vadd.f32 0.0, %v2032
      %v2034 = vpop.f32.mrb[0].mxu0
      %v2035 = vpop.f32.mrb[0].mxu0
      %v2036 = vadd.f32 0.0, %v2035
      %v2037 = vpop.f32.mrb[0].mxu0
      %2038 = vmatprep.mubr.bf16.mxu0 0
      %2039 = vmatmul.mubr.bf16.gmra.mrb[0].mxu0 %v1945
      %v2040 = vpop.f32.mrb[0].mxu0
      %v2041 = vadd.f32 0.0, %v2040
      %v2042 = vpop.f32.mrb[0].mxu0
      %v2043 = vpop.f32.mrb[0].mxu0
      %v2044 = vadd.f32 0.0, %v2043
      %v2045 = vpop.f32.mrb[0].mxu0
      %2046 = vmatprep.mubr.bf16.mxu0 0
      %2047 = vmatmul.mubr.bf16.gmra.mrb[0].mxu0 %v1948
      %v2048 = vpop.f32.mrb[0].mxu0
      %v2049 = vadd.f32 0.0, %v2048
      %v2050 = vpop.f32.mrb[0].mxu0
      %v2051 = vpop.f32.mrb[0].mxu0
      %v2052 = vadd.f32 0.0, %v2051
      %v2053 = vpop.f32.mrb[0].mxu0
      %2054 = vmatprep.mubr.bf16.mxu0 0
      %2055 = vmatmul.mubr.bf16.gmra.mrb[0].mxu0 %v1951
      %v2056 = vpop.f32.mrb[0].mxu0
      %v2057 = vadd.f32 0.0, %v2056
      %v2058 = vpop.f32.mrb[0].mxu0
      %v2059 = vpop.f32.mrb[0].mxu0
      %v2060 = vadd.f32 0.0, %v2059
      %v2061 = vpop.f32.mrb[0].mxu0
      %2062 = vmatprep.mubr.bf16.mxu0 0
      %2063 = vmatmul.mubr.bf16.gmra.mrb[0].mxu0 %v1954
      %v2064 = vpop.f32.mrb[0].mxu0
      %v2065 = vadd.f32 0.0, %v2064
      %v2066 = vpop.f32.mrb[0].mxu0
      %v2067 = vpop.f32.mrb[0].mxu0
      %v2068 = vadd.f32 0.0, %v2067
      %v2069 = vpop.f32.mrb[0].mxu0
      %2070 = vmatprep.mubr.bf16.mxu0 0
      %2071 = vmatmul.mubr.bf16.gmra.mrb[0].mxu0 %v1957
      %v2072 = vpop.f32.mrb[0].mxu0
      %v2073 = vadd.f32 0.0, %v2072
      %v2074 = vpop.f32.mrb[0].mxu0
      %v2075 = vpop.f32.mrb[0].mxu0
      %v2076 = vadd.f32 0.0, %v2075
      %v2077 = vpop.f32.mrb[0].mxu0
      %2078 = vmatprep.mubr.bf16.mxu0 0
      %2079 = vmatmul.mubr.bf16.gmra.mrb[0].mxu0 %v1960
      %v2080 = vpop.f32.mrb[0].mxu0
      %v2081 = vadd.f32 0.0, %v2080
      %v2082 = vpop.f32.mrb[0].mxu0
      %v2083 = vpop.f32.mrb[0].mxu0
      %v2084 = vadd.f32 0.0, %v2083
      %v2085 = vpop.f32.mrb[0].mxu0
      %2086 = vmatprep.mubr.bf16.mxu0 0
      %2087 = vmatmul.mubr.bf16.gmra.mrb[0].mxu0 %v1963
      %v2088 = vpop.f32.mrb[0].mxu0
      %v2089 = vadd.f32 0.0, %v2088
      %v2090 = vpop.f32.mrb[0].mxu0
      %v2091 = vpop.f32.mrb[0].mxu0
      %v2092 = vadd.f32 0.0, %v2091
      %v2093 = vpop.f32.mrb[0].mxu0
      %2094 = vmatprep.mubr.bf16.mxu0 0
      %2095 = vmatmul.mubr.bf16.gmra.mrb[0].mxu0 %v1966
      %v2096 = vpop.f32.mrb[0].mxu0
      %v2097 = vadd.f32 0.0, %v2096
      %v2098 = vpop.f32.mrb[0].mxu0
      %v2099 = vpop.f32.mrb[0].mxu0
      %v2100 = vadd.f32 0.0, %v2099
      %v2101 = vpop.f32.mrb[0].mxu0
      %2102 = vmatprep.mubr.bf16.mxu0 0
      %2103 = vmatmul.mubr.bf16.gmra.mrb[0].mxu0 %v1969
      %v2104 = vpop.f32.mrb[0].mxu0
      %v2105 = vadd.f32 0.0, %v2104
      %v2106 = vpop.f32.mrb[0].mxu0
      %v2107 = vpop.f32.mrb[0].mxu0
      %v2108 = vadd.f32 0.0, %v2107
      %v2109 = vpop.f32.mrb[0].mxu0
      %2110 = vmatprep.mubr.bf16.mxu0 0
      %2111 = vmatmul.mubr.bf16.gmra.mrb[0].mxu0 %v1972
      %v2112 = vpop.f32.mrb[0].mxu0
      %v2113 = vadd.f32 0.0, %v2112
      %v2114 = vpop.f32.mrb[0].mxu0
      %v2115 = vpop.f32.mrb[0].mxu0
      %v2116 = vadd.f32 0.0, %v2115
      %v2117 = vpop.f32.mrb[0].mxu0
      %2118 = vmatprep.mubr.bf16.mxu0 0
      %2119 = vmatmul.mubr.bf16.gmra.mrb[0].mxu0 %v1975
      %v2120 = vpop.f32.mrb[0].mxu0
      %v2121 = vadd.f32 0.0, %v2120
      %v2122 = vpop.f32.mrb[0].mxu0
      %v2123 = vpop.f32.mrb[0].mxu0
      %v2124 = vadd.f32 0.0, %v2123
      %v2125 = vpop.f32.mrb[0].mxu0
      %2126 = vmatprep.mubr.bf16.mxu0 0
      %2127 = vmatmul.mubr.bf16.gmra.mrb[0].mxu0 %v1978
      %v2128 = vpop.f32.mrb[0].mxu0
      %v2129 = vadd.f32 0.0, %v2128
      %v2130 = vpop.f32.mrb[0].mxu0
      %v2131 = vpop.f32.mrb[0].mxu0
      %v2132 = vadd.f32 0.0, %v2131
      %v2133 = vpop.f32.mrb[0].mxu0
      %2134 = vmatprep.mubr.bf16.mxu0 0
      %2135 = vmatmul.mubr.bf16.gmra.mrb[0].mxu0 %v1981
      %v2136 = vpop.f32.mrb[0].mxu0
      %v2137 = vadd.f32 0.0, %v2136
      %v2138 = vpop.f32.mrb[0].mxu0
      %v2139 = vpop.f32.mrb[0].mxu0
      %v2140 = vadd.f32 0.0, %v2139
      %v2141 = vpop.f32.mrb[0].mxu0
      %2142 = vmatprep.mubr.bf16.mxu0 0
      %2143 = vmatmul.mubr.bf16.gmra.mrb[0].mxu0 %v1984
      %v2144 = vpop.f32.mrb[0].mxu0
      %v2145 = vadd.f32 0.0, %v2144
      %v2146 = vpop.f32.mrb[0].mxu0
      %v2147 = vpop.f32.mrb[0].mxu0
      %v2148 = vadd.f32 0.0, %v2147
      %v2149 = vpop.f32.mrb[0].mxu0
      %2150 = vmatprep.mubr.bf16.mxu0 0
      %2151 = vmatmul.mubr.bf16.gmra.mrb[0].mxu0 %v1987
      %v2152 = vpop.f32.mrb[0].mxu0
      %v2153 = vadd.f32 0.0, %v2152
      %v2154 = vpop.f32.mrb[0].mxu0
      %v2155 = vpop.f32.mrb[0].mxu0
      %v2156 = vadd.f32 0.0, %v2155
      %v2157 = vpop.f32.mrb[0].mxu0
      %2158 = vmatprep.mubr.bf16.mxu0 0
      %2159 = vmatmul.mubr.bf16.gmra.mrb[0].mxu0 %v1990
      %v2160 = vpop.f32.mrb[0].mxu0
      %v2161 = vadd.f32 0.0, %v2160
      %v2162 = vpop.f32.mrb[0].mxu0
      %v2163 = vpop.f32.mrb[0].mxu0
      %v2164 = vadd.f32 0.0, %v2163
      %v2165 = vpop.f32.mrb[0].mxu0
      %2166 = vmatprep.mubr.bf16.mxu0 0
      %2167 = vmatmul.mubr.bf16.gmra.mrb[0].mxu0 %v1993
      %v2168 = vpop.f32.mrb[0].mxu0
      %v2169 = vadd.f32 0.0, %v2168
      %v2170 = vpop.f32.mrb[0].mxu0
      %v2171 = vpop.f32.mrb[0].mxu0
      %v2172 = vadd.f32 0.0, %v2171
      %v2173 = vpop.f32.mrb[0].mxu0
      %2174 = vdwg.mxu0
      %v2175 = vadd.f32 %v1903, %v2033
      %v2176 = vadd.f32 %v1904, %v2036
      %v2177 = vadd.f32 %v1905, %v2041
      %v2178 = vadd.f32 %v1906, %v2044
      %v2179 = vadd.f32 %v1907, %v2049
      %v2180 = vadd.f32 %v1908, %v2052
      %v2181 = vadd.f32 %v1909, %v2057
      %v2182 = vadd.f32 %v1910, %v2060
      %v2183 = vadd.f32 %v1911, %v2065
      %v2184 = vadd.f32 %v1912, %v2068
      %v2185 = vadd.f32 %v1913, %v2073
      %v2186 = vadd.f32 %v1914, %v2076
      %v2187 = vadd.f32 %v1915, %v2081
      %v2188 = vadd.f32 %v1916, %v2084
      %v2189 = vadd.f32 %v1917, %v2089
      %v2190 = vadd.f32 %v1918, %v2092
      %v2191 = vadd.f32 %v1919, %v2097
      %v2192 = vadd.f32 %v1920, %v2100
      %v2193 = vadd.f32 %v1921, %v2105
      %v2194 = vadd.f32 %v1922, %v2108
      %v2195 = vadd.f32 %v1923, %v2113
      %v2196 = vadd.f32 %v1924, %v2116
      %v2197 = vadd.f32 %v1925, %v2121
      %v2198 = vadd.f32 %v1926, %v2124
      %v2199 = vadd.f32 %v1927, %v2129
      %v2200 = vadd.f32 %v1928, %v2132
      %v2201 = vadd.f32 %v1929, %v2137
      %v2202 = vadd.f32 %v1930, %v2140
      %v2203 = vadd.f32 %v1931, %v2145
      %v2204 = vadd.f32 %v1932, %v2148
      %v2205 = vadd.f32 %v1933, %v2153
      %v2206 = vadd.f32 %v1934, %v2156
      %v2207 = vadd.f32 %v1935, %v2161
      %v2208 = vadd.f32 %v1936, %v2164
      %v2209 = vadd.f32 %v1937, %v2169
      %v2210 = vadd.f32 %v1938, %v2172
      %v2211 = vld [vmem:[%s315 + $0x12] sm:$0xff]
      %v2212 = vld [vmem:[%s315 + $0x1a] sm:$0xff]
      %v2213 = vld [vmem:[%s315 + $0x22] sm:$0xff]
      %v2214 = vld [vmem:[%s315 + $0x2a] sm:$0xff]
      %v2215 = vld [vmem:[%s315 + $0x32] sm:$0xff]
      %v2216 = vld [vmem:[%s315 + $0x3a] sm:$0xff]
      %v2217 = vld [vmem:[%s315 + $0x42] sm:$0xff]
      %v2218 = vld [vmem:[%s315 + $0x4a] sm:$0xff]
      %v2219 = vld [vmem:[%s315 + $0x52] sm:$0xff]
      %v2220 = vld [vmem:[%s315 + $0x5a] sm:$0xff]
      %v2221 = vld [vmem:[%s315 + $0x62] sm:$0xff]
      %v2222 = vld [vmem:[%s315 + $0x6a] sm:$0xff]
      %v2223 = vld [vmem:[%s315 + $0x72] sm:$0xff]
      %v2224 = vld [vmem:[%s315 + $0x7a] sm:$0xff]
      %v2225 = vld [vmem:[%s315 + $0x82] sm:$0xff]
      %v2226 = vld [vmem:[%s315 + $0x8a] sm:$0xff]
      %v2227 = vld [vmem:[%s315 + $0x92] sm:$0xff]
      %v2228 = vld [vmem:[%s315 + $0x9a] sm:$0xff]
      %v2229 = vld [vmem:[%s315 + $0xa2] sm:$0xff]
      %v2230 = vld [vmem:[%s315 + $0xaa] sm:$0xff]
      %v2231 = vld [vmem:[%s315 + $0xb2] sm:$0xff]
      %v2232 = vld [vmem:[%s315 + $0xba] sm:$0xff]
      %v2233 = vld [vmem:[%s315 + $0xc2] sm:$0xff]
      %v2234 = vld [vmem:[%s315 + $0xca] sm:$0xff]
      %v2235 = vld [vmem:[%s315 + $0xd2] sm:$0xff]
      %v2236 = vld [vmem:[%s315 + $0xda] sm:$0xff]
      %v2237 = vld [vmem:[%s315 + $0xe2] sm:$0xff]
      %v2238 = vld [vmem:[%s315 + $0xea] sm:$0xff]
      %v2239 = vld [vmem:[%s315 + $0xf2] sm:$0xff]
      %v2240 = vld [vmem:[%s315 + $0xfa] sm:$0xff]
      %v2241 = vld [vmem:[%s315 + $0x102] sm:$0xff]
      %v2242 = vld [vmem:[%s315 + $0x10a] sm:$0xff]
      %v2243 = vld [vmem:[%s315 + $0x112] sm:$0xff]
      %v2244 = vld [vmem:[%s315 + $0x11a] sm:$0xff]
      %v2245 = vld [vmem:[%s315 + $0x122] sm:$0xff]
      %v2246 = vld [vmem:[%s315 + $0x12a] sm:$0xff]
      %v2247 = vpack.c.bf16 %v2212, %v2211
      %v2248 = vpack.c.bf16 %v2214, %v2213
      %v2249 = vpack.c.bf16 %v2216, %v2215
      %v2250 = vpack.c.bf16 %v2218, %v2217
      %v2251 = vpack.c.bf16 %v2220, %v2219
      %v2252 = vpack.c.bf16 %v2222, %v2221
      %v2253 = vpack.c.bf16 %v2224, %v2223
      %v2254 = vpack.c.bf16 %v2226, %v2225
      %v2255 = vpack.c.bf16 %v2228, %v2227
      %v2256 = vpack.c.bf16 %v2230, %v2229
      %v2257 = vpack.c.bf16 %v2232, %v2231
      %v2258 = vpack.c.bf16 %v2234, %v2233
      %v2259 = vpack.c.bf16 %v2236, %v2235
      %v2260 = vpack.c.bf16 %v2238, %v2237
      %v2261 = vpack.c.bf16 %v2240, %v2239
      %v2262 = vpack.c.bf16 %v2242, %v2241
      %v2263 = vpack.c.bf16 %v2244, %v2243
      %v2264 = vpack.c.bf16 %v2246, %v2245
      %v2265 = vld [vmem:[%s320 + $0x12] sm:$0xff]
      %v2266 = vld [vmem:[%s320 + $0x1a] sm:$0xff]
      %v2267 = vld [vmem:[%s320 + $0x22] sm:$0xff]
      %v2268 = vld [vmem:[%s320 + $0x2a] sm:$0xff]
      %v2269 = vld [vmem:[%s320 + $0x32] sm:$0xff]
      %v2270 = vld [vmem:[%s320 + $0x3a] sm:$0xff]
      %v2271 = vld [vmem:[%s320 + $0x42] sm:$0xff]
      %v2272 = vld [vmem:[%s320 + $0x4a] sm:$0xff]
      %v2273 = vld [vmem:[%s320 + $0x52] sm:$0xff]
      %v2274 = vld [vmem:[%s320 + $0x5a] sm:$0xff]
      %v2275 = vld [vmem:[%s320 + $0x62] sm:$0xff]
      %v2276 = vld [vmem:[%s320 + $0x6a] sm:$0xff]
      %v2277 = vld [vmem:[%s320 + $0x72] sm:$0xff]
      %v2278 = vld [vmem:[%s320 + $0x7a] sm:$0xff]
      %v2279 = vld [vmem:[%s320 + $0x82] sm:$0xff]
      %v2280 = vld [vmem:[%s320 + $0x8a] sm:$0xff]
      %v2281 = vld [vmem:[%s320 + $0x92] sm:$0xff]
      %v2282 = vld [vmem:[%s320 + $0x9a] sm:$0xff]
      %v2283 = vld [vmem:[%s320 + $0xa2] sm:$0xff]
      %v2284 = vld [vmem:[%s320 + $0xaa] sm:$0xff]
      %v2285 = vld [vmem:[%s320 + $0xb2] sm:$0xff]
      %v2286 = vld [vmem:[%s320 + $0xba] sm:$0xff]
      %v2287 = vld [vmem:[%s320 + $0xc2] sm:$0xff]
      %v2288 = vld [vmem:[%s320 + $0xca] sm:$0xff]
      %v2289 = vld [vmem:[%s320 + $0xd2] sm:$0xff]
      %v2290 = vld [vmem:[%s320 + $0xda] sm:$0xff]
      %v2291 = vld [vmem:[%s320 + $0xe2] sm:$0xff]
      %v2292 = vld [vmem:[%s320 + $0xea] sm:$0xff]
      %v2293 = vld [vmem:[%s320 + $0xf2] sm:$0xff]
      %v2294 = vld [vmem:[%s320 + $0xfa] sm:$0xff]
      %v2295 = vld [vmem:[%s320 + $0x102] sm:$0xff]
      %v2296 = vld [vmem:[%s320 + $0x10a] sm:$0xff]
      %v2297 = vld [vmem:[%s320 + $0x112] sm:$0xff]
      %v2298 = vld [vmem:[%s320 + $0x11a] sm:$0xff]
      %v2299 = vld [vmem:[%s320 + $0x122] sm:$0xff]
      %v2300 = vld [vmem:[%s320 + $0x12a] sm:$0xff]
      %v2301 = vpack.c.bf16 %v2266, %v2265
      %v2302 = vpack.c.bf16 %v2268, %v2267
      %v2303 = vpack.c.bf16 %v2270, %v2269
      %v2304 = vpack.c.bf16 %v2272, %v2271
      %v2305 = vpack.c.bf16 %v2274, %v2273
      %v2306 = vpack.c.bf16 %v2276, %v2275
      %v2307 = vpack.c.bf16 %v2278, %v2277
      %v2308 = vpack.c.bf16 %v2280, %v2279
      %v2309 = vpack.c.bf16 %v2282, %v2281
      %v2310 = vpack.c.bf16 %v2284, %v2283
      %v2311 = vpack.c.bf16 %v2286, %v2285
      %v2312 = vpack.c.bf16 %v2288, %v2287
      %v2313 = vpack.c.bf16 %v2290, %v2289
      %v2314 = vpack.c.bf16 %v2292, %v2291
      %v2315 = vpack.c.bf16 %v2294, %v2293
      %v2316 = vpack.c.bf16 %v2296, %v2295
      %v2317 = vpack.c.bf16 %v2298, %v2297
      %v2318 = vpack.c.bf16 %v2300, %v2299
      %s2319 = scalar_lea.vmem %s3, 6
      %v2320 = vld [vmem:[%s2319] sm:$0x3]
      %v2322 = vsel %vm437, %v2247, 0
      %v2325 = vsel %vm437, %v2248, 0
      %v2328 = vsel %vm437, %v2249, 0
      %v2331 = vsel %vm437, %v2250, 0
      %v2334 = vsel %vm437, %v2251, 0
      %v2337 = vsel %vm437, %v2252, 0
      %v2340 = vsel %vm437, %v2253, 0
      %v2343 = vsel %vm437, %v2254, 0
      %v2346 = vsel %vm437, %v2255, 0
      %v2349 = vsel %vm437, %v2256, 0
      %v2352 = vsel %vm437, %v2257, 0
      %v2355 = vsel %vm437, %v2258, 0
      %v2358 = vsel %vm437, %v2259, 0
      %v2361 = vsel %vm437, %v2260, 0
      %v2364 = vsel %vm437, %v2261, 0
      %v2367 = vsel %vm437, %v2262, 0
      %v2370 = vsel %vm437, %v2263, 0
      %v2373 = vsel %vm437, %v2264, 0
      %v2376 = vsel %vm492, %v2320, 0
      %2378 = vmatprep.subr.bf16.mxu0 0
      %2379 = vmatpush1.bf16.msra.mxu0 %v2376
      %2380 = vmatprep.subr.bf16.mxu0 0
      %2381 = vmatpush1.bf16.msra.mxu0 0
      %2382 = vmatprep.subr.bf16.mxu0 0
      %2383 = vmatpush1.bf16.msra.mxu0 0
      %2384 = vmatprep.subr.bf16.mxu0 0
      %2385 = vmatpush1.bf16.msra.mxu0 0
      %2386 = vmatprep.subr.bf16.mxu0 0
      %2387 = vmatpush1.bf16.msra.mxu0 0
      %2388 = vmatprep.subr.bf16.mxu0 0
      %2389 = vmatpush1.bf16.msra.mxu0 0
      %2390 = vmatprep.subr.bf16.mxu0 0
      %2391 = vmatpush1.bf16.msra.mxu0 0
      %2392 = vmatprep.subr.bf16.mxu0 0
      %2393 = vmatpush1.bf16.msra.mxu0 0
      %2394 = vmatprep.subr.bf16.mxu0 0
      %2395 = vmatpush1.bf16.msra.mxu0 0
      %2396 = vmatprep.subr.bf16.mxu0 0
      %2397 = vmatpush1.bf16.msra.mxu0 0
      %2398 = vmatprep.subr.bf16.mxu0 0
      %2399 = vmatpush1.bf16.msra.mxu0 0
      %2400 = vmatprep.subr.bf16.mxu0 0
      %2401 = vmatpush1.bf16.msra.mxu0 0
      %2402 = vmatprep.subr.bf16.mxu0 0
      %2403 = vmatpush1.bf16.msra.mxu0 0
      %2404 = vmatprep.subr.bf16.mxu0 0
      %2405 = vmatpush1.bf16.msra.mxu0 0
      %2406 = vmatprep.subr.bf16.mxu0 0
      %2407 = vmatpush1.bf16.msra.mxu0 0
      %2408 = vmatprep.subr.bf16.mxu0 0
      %2409 = vmatpush1.bf16.msra.mxu0 0
      %2410 = vmatprep.mubr.bf16.mxu0 0
      %2411 = vmatmul.mubr.bf16.gmra.mrb[0].mxu0 %v2322
      %v2412 = vpop.f32.mrb[0].mxu0
      %v2413 = vadd.f32 0.0, %v2412
      %v2414 = vpop.f32.mrb[0].mxu0
      %v2415 = vpop.f32.mrb[0].mxu0
      %v2416 = vadd.f32 0.0, %v2415
      %v2417 = vpop.f32.mrb[0].mxu0
      %2418 = vmatprep.mubr.bf16.mxu0 0
      %2419 = vmatmul.mubr.bf16.gmra.mrb[0].mxu0 %v2325
      %v2420 = vpop.f32.mrb[0].mxu0
      %v2421 = vadd.f32 0.0, %v2420
      %v2422 = vpop.f32.mrb[0].mxu0
      %v2423 = vpop.f32.mrb[0].mxu0
      %v2424 = vadd.f32 0.0, %v2423
      %v2425 = vpop.f32.mrb[0].mxu0
      %2426 = vmatprep.mubr.bf16.mxu0 0
      %2427 = vmatmul.mubr.bf16.gmra.mrb[0].mxu0 %v2328
      %v2428 = vpop.f32.mrb[0].mxu0
      %v2429 = vadd.f32 0.0, %v2428
      %v2430 = vpop.f32.mrb[0].mxu0
      %v2431 = vpop.f32.mrb[0].mxu0
      %v2432 = vadd.f32 0.0, %v2431
      %v2433 = vpop.f32.mrb[0].mxu0
      %2434 = vmatprep.mubr.bf16.mxu0 0
      %2435 = vmatmul.mubr.bf16.gmra.mrb[0].mxu0 %v2331
      %v2436 = vpop.f32.mrb[0].mxu0
      %v2437 = vadd.f32 0.0, %v2436
      %v2438 = vpop.f32.mrb[0].mxu0
      %v2439 = vpop.f32.mrb[0].mxu0
      %v2440 = vadd.f32 0.0, %v2439
      %v2441 = vpop.f32.mrb[0].mxu0
      %2442 = vmatprep.mubr.bf16.mxu0 0
      %2443 = vmatmul.mubr.bf16.gmra.mrb[0].mxu0 %v2334
      %v2444 = vpop.f32.mrb[0].mxu0
      %v2445 = vadd.f32 0.0, %v2444
      %v2446 = vpop.f32.mrb[0].mxu0
      %v2447 = vpop.f32.mrb[0].mxu0
      %v2448 = vadd.f32 0.0, %v2447
      %v2449 = vpop.f32.mrb[0].mxu0
      %2450 = vmatprep.mubr.bf16.mxu0 0
      %2451 = vmatmul.mubr.bf16.gmra.mrb[0].mxu0 %v2337
      %v2452 = vpop.f32.mrb[0].mxu0
      %v2453 = vadd.f32 0.0, %v2452
      %v2454 = vpop.f32.mrb[0].mxu0
      %v2455 = vpop.f32.mrb[0].mxu0
      %v2456 = vadd.f32 0.0, %v2455
      %v2457 = vpop.f32.mrb[0].mxu0
      %2458 = vmatprep.mubr.bf16.mxu0 0
      %2459 = vmatmul.mubr.bf16.gmra.mrb[0].mxu0 %v2340
      %v2460 = vpop.f32.mrb[0].mxu0
      %v2461 = vadd.f32 0.0, %v2460
      %v2462 = vpop.f32.mrb[0].mxu0
      %v2463 = vpop.f32.mrb[0].mxu0
      %v2464 = vadd.f32 0.0, %v2463
      %v2465 = vpop.f32.mrb[0].mxu0
      %2466 = vmatprep.mubr.bf16.mxu0 0
      %2467 = vmatmul.mubr.bf16.gmra.mrb[0].mxu0 %v2343
      %v2468 = vpop.f32.mrb[0].mxu0
      %v2469 = vadd.f32 0.0, %v2468
      %v2470 = vpop.f32.mrb[0].mxu0
      %v2471 = vpop.f32.mrb[0].mxu0
      %v2472 = vadd.f32 0.0, %v2471
      %v2473 = vpop.f32.mrb[0].mxu0
      %2474 = vmatprep.mubr.bf16.mxu0 0
      %2475 = vmatmul.mubr.bf16.gmra.mrb[0].mxu0 %v2346
      %v2476 = vpop.f32.mrb[0].mxu0
      %v2477 = vadd.f32 0.0, %v2476
      %v2478 = vpop.f32.mrb[0].mxu0
      %v2479 = vpop.f32.mrb[0].mxu0
      %v2480 = vadd.f32 0.0, %v2479
      %v2481 = vpop.f32.mrb[0].mxu0
      %2482 = vmatprep.mubr.bf16.mxu0 0
      %2483 = vmatmul.mubr.bf16.gmra.mrb[0].mxu0 %v2349
      %v2484 = vpop.f32.mrb[0].mxu0
      %v2485 = vadd.f32 0.0, %v2484
      %v2486 = vpop.f32.mrb[0].mxu0
      %v2487 = vpop.f32.mrb[0].mxu0
      %v2488 = vadd.f32 0.0, %v2487
      %v2489 = vpop.f32.mrb[0].mxu0
      %2490 = vmatprep.mubr.bf16.mxu0 0
      %2491 = vmatmul.mubr.bf16.gmra.mrb[0].mxu0 %v2352
      %v2492 = vpop.f32.mrb[0].mxu0
      %v2493 = vadd.f32 0.0, %v2492
      %v2494 = vpop.f32.mrb[0].mxu0
      %v2495 = vpop.f32.mrb[0].mxu0
      %v2496 = vadd.f32 0.0, %v2495
      %v2497 = vpop.f32.mrb[0].mxu0
      %2498 = vmatprep.mubr.bf16.mxu0 0
      %2499 = vmatmul.mubr.bf16.gmra.mrb[0].mxu0 %v2355
      %v2500 = vpop.f32.mrb[0].mxu0
      %v2501 = vadd.f32 0.0, %v2500
      %v2502 = vpop.f32.mrb[0].mxu0
      %v2503 = vpop.f32.mrb[0].mxu0
      %v2504 = vadd.f32 0.0, %v2503
      %v2505 = vpop.f32.mrb[0].mxu0
      %2506 = vmatprep.mubr.bf16.mxu0 0
      %2507 = vmatmul.mubr.bf16.gmra.mrb[0].mxu0 %v2358
      %v2508 = vpop.f32.mrb[0].mxu0
      %v2509 = vadd.f32 0.0, %v2508
      %v2510 = vpop.f32.mrb[0].mxu0
      %v2511 = vpop.f32.mrb[0].mxu0
      %v2512 = vadd.f32 0.0, %v2511
      %v2513 = vpop.f32.mrb[0].mxu0
      %2514 = vmatprep.mubr.bf16.mxu0 0
      %2515 = vmatmul.mubr.bf16.gmra.mrb[0].mxu0 %v2361
      %v2516 = vpop.f32.mrb[0].mxu0
      %v2517 = vadd.f32 0.0, %v2516
      %v2518 = vpop.f32.mrb[0].mxu0
      %v2519 = vpop.f32.mrb[0].mxu0
      %v2520 = vadd.f32 0.0, %v2519
      %v2521 = vpop.f32.mrb[0].mxu0
      %2522 = vmatprep.mubr.bf16.mxu0 0
      %2523 = vmatmul.mubr.bf16.gmra.mrb[0].mxu0 %v2364
      %v2524 = vpop.f32.mrb[0].mxu0
      %v2525 = vadd.f32 0.0, %v2524
      %v2526 = vpop.f32.mrb[0].mxu0
      %v2527 = vpop.f32.mrb[0].mxu0
      %v2528 = vadd.f32 0.0, %v2527
      %v2529 = vpop.f32.mrb[0].mxu0
      %2530 = vmatprep.mubr.bf16.mxu0 0
      %2531 = vmatmul.mubr.bf16.gmra.mrb[0].mxu0 %v2367
      %v2532 = vpop.f32.mrb[0].mxu0
      %v2533 = vadd.f32 0.0, %v2532
      %v2534 = vpop.f32.mrb[0].mxu0
      %v2535 = vpop.f32.mrb[0].mxu0
      %v2536 = vadd.f32 0.0, %v2535
      %v2537 = vpop.f32.mrb[0].mxu0
      %2538 = vmatprep.mubr.bf16.mxu0 0
      %2539 = vmatmul.mubr.bf16.gmra.mrb[0].mxu0 %v2370
      %v2540 = vpop.f32.mrb[0].mxu0
      %v2541 = vadd.f32 0.0, %v2540
      %v2542 = vpop.f32.mrb[0].mxu0
      %v2543 = vpop.f32.mrb[0].mxu0
      %v2544 = vadd.f32 0.0, %v2543
      %v2545 = vpop.f32.mrb[0].mxu0
      %2546 = vmatprep.mubr.bf16.mxu0 0
      %2547 = vmatmul.mubr.bf16.gmra.mrb[0].mxu0 %v2373
      %v2548 = vpop.f32.mrb[0].mxu0
      %v2549 = vadd.f32 0.0, %v2548
      %v2550 = vpop.f32.mrb[0].mxu0
      %v2551 = vpop.f32.mrb[0].mxu0
      %v2552 = vadd.f32 0.0, %v2551
      %v2553 = vpop.f32.mrb[0].mxu0
      %2554 = vdwg.mxu0
      %v2555 = vadd.f32 %v2175, %v2413
      %v2556 = vadd.f32 %v2176, %v2416
      %v2557 = vadd.f32 %v2177, %v2421
      %v2558 = vadd.f32 %v2178, %v2424
      %v2559 = vadd.f32 %v2179, %v2429
      %v2560 = vadd.f32 %v2180, %v2432
      %v2561 = vadd.f32 %v2181, %v2437
      %v2562 = vadd.f32 %v2182, %v2440
      %v2563 = vadd.f32 %v2183, %v2445
      %v2564 = vadd.f32 %v2184, %v2448
      %v2565 = vadd.f32 %v2185, %v2453
      %v2566 = vadd.f32 %v2186, %v2456
      %v2567 = vadd.f32 %v2187, %v2461
      %v2568 = vadd.f32 %v2188, %v2464
      %v2569 = vadd.f32 %v2189, %v2469
      %v2570 = vadd.f32 %v2190, %v2472
      %v2571 = vadd.f32 %v2191, %v2477
      %v2572 = vadd.f32 %v2192, %v2480
      %v2573 = vadd.f32 %v2193, %v2485
      %v2574 = vadd.f32 %v2194, %v2488
      %v2575 = vadd.f32 %v2195, %v2493
      %v2576 = vadd.f32 %v2196, %v2496
      %v2577 = vadd.f32 %v2197, %v2501
      %v2578 = vadd.f32 %v2198, %v2504
      %v2579 = vadd.f32 %v2199, %v2509
      %v2580 = vadd.f32 %v2200, %v2512
      %v2581 = vadd.f32 %v2201, %v2517
      %v2582 = vadd.f32 %v2202, %v2520
      %v2583 = vadd.f32 %v2203, %v2525
      %v2584 = vadd.f32 %v2204, %v2528
      %v2585 = vadd.f32 %v2205, %v2533
      %v2586 = vadd.f32 %v2206, %v2536
      %v2587 = vadd.f32 %v2207, %v2541
      %v2588 = vadd.f32 %v2208, %v2544
      %v2589 = vadd.f32 %v2209, %v2549
      %v2590 = vadd.f32 %v2210, %v2552
      %s2591 = scalar_lea.vmem %s4, 6
      %v2592 = vld [vmem:[%s2591] sm:$0x3]
      %v2594 = vsel %vm437, %v2301, 0
      %v2597 = vsel %vm437, %v2302, 0
      %v2600 = vsel %vm437, %v2303, 0
      %v2603 = vsel %vm437, %v2304, 0
      %v2606 = vsel %vm437, %v2305, 0
      %v2609 = vsel %vm437, %v2306, 0
      %v2612 = vsel %vm437, %v2307, 0
      %v2615 = vsel %vm437, %v2308, 0
      %v2618 = vsel %vm437, %v2309, 0
      %v2621 = vsel %vm437, %v2310, 0
      %v2624 = vsel %vm437, %v2311, 0
      %v2627 = vsel %vm437, %v2312, 0
      %v2630 = vsel %vm437, %v2313, 0
      %v2633 = vsel %vm437, %v2314, 0
      %v2636 = vsel %vm437, %v2315, 0
      %v2639 = vsel %vm437, %v2316, 0
      %v2642 = vsel %vm437, %v2317, 0
      %v2645 = vsel %vm437, %v2318, 0
      %v2648 = vsel %vm492, %v2592, 0
      %2650 = vmatprep.subr.bf16.mxu0 0
      %2651 = vmatpush1.bf16.msra.mxu0 %v2648
      %2652 = vmatprep.subr.bf16.mxu0 0
      %2653 = vmatpush1.bf16.msra.mxu0 0
      %2654 = vmatprep.subr.bf16.mxu0 0
      %2655 = vmatpush1.bf16.msra.mxu0 0
      %2656 = vmatprep.subr.bf16.mxu0 0
      %2657 = vmatpush1.bf16.msra.mxu0 0
      %2658 = vmatprep.subr.bf16.mxu0 0
      %2659 = vmatpush1.bf16.msra.mxu0 0
      %2660 = vmatprep.subr.bf16.mxu0 0
      %2661 = vmatpush1.bf16.msra.mxu0 0
      %2662 = vmatprep.subr.bf16.mxu0 0
      %2663 = vmatpush1.bf16.msra.mxu0 0
      %2664 = vmatprep.subr.bf16.mxu0 0
      %2665 = vmatpush1.bf16.msra.mxu0 0
      %2666 = vmatprep.subr.bf16.mxu0 0
      %2667 = vmatpush1.bf16.msra.mxu0 0
      %2668 = vmatprep.subr.bf16.mxu0 0
      %2669 = vmatpush1.bf16.msra.mxu0 0
      %2670 = vmatprep.subr.bf16.mxu0 0
      %2671 = vmatpush1.bf16.msra.mxu0 0
      %2672 = vmatprep.subr.bf16.mxu0 0
      %2673 = vmatpush1.bf16.msra.mxu0 0
      %2674 = vmatprep.subr.bf16.mxu0 0
      %2675 = vmatpush1.bf16.msra.mxu0 0
      %2676 = vmatprep.subr.bf16.mxu0 0
      %2677 = vmatpush1.bf16.msra.mxu0 0
      %2678 = vmatprep.subr.bf16.mxu0 0
      %2679 = vmatpush1.bf16.msra.mxu0 0
      %2680 = vmatprep.subr.bf16.mxu0 0
      %2681 = vmatpush1.bf16.msra.mxu0 0
      %2682 = vmatprep.mubr.bf16.mxu0 0
      %2683 = vmatmul.mubr.bf16.gmra.mrb[0].mxu0 %v2594
      %v2684 = vpop.f32.mrb[0].mxu0
      %v2685 = vadd.f32 0.0, %v2684
      %v2686 = vpop.f32.mrb[0].mxu0
      %v2687 = vpop.f32.mrb[0].mxu0
      %v2688 = vadd.f32 0.0, %v2687
      %v2689 = vpop.f32.mrb[0].mxu0
      %2690 = vmatprep.mubr.bf16.mxu0 0
      %2691 = vmatmul.mubr.bf16.gmra.mrb[0].mxu0 %v2597
      %v2692 = vpop.f32.mrb[0].mxu0
      %v2693 = vadd.f32 0.0, %v2692
      %v2694 = vpop.f32.mrb[0].mxu0
      %v2695 = vpop.f32.mrb[0].mxu0
      %v2696 = vadd.f32 0.0, %v2695
      %v2697 = vpop.f32.mrb[0].mxu0
      %2698 = vmatprep.mubr.bf16.mxu0 0
      %2699 = vmatmul.mubr.bf16.gmra.mrb[0].mxu0 %v2600
      %v2700 = vpop.f32.mrb[0].mxu0
      %v2701 = vadd.f32 0.0, %v2700
      %v2702 = vpop.f32.mrb[0].mxu0
      %v2703 = vpop.f32.mrb[0].mxu0
      %v2704 = vadd.f32 0.0, %v2703
      %v2705 = vpop.f32.mrb[0].mxu0
      %2706 = vmatprep.mubr.bf16.mxu0 0
      %2707 = vmatmul.mubr.bf16.gmra.mrb[0].mxu0 %v2603
      %v2708 = vpop.f32.mrb[0].mxu0
      %v2709 = vadd.f32 0.0, %v2708
      %v2710 = vpop.f32.mrb[0].mxu0
      %v2711 = vpop.f32.mrb[0].mxu0
      %v2712 = vadd.f32 0.0, %v2711
      %v2713 = vpop.f32.mrb[0].mxu0
      %2714 = vmatprep.mubr.bf16.mxu0 0
      %2715 = vmatmul.mubr.bf16.gmra.mrb[0].mxu0 %v2606
      %v2716 = vpop.f32.mrb[0].mxu0
      %v2717 = vadd.f32 0.0, %v2716
      %v2718 = vpop.f32.mrb[0].mxu0
      %v2719 = vpop.f32.mrb[0].mxu0
      %v2720 = vadd.f32 0.0, %v2719
      %v2721 = vpop.f32.mrb[0].mxu0
      %2722 = vmatprep.mubr.bf16.mxu0 0
      %2723 = vmatmul.mubr.bf16.gmra.mrb[0].mxu0 %v2609
      %v2724 = vpop.f32.mrb[0].mxu0
      %v2725 = vadd.f32 0.0, %v2724
      %v2726 = vpop.f32.mrb[0].mxu0
      %v2727 = vpop.f32.mrb[0].mxu0
      %v2728 = vadd.f32 0.0, %v2727
      %v2729 = vpop.f32.mrb[0].mxu0
      %2730 = vmatprep.mubr.bf16.mxu0 0
      %2731 = vmatmul.mubr.bf16.gmra.mrb[0].mxu0 %v2612
      %v2732 = vpop.f32.mrb[0].mxu0
      %v2733 = vadd.f32 0.0, %v2732
      %v2734 = vpop.f32.mrb[0].mxu0
      %v2735 = vpop.f32.mrb[0].mxu0
      %v2736 = vadd.f32 0.0, %v2735
      %v2737 = vpop.f32.mrb[0].mxu0
      %2738 = vmatprep.mubr.bf16.mxu0 0
      %2739 = vmatmul.mubr.bf16.gmra.mrb[0].mxu0 %v2615
      %v2740 = vpop.f32.mrb[0].mxu0
      %v2741 = vadd.f32 0.0, %v2740
      %v2742 = vpop.f32.mrb[0].mxu0
      %v2743 = vpop.f32.mrb[0].mxu0
      %v2744 = vadd.f32 0.0, %v2743
      %v2745 = vpop.f32.mrb[0].mxu0
      %2746 = vmatprep.mubr.bf16.mxu0 0
      %2747 = vmatmul.mubr.bf16.gmra.mrb[0].mxu0 %v2618
      %v2748 = vpop.f32.mrb[0].mxu0
      %v2749 = vadd.f32 0.0, %v2748
      %v2750 = vpop.f32.mrb[0].mxu0
      %v2751 = vpop.f32.mrb[0].mxu0
      %v2752 = vadd.f32 0.0, %v2751
      %v2753 = vpop.f32.mrb[0].mxu0
      %2754 = vmatprep.mubr.bf16.mxu0 0
      %2755 = vmatmul.mubr.bf16.gmra.mrb[0].mxu0 %v2621
      %v2756 = vpop.f32.mrb[0].mxu0
      %v2757 = vadd.f32 0.0, %v2756
      %v2758 = vpop.f32.mrb[0].mxu0
      %v2759 = vpop.f32.mrb[0].mxu0
      %v2760 = vadd.f32 0.0, %v2759
      %v2761 = vpop.f32.mrb[0].mxu0
      %2762 = vmatprep.mubr.bf16.mxu0 0
      %2763 = vmatmul.mubr.bf16.gmra.mrb[0].mxu0 %v2624
      %v2764 = vpop.f32.mrb[0].mxu0
      %v2765 = vadd.f32 0.0, %v2764
      %v2766 = vpop.f32.mrb[0].mxu0
      %v2767 = vpop.f32.mrb[0].mxu0
      %v2768 = vadd.f32 0.0, %v2767
      %v2769 = vpop.f32.mrb[0].mxu0
      %2770 = vmatprep.mubr.bf16.mxu0 0
      %2771 = vmatmul.mubr.bf16.gmra.mrb[0].mxu0 %v2627
      %v2772 = vpop.f32.mrb[0].mxu0
      %v2773 = vadd.f32 0.0, %v2772
      %v2774 = vpop.f32.mrb[0].mxu0
      %v2775 = vpop.f32.mrb[0].mxu0
      %v2776 = vadd.f32 0.0, %v2775
      %v2777 = vpop.f32.mrb[0].mxu0
      %2778 = vmatprep.mubr.bf16.mxu0 0
      %2779 = vmatmul.mubr.bf16.gmra.mrb[0].mxu0 %v2630
      %v2780 = vpop.f32.mrb[0].mxu0
      %v2781 = vadd.f32 0.0, %v2780
      %v2782 = vpop.f32.mrb[0].mxu0
      %v2783 = vpop.f32.mrb[0].mxu0
      %v2784 = vadd.f32 0.0, %v2783
      %v2785 = vpop.f32.mrb[0].mxu0
      %2786 = vmatprep.mubr.bf16.mxu0 0
      %2787 = vmatmul.mubr.bf16.gmra.mrb[0].mxu0 %v2633
      %v2788 = vpop.f32.mrb[0].mxu0
      %v2789 = vadd.f32 0.0, %v2788
      %v2790 = vpop.f32.mrb[0].mxu0
      %v2791 = vpop.f32.mrb[0].mxu0
      %v2792 = vadd.f32 0.0, %v2791
      %v2793 = vpop.f32.mrb[0].mxu0
      %2794 = vmatprep.mubr.bf16.mxu0 0
      %2795 = vmatmul.mubr.bf16.gmra.mrb[0].mxu0 %v2636
      %v2796 = vpop.f32.mrb[0].mxu0
      %v2797 = vadd.f32 0.0, %v2796
      %v2798 = vpop.f32.mrb[0].mxu0
      %v2799 = vpop.f32.mrb[0].mxu0
      %v2800 = vadd.f32 0.0, %v2799
      %v2801 = vpop.f32.mrb[0].mxu0
      %2802 = vmatprep.mubr.bf16.mxu0 0
      %2803 = vmatmul.mubr.bf16.gmra.mrb[0].mxu0 %v2639
      %v2804 = vpop.f32.mrb[0].mxu0
      %v2805 = vadd.f32 0.0, %v2804
      %v2806 = vpop.f32.mrb[0].mxu0
      %v2807 = vpop.f32.mrb[0].mxu0
      %v2808 = vadd.f32 0.0, %v2807
      %v2809 = vpop.f32.mrb[0].mxu0
      %2810 = vmatprep.mubr.bf16.mxu0 0
      %2811 = vmatmul.mubr.bf16.gmra.mrb[0].mxu0 %v2642
      %v2812 = vpop.f32.mrb[0].mxu0
      %v2813 = vadd.f32 0.0, %v2812
      %v2814 = vpop.f32.mrb[0].mxu0
      %v2815 = vpop.f32.mrb[0].mxu0
      %v2816 = vadd.f32 0.0, %v2815
      %v2817 = vpop.f32.mrb[0].mxu0
      %2818 = vmatprep.mubr.bf16.mxu0 0
      %2819 = vmatmul.mubr.bf16.gmra.mrb[0].mxu0 %v2645
      %v2820 = vpop.f32.mrb[0].mxu0
      %v2821 = vadd.f32 0.0, %v2820
      %v2822 = vpop.f32.mrb[0].mxu0
      %v2823 = vpop.f32.mrb[0].mxu0
      %v2824 = vadd.f32 0.0, %v2823
      %v2825 = vpop.f32.mrb[0].mxu0
      %2826 = vdwg.mxu0
      %v2827 = vadd.f32 %v2555, %v2685
      %v2828 = vadd.f32 %v2556, %v2688
      %v2829 = vadd.f32 %v2557, %v2693
      %v2830 = vadd.f32 %v2558, %v2696
      %v2831 = vadd.f32 %v2559, %v2701
      %v2832 = vadd.f32 %v2560, %v2704
      %v2833 = vadd.f32 %v2561, %v2709
      %v2834 = vadd.f32 %v2562, %v2712
      %v2835 = vadd.f32 %v2563, %v2717
      %v2836 = vadd.f32 %v2564, %v2720
      %v2837 = vadd.f32 %v2565, %v2725
      %v2838 = vadd.f32 %v2566, %v2728
      %v2839 = vadd.f32 %v2567, %v2733
      %v2840 = vadd.f32 %v2568, %v2736
      %v2841 = vadd.f32 %v2569, %v2741
      %v2842 = vadd.f32 %v2570, %v2744
      %v2843 = vadd.f32 %v2571, %v2749
      %v2844 = vadd.f32 %v2572, %v2752
      %v2845 = vadd.f32 %v2573, %v2757
      %v2846 = vadd.f32 %v2574, %v2760
      %v2847 = vadd.f32 %v2575, %v2765
      %v2848 = vadd.f32 %v2576, %v2768
      %v2849 = vadd.f32 %v2577, %v2773
      %v2850 = vadd.f32 %v2578, %v2776
      %v2851 = vadd.f32 %v2579, %v2781
      %v2852 = vadd.f32 %v2580, %v2784
      %v2853 = vadd.f32 %v2581, %v2789
      %v2854 = vadd.f32 %v2582, %v2792
      %v2855 = vadd.f32 %v2583, %v2797
      %v2856 = vadd.f32 %v2584, %v2800
      %v2857 = vadd.f32 %v2585, %v2805
      %v2858 = vadd.f32 %v2586, %v2808
      %v2859 = vadd.f32 %v2587, %v2813
      %v2860 = vadd.f32 %v2588, %v2816
      %v2861 = vadd.f32 %v2589, %v2821
      %v2862 = vadd.f32 %v2590, %v2824
      %v2863 = vld [vmem:[%s315 + $0x13] sm:$0xff]
      %v2864 = vld [vmem:[%s315 + $0x1b] sm:$0xff]
      %v2865 = vld [vmem:[%s315 + $0x23] sm:$0xff]
      %v2866 = vld [vmem:[%s315 + $0x2b] sm:$0xff]
      %v2867 = vld [vmem:[%s315 + $0x33] sm:$0xff]
      %v2868 = vld [vmem:[%s315 + $0x3b] sm:$0xff]
      %v2869 = vld [vmem:[%s315 + $0x43] sm:$0xff]
      %v2870 = vld [vmem:[%s315 + $0x4b] sm:$0xff]
      %v2871 = vld [vmem:[%s315 + $0x53] sm:$0xff]
      %v2872 = vld [vmem:[%s315 + $0x5b] sm:$0xff]
      %v2873 = vld [vmem:[%s315 + $0x63] sm:$0xff]
      %v2874 = vld [vmem:[%s315 + $0x6b] sm:$0xff]
      %v2875 = vld [vmem:[%s315 + $0x73] sm:$0xff]
      %v2876 = vld [vmem:[%s315 + $0x7b] sm:$0xff]
      %v2877 = vld [vmem:[%s315 + $0x83] sm:$0xff]
      %v2878 = vld [vmem:[%s315 + $0x8b] sm:$0xff]
      %v2879 = vld [vmem:[%s315 + $0x93] sm:$0xff]
      %v2880 = vld [vmem:[%s315 + $0x9b] sm:$0xff]
      %v2881 = vld [vmem:[%s315 + $0xa3] sm:$0xff]
      %v2882 = vld [vmem:[%s315 + $0xab] sm:$0xff]
      %v2883 = vld [vmem:[%s315 + $0xb3] sm:$0xff]
      %v2884 = vld [vmem:[%s315 + $0xbb] sm:$0xff]
      %v2885 = vld [vmem:[%s315 + $0xc3] sm:$0xff]
      %v2886 = vld [vmem:[%s315 + $0xcb] sm:$0xff]
      %v2887 = vld [vmem:[%s315 + $0xd3] sm:$0xff]
      %v2888 = vld [vmem:[%s315 + $0xdb] sm:$0xff]
      %v2889 = vld [vmem:[%s315 + $0xe3] sm:$0xff]
      %v2890 = vld [vmem:[%s315 + $0xeb] sm:$0xff]
      %v2891 = vld [vmem:[%s315 + $0xf3] sm:$0xff]
      %v2892 = vld [vmem:[%s315 + $0xfb] sm:$0xff]
      %v2893 = vld [vmem:[%s315 + $0x103] sm:$0xff]
      %v2894 = vld [vmem:[%s315 + $0x10b] sm:$0xff]
      %v2895 = vld [vmem:[%s315 + $0x113] sm:$0xff]
      %v2896 = vld [vmem:[%s315 + $0x11b] sm:$0xff]
      %v2897 = vld [vmem:[%s315 + $0x123] sm:$0xff]
      %v2898 = vld [vmem:[%s315 + $0x12b] sm:$0xff]
      %v2899 = vpack.c.bf16 %v2864, %v2863
      %v2900 = vpack.c.bf16 %v2866, %v2865
      %v2901 = vpack.c.bf16 %v2868, %v2867
      %v2902 = vpack.c.bf16 %v2870, %v2869
      %v2903 = vpack.c.bf16 %v2872, %v2871
      %v2904 = vpack.c.bf16 %v2874, %v2873
      %v2905 = vpack.c.bf16 %v2876, %v2875
      %v2906 = vpack.c.bf16 %v2878, %v2877
      %v2907 = vpack.c.bf16 %v2880, %v2879
      %v2908 = vpack.c.bf16 %v2882, %v2881
      %v2909 = vpack.c.bf16 %v2884, %v2883
      %v2910 = vpack.c.bf16 %v2886, %v2885
      %v2911 = vpack.c.bf16 %v2888, %v2887
      %v2912 = vpack.c.bf16 %v2890, %v2889
      %v2913 = vpack.c.bf16 %v2892, %v2891
      %v2914 = vpack.c.bf16 %v2894, %v2893
      %v2915 = vpack.c.bf16 %v2896, %v2895
      %v2916 = vpack.c.bf16 %v2898, %v2897
      %v2917 = vld [vmem:[%s320 + $0x13] sm:$0xff]
      %v2918 = vld [vmem:[%s320 + $0x1b] sm:$0xff]
      %v2919 = vld [vmem:[%s320 + $0x23] sm:$0xff]
      %v2920 = vld [vmem:[%s320 + $0x2b] sm:$0xff]
      %v2921 = vld [vmem:[%s320 + $0x33] sm:$0xff]
      %v2922 = vld [vmem:[%s320 + $0x3b] sm:$0xff]
      %v2923 = vld [vmem:[%s320 + $0x43] sm:$0xff]
      %v2924 = vld [vmem:[%s320 + $0x4b] sm:$0xff]
      %v2925 = vld [vmem:[%s320 + $0x53] sm:$0xff]
      %v2926 = vld [vmem:[%s320 + $0x5b] sm:$0xff]
      %v2927 = vld [vmem:[%s320 + $0x63] sm:$0xff]
      %v2928 = vld [vmem:[%s320 + $0x6b] sm:$0xff]
      %v2929 = vld [vmem:[%s320 + $0x73] sm:$0xff]
      %v2930 = vld [vmem:[%s320 + $0x7b] sm:$0xff]
      %v2931 = vld [vmem:[%s320 + $0x83] sm:$0xff]
      %v2932 = vld [vmem:[%s320 + $0x8b] sm:$0xff]
      %v2933 = vld [vmem:[%s320 + $0x93] sm:$0xff]
      %v2934 = vld [vmem:[%s320 + $0x9b] sm:$0xff]
      %v2935 = vld [vmem:[%s320 + $0xa3] sm:$0xff]
      %v2936 = vld [vmem:[%s320 + $0xab] sm:$0xff]
      %v2937 = vld [vmem:[%s320 + $0xb3] sm:$0xff]
      %v2938 = vld [vmem:[%s320 + $0xbb] sm:$0xff]
      %v2939 = vld [vmem:[%s320 + $0xc3] sm:$0xff]
      %v2940 = vld [vmem:[%s320 + $0xcb] sm:$0xff]
      %v2941 = vld [vmem:[%s320 + $0xd3] sm:$0xff]
      %v2942 = vld [vmem:[%s320 + $0xdb] sm:$0xff]
      %v2943 = vld [vmem:[%s320 + $0xe3] sm:$0xff]
      %v2944 = vld [vmem:[%s320 + $0xeb] sm:$0xff]
      %v2945 = vld [vmem:[%s320 + $0xf3] sm:$0xff]
      %v2946 = vld [vmem:[%s320 + $0xfb] sm:$0xff]
      %v2947 = vld [vmem:[%s320 + $0x103] sm:$0xff]
      %v2948 = vld [vmem:[%s320 + $0x10b] sm:$0xff]
      %v2949 = vld [vmem:[%s320 + $0x113] sm:$0xff]
      %v2950 = vld [vmem:[%s320 + $0x11b] sm:$0xff]
      %v2951 = vld [vmem:[%s320 + $0x123] sm:$0xff]
      %v2952 = vld [vmem:[%s320 + $0x12b] sm:$0xff]
      %v2953 = vpack.c.bf16 %v2918, %v2917
      %v2954 = vpack.c.bf16 %v2920, %v2919
      %v2955 = vpack.c.bf16 %v2922, %v2921
      %v2956 = vpack.c.bf16 %v2924, %v2923
      %v2957 = vpack.c.bf16 %v2926, %v2925
      %v2958 = vpack.c.bf16 %v2928, %v2927
      %v2959 = vpack.c.bf16 %v2930, %v2929
      %v2960 = vpack.c.bf16 %v2932, %v2931
      %v2961 = vpack.c.bf16 %v2934, %v2933
      %v2962 = vpack.c.bf16 %v2936, %v2935
      %v2963 = vpack.c.bf16 %v2938, %v2937
      %v2964 = vpack.c.bf16 %v2940, %v2939
      %v2965 = vpack.c.bf16 %v2942, %v2941
      %v2966 = vpack.c.bf16 %v2944, %v2943
      %v2967 = vpack.c.bf16 %v2946, %v2945
      %v2968 = vpack.c.bf16 %v2948, %v2947
      %v2969 = vpack.c.bf16 %v2950, %v2949
      %v2970 = vpack.c.bf16 %v2952, %v2951
      %s2971 = scalar_lea.vmem %s3, 8
      %v2972 = vld [vmem:[%s2971] sm:$0x3]
      %v2974 = vsel %vm437, %v2899, 0
      %v2977 = vsel %vm437, %v2900, 0
      %v2980 = vsel %vm437, %v2901, 0
      %v2983 = vsel %vm437, %v2902, 0
      %v2986 = vsel %vm437, %v2903, 0
      %v2989 = vsel %vm437, %v2904, 0
      %v2992 = vsel %vm437, %v2905, 0
      %v2995 = vsel %vm437, %v2906, 0
      %v2998 = vsel %vm437, %v2907, 0
      %v3001 = vsel %vm437, %v2908, 0
      %v3004 = vsel %vm437, %v2909, 0
      %v3007 = vsel %vm437, %v2910, 0
      %v3010 = vsel %vm437, %v2911, 0
      %v3013 = vsel %vm437, %v2912, 0
      %v3016 = vsel %vm437, %v2913, 0
      %v3019 = vsel %vm437, %v2914, 0
      %v3022 = vsel %vm437, %v2915, 0
      %v3025 = vsel %vm437, %v2916, 0
      %v3028 = vsel %vm492, %v2972, 0
      %3030 = vmatprep.subr.bf16.mxu0 0
      %3031 = vmatpush1.bf16.msra.mxu0 %v3028
      %3032 = vmatprep.subr.bf16.mxu0 0
      %3033 = vmatpush1.bf16.msra.mxu0 0
      %3034 = vmatprep.subr.bf16.mxu0 0
      %3035 = vmatpush1.bf16.msra.mxu0 0
      %3036 = vmatprep.subr.bf16.mxu0 0
      %3037 = vmatpush1.bf16.msra.mxu0 0
      %3038 = vmatprep.subr.bf16.mxu0 0
      %3039 = vmatpush1.bf16.msra.mxu0 0
      %3040 = vmatprep.subr.bf16.mxu0 0
      %3041 = vmatpush1.bf16.msra.mxu0 0
      %3042 = vmatprep.subr.bf16.mxu0 0
      %3043 = vmatpush1.bf16.msra.mxu0 0
      %3044 = vmatprep.subr.bf16.mxu0 0
      %3045 = vmatpush1.bf16.msra.mxu0 0
      %3046 = vmatprep.subr.bf16.mxu0 0
      %3047 = vmatpush1.bf16.msra.mxu0 0
      %3048 = vmatprep.subr.bf16.mxu0 0
      %3049 = vmatpush1.bf16.msra.mxu0 0
      %3050 = vmatprep.subr.bf16.mxu0 0
      %3051 = vmatpush1.bf16.msra.mxu0 0
      %3052 = vmatprep.subr.bf16.mxu0 0
      %3053 = vmatpush1.bf16.msra.mxu0 0
      %3054 = vmatprep.subr.bf16.mxu0 0
      %3055 = vmatpush1.bf16.msra.mxu0 0
      %3056 = vmatprep.subr.bf16.mxu0 0
      %3057 = vmatpush1.bf16.msra.mxu0 0
      %3058 = vmatprep.subr.bf16.mxu0 0
      %3059 = vmatpush1.bf16.msra.mxu0 0
      %3060 = vmatprep.subr.bf16.mxu0 0
      %3061 = vmatpush1.bf16.msra.mxu0 0
      %3062 = vmatprep.mubr.bf16.mxu0 0
      %3063 = vmatmul.mubr.bf16.gmra.mrb[0].mxu0 %v2974
      %v3064 = vpop.f32.mrb[0].mxu0
      %v3065 = vadd.f32 0.0, %v3064
      %v3066 = vpop.f32.mrb[0].mxu0
      %v3067 = vpop.f32.mrb[0].mxu0
      %v3068 = vadd.f32 0.0, %v3067
      %v3069 = vpop.f32.mrb[0].mxu0
      %3070 = vmatprep.mubr.bf16.mxu0 0
      %3071 = vmatmul.mubr.bf16.gmra.mrb[0].mxu0 %v2977
      %v3072 = vpop.f32.mrb[0].mxu0
      %v3073 = vadd.f32 0.0, %v3072
      %v3074 = vpop.f32.mrb[0].mxu0
      %v3075 = vpop.f32.mrb[0].mxu0
      %v3076 = vadd.f32 0.0, %v3075
      %v3077 = vpop.f32.mrb[0].mxu0
      %3078 = vmatprep.mubr.bf16.mxu0 0
      %3079 = vmatmul.mubr.bf16.gmra.mrb[0].mxu0 %v2980
      %v3080 = vpop.f32.mrb[0].mxu0
      %v3081 = vadd.f32 0.0, %v3080
      %v3082 = vpop.f32.mrb[0].mxu0
      %v3083 = vpop.f32.mrb[0].mxu0
      %v3084 = vadd.f32 0.0, %v3083
      %v3085 = vpop.f32.mrb[0].mxu0
      %3086 = vmatprep.mubr.bf16.mxu0 0
      %3087 = vmatmul.mubr.bf16.gmra.mrb[0].mxu0 %v2983
      %v3088 = vpop.f32.mrb[0].mxu0
      %v3089 = vadd.f32 0.0, %v3088
      %v3090 = vpop.f32.mrb[0].mxu0
      %v3091 = vpop.f32.mrb[0].mxu0
      %v3092 = vadd.f32 0.0, %v3091
      %v3093 = vpop.f32.mrb[0].mxu0
      %3094 = vmatprep.mubr.bf16.mxu0 0
      %3095 = vmatmul.mubr.bf16.gmra.mrb[0].mxu0 %v2986
      %v3096 = vpop.f32.mrb[0].mxu0
      %v3097 = vadd.f32 0.0, %v3096
      %v3098 = vpop.f32.mrb[0].mxu0
      %v3099 = vpop.f32.mrb[0].mxu0
      %v3100 = vadd.f32 0.0, %v3099
      %v3101 = vpop.f32.mrb[0].mxu0
      %3102 = vmatprep.mubr.bf16.mxu0 0
      %3103 = vmatmul.mubr.bf16.gmra.mrb[0].mxu0 %v2989
      %v3104 = vpop.f32.mrb[0].mxu0
      %v3105 = vadd.f32 0.0, %v3104
      %v3106 = vpop.f32.mrb[0].mxu0
      %v3107 = vpop.f32.mrb[0].mxu0
      %v3108 = vadd.f32 0.0, %v3107
      %v3109 = vpop.f32.mrb[0].mxu0
      %3110 = vmatprep.mubr.bf16.mxu0 0
      %3111 = vmatmul.mubr.bf16.gmra.mrb[0].mxu0 %v2992
      %v3112 = vpop.f32.mrb[0].mxu0
      %v3113 = vadd.f32 0.0, %v3112
      %v3114 = vpop.f32.mrb[0].mxu0
      %v3115 = vpop.f32.mrb[0].mxu0
      %v3116 = vadd.f32 0.0, %v3115
      %v3117 = vpop.f32.mrb[0].mxu0
      %3118 = vmatprep.mubr.bf16.mxu0 0
      %3119 = vmatmul.mubr.bf16.gmra.mrb[0].mxu0 %v2995
      %v3120 = vpop.f32.mrb[0].mxu0
      %v3121 = vadd.f32 0.0, %v3120
      %v3122 = vpop.f32.mrb[0].mxu0
      %v3123 = vpop.f32.mrb[0].mxu0
      %v3124 = vadd.f32 0.0, %v3123
      %v3125 = vpop.f32.mrb[0].mxu0
      %3126 = vmatprep.mubr.bf16.mxu0 0
      %3127 = vmatmul.mubr.bf16.gmra.mrb[0].mxu0 %v2998
      %v3128 = vpop.f32.mrb[0].mxu0
      %v3129 = vadd.f32 0.0, %v3128
      %v3130 = vpop.f32.mrb[0].mxu0
      %v3131 = vpop.f32.mrb[0].mxu0
      %v3132 = vadd.f32 0.0, %v3131
      %v3133 = vpop.f32.mrb[0].mxu0
      %3134 = vmatprep.mubr.bf16.mxu0 0
      %3135 = vmatmul.mubr.bf16.gmra.mrb[0].mxu0 %v3001
      %v3136 = vpop.f32.mrb[0].mxu0
      %v3137 = vadd.f32 0.0, %v3136
      %v3138 = vpop.f32.mrb[0].mxu0
      %v3139 = vpop.f32.mrb[0].mxu0
      %v3140 = vadd.f32 0.0, %v3139
      %v3141 = vpop.f32.mrb[0].mxu0
      %3142 = vmatprep.mubr.bf16.mxu0 0
      %3143 = vmatmul.mubr.bf16.gmra.mrb[0].mxu0 %v3004
      %v3144 = vpop.f32.mrb[0].mxu0
      %v3145 = vadd.f32 0.0, %v3144
      %v3146 = vpop.f32.mrb[0].mxu0
      %v3147 = vpop.f32.mrb[0].mxu0
      %v3148 = vadd.f32 0.0, %v3147
      %v3149 = vpop.f32.mrb[0].mxu0
      %3150 = vmatprep.mubr.bf16.mxu0 0
      %3151 = vmatmul.mubr.bf16.gmra.mrb[0].mxu0 %v3007
      %v3152 = vpop.f32.mrb[0].mxu0
      %v3153 = vadd.f32 0.0, %v3152
      %v3154 = vpop.f32.mrb[0].mxu0
      %v3155 = vpop.f32.mrb[0].mxu0
      %v3156 = vadd.f32 0.0, %v3155
      %v3157 = vpop.f32.mrb[0].mxu0
      %3158 = vmatprep.mubr.bf16.mxu0 0
      %3159 = vmatmul.mubr.bf16.gmra.mrb[0].mxu0 %v3010
      %v3160 = vpop.f32.mrb[0].mxu0
      %v3161 = vadd.f32 0.0, %v3160
      %v3162 = vpop.f32.mrb[0].mxu0
      %v3163 = vpop.f32.mrb[0].mxu0
      %v3164 = vadd.f32 0.0, %v3163
      %v3165 = vpop.f32.mrb[0].mxu0
      %3166 = vmatprep.mubr.bf16.mxu0 0
      %3167 = vmatmul.mubr.bf16.gmra.mrb[0].mxu0 %v3013
      %v3168 = vpop.f32.mrb[0].mxu0
      %v3169 = vadd.f32 0.0, %v3168
      %v3170 = vpop.f32.mrb[0].mxu0
      %v3171 = vpop.f32.mrb[0].mxu0
      %v3172 = vadd.f32 0.0, %v3171
      %v3173 = vpop.f32.mrb[0].mxu0
      %3174 = vmatprep.mubr.bf16.mxu0 0
      %3175 = vmatmul.mubr.bf16.gmra.mrb[0].mxu0 %v3016
      %v3176 = vpop.f32.mrb[0].mxu0
      %v3177 = vadd.f32 0.0, %v3176
      %v3178 = vpop.f32.mrb[0].mxu0
      %v3179 = vpop.f32.mrb[0].mxu0
      %v3180 = vadd.f32 0.0, %v3179
      %v3181 = vpop.f32.mrb[0].mxu0
      %3182 = vmatprep.mubr.bf16.mxu0 0
      %3183 = vmatmul.mubr.bf16.gmra.mrb[0].mxu0 %v3019
      %v3184 = vpop.f32.mrb[0].mxu0
      %v3185 = vadd.f32 0.0, %v3184
      %v3186 = vpop.f32.mrb[0].mxu0
      %v3187 = vpop.f32.mrb[0].mxu0
      %v3188 = vadd.f32 0.0, %v3187
      %v3189 = vpop.f32.mrb[0].mxu0
      %3190 = vmatprep.mubr.bf16.mxu0 0
      %3191 = vmatmul.mubr.bf16.gmra.mrb[0].mxu0 %v3022
      %v3192 = vpop.f32.mrb[0].mxu0
      %v3193 = vadd.f32 0.0, %v3192
      %v3194 = vpop.f32.mrb[0].mxu0
      %v3195 = vpop.f32.mrb[0].mxu0
      %v3196 = vadd.f32 0.0, %v3195
      %v3197 = vpop.f32.mrb[0].mxu0
      %3198 = vmatprep.mubr.bf16.mxu0 0
      %3199 = vmatmul.mubr.bf16.gmra.mrb[0].mxu0 %v3025
      %v3200 = vpop.f32.mrb[0].mxu0
      %v3201 = vadd.f32 0.0, %v3200
      %v3202 = vpop.f32.mrb[0].mxu0
      %v3203 = vpop.f32.mrb[0].mxu0
      %v3204 = vadd.f32 0.0, %v3203
      %v3205 = vpop.f32.mrb[0].mxu0
      %3206 = vdwg.mxu0
      %v3207 = vadd.f32 %v2827, %v3065
      %v3208 = vadd.f32 %v2828, %v3068
      %v3209 = vadd.f32 %v2829, %v3073
      %v3210 = vadd.f32 %v2830, %v3076
      %v3211 = vadd.f32 %v2831, %v3081
      %v3212 = vadd.f32 %v2832, %v3084
      %v3213 = vadd.f32 %v2833, %v3089
      %v3214 = vadd.f32 %v2834, %v3092
      %v3215 = vadd.f32 %v2835, %v3097
      %v3216 = vadd.f32 %v2836, %v3100
      %v3217 = vadd.f32 %v2837, %v3105
      %v3218 = vadd.f32 %v2838, %v3108
      %v3219 = vadd.f32 %v2839, %v3113
      %v3220 = vadd.f32 %v2840, %v3116
      %v3221 = vadd.f32 %v2841, %v3121
      %v3222 = vadd.f32 %v2842, %v3124
      %v3223 = vadd.f32 %v2843, %v3129
      %v3224 = vadd.f32 %v2844, %v3132
      %v3225 = vadd.f32 %v2845, %v3137
      %v3226 = vadd.f32 %v2846, %v3140
      %v3227 = vadd.f32 %v2847, %v3145
      %v3228 = vadd.f32 %v2848, %v3148
      %v3229 = vadd.f32 %v2849, %v3153
      %v3230 = vadd.f32 %v2850, %v3156
      %v3231 = vadd.f32 %v2851, %v3161
      %v3232 = vadd.f32 %v2852, %v3164
      %v3233 = vadd.f32 %v2853, %v3169
      %v3234 = vadd.f32 %v2854, %v3172
      %v3235 = vadd.f32 %v2855, %v3177
      %v3236 = vadd.f32 %v2856, %v3180
      %v3237 = vadd.f32 %v2857, %v3185
      %v3238 = vadd.f32 %v2858, %v3188
      %v3239 = vadd.f32 %v2859, %v3193
      %v3240 = vadd.f32 %v2860, %v3196
      %v3241 = vadd.f32 %v2861, %v3201
      %v3242 = vadd.f32 %v2862, %v3204
      %s3243 = scalar_lea.vmem %s4, 8
      %v3244 = vld [vmem:[%s3243] sm:$0x3]
      %v3246 = vsel %vm437, %v2953, 0
      %v3249 = vsel %vm437, %v2954, 0
      %v3252 = vsel %vm437, %v2955, 0
      %v3255 = vsel %vm437, %v2956, 0
      %v3258 = vsel %vm437, %v2957, 0
      %v3261 = vsel %vm437, %v2958, 0
      %v3264 = vsel %vm437, %v2959, 0
      %v3267 = vsel %vm437, %v2960, 0
      %v3270 = vsel %vm437, %v2961, 0
      %v3273 = vsel %vm437, %v2962, 0
      %v3276 = vsel %vm437, %v2963, 0
      %v3279 = vsel %vm437, %v2964, 0
      %v3282 = vsel %vm437, %v2965, 0
      %v3285 = vsel %vm437, %v2966, 0
      %v3288 = vsel %vm437, %v2967, 0
      %v3291 = vsel %vm437, %v2968, 0
      %v3294 = vsel %vm437, %v2969, 0
      %v3297 = vsel %vm437, %v2970, 0
      %v3300 = vsel %vm492, %v3244, 0
      %3302 = vmatprep.subr.bf16.mxu0 0
      %3303 = vmatpush1.bf16.msra.mxu0 %v3300
      %3304 = vmatprep.subr.bf16.mxu0 0
      %3305 = vmatpush1.bf16.msra.mxu0 0
      %3306 = vmatprep.subr.bf16.mxu0 0
      %3307 = vmatpush1.bf16.msra.mxu0 0
      %3308 = vmatprep.subr.bf16.mxu0 0
      %3309 = vmatpush1.bf16.msra.mxu0 0
      %3310 = vmatprep.subr.bf16.mxu0 0
      %3311 = vmatpush1.bf16.msra.mxu0 0
      %3312 = vmatprep.subr.bf16.mxu0 0
      %3313 = vmatpush1.bf16.msra.mxu0 0
      %3314 = vmatprep.subr.bf16.mxu0 0
      %3315 = vmatpush1.bf16.msra.mxu0 0
      %3316 = vmatprep.subr.bf16.mxu0 0
      %3317 = vmatpush1.bf16.msra.mxu0 0
      %3318 = vmatprep.subr.bf16.mxu0 0
      %3319 = vmatpush1.bf16.msra.mxu0 0
      %3320 = vmatprep.subr.bf16.mxu0 0
      %3321 = vmatpush1.bf16.msra.mxu0 0
      %3322 = vmatprep.subr.bf16.mxu0 0
      %3323 = vmatpush1.bf16.msra.mxu0 0
      %3324 = vmatprep.subr.bf16.mxu0 0
      %3325 = vmatpush1.bf16.msra.mxu0 0
      %3326 = vmatprep.subr.bf16.mxu0 0
      %3327 = vmatpush1.bf16.msra.mxu0 0
      %3328 = vmatprep.subr.bf16.mxu0 0
      %3329 = vmatpush1.bf16.msra.mxu0 0
      %3330 = vmatprep.subr.bf16.mxu0 0
      %3331 = vmatpush1.bf16.msra.mxu0 0
      %3332 = vmatprep.subr.bf16.mxu0 0
      %3333 = vmatpush1.bf16.msra.mxu0 0
      %3334 = vmatprep.mubr.bf16.mxu0 0
      %3335 = vmatmul.mubr.bf16.gmra.mrb[0].mxu0 %v3246
      %v3336 = vpop.f32.mrb[0].mxu0
      %v3337 = vadd.f32 0.0, %v3336
      %v3338 = vpop.f32.mrb[0].mxu0
      %v3339 = vpop.f32.mrb[0].mxu0
      %v3340 = vadd.f32 0.0, %v3339
      %v3341 = vpop.f32.mrb[0].mxu0
      %3342 = vmatprep.mubr.bf16.mxu0 0
      %3343 = vmatmul.mubr.bf16.gmra.mrb[0].mxu0 %v3249
      %v3344 = vpop.f32.mrb[0].mxu0
      %v3345 = vadd.f32 0.0, %v3344
      %v3346 = vpop.f32.mrb[0].mxu0
      %v3347 = vpop.f32.mrb[0].mxu0
      %v3348 = vadd.f32 0.0, %v3347
      %v3349 = vpop.f32.mrb[0].mxu0
      %3350 = vmatprep.mubr.bf16.mxu0 0
      %3351 = vmatmul.mubr.bf16.gmra.mrb[0].mxu0 %v3252
      %v3352 = vpop.f32.mrb[0].mxu0
      %v3353 = vadd.f32 0.0, %v3352
      %v3354 = vpop.f32.mrb[0].mxu0
      %v3355 = vpop.f32.mrb[0].mxu0
      %v3356 = vadd.f32 0.0, %v3355
      %v3357 = vpop.f32.mrb[0].mxu0
      %3358 = vmatprep.mubr.bf16.mxu0 0
      %3359 = vmatmul.mubr.bf16.gmra.mrb[0].mxu0 %v3255
      %v3360 = vpop.f32.mrb[0].mxu0
      %v3361 = vadd.f32 0.0, %v3360
      %v3362 = vpop.f32.mrb[0].mxu0
      %v3363 = vpop.f32.mrb[0].mxu0
      %v3364 = vadd.f32 0.0, %v3363
      %v3365 = vpop.f32.mrb[0].mxu0
      %3366 = vmatprep.mubr.bf16.mxu0 0
      %3367 = vmatmul.mubr.bf16.gmra.mrb[0].mxu0 %v3258
      %v3368 = vpop.f32.mrb[0].mxu0
      %v3369 = vadd.f32 0.0, %v3368
      %v3370 = vpop.f32.mrb[0].mxu0
      %v3371 = vpop.f32.mrb[0].mxu0
      %v3372 = vadd.f32 0.0, %v3371
      %v3373 = vpop.f32.mrb[0].mxu0
      %3374 = vmatprep.mubr.bf16.mxu0 0
      %3375 = vmatmul.mubr.bf16.gmra.mrb[0].mxu0 %v3261
      %v3376 = vpop.f32.mrb[0].mxu0
      %v3377 = vadd.f32 0.0, %v3376
      %v3378 = vpop.f32.mrb[0].mxu0
      %v3379 = vpop.f32.mrb[0].mxu0
      %v3380 = vadd.f32 0.0, %v3379
      %v3381 = vpop.f32.mrb[0].mxu0
      %3382 = vmatprep.mubr.bf16.mxu0 0
      %3383 = vmatmul.mubr.bf16.gmra.mrb[0].mxu0 %v3264
      %v3384 = vpop.f32.mrb[0].mxu0
      %v3385 = vadd.f32 0.0, %v3384
      %v3386 = vpop.f32.mrb[0].mxu0
      %v3387 = vpop.f32.mrb[0].mxu0
      %v3388 = vadd.f32 0.0, %v3387
      %v3389 = vpop.f32.mrb[0].mxu0
      %3390 = vmatprep.mubr.bf16.mxu0 0
      %3391 = vmatmul.mubr.bf16.gmra.mrb[0].mxu0 %v3267
      %v3392 = vpop.f32.mrb[0].mxu0
      %v3393 = vadd.f32 0.0, %v3392
      %v3394 = vpop.f32.mrb[0].mxu0
      %v3395 = vpop.f32.mrb[0].mxu0
      %v3396 = vadd.f32 0.0, %v3395
      %v3397 = vpop.f32.mrb[0].mxu0
      %3398 = vmatprep.mubr.bf16.mxu0 0
      %3399 = vmatmul.mubr.bf16.gmra.mrb[0].mxu0 %v3270
      %v3400 = vpop.f32.mrb[0].mxu0
      %v3401 = vadd.f32 0.0, %v3400
      %v3402 = vpop.f32.mrb[0].mxu0
      %v3403 = vpop.f32.mrb[0].mxu0
      %v3404 = vadd.f32 0.0, %v3403
      %v3405 = vpop.f32.mrb[0].mxu0
      %3406 = vmatprep.mubr.bf16.mxu0 0
      %3407 = vmatmul.mubr.bf16.gmra.mrb[0].mxu0 %v3273
      %v3408 = vpop.f32.mrb[0].mxu0
      %v3409 = vadd.f32 0.0, %v3408
      %v3410 = vpop.f32.mrb[0].mxu0
      %v3411 = vpop.f32.mrb[0].mxu0
      %v3412 = vadd.f32 0.0, %v3411
      %v3413 = vpop.f32.mrb[0].mxu0
      %3414 = vmatprep.mubr.bf16.mxu0 0
      %3415 = vmatmul.mubr.bf16.gmra.mrb[0].mxu0 %v3276
      %v3416 = vpop.f32.mrb[0].mxu0
      %v3417 = vadd.f32 0.0, %v3416
      %v3418 = vpop.f32.mrb[0].mxu0
      %v3419 = vpop.f32.mrb[0].mxu0
      %v3420 = vadd.f32 0.0, %v3419
      %v3421 = vpop.f32.mrb[0].mxu0
      %3422 = vmatprep.mubr.bf16.mxu0 0
      %3423 = vmatmul.mubr.bf16.gmra.mrb[0].mxu0 %v3279
      %v3424 = vpop.f32.mrb[0].mxu0
      %v3425 = vadd.f32 0.0, %v3424
      %v3426 = vpop.f32.mrb[0].mxu0
      %v3427 = vpop.f32.mrb[0].mxu0
      %v3428 = vadd.f32 0.0, %v3427
      %v3429 = vpop.f32.mrb[0].mxu0
      %3430 = vmatprep.mubr.bf16.mxu0 0
      %3431 = vmatmul.mubr.bf16.gmra.mrb[0].mxu0 %v3282
      %v3432 = vpop.f32.mrb[0].mxu0
      %v3433 = vadd.f32 0.0, %v3432
      %v3434 = vpop.f32.mrb[0].mxu0
      %v3435 = vpop.f32.mrb[0].mxu0
      %v3436 = vadd.f32 0.0, %v3435
      %v3437 = vpop.f32.mrb[0].mxu0
      %3438 = vmatprep.mubr.bf16.mxu0 0
      %3439 = vmatmul.mubr.bf16.gmra.mrb[0].mxu0 %v3285
      %v3440 = vpop.f32.mrb[0].mxu0
      %v3441 = vadd.f32 0.0, %v3440
      %v3442 = vpop.f32.mrb[0].mxu0
      %v3443 = vpop.f32.mrb[0].mxu0
      %v3444 = vadd.f32 0.0, %v3443
      %v3445 = vpop.f32.mrb[0].mxu0
      %3446 = vmatprep.mubr.bf16.mxu0 0
      %3447 = vmatmul.mubr.bf16.gmra.mrb[0].mxu0 %v3288
      %v3448 = vpop.f32.mrb[0].mxu0
      %v3449 = vadd.f32 0.0, %v3448
      %v3450 = vpop.f32.mrb[0].mxu0
      %v3451 = vpop.f32.mrb[0].mxu0
      %v3452 = vadd.f32 0.0, %v3451
      %v3453 = vpop.f32.mrb[0].mxu0
      %3454 = vmatprep.mubr.bf16.mxu0 0
      %3455 = vmatmul.mubr.bf16.gmra.mrb[0].mxu0 %v3291
      %v3456 = vpop.f32.mrb[0].mxu0
      %v3457 = vadd.f32 0.0, %v3456
      %v3458 = vpop.f32.mrb[0].mxu0
      %v3459 = vpop.f32.mrb[0].mxu0
      %v3460 = vadd.f32 0.0, %v3459
      %v3461 = vpop.f32.mrb[0].mxu0
      %3462 = vmatprep.mubr.bf16.mxu0 0
      %3463 = vmatmul.mubr.bf16.gmra.mrb[0].mxu0 %v3294
      %v3464 = vpop.f32.mrb[0].mxu0
      %v3465 = vadd.f32 0.0, %v3464
      %v3466 = vpop.f32.mrb[0].mxu0
      %v3467 = vpop.f32.mrb[0].mxu0
      %v3468 = vadd.f32 0.0, %v3467
      %v3469 = vpop.f32.mrb[0].mxu0
      %3470 = vmatprep.mubr.bf16.mxu0 0
      %3471 = vmatmul.mubr.bf16.gmra.mrb[0].mxu0 %v3297
      %v3472 = vpop.f32.mrb[0].mxu0
      %v3473 = vadd.f32 0.0, %v3472
      %v3474 = vpop.f32.mrb[0].mxu0
      %v3475 = vpop.f32.mrb[0].mxu0
      %v3476 = vadd.f32 0.0, %v3475
      %v3477 = vpop.f32.mrb[0].mxu0
      %3478 = vdwg.mxu0
      %v3479 = vadd.f32 %v3207, %v3337
      %v3480 = vadd.f32 %v3208, %v3340
      %v3481 = vadd.f32 %v3209, %v3345
      %v3482 = vadd.f32 %v3210, %v3348
      %v3483 = vadd.f32 %v3211, %v3353
      %v3484 = vadd.f32 %v3212, %v3356
      %v3485 = vadd.f32 %v3213, %v3361
      %v3486 = vadd.f32 %v3214, %v3364
      %v3487 = vadd.f32 %v3215, %v3369
      %v3488 = vadd.f32 %v3216, %v3372
      %v3489 = vadd.f32 %v3217, %v3377
      %v3490 = vadd.f32 %v3218, %v3380
      %v3491 = vadd.f32 %v3219, %v3385
      %v3492 = vadd.f32 %v3220, %v3388
      %v3493 = vadd.f32 %v3221, %v3393
      %v3494 = vadd.f32 %v3222, %v3396
      %v3495 = vadd.f32 %v3223, %v3401
      %v3496 = vadd.f32 %v3224, %v3404
      %v3497 = vadd.f32 %v3225, %v3409
      %v3498 = vadd.f32 %v3226, %v3412
      %v3499 = vadd.f32 %v3227, %v3417
      %v3500 = vadd.f32 %v3228, %v3420
      %v3501 = vadd.f32 %v3229, %v3425
      %v3502 = vadd.f32 %v3230, %v3428
      %v3503 = vadd.f32 %v3231, %v3433
      %v3504 = vadd.f32 %v3232, %v3436
      %v3505 = vadd.f32 %v3233, %v3441
      %v3506 = vadd.f32 %v3234, %v3444
      %v3507 = vadd.f32 %v3235, %v3449
      %v3508 = vadd.f32 %v3236, %v3452
      %v3509 = vadd.f32 %v3237, %v3457
      %v3510 = vadd.f32 %v3238, %v3460
      %v3511 = vadd.f32 %v3239, %v3465
      %v3512 = vadd.f32 %v3240, %v3468
      %v3513 = vadd.f32 %v3241, %v3473
      %v3514 = vadd.f32 %v3242, %v3476
      %v3515 = vld [vmem:[%s315 + $0x14] sm:$0xff]
      %v3516 = vld [vmem:[%s315 + $0x1c] sm:$0xff]
      %v3517 = vld [vmem:[%s315 + $0x24] sm:$0xff]
      %v3518 = vld [vmem:[%s315 + $0x2c] sm:$0xff]
      %v3519 = vld [vmem:[%s315 + $0x34] sm:$0xff]
      %v3520 = vld [vmem:[%s315 + $0x3c] sm:$0xff]
      %v3521 = vld [vmem:[%s315 + $0x44] sm:$0xff]
      %v3522 = vld [vmem:[%s315 + $0x4c] sm:$0xff]
      %v3523 = vld [vmem:[%s315 + $0x54] sm:$0xff]
      %v3524 = vld [vmem:[%s315 + $0x5c] sm:$0xff]
      %v3525 = vld [vmem:[%s315 + $0x64] sm:$0xff]
      %v3526 = vld [vmem:[%s315 + $0x6c] sm:$0xff]
      %v3527 = vld [vmem:[%s315 + $0x74] sm:$0xff]
      %v3528 = vld [vmem:[%s315 + $0x7c] sm:$0xff]
      %v3529 = vld [vmem:[%s315 + $0x84] sm:$0xff]
      %v3530 = vld [vmem:[%s315 + $0x8c] sm:$0xff]
      %v3531 = vld [vmem:[%s315 + $0x94] sm:$0xff]
      %v3532 = vld [vmem:[%s315 + $0x9c] sm:$0xff]
      %v3533 = vld [vmem:[%s315 + $0xa4] sm:$0xff]
      %v3534 = vld [vmem:[%s315 + $0xac] sm:$0xff]
      %v3535 = vld [vmem:[%s315 + $0xb4] sm:$0xff]
      %v3536 = vld [vmem:[%s315 + $0xbc] sm:$0xff]
      %v3537 = vld [vmem:[%s315 + $0xc4] sm:$0xff]
      %v3538 = vld [vmem:[%s315 + $0xcc] sm:$0xff]
      %v3539 = vld [vmem:[%s315 + $0xd4] sm:$0xff]
      %v3540 = vld [vmem:[%s315 + $0xdc] sm:$0xff]
      %v3541 = vld [vmem:[%s315 + $0xe4] sm:$0xff]
      %v3542 = vld [vmem:[%s315 + $0xec] sm:$0xff]
      %v3543 = vld [vmem:[%s315 + $0xf4] sm:$0xff]
      %v3544 = vld [vmem:[%s315 + $0xfc] sm:$0xff]
      %v3545 = vld [vmem:[%s315 + $0x104] sm:$0xff]
      %v3546 = vld [vmem:[%s315 + $0x10c] sm:$0xff]
      %v3547 = vld [vmem:[%s315 + $0x114] sm:$0xff]
      %v3548 = vld [vmem:[%s315 + $0x11c] sm:$0xff]
      %v3549 = vld [vmem:[%s315 + $0x124] sm:$0xff]
      %v3550 = vld [vmem:[%s315 + $0x12c] sm:$0xff]
      %v3551 = vpack.c.bf16 %v3516, %v3515
      %v3552 = vpack.c.bf16 %v3518, %v3517
      %v3553 = vpack.c.bf16 %v3520, %v3519
      %v3554 = vpack.c.bf16 %v3522, %v3521
      %v3555 = vpack.c.bf16 %v3524, %v3523
      %v3556 = vpack.c.bf16 %v3526, %v3525
      %v3557 = vpack.c.bf16 %v3528, %v3527
      %v3558 = vpack.c.bf16 %v3530, %v3529
      %v3559 = vpack.c.bf16 %v3532, %v3531
      %v3560 = vpack.c.bf16 %v3534, %v3533
      %v3561 = vpack.c.bf16 %v3536, %v3535
      %v3562 = vpack.c.bf16 %v3538, %v3537
      %v3563 = vpack.c.bf16 %v3540, %v3539
      %v3564 = vpack.c.bf16 %v3542, %v3541
      %v3565 = vpack.c.bf16 %v3544, %v3543
      %v3566 = vpack.c.bf16 %v3546, %v3545
      %v3567 = vpack.c.bf16 %v3548, %v3547
      %v3568 = vpack.c.bf16 %v3550, %v3549
      %v3569 = vld [vmem:[%s320 + $0x14] sm:$0xff]
      %v3570 = vld [vmem:[%s320 + $0x1c] sm:$0xff]
      %v3571 = vld [vmem:[%s320 + $0x24] sm:$0xff]
      %v3572 = vld [vmem:[%s320 + $0x2c] sm:$0xff]
      %v3573 = vld [vmem:[%s320 + $0x34] sm:$0xff]
      %v3574 = vld [vmem:[%s320 + $0x3c] sm:$0xff]
      %v3575 = vld [vmem:[%s320 + $0x44] sm:$0xff]
      %v3576 = vld [vmem:[%s320 + $0x4c] sm:$0xff]
      %v3577 = vld [vmem:[%s320 + $0x54] sm:$0xff]
      %v3578 = vld [vmem:[%s320 + $0x5c] sm:$0xff]
      %v3579 = vld [vmem:[%s320 + $0x64] sm:$0xff]
      %v3580 = vld [vmem:[%s320 + $0x6c] sm:$0xff]
      %v3581 = vld [vmem:[%s320 + $0x74] sm:$0xff]
      %v3582 = vld [vmem:[%s320 + $0x7c] sm:$0xff]
      %v3583 = vld [vmem:[%s320 + $0x84] sm:$0xff]
      %v3584 = vld [vmem:[%s320 + $0x8c] sm:$0xff]
      %v3585 = vld [vmem:[%s320 + $0x94] sm:$0xff]
      %v3586 = vld [vmem:[%s320 + $0x9c] sm:$0xff]
      %v3587 = vld [vmem:[%s320 + $0xa4] sm:$0xff]
      %v3588 = vld [vmem:[%s320 + $0xac] sm:$0xff]
      %v3589 = vld [vmem:[%s320 + $0xb4] sm:$0xff]
      %v3590 = vld [vmem:[%s320 + $0xbc] sm:$0xff]
      %v3591 = vld [vmem:[%s320 + $0xc4] sm:$0xff]
      %v3592 = vld [vmem:[%s320 + $0xcc] sm:$0xff]
      %v3593 = vld [vmem:[%s320 + $0xd4] sm:$0xff]
      %v3594 = vld [vmem:[%s320 + $0xdc] sm:$0xff]
      %v3595 = vld [vmem:[%s320 + $0xe4] sm:$0xff]
      %v3596 = vld [vmem:[%s320 + $0xec] sm:$0xff]
      %v3597 = vld [vmem:[%s320 + $0xf4] sm:$0xff]
      %v3598 = vld [vmem:[%s320 + $0xfc] sm:$0xff]
      %v3599 = vld [vmem:[%s320 + $0x104] sm:$0xff]
      %v3600 = vld [vmem:[%s320 + $0x10c] sm:$0xff]
      %v3601 = vld [vmem:[%s320 + $0x114] sm:$0xff]
      %v3602 = vld [vmem:[%s320 + $0x11c] sm:$0xff]
      %v3603 = vld [vmem:[%s320 + $0x124] sm:$0xff]
      %v3604 = vld [vmem:[%s320 + $0x12c] sm:$0xff]
      %v3605 = vpack.c.bf16 %v3570, %v3569
      %v3606 = vpack.c.bf16 %v3572, %v3571
      %v3607 = vpack.c.bf16 %v3574, %v3573
      %v3608 = vpack.c.bf16 %v3576, %v3575
      %v3609 = vpack.c.bf16 %v3578, %v3577
      %v3610 = vpack.c.bf16 %v3580, %v3579
      %v3611 = vpack.c.bf16 %v3582, %v3581
      %v3612 = vpack.c.bf16 %v3584, %v3583
      %v3613 = vpack.c.bf16 %v3586, %v3585
      %v3614 = vpack.c.bf16 %v3588, %v3587
      %v3615 = vpack.c.bf16 %v3590, %v3589
      %v3616 = vpack.c.bf16 %v3592, %v3591
      %v3617 = vpack.c.bf16 %v3594, %v3593
      %v3618 = vpack.c.bf16 %v3596, %v3595
      %v3619 = vpack.c.bf16 %v3598, %v3597
      %v3620 = vpack.c.bf16 %v3600, %v3599
      %v3621 = vpack.c.bf16 %v3602, %v3601
      %v3622 = vpack.c.bf16 %v3604, %v3603
      %s3623 = scalar_lea.vmem %s3, 10
      %v3624 = vld [vmem:[%s3623] sm:$0x3]
      %v3626 = vsel %vm437, %v3551, 0
      %v3629 = vsel %vm437, %v3552, 0
      %v3632 = vsel %vm437, %v3553, 0
      %v3635 = vsel %vm437, %v3554, 0
      %v3638 = vsel %vm437, %v3555, 0
      %v3641 = vsel %vm437, %v3556, 0
      %v3644 = vsel %vm437, %v3557, 0
      %v3647 = vsel %vm437, %v3558, 0
      %v3650 = vsel %vm437, %v3559, 0
      %v3653 = vsel %vm437, %v3560, 0
      %v3656 = vsel %vm437, %v3561, 0
      %v3659 = vsel %vm437, %v3562, 0
      %v3662 = vsel %vm437, %v3563, 0
      %v3665 = vsel %vm437, %v3564, 0
      %v3668 = vsel %vm437, %v3565, 0
      %v3671 = vsel %vm437, %v3566, 0
      %v3674 = vsel %vm437, %v3567, 0
      %v3677 = vsel %vm437, %v3568, 0
      %v3680 = vsel %vm492, %v3624, 0
      %3682 = vmatprep.subr.bf16.mxu0 0
      %3683 = vmatpush1.bf16.msra.mxu0 %v3680
      %3684 = vmatprep.subr.bf16.mxu0 0
      %3685 = vmatpush1.bf16.msra.mxu0 0
      %3686 = vmatprep.subr.bf16.mxu0 0
      %3687 = vmatpush1.bf16.msra.mxu0 0
      %3688 = vmatprep.subr.bf16.mxu0 0
      %3689 = vmatpush1.bf16.msra.mxu0 0
      %3690 = vmatprep.subr.bf16.mxu0 0
      %3691 = vmatpush1.bf16.msra.mxu0 0
      %3692 = vmatprep.subr.bf16.mxu0 0
      %3693 = vmatpush1.bf16.msra.mxu0 0
      %3694 = vmatprep.subr.bf16.mxu0 0
      %3695 = vmatpush1.bf16.msra.mxu0 0
      %3696 = vmatprep.subr.bf16.mxu0 0
      %3697 = vmatpush1.bf16.msra.mxu0 0
      %3698 = vmatprep.subr.bf16.mxu0 0
      %3699 = vmatpush1.bf16.msra.mxu0 0
      %3700 = vmatprep.subr.bf16.mxu0 0
      %3701 = vmatpush1.bf16.msra.mxu0 0
      %3702 = vmatprep.subr.bf16.mxu0 0
      %3703 = vmatpush1.bf16.msra.mxu0 0
      %3704 = vmatprep.subr.bf16.mxu0 0
      %3705 = vmatpush1.bf16.msra.mxu0 0
      %3706 = vmatprep.subr.bf16.mxu0 0
      %3707 = vmatpush1.bf16.msra.mxu0 0
      %3708 = vmatprep.subr.bf16.mxu0 0
      %3709 = vmatpush1.bf16.msra.mxu0 0
      %3710 = vmatprep.subr.bf16.mxu0 0
      %3711 = vmatpush1.bf16.msra.mxu0 0
      %3712 = vmatprep.subr.bf16.mxu0 0
      %3713 = vmatpush1.bf16.msra.mxu0 0
      %3714 = vmatprep.mubr.bf16.mxu0 0
      %3715 = vmatmul.mubr.bf16.gmra.mrb[0].mxu0 %v3626
      %v3716 = vpop.f32.mrb[0].mxu0
      %v3717 = vadd.f32 0.0, %v3716
      %v3718 = vpop.f32.mrb[0].mxu0
      %v3719 = vpop.f32.mrb[0].mxu0
      %v3720 = vadd.f32 0.0, %v3719
      %v3721 = vpop.f32.mrb[0].mxu0
      %3722 = vmatprep.mubr.bf16.mxu0 0
      %3723 = vmatmul.mubr.bf16.gmra.mrb[0].mxu0 %v3629
      %v3724 = vpop.f32.mrb[0].mxu0
      %v3725 = vadd.f32 0.0, %v3724
      %v3726 = vpop.f32.mrb[0].mxu0
      %v3727 = vpop.f32.mrb[0].mxu0
      %v3728 = vadd.f32 0.0, %v3727
      %v3729 = vpop.f32.mrb[0].mxu0
      %3730 = vmatprep.mubr.bf16.mxu0 0
      %3731 = vmatmul.mubr.bf16.gmra.mrb[0].mxu0 %v3632
      %v3732 = vpop.f32.mrb[0].mxu0
      %v3733 = vadd.f32 0.0, %v3732
      %v3734 = vpop.f32.mrb[0].mxu0
      %v3735 = vpop.f32.mrb[0].mxu0
      %v3736 = vadd.f32 0.0, %v3735
      %v3737 = vpop.f32.mrb[0].mxu0
      %3738 = vmatprep.mubr.bf16.mxu0 0
      %3739 = vmatmul.mubr.bf16.gmra.mrb[0].mxu0 %v3635
      %v3740 = vpop.f32.mrb[0].mxu0
      %v3741 = vadd.f32 0.0, %v3740
      %v3742 = vpop.f32.mrb[0].mxu0
      %v3743 = vpop.f32.mrb[0].mxu0
      %v3744 = vadd.f32 0.0, %v3743
      %v3745 = vpop.f32.mrb[0].mxu0
      %3746 = vmatprep.mubr.bf16.mxu0 0
      %3747 = vmatmul.mubr.bf16.gmra.mrb[0].mxu0 %v3638
      %v3748 = vpop.f32.mrb[0].mxu0
      %v3749 = vadd.f32 0.0, %v3748
      %v3750 = vpop.f32.mrb[0].mxu0
      %v3751 = vpop.f32.mrb[0].mxu0
      %v3752 = vadd.f32 0.0, %v3751
      %v3753 = vpop.f32.mrb[0].mxu0
      %3754 = vmatprep.mubr.bf16.mxu0 0
      %3755 = vmatmul.mubr.bf16.gmra.mrb[0].mxu0 %v3641
      %v3756 = vpop.f32.mrb[0].mxu0
      %v3757 = vadd.f32 0.0, %v3756
      %v3758 = vpop.f32.mrb[0].mxu0
      %v3759 = vpop.f32.mrb[0].mxu0
      %v3760 = vadd.f32 0.0, %v3759
      %v3761 = vpop.f32.mrb[0].mxu0
      %3762 = vmatprep.mubr.bf16.mxu0 0
      %3763 = vmatmul.mubr.bf16.gmra.mrb[0].mxu0 %v3644
      %v3764 = vpop.f32.mrb[0].mxu0
      %v3765 = vadd.f32 0.0, %v3764
      %v3766 = vpop.f32.mrb[0].mxu0
      %v3767 = vpop.f32.mrb[0].mxu0
      %v3768 = vadd.f32 0.0, %v3767
      %v3769 = vpop.f32.mrb[0].mxu0
      %3770 = vmatprep.mubr.bf16.mxu0 0
      %3771 = vmatmul.mubr.bf16.gmra.mrb[0].mxu0 %v3647
      %v3772 = vpop.f32.mrb[0].mxu0
      %v3773 = vadd.f32 0.0, %v3772
      %v3774 = vpop.f32.mrb[0].mxu0
      %v3775 = vpop.f32.mrb[0].mxu0
      %v3776 = vadd.f32 0.0, %v3775
      %v3777 = vpop.f32.mrb[0].mxu0
      %3778 = vmatprep.mubr.bf16.mxu0 0
      %3779 = vmatmul.mubr.bf16.gmra.mrb[0].mxu0 %v3650
      %v3780 = vpop.f32.mrb[0].mxu0
      %v3781 = vadd.f32 0.0, %v3780
      %v3782 = vpop.f32.mrb[0].mxu0
      %v3783 = vpop.f32.mrb[0].mxu0
      %v3784 = vadd.f32 0.0, %v3783
      %v3785 = vpop.f32.mrb[0].mxu0
      %3786 = vmatprep.mubr.bf16.mxu0 0
      %3787 = vmatmul.mubr.bf16.gmra.mrb[0].mxu0 %v3653
      %v3788 = vpop.f32.mrb[0].mxu0
      %v3789 = vadd.f32 0.0, %v3788
      %v3790 = vpop.f32.mrb[0].mxu0
      %v3791 = vpop.f32.mrb[0].mxu0
      %v3792 = vadd.f32 0.0, %v3791
      %v3793 = vpop.f32.mrb[0].mxu0
      %3794 = vmatprep.mubr.bf16.mxu0 0
      %3795 = vmatmul.mubr.bf16.gmra.mrb[0].mxu0 %v3656
      %v3796 = vpop.f32.mrb[0].mxu0
      %v3797 = vadd.f32 0.0, %v3796
      %v3798 = vpop.f32.mrb[0].mxu0
      %v3799 = vpop.f32.mrb[0].mxu0
      %v3800 = vadd.f32 0.0, %v3799
      %v3801 = vpop.f32.mrb[0].mxu0
      %3802 = vmatprep.mubr.bf16.mxu0 0
      %3803 = vmatmul.mubr.bf16.gmra.mrb[0].mxu0 %v3659
      %v3804 = vpop.f32.mrb[0].mxu0
      %v3805 = vadd.f32 0.0, %v3804
      %v3806 = vpop.f32.mrb[0].mxu0
      %v3807 = vpop.f32.mrb[0].mxu0
      %v3808 = vadd.f32 0.0, %v3807
      %v3809 = vpop.f32.mrb[0].mxu0
      %3810 = vmatprep.mubr.bf16.mxu0 0
      %3811 = vmatmul.mubr.bf16.gmra.mrb[0].mxu0 %v3662
      %v3812 = vpop.f32.mrb[0].mxu0
      %v3813 = vadd.f32 0.0, %v3812
      %v3814 = vpop.f32.mrb[0].mxu0
      %v3815 = vpop.f32.mrb[0].mxu0
      %v3816 = vadd.f32 0.0, %v3815
      %v3817 = vpop.f32.mrb[0].mxu0
      %3818 = vmatprep.mubr.bf16.mxu0 0
      %3819 = vmatmul.mubr.bf16.gmra.mrb[0].mxu0 %v3665
      %v3820 = vpop.f32.mrb[0].mxu0
      %v3821 = vadd.f32 0.0, %v3820
      %v3822 = vpop.f32.mrb[0].mxu0
      %v3823 = vpop.f32.mrb[0].mxu0
      %v3824 = vadd.f32 0.0, %v3823
      %v3825 = vpop.f32.mrb[0].mxu0
      %3826 = vmatprep.mubr.bf16.mxu0 0
      %3827 = vmatmul.mubr.bf16.gmra.mrb[0].mxu0 %v3668
      %v3828 = vpop.f32.mrb[0].mxu0
      %v3829 = vadd.f32 0.0, %v3828
      %v3830 = vpop.f32.mrb[0].mxu0
      %v3831 = vpop.f32.mrb[0].mxu0
      %v3832 = vadd.f32 0.0, %v3831
      %v3833 = vpop.f32.mrb[0].mxu0
      %3834 = vmatprep.mubr.bf16.mxu0 0
      %3835 = vmatmul.mubr.bf16.gmra.mrb[0].mxu0 %v3671
      %v3836 = vpop.f32.mrb[0].mxu0
      %v3837 = vadd.f32 0.0, %v3836
      %v3838 = vpop.f32.mrb[0].mxu0
      %v3839 = vpop.f32.mrb[0].mxu0
      %v3840 = vadd.f32 0.0, %v3839
      %v3841 = vpop.f32.mrb[0].mxu0
      %3842 = vmatprep.mubr.bf16.mxu0 0
      %3843 = vmatmul.mubr.bf16.gmra.mrb[0].mxu0 %v3674
      %v3844 = vpop.f32.mrb[0].mxu0
      %v3845 = vadd.f32 0.0, %v3844
      %v3846 = vpop.f32.mrb[0].mxu0
      %v3847 = vpop.f32.mrb[0].mxu0
      %v3848 = vadd.f32 0.0, %v3847
      %v3849 = vpop.f32.mrb[0].mxu0
      %3850 = vmatprep.mubr.bf16.mxu0 0
      %3851 = vmatmul.mubr.bf16.gmra.mrb[0].mxu0 %v3677
      %v3852 = vpop.f32.mrb[0].mxu0
      %v3853 = vadd.f32 0.0, %v3852
      %v3854 = vpop.f32.mrb[0].mxu0
      %v3855 = vpop.f32.mrb[0].mxu0
      %v3856 = vadd.f32 0.0, %v3855
      %v3857 = vpop.f32.mrb[0].mxu0
      %3858 = vdwg.mxu0
      %v3859 = vadd.f32 %v3479, %v3717
      %v3860 = vadd.f32 %v3480, %v3720
      %v3861 = vadd.f32 %v3481, %v3725
      %v3862 = vadd.f32 %v3482, %v3728
      %v3863 = vadd.f32 %v3483, %v3733
      %v3864 = vadd.f32 %v3484, %v3736
      %v3865 = vadd.f32 %v3485, %v3741
      %v3866 = vadd.f32 %v3486, %v3744
      %v3867 = vadd.f32 %v3487, %v3749
      %v3868 = vadd.f32 %v3488, %v3752
      %v3869 = vadd.f32 %v3489, %v3757
      %v3870 = vadd.f32 %v3490, %v3760
      %v3871 = vadd.f32 %v3491, %v3765
      %v3872 = vadd.f32 %v3492, %v3768
      %v3873 = vadd.f32 %v3493, %v3773
      %v3874 = vadd.f32 %v3494, %v3776
      %v3875 = vadd.f32 %v3495, %v3781
      %v3876 = vadd.f32 %v3496, %v3784
      %v3877 = vadd.f32 %v3497, %v3789
      %v3878 = vadd.f32 %v3498, %v3792
      %v3879 = vadd.f32 %v3499, %v3797
      %v3880 = vadd.f32 %v3500, %v3800
      %v3881 = vadd.f32 %v3501, %v3805
      %v3882 = vadd.f32 %v3502, %v3808
      %v3883 = vadd.f32 %v3503, %v3813
      %v3884 = vadd.f32 %v3504, %v3816
      %v3885 = vadd.f32 %v3505, %v3821
      %v3886 = vadd.f32 %v3506, %v3824
      %v3887 = vadd.f32 %v3507, %v3829
      %v3888 = vadd.f32 %v3508, %v3832
      %v3889 = vadd.f32 %v3509, %v3837
      %v3890 = vadd.f32 %v3510, %v3840
      %v3891 = vadd.f32 %v3511, %v3845
      %v3892 = vadd.f32 %v3512, %v3848
      %v3893 = vadd.f32 %v3513, %v3853
      %v3894 = vadd.f32 %v3514, %v3856
      %s3895 = scalar_lea.vmem %s4, 10
      %v3896 = vld [vmem:[%s3895] sm:$0x3]
      %v3898 = vsel %vm437, %v3605, 0
      %v3901 = vsel %vm437, %v3606, 0
      %v3904 = vsel %vm437, %v3607, 0
      %v3907 = vsel %vm437, %v3608, 0
      %v3910 = vsel %vm437, %v3609, 0
      %v3913 = vsel %vm437, %v3610, 0
      %v3916 = vsel %vm437, %v3611, 0
      %v3919 = vsel %vm437, %v3612, 0
      %v3922 = vsel %vm437, %v3613, 0
      %v3925 = vsel %vm437, %v3614, 0
      %v3928 = vsel %vm437, %v3615, 0
      %v3931 = vsel %vm437, %v3616, 0
      %v3934 = vsel %vm437, %v3617, 0
      %v3937 = vsel %vm437, %v3618, 0
      %v3940 = vsel %vm437, %v3619, 0
      %v3943 = vsel %vm437, %v3620, 0
      %v3946 = vsel %vm437, %v3621, 0
      %v3949 = vsel %vm437, %v3622, 0
      %v3952 = vsel %vm492, %v3896, 0
      %3954 = vmatprep.subr.bf16.mxu0 0
      %3955 = vmatpush1.bf16.msra.mxu0 %v3952
      %3956 = vmatprep.subr.bf16.mxu0 0
      %3957 = vmatpush1.bf16.msra.mxu0 0
      %3958 = vmatprep.subr.bf16.mxu0 0
      %3959 = vmatpush1.bf16.msra.mxu0 0
      %3960 = vmatprep.subr.bf16.mxu0 0
      %3961 = vmatpush1.bf16.msra.mxu0 0
      %3962 = vmatprep.subr.bf16.mxu0 0
      %3963 = vmatpush1.bf16.msra.mxu0 0
      %3964 = vmatprep.subr.bf16.mxu0 0
      %3965 = vmatpush1.bf16.msra.mxu0 0
      %3966 = vmatprep.subr.bf16.mxu0 0
      %3967 = vmatpush1.bf16.msra.mxu0 0
      %3968 = vmatprep.subr.bf16.mxu0 0
      %3969 = vmatpush1.bf16.msra.mxu0 0
      %3970 = vmatprep.subr.bf16.mxu0 0
      %3971 = vmatpush1.bf16.msra.mxu0 0
      %3972 = vmatprep.subr.bf16.mxu0 0
      %3973 = vmatpush1.bf16.msra.mxu0 0
      %3974 = vmatprep.subr.bf16.mxu0 0
      %3975 = vmatpush1.bf16.msra.mxu0 0
      %3976 = vmatprep.subr.bf16.mxu0 0
      %3977 = vmatpush1.bf16.msra.mxu0 0
      %3978 = vmatprep.subr.bf16.mxu0 0
      %3979 = vmatpush1.bf16.msra.mxu0 0
      %3980 = vmatprep.subr.bf16.mxu0 0
      %3981 = vmatpush1.bf16.msra.mxu0 0
      %3982 = vmatprep.subr.bf16.mxu0 0
      %3983 = vmatpush1.bf16.msra.mxu0 0
      %3984 = vmatprep.subr.bf16.mxu0 0
      %3985 = vmatpush1.bf16.msra.mxu0 0
      %3986 = vmatprep.mubr.bf16.mxu0 0
      %3987 = vmatmul.mubr.bf16.gmra.mrb[0].mxu0 %v3898
      %v3988 = vpop.f32.mrb[0].mxu0
      %v3989 = vadd.f32 0.0, %v3988
      %v3990 = vpop.f32.mrb[0].mxu0
      %v3991 = vpop.f32.mrb[0].mxu0
      %v3992 = vadd.f32 0.0, %v3991
      %v3993 = vpop.f32.mrb[0].mxu0
      %3994 = vmatprep.mubr.bf16.mxu0 0
      %3995 = vmatmul.mubr.bf16.gmra.mrb[0].mxu0 %v3901
      %v3996 = vpop.f32.mrb[0].mxu0
      %v3997 = vadd.f32 0.0, %v3996
      %v3998 = vpop.f32.mrb[0].mxu0
      %v3999 = vpop.f32.mrb[0].mxu0
      %v4000 = vadd.f32 0.0, %v3999
      %v4001 = vpop.f32.mrb[0].mxu0
      %4002 = vmatprep.mubr.bf16.mxu0 0
      %4003 = vmatmul.mubr.bf16.gmra.mrb[0].mxu0 %v3904
      %v4004 = vpop.f32.mrb[0].mxu0
      %v4005 = vadd.f32 0.0, %v4004
      %v4006 = vpop.f32.mrb[0].mxu0
      %v4007 = vpop.f32.mrb[0].mxu0
      %v4008 = vadd.f32 0.0, %v4007
      %v4009 = vpop.f32.mrb[0].mxu0
      %4010 = vmatprep.mubr.bf16.mxu0 0
      %4011 = vmatmul.mubr.bf16.gmra.mrb[0].mxu0 %v3907
      %v4012 = vpop.f32.mrb[0].mxu0
      %v4013 = vadd.f32 0.0, %v4012
      %v4014 = vpop.f32.mrb[0].mxu0
      %v4015 = vpop.f32.mrb[0].mxu0
      %v4016 = vadd.f32 0.0, %v4015
      %v4017 = vpop.f32.mrb[0].mxu0
      %4018 = vmatprep.mubr.bf16.mxu0 0
      %4019 = vmatmul.mubr.bf16.gmra.mrb[0].mxu0 %v3910
      %v4020 = vpop.f32.mrb[0].mxu0
      %v4021 = vadd.f32 0.0, %v4020
      %v4022 = vpop.f32.mrb[0].mxu0
      %v4023 = vpop.f32.mrb[0].mxu0
      %v4024 = vadd.f32 0.0, %v4023
      %v4025 = vpop.f32.mrb[0].mxu0
      %4026 = vmatprep.mubr.bf16.mxu0 0
      %4027 = vmatmul.mubr.bf16.gmra.mrb[0].mxu0 %v3913
      %v4028 = vpop.f32.mrb[0].mxu0
      %v4029 = vadd.f32 0.0, %v4028
      %v4030 = vpop.f32.mrb[0].mxu0
      %v4031 = vpop.f32.mrb[0].mxu0
      %v4032 = vadd.f32 0.0, %v4031
      %v4033 = vpop.f32.mrb[0].mxu0
      %4034 = vmatprep.mubr.bf16.mxu0 0
      %4035 = vmatmul.mubr.bf16.gmra.mrb[0].mxu0 %v3916
      %v4036 = vpop.f32.mrb[0].mxu0
      %v4037 = vadd.f32 0.0, %v4036
      %v4038 = vpop.f32.mrb[0].mxu0
      %v4039 = vpop.f32.mrb[0].mxu0
      %v4040 = vadd.f32 0.0, %v4039
      %v4041 = vpop.f32.mrb[0].mxu0
      %4042 = vmatprep.mubr.bf16.mxu0 0
      %4043 = vmatmul.mubr.bf16.gmra.mrb[0].mxu0 %v3919
      %v4044 = vpop.f32.mrb[0].mxu0
      %v4045 = vadd.f32 0.0, %v4044
      %v4046 = vpop.f32.mrb[0].mxu0
      %v4047 = vpop.f32.mrb[0].mxu0
      %v4048 = vadd.f32 0.0, %v4047
      %v4049 = vpop.f32.mrb[0].mxu0
      %4050 = vmatprep.mubr.bf16.mxu0 0
      %4051 = vmatmul.mubr.bf16.gmra.mrb[0].mxu0 %v3922
      %v4052 = vpop.f32.mrb[0].mxu0
      %v4053 = vadd.f32 0.0, %v4052
      %v4054 = vpop.f32.mrb[0].mxu0
      %v4055 = vpop.f32.mrb[0].mxu0
      %v4056 = vadd.f32 0.0, %v4055
      %v4057 = vpop.f32.mrb[0].mxu0
      %4058 = vmatprep.mubr.bf16.mxu0 0
      %4059 = vmatmul.mubr.bf16.gmra.mrb[0].mxu0 %v3925
      %v4060 = vpop.f32.mrb[0].mxu0
      %v4061 = vadd.f32 0.0, %v4060
      %v4062 = vpop.f32.mrb[0].mxu0
      %v4063 = vpop.f32.mrb[0].mxu0
      %v4064 = vadd.f32 0.0, %v4063
      %v4065 = vpop.f32.mrb[0].mxu0
      %4066 = vmatprep.mubr.bf16.mxu0 0
      %4067 = vmatmul.mubr.bf16.gmra.mrb[0].mxu0 %v3928
      %v4068 = vpop.f32.mrb[0].mxu0
      %v4069 = vadd.f32 0.0, %v4068
      %v4070 = vpop.f32.mrb[0].mxu0
      %v4071 = vpop.f32.mrb[0].mxu0
      %v4072 = vadd.f32 0.0, %v4071
      %v4073 = vpop.f32.mrb[0].mxu0
      %4074 = vmatprep.mubr.bf16.mxu0 0
      %4075 = vmatmul.mubr.bf16.gmra.mrb[0].mxu0 %v3931
      %v4076 = vpop.f32.mrb[0].mxu0
      %v4077 = vadd.f32 0.0, %v4076
      %v4078 = vpop.f32.mrb[0].mxu0
      %v4079 = vpop.f32.mrb[0].mxu0
      %v4080 = vadd.f32 0.0, %v4079
      %v4081 = vpop.f32.mrb[0].mxu0
      %4082 = vmatprep.mubr.bf16.mxu0 0
      %4083 = vmatmul.mubr.bf16.gmra.mrb[0].mxu0 %v3934
      %v4084 = vpop.f32.mrb[0].mxu0
      %v4085 = vadd.f32 0.0, %v4084
      %v4086 = vpop.f32.mrb[0].mxu0
      %v4087 = vpop.f32.mrb[0].mxu0
      %v4088 = vadd.f32 0.0, %v4087
      %v4089 = vpop.f32.mrb[0].mxu0
      %4090 = vmatprep.mubr.bf16.mxu0 0
      %4091 = vmatmul.mubr.bf16.gmra.mrb[0].mxu0 %v3937
      %v4092 = vpop.f32.mrb[0].mxu0
      %v4093 = vadd.f32 0.0, %v4092
      %v4094 = vpop.f32.mrb[0].mxu0
      %v4095 = vpop.f32.mrb[0].mxu0
      %v4096 = vadd.f32 0.0, %v4095
      %v4097 = vpop.f32.mrb[0].mxu0
      %4098 = vmatprep.mubr.bf16.mxu0 0
      %4099 = vmatmul.mubr.bf16.gmra.mrb[0].mxu0 %v3940
      %v4100 = vpop.f32.mrb[0].mxu0
      %v4101 = vadd.f32 0.0, %v4100
      %v4102 = vpop.f32.mrb[0].mxu0
      %v4103 = vpop.f32.mrb[0].mxu0
      %v4104 = vadd.f32 0.0, %v4103
      %v4105 = vpop.f32.mrb[0].mxu0
      %4106 = vmatprep.mubr.bf16.mxu0 0
      %4107 = vmatmul.mubr.bf16.gmra.mrb[0].mxu0 %v3943
      %v4108 = vpop.f32.mrb[0].mxu0
      %v4109 = vadd.f32 0.0, %v4108
      %v4110 = vpop.f32.mrb[0].mxu0
      %v4111 = vpop.f32.mrb[0].mxu0
      %v4112 = vadd.f32 0.0, %v4111
      %v4113 = vpop.f32.mrb[0].mxu0
      %4114 = vmatprep.mubr.bf16.mxu0 0
      %4115 = vmatmul.mubr.bf16.gmra.mrb[0].mxu0 %v3946
      %v4116 = vpop.f32.mrb[0].mxu0
      %v4117 = vadd.f32 0.0, %v4116
      %v4118 = vpop.f32.mrb[0].mxu0
      %v4119 = vpop.f32.mrb[0].mxu0
      %v4120 = vadd.f32 0.0, %v4119
      %v4121 = vpop.f32.mrb[0].mxu0
      %4122 = vmatprep.mubr.bf16.mxu0 0
      %4123 = vmatmul.mubr.bf16.gmra.mrb[0].mxu0 %v3949
      %v4124 = vpop.f32.mrb[0].mxu0
      %v4125 = vadd.f32 0.0, %v4124
      %v4126 = vpop.f32.mrb[0].mxu0
      %v4127 = vpop.f32.mrb[0].mxu0
      %v4128 = vadd.f32 0.0, %v4127
      %v4129 = vpop.f32.mrb[0].mxu0
      %4130 = vdwg.mxu0
      %v4131 = vadd.f32 %v3859, %v3989
      %v4132 = vadd.f32 %v3860, %v3992
      %v4133 = vadd.f32 %v3861, %v3997
      %v4134 = vadd.f32 %v3862, %v4000
      %v4135 = vadd.f32 %v3863, %v4005
      %v4136 = vadd.f32 %v3864, %v4008
      %v4137 = vadd.f32 %v3865, %v4013
      %v4138 = vadd.f32 %v3866, %v4016
      %v4139 = vadd.f32 %v3867, %v4021
      %v4140 = vadd.f32 %v3868, %v4024
      %v4141 = vadd.f32 %v3869, %v4029
      %v4142 = vadd.f32 %v3870, %v4032
      %v4143 = vadd.f32 %v3871, %v4037
      %v4144 = vadd.f32 %v3872, %v4040
      %v4145 = vadd.f32 %v3873, %v4045
      %v4146 = vadd.f32 %v3874, %v4048
      %v4147 = vadd.f32 %v3875, %v4053
      %v4148 = vadd.f32 %v3876, %v4056
      %v4149 = vadd.f32 %v3877, %v4061
      %v4150 = vadd.f32 %v3878, %v4064
      %v4151 = vadd.f32 %v3879, %v4069
      %v4152 = vadd.f32 %v3880, %v4072
      %v4153 = vadd.f32 %v3881, %v4077
      %v4154 = vadd.f32 %v3882, %v4080
      %v4155 = vadd.f32 %v3883, %v4085
      %v4156 = vadd.f32 %v3884, %v4088
      %v4157 = vadd.f32 %v3885, %v4093
      %v4158 = vadd.f32 %v3886, %v4096
      %v4159 = vadd.f32 %v3887, %v4101
      %v4160 = vadd.f32 %v3888, %v4104
      %v4161 = vadd.f32 %v3889, %v4109
      %v4162 = vadd.f32 %v3890, %v4112
      %v4163 = vadd.f32 %v3891, %v4117
      %v4164 = vadd.f32 %v3892, %v4120
      %v4165 = vadd.f32 %v3893, %v4125
      %v4166 = vadd.f32 %v3894, %v4128
      %v4167 = vld [vmem:[%s315 + $0x24] sm:$0xff]
      %v4168 = vld [vmem:[%s315 + $0x2c] sm:$0xff]
      %v4169 = vld [vmem:[%s315 + $0x34] sm:$0xff]
      %v4170 = vld [vmem:[%s315 + $0x3c] sm:$0xff]
      %v4171 = vld [vmem:[%s315 + $0x44] sm:$0xff]
      %v4172 = vld [vmem:[%s315 + $0x4c] sm:$0xff]
      %v4173 = vld [vmem:[%s315 + $0x54] sm:$0xff]
      %v4174 = vld [vmem:[%s315 + $0x5c] sm:$0xff]
      %v4175 = vld [vmem:[%s315 + $0x64] sm:$0xff]
      %v4176 = vld [vmem:[%s315 + $0x6c] sm:$0xff]
      %v4177 = vld [vmem:[%s315 + $0x74] sm:$0xff]
      %v4178 = vld [vmem:[%s315 + $0x7c] sm:$0xff]
      %v4179 = vld [vmem:[%s315 + $0x84] sm:$0xff]
      %v4180 = vld [vmem:[%s315 + $0x8c] sm:$0xff]
      %v4181 = vld [vmem:[%s315 + $0x94] sm:$0xff]
      %v4182 = vld [vmem:[%s315 + $0x9c] sm:$0xff]
      %v4183 = vld [vmem:[%s315 + $0xa4] sm:$0xff]
      %v4184 = vld [vmem:[%s315 + $0xac] sm:$0xff]
      %v4185 = vld [vmem:[%s315 + $0xb4] sm:$0xff]
      %v4186 = vld [vmem:[%s315 + $0xbc] sm:$0xff]
      %v4187 = vld [vmem:[%s315 + $0xc4] sm:$0xff]
      %v4188 = vld [vmem:[%s315 + $0xcc] sm:$0xff]
      %v4189 = vld [vmem:[%s315 + $0xd4] sm:$0xff]
      %v4190 = vld [vmem:[%s315 + $0xdc] sm:$0xff]
      %v4191 = vld [vmem:[%s315 + $0xe4] sm:$0xff]
      %v4192 = vld [vmem:[%s315 + $0xec] sm:$0xff]
      %v4193 = vld [vmem:[%s315 + $0xf4] sm:$0xff]
      %v4194 = vld [vmem:[%s315 + $0xfc] sm:$0xff]
      %v4195 = vld [vmem:[%s315 + $0x104] sm:$0xff]
      %v4196 = vld [vmem:[%s315 + $0x10c] sm:$0xff]
      %v4197 = vld [vmem:[%s315 + $0x114] sm:$0xff]
      %v4198 = vld [vmem:[%s315 + $0x11c] sm:$0xff]
      %v4199 = vld [vmem:[%s315 + $0x124] sm:$0xff]
      %v4200 = vld [vmem:[%s315 + $0x12c] sm:$0xff]
      %v4201 = vld [vmem:[%s315 + $0x134] sm:$0xff]
      %v4202 = vld [vmem:[%s315 + $0x13c] sm:$0xff]
      %v4203 = vpack.c.bf16 %v4168, %v4167
      %v4204 = vpack.c.bf16 %v4170, %v4169
      %v4205 = vpack.c.bf16 %v4172, %v4171
      %v4206 = vpack.c.bf16 %v4174, %v4173
      %v4207 = vpack.c.bf16 %v4176, %v4175
      %v4208 = vpack.c.bf16 %v4178, %v4177
      %v4209 = vpack.c.bf16 %v4180, %v4179
      %v4210 = vpack.c.bf16 %v4182, %v4181
      %v4211 = vpack.c.bf16 %v4184, %v4183
      %v4212 = vpack.c.bf16 %v4186, %v4185
      %v4213 = vpack.c.bf16 %v4188, %v4187
      %v4214 = vpack.c.bf16 %v4190, %v4189
      %v4215 = vpack.c.bf16 %v4192, %v4191
      %v4216 = vpack.c.bf16 %v4194, %v4193
      %v4217 = vpack.c.bf16 %v4196, %v4195
      %v4218 = vpack.c.bf16 %v4198, %v4197
      %v4219 = vpack.c.bf16 %v4200, %v4199
      %v4220 = vpack.c.bf16 %v4202, %v4201
      %v4221 = vld [vmem:[%s320 + $0x24] sm:$0xff]
      %v4222 = vld [vmem:[%s320 + $0x2c] sm:$0xff]
      %v4223 = vld [vmem:[%s320 + $0x34] sm:$0xff]
      %v4224 = vld [vmem:[%s320 + $0x3c] sm:$0xff]
      %v4225 = vld [vmem:[%s320 + $0x44] sm:$0xff]
      %v4226 = vld [vmem:[%s320 + $0x4c] sm:$0xff]
      %v4227 = vld [vmem:[%s320 + $0x54] sm:$0xff]
      %v4228 = vld [vmem:[%s320 + $0x5c] sm:$0xff]
      %v4229 = vld [vmem:[%s320 + $0x64] sm:$0xff]
      %v4230 = vld [vmem:[%s320 + $0x6c] sm:$0xff]
      %v4231 = vld [vmem:[%s320 + $0x74] sm:$0xff]
      %v4232 = vld [vmem:[%s320 + $0x7c] sm:$0xff]
      %v4233 = vld [vmem:[%s320 + $0x84] sm:$0xff]
      %v4234 = vld [vmem:[%s320 + $0x8c] sm:$0xff]
      %v4235 = vld [vmem:[%s320 + $0x94] sm:$0xff]
      %v4236 = vld [vmem:[%s320 + $0x9c] sm:$0xff]
      %v4237 = vld [vmem:[%s320 + $0xa4] sm:$0xff]
      %v4238 = vld [vmem:[%s320 + $0xac] sm:$0xff]
      %v4239 = vld [vmem:[%s320 + $0xb4] sm:$0xff]
      %v4240 = vld [vmem:[%s320 + $0xbc] sm:$0xff]
      %v4241 = vld [vmem:[%s320 + $0xc4] sm:$0xff]
      %v4242 = vld [vmem:[%s320 + $0xcc] sm:$0xff]
      %v4243 = vld [vmem:[%s320 + $0xd4] sm:$0xff]
      %v4244 = vld [vmem:[%s320 + $0xdc] sm:$0xff]
      %v4245 = vld [vmem:[%s320 + $0xe4] sm:$0xff]
      %v4246 = vld [vmem:[%s320 + $0xec] sm:$0xff]
      %v4247 = vld [vmem:[%s320 + $0xf4] sm:$0xff]
      %v4248 = vld [vmem:[%s320 + $0xfc] sm:$0xff]
      %v4249 = vld [vmem:[%s320 + $0x104] sm:$0xff]
      %v4250 = vld [vmem:[%s320 + $0x10c] sm:$0xff]
      %v4251 = vld [vmem:[%s320 + $0x114] sm:$0xff]
      %v4252 = vld [vmem:[%s320 + $0x11c] sm:$0xff]
      %v4253 = vld [vmem:[%s320 + $0x124] sm:$0xff]
      %v4254 = vld [vmem:[%s320 + $0x12c] sm:$0xff]
      %v4255 = vld [vmem:[%s320 + $0x134] sm:$0xff]
      %v4256 = vld [vmem:[%s320 + $0x13c] sm:$0xff]
      %v4257 = vpack.c.bf16 %v4222, %v4221
      %v4258 = vpack.c.bf16 %v4224, %v4223
      %v4259 = vpack.c.bf16 %v4226, %v4225
      %v4260 = vpack.c.bf16 %v4228, %v4227
      %v4261 = vpack.c.bf16 %v4230, %v4229
      %v4262 = vpack.c.bf16 %v4232, %v4231
      %v4263 = vpack.c.bf16 %v4234, %v4233
      %v4264 = vpack.c.bf16 %v4236, %v4235
      %v4265 = vpack.c.bf16 %v4238, %v4237
      %v4266 = vpack.c.bf16 %v4240, %v4239
      %v4267 = vpack.c.bf16 %v4242, %v4241
      %v4268 = vpack.c.bf16 %v4244, %v4243
      %v4269 = vpack.c.bf16 %v4246, %v4245
      %v4270 = vpack.c.bf16 %v4248, %v4247
      %v4271 = vpack.c.bf16 %v4250, %v4249
      %v4272 = vpack.c.bf16 %v4252, %v4251
      %v4273 = vpack.c.bf16 %v4254, %v4253
      %v4274 = vpack.c.bf16 %v4256, %v4255
      %s4275 = scalar_lea.vmem %s3, 12
      %v4276 = vld [vmem:[%s4275] sm:$0x3]
      %v4278 = vsel %vm437, %v4203, 0
      %v4281 = vsel %vm437, %v4204, 0
      %v4284 = vsel %vm437, %v4205, 0
      %v4287 = vsel %vm437, %v4206, 0
      %v4290 = vsel %vm437, %v4207, 0
      %v4293 = vsel %vm437, %v4208, 0
      %v4296 = vsel %vm437, %v4209, 0
      %v4299 = vsel %vm437, %v4210, 0
      %v4302 = vsel %vm437, %v4211, 0
      %v4305 = vsel %vm437, %v4212, 0
      %v4308 = vsel %vm437, %v4213, 0
      %v4311 = vsel %vm437, %v4214, 0
      %v4314 = vsel %vm437, %v4215, 0
      %v4317 = vsel %vm437, %v4216, 0
      %v4320 = vsel %vm437, %v4217, 0
      %v4323 = vsel %vm437, %v4218, 0
      %v4326 = vsel %vm437, %v4219, 0
      %v4329 = vsel %vm437, %v4220, 0
      %v4332 = vsel %vm492, %v4276, 0
      %4334 = vmatprep.subr.bf16.mxu0 0
      %4335 = vmatpush1.bf16.msra.mxu0 %v4332
      %4336 = vmatprep.subr.bf16.mxu0 0
      %4337 = vmatpush1.bf16.msra.mxu0 0
      %4338 = vmatprep.subr.bf16.mxu0 0
      %4339 = vmatpush1.bf16.msra.mxu0 0
      %4340 = vmatprep.subr.bf16.mxu0 0
      %4341 = vmatpush1.bf16.msra.mxu0 0
      %4342 = vmatprep.subr.bf16.mxu0 0
      %4343 = vmatpush1.bf16.msra.mxu0 0
      %4344 = vmatprep.subr.bf16.mxu0 0
      %4345 = vmatpush1.bf16.msra.mxu0 0
      %4346 = vmatprep.subr.bf16.mxu0 0
      %4347 = vmatpush1.bf16.msra.mxu0 0
      %4348 = vmatprep.subr.bf16.mxu0 0
      %4349 = vmatpush1.bf16.msra.mxu0 0
      %4350 = vmatprep.subr.bf16.mxu0 0
      %4351 = vmatpush1.bf16.msra.mxu0 0
      %4352 = vmatprep.subr.bf16.mxu0 0
      %4353 = vmatpush1.bf16.msra.mxu0 0
      %4354 = vmatprep.subr.bf16.mxu0 0
      %4355 = vmatpush1.bf16.msra.mxu0 0
      %4356 = vmatprep.subr.bf16.mxu0 0
      %4357 = vmatpush1.bf16.msra.mxu0 0
      %4358 = vmatprep.subr.bf16.mxu0 0
      %4359 = vmatpush1.bf16.msra.mxu0 0
      %4360 = vmatprep.subr.bf16.mxu0 0
      %4361 = vmatpush1.bf16.msra.mxu0 0
      %4362 = vmatprep.subr.bf16.mxu0 0
      %4363 = vmatpush1.bf16.msra.mxu0 0
      %4364 = vmatprep.subr.bf16.mxu0 0
      %4365 = vmatpush1.bf16.msra.mxu0 0
      %4366 = vmatprep.mubr.bf16.mxu0 0
      %4367 = vmatmul.mubr.bf16.gmra.mrb[0].mxu0 %v4278
      %v4368 = vpop.f32.mrb[0].mxu0
      %v4369 = vadd.f32 0.0, %v4368
      %v4370 = vpop.f32.mrb[0].mxu0
      %v4371 = vpop.f32.mrb[0].mxu0
      %v4372 = vadd.f32 0.0, %v4371
      %v4373 = vpop.f32.mrb[0].mxu0
      %4374 = vmatprep.mubr.bf16.mxu0 0
      %4375 = vmatmul.mubr.bf16.gmra.mrb[0].mxu0 %v4281
      %v4376 = vpop.f32.mrb[0].mxu0
      %v4377 = vadd.f32 0.0, %v4376
      %v4378 = vpop.f32.mrb[0].mxu0
      %v4379 = vpop.f32.mrb[0].mxu0
      %v4380 = vadd.f32 0.0, %v4379
      %v4381 = vpop.f32.mrb[0].mxu0
      %4382 = vmatprep.mubr.bf16.mxu0 0
      %4383 = vmatmul.mubr.bf16.gmra.mrb[0].mxu0 %v4284
      %v4384 = vpop.f32.mrb[0].mxu0
      %v4385 = vadd.f32 0.0, %v4384
      %v4386 = vpop.f32.mrb[0].mxu0
      %v4387 = vpop.f32.mrb[0].mxu0
      %v4388 = vadd.f32 0.0, %v4387
      %v4389 = vpop.f32.mrb[0].mxu0
      %4390 = vmatprep.mubr.bf16.mxu0 0
      %4391 = vmatmul.mubr.bf16.gmra.mrb[0].mxu0 %v4287
      %v4392 = vpop.f32.mrb[0].mxu0
      %v4393 = vadd.f32 0.0, %v4392
      %v4394 = vpop.f32.mrb[0].mxu0
      %v4395 = vpop.f32.mrb[0].mxu0
      %v4396 = vadd.f32 0.0, %v4395
      %v4397 = vpop.f32.mrb[0].mxu0
      %4398 = vmatprep.mubr.bf16.mxu0 0
      %4399 = vmatmul.mubr.bf16.gmra.mrb[0].mxu0 %v4290
      %v4400 = vpop.f32.mrb[0].mxu0
      %v4401 = vadd.f32 0.0, %v4400
      %v4402 = vpop.f32.mrb[0].mxu0
      %v4403 = vpop.f32.mrb[0].mxu0
      %v4404 = vadd.f32 0.0, %v4403
      %v4405 = vpop.f32.mrb[0].mxu0
      %4406 = vmatprep.mubr.bf16.mxu0 0
      %4407 = vmatmul.mubr.bf16.gmra.mrb[0].mxu0 %v4293
      %v4408 = vpop.f32.mrb[0].mxu0
      %v4409 = vadd.f32 0.0, %v4408
      %v4410 = vpop.f32.mrb[0].mxu0
      %v4411 = vpop.f32.mrb[0].mxu0
      %v4412 = vadd.f32 0.0, %v4411
      %v4413 = vpop.f32.mrb[0].mxu0
      %4414 = vmatprep.mubr.bf16.mxu0 0
      %4415 = vmatmul.mubr.bf16.gmra.mrb[0].mxu0 %v4296
      %v4416 = vpop.f32.mrb[0].mxu0
      %v4417 = vadd.f32 0.0, %v4416
      %v4418 = vpop.f32.mrb[0].mxu0
      %v4419 = vpop.f32.mrb[0].mxu0
      %v4420 = vadd.f32 0.0, %v4419
      %v4421 = vpop.f32.mrb[0].mxu0
      %4422 = vmatprep.mubr.bf16.mxu0 0
      %4423 = vmatmul.mubr.bf16.gmra.mrb[0].mxu0 %v4299
      %v4424 = vpop.f32.mrb[0].mxu0
      %v4425 = vadd.f32 0.0, %v4424
      %v4426 = vpop.f32.mrb[0].mxu0
      %v4427 = vpop.f32.mrb[0].mxu0
      %v4428 = vadd.f32 0.0, %v4427
      %v4429 = vpop.f32.mrb[0].mxu0
      %4430 = vmatprep.mubr.bf16.mxu0 0
      %4431 = vmatmul.mubr.bf16.gmra.mrb[0].mxu0 %v4302
      %v4432 = vpop.f32.mrb[0].mxu0
      %v4433 = vadd.f32 0.0, %v4432
      %v4434 = vpop.f32.mrb[0].mxu0
      %v4435 = vpop.f32.mrb[0].mxu0
      %v4436 = vadd.f32 0.0, %v4435
      %v4437 = vpop.f32.mrb[0].mxu0
      %4438 = vmatprep.mubr.bf16.mxu0 0
      %4439 = vmatmul.mubr.bf16.gmra.mrb[0].mxu0 %v4305
      %v4440 = vpop.f32.mrb[0].mxu0
      %v4441 = vadd.f32 0.0, %v4440
      %v4442 = vpop.f32.mrb[0].mxu0
      %v4443 = vpop.f32.mrb[0].mxu0
      %v4444 = vadd.f32 0.0, %v4443
      %v4445 = vpop.f32.mrb[0].mxu0
      %4446 = vmatprep.mubr.bf16.mxu0 0
      %4447 = vmatmul.mubr.bf16.gmra.mrb[0].mxu0 %v4308
      %v4448 = vpop.f32.mrb[0].mxu0
      %v4449 = vadd.f32 0.0, %v4448
      %v4450 = vpop.f32.mrb[0].mxu0
      %v4451 = vpop.f32.mrb[0].mxu0
      %v4452 = vadd.f32 0.0, %v4451
      %v4453 = vpop.f32.mrb[0].mxu0
      %4454 = vmatprep.mubr.bf16.mxu0 0
      %4455 = vmatmul.mubr.bf16.gmra.mrb[0].mxu0 %v4311
      %v4456 = vpop.f32.mrb[0].mxu0
      %v4457 = vadd.f32 0.0, %v4456
      %v4458 = vpop.f32.mrb[0].mxu0
      %v4459 = vpop.f32.mrb[0].mxu0
      %v4460 = vadd.f32 0.0, %v4459
      %v4461 = vpop.f32.mrb[0].mxu0
      %4462 = vmatprep.mubr.bf16.mxu0 0
      %4463 = vmatmul.mubr.bf16.gmra.mrb[0].mxu0 %v4314
      %v4464 = vpop.f32.mrb[0].mxu0
      %v4465 = vadd.f32 0.0, %v4464
      %v4466 = vpop.f32.mrb[0].mxu0
      %v4467 = vpop.f32.mrb[0].mxu0
      %v4468 = vadd.f32 0.0, %v4467
      %v4469 = vpop.f32.mrb[0].mxu0
      %4470 = vmatprep.mubr.bf16.mxu0 0
      %4471 = vmatmul.mubr.bf16.gmra.mrb[0].mxu0 %v4317
      %v4472 = vpop.f32.mrb[0].mxu0
      %v4473 = vadd.f32 0.0, %v4472
      %v4474 = vpop.f32.mrb[0].mxu0
      %v4475 = vpop.f32.mrb[0].mxu0
      %v4476 = vadd.f32 0.0, %v4475
      %v4477 = vpop.f32.mrb[0].mxu0
      %4478 = vmatprep.mubr.bf16.mxu0 0
      %4479 = vmatmul.mubr.bf16.gmra.mrb[0].mxu0 %v4320
      %v4480 = vpop.f32.mrb[0].mxu0
      %v4481 = vadd.f32 0.0, %v4480
      %v4482 = vpop.f32.mrb[0].mxu0
      %v4483 = vpop.f32.mrb[0].mxu0
      %v4484 = vadd.f32 0.0, %v4483
      %v4485 = vpop.f32.mrb[0].mxu0
      %4486 = vmatprep.mubr.bf16.mxu0 0
      %4487 = vmatmul.mubr.bf16.gmra.mrb[0].mxu0 %v4323
      %v4488 = vpop.f32.mrb[0].mxu0
      %v4489 = vadd.f32 0.0, %v4488
      %v4490 = vpop.f32.mrb[0].mxu0
      %v4491 = vpop.f32.mrb[0].mxu0
      %v4492 = vadd.f32 0.0, %v4491
      %v4493 = vpop.f32.mrb[0].mxu0
      %4494 = vmatprep.mubr.bf16.mxu0 0
      %4495 = vmatmul.mubr.bf16.gmra.mrb[0].mxu0 %v4326
      %v4496 = vpop.f32.mrb[0].mxu0
      %v4497 = vadd.f32 0.0, %v4496
      %v4498 = vpop.f32.mrb[0].mxu0
      %v4499 = vpop.f32.mrb[0].mxu0
      %v4500 = vadd.f32 0.0, %v4499
      %v4501 = vpop.f32.mrb[0].mxu0
      %4502 = vmatprep.mubr.bf16.mxu0 0
      %4503 = vmatmul.mubr.bf16.gmra.mrb[0].mxu0 %v4329
      %v4504 = vpop.f32.mrb[0].mxu0
      %v4505 = vadd.f32 0.0, %v4504
      %v4506 = vpop.f32.mrb[0].mxu0
      %v4507 = vpop.f32.mrb[0].mxu0
      %v4508 = vadd.f32 0.0, %v4507
      %v4509 = vpop.f32.mrb[0].mxu0
      %4510 = vdwg.mxu0
      %v4511 = vadd.f32 %v4131, %v4369
      %v4512 = vadd.f32 %v4132, %v4372
      %v4513 = vadd.f32 %v4133, %v4377
      %v4514 = vadd.f32 %v4134, %v4380
      %v4515 = vadd.f32 %v4135, %v4385
      %v4516 = vadd.f32 %v4136, %v4388
      %v4517 = vadd.f32 %v4137, %v4393
      %v4518 = vadd.f32 %v4138, %v4396
      %v4519 = vadd.f32 %v4139, %v4401
      %v4520 = vadd.f32 %v4140, %v4404
      %v4521 = vadd.f32 %v4141, %v4409
      %v4522 = vadd.f32 %v4142, %v4412
      %v4523 = vadd.f32 %v4143, %v4417
      %v4524 = vadd.f32 %v4144, %v4420
      %v4525 = vadd.f32 %v4145, %v4425
      %v4526 = vadd.f32 %v4146, %v4428
      %v4527 = vadd.f32 %v4147, %v4433
      %v4528 = vadd.f32 %v4148, %v4436
      %v4529 = vadd.f32 %v4149, %v4441
      %v4530 = vadd.f32 %v4150, %v4444
      %v4531 = vadd.f32 %v4151, %v4449
      %v4532 = vadd.f32 %v4152, %v4452
      %v4533 = vadd.f32 %v4153, %v4457
      %v4534 = vadd.f32 %v4154, %v4460
      %v4535 = vadd.f32 %v4155, %v4465
      %v4536 = vadd.f32 %v4156, %v4468
      %v4537 = vadd.f32 %v4157, %v4473
      %v4538 = vadd.f32 %v4158, %v4476
      %v4539 = vadd.f32 %v4159, %v4481
      %v4540 = vadd.f32 %v4160, %v4484
      %v4541 = vadd.f32 %v4161, %v4489
      %v4542 = vadd.f32 %v4162, %v4492
      %v4543 = vadd.f32 %v4163, %v4497
      %v4544 = vadd.f32 %v4164, %v4500
      %v4545 = vadd.f32 %v4165, %v4505
      %v4546 = vadd.f32 %v4166, %v4508
      %s4547 = scalar_lea.vmem %s4, 12
      %v4548 = vld [vmem:[%s4547] sm:$0x3]
      %v4550 = vsel %vm437, %v4257, 0
      %v4553 = vsel %vm437, %v4258, 0
      %v4556 = vsel %vm437, %v4259, 0
      %v4559 = vsel %vm437, %v4260, 0
      %v4562 = vsel %vm437, %v4261, 0
      %v4565 = vsel %vm437, %v4262, 0
      %v4568 = vsel %vm437, %v4263, 0
      %v4571 = vsel %vm437, %v4264, 0
      %v4574 = vsel %vm437, %v4265, 0
      %v4577 = vsel %vm437, %v4266, 0
      %v4580 = vsel %vm437, %v4267, 0
      %v4583 = vsel %vm437, %v4268, 0
      %v4586 = vsel %vm437, %v4269, 0
      %v4589 = vsel %vm437, %v4270, 0
      %v4592 = vsel %vm437, %v4271, 0
      %v4595 = vsel %vm437, %v4272, 0
      %v4598 = vsel %vm437, %v4273, 0
      %v4601 = vsel %vm437, %v4274, 0
      %v4604 = vsel %vm492, %v4548, 0
      %4606 = vmatprep.subr.bf16.mxu0 0
      %4607 = vmatpush1.bf16.msra.mxu0 %v4604
      %4608 = vmatprep.subr.bf16.mxu0 0
      %4609 = vmatpush1.bf16.msra.mxu0 0
      %4610 = vmatprep.subr.bf16.mxu0 0
      %4611 = vmatpush1.bf16.msra.mxu0 0
      %4612 = vmatprep.subr.bf16.mxu0 0
      %4613 = vmatpush1.bf16.msra.mxu0 0
      %4614 = vmatprep.subr.bf16.mxu0 0
      %4615 = vmatpush1.bf16.msra.mxu0 0
      %4616 = vmatprep.subr.bf16.mxu0 0
      %4617 = vmatpush1.bf16.msra.mxu0 0
      %4618 = vmatprep.subr.bf16.mxu0 0
      %4619 = vmatpush1.bf16.msra.mxu0 0
      %4620 = vmatprep.subr.bf16.mxu0 0
      %4621 = vmatpush1.bf16.msra.mxu0 0
      %4622 = vmatprep.subr.bf16.mxu0 0
      %4623 = vmatpush1.bf16.msra.mxu0 0
      %4624 = vmatprep.subr.bf16.mxu0 0
      %4625 = vmatpush1.bf16.msra.mxu0 0
      %4626 = vmatprep.subr.bf16.mxu0 0
      %4627 = vmatpush1.bf16.msra.mxu0 0
      %4628 = vmatprep.subr.bf16.mxu0 0
      %4629 = vmatpush1.bf16.msra.mxu0 0
      %4630 = vmatprep.subr.bf16.mxu0 0
      %4631 = vmatpush1.bf16.msra.mxu0 0
      %4632 = vmatprep.subr.bf16.mxu0 0
      %4633 = vmatpush1.bf16.msra.mxu0 0
      %4634 = vmatprep.subr.bf16.mxu0 0
      %4635 = vmatpush1.bf16.msra.mxu0 0
      %4636 = vmatprep.subr.bf16.mxu0 0
      %4637 = vmatpush1.bf16.msra.mxu0 0
      %4638 = vmatprep.mubr.bf16.mxu0 0
      %4639 = vmatmul.mubr.bf16.gmra.mrb[0].mxu0 %v4550
      %v4640 = vpop.f32.mrb[0].mxu0
      %v4641 = vadd.f32 0.0, %v4640
      %v4642 = vpop.f32.mrb[0].mxu0
      %v4643 = vpop.f32.mrb[0].mxu0
      %v4644 = vadd.f32 0.0, %v4643
      %v4645 = vpop.f32.mrb[0].mxu0
      %4646 = vmatprep.mubr.bf16.mxu0 0
      %4647 = vmatmul.mubr.bf16.gmra.mrb[0].mxu0 %v4553
      %v4648 = vpop.f32.mrb[0].mxu0
      %v4649 = vadd.f32 0.0, %v4648
      %v4650 = vpop.f32.mrb[0].mxu0
      %v4651 = vpop.f32.mrb[0].mxu0
      %v4652 = vadd.f32 0.0, %v4651
      %v4653 = vpop.f32.mrb[0].mxu0
      %4654 = vmatprep.mubr.bf16.mxu0 0
      %4655 = vmatmul.mubr.bf16.gmra.mrb[0].mxu0 %v4556
      %v4656 = vpop.f32.mrb[0].mxu0
      %v4657 = vadd.f32 0.0, %v4656
      %v4658 = vpop.f32.mrb[0].mxu0
      %v4659 = vpop.f32.mrb[0].mxu0
      %v4660 = vadd.f32 0.0, %v4659
      %v4661 = vpop.f32.mrb[0].mxu0
      %4662 = vmatprep.mubr.bf16.mxu0 0
      %4663 = vmatmul.mubr.bf16.gmra.mrb[0].mxu0 %v4559
      %v4664 = vpop.f32.mrb[0].mxu0
      %v4665 = vadd.f32 0.0, %v4664
      %v4666 = vpop.f32.mrb[0].mxu0
      %v4667 = vpop.f32.mrb[0].mxu0
      %v4668 = vadd.f32 0.0, %v4667
      %v4669 = vpop.f32.mrb[0].mxu0
      %4670 = vmatprep.mubr.bf16.mxu0 0
      %4671 = vmatmul.mubr.bf16.gmra.mrb[0].mxu0 %v4562
      %v4672 = vpop.f32.mrb[0].mxu0
      %v4673 = vadd.f32 0.0, %v4672
      %v4674 = vpop.f32.mrb[0].mxu0
      %v4675 = vpop.f32.mrb[0].mxu0
      %v4676 = vadd.f32 0.0, %v4675
      %v4677 = vpop.f32.mrb[0].mxu0
      %4678 = vmatprep.mubr.bf16.mxu0 0
      %4679 = vmatmul.mubr.bf16.gmra.mrb[0].mxu0 %v4565
      %v4680 = vpop.f32.mrb[0].mxu0
      %v4681 = vadd.f32 0.0, %v4680
      %v4682 = vpop.f32.mrb[0].mxu0
      %v4683 = vpop.f32.mrb[0].mxu0
      %v4684 = vadd.f32 0.0, %v4683
      %v4685 = vpop.f32.mrb[0].mxu0
      %4686 = vmatprep.mubr.bf16.mxu0 0
      %4687 = vmatmul.mubr.bf16.gmra.mrb[0].mxu0 %v4568
      %v4688 = vpop.f32.mrb[0].mxu0
      %v4689 = vadd.f32 0.0, %v4688
      %v4690 = vpop.f32.mrb[0].mxu0
      %v4691 = vpop.f32.mrb[0].mxu0
      %v4692 = vadd.f32 0.0, %v4691
      %v4693 = vpop.f32.mrb[0].mxu0
      %4694 = vmatprep.mubr.bf16.mxu0 0
      %4695 = vmatmul.mubr.bf16.gmra.mrb[0].mxu0 %v4571
      %v4696 = vpop.f32.mrb[0].mxu0
      %v4697 = vadd.f32 0.0, %v4696
      %v4698 = vpop.f32.mrb[0].mxu0
      %v4699 = vpop.f32.mrb[0].mxu0
      %v4700 = vadd.f32 0.0, %v4699
      %v4701 = vpop.f32.mrb[0].mxu0
      %4702 = vmatprep.mubr.bf16.mxu0 0
      %4703 = vmatmul.mubr.bf16.gmra.mrb[0].mxu0 %v4574
      %v4704 = vpop.f32.mrb[0].mxu0
      %v4705 = vadd.f32 0.0, %v4704
      %v4706 = vpop.f32.mrb[0].mxu0
      %v4707 = vpop.f32.mrb[0].mxu0
      %v4708 = vadd.f32 0.0, %v4707
      %v4709 = vpop.f32.mrb[0].mxu0
      %4710 = vmatprep.mubr.bf16.mxu0 0
      %4711 = vmatmul.mubr.bf16.gmra.mrb[0].mxu0 %v4577
      %v4712 = vpop.f32.mrb[0].mxu0
      %v4713 = vadd.f32 0.0, %v4712
      %v4714 = vpop.f32.mrb[0].mxu0
      %v4715 = vpop.f32.mrb[0].mxu0
      %v4716 = vadd.f32 0.0, %v4715
      %v4717 = vpop.f32.mrb[0].mxu0
      %4718 = vmatprep.mubr.bf16.mxu0 0
      %4719 = vmatmul.mubr.bf16.gmra.mrb[0].mxu0 %v4580
      %v4720 = vpop.f32.mrb[0].mxu0
      %v4721 = vadd.f32 0.0, %v4720
      %v4722 = vpop.f32.mrb[0].mxu0
      %v4723 = vpop.f32.mrb[0].mxu0
      %v4724 = vadd.f32 0.0, %v4723
      %v4725 = vpop.f32.mrb[0].mxu0
      %4726 = vmatprep.mubr.bf16.mxu0 0
      %4727 = vmatmul.mubr.bf16.gmra.mrb[0].mxu0 %v4583
      %v4728 = vpop.f32.mrb[0].mxu0
      %v4729 = vadd.f32 0.0, %v4728
      %v4730 = vpop.f32.mrb[0].mxu0
      %v4731 = vpop.f32.mrb[0].mxu0
      %v4732 = vadd.f32 0.0, %v4731
      %v4733 = vpop.f32.mrb[0].mxu0
      %4734 = vmatprep.mubr.bf16.mxu0 0
      %4735 = vmatmul.mubr.bf16.gmra.mrb[0].mxu0 %v4586
      %v4736 = vpop.f32.mrb[0].mxu0
      %v4737 = vadd.f32 0.0, %v4736
      %v4738 = vpop.f32.mrb[0].mxu0
      %v4739 = vpop.f32.mrb[0].mxu0
      %v4740 = vadd.f32 0.0, %v4739
      %v4741 = vpop.f32.mrb[0].mxu0
      %4742 = vmatprep.mubr.bf16.mxu0 0
      %4743 = vmatmul.mubr.bf16.gmra.mrb[0].mxu0 %v4589
      %v4744 = vpop.f32.mrb[0].mxu0
      %v4745 = vadd.f32 0.0, %v4744
      %v4746 = vpop.f32.mrb[0].mxu0
      %v4747 = vpop.f32.mrb[0].mxu0
      %v4748 = vadd.f32 0.0, %v4747
      %v4749 = vpop.f32.mrb[0].mxu0
      %4750 = vmatprep.mubr.bf16.mxu0 0
      %4751 = vmatmul.mubr.bf16.gmra.mrb[0].mxu0 %v4592
      %v4752 = vpop.f32.mrb[0].mxu0
      %v4753 = vadd.f32 0.0, %v4752
      %v4754 = vpop.f32.mrb[0].mxu0
      %v4755 = vpop.f32.mrb[0].mxu0
      %v4756 = vadd.f32 0.0, %v4755
      %v4757 = vpop.f32.mrb[0].mxu0
      %4758 = vmatprep.mubr.bf16.mxu0 0
      %4759 = vmatmul.mubr.bf16.gmra.mrb[0].mxu0 %v4595
      %v4760 = vpop.f32.mrb[0].mxu0
      %v4761 = vadd.f32 0.0, %v4760
      %v4762 = vpop.f32.mrb[0].mxu0
      %v4763 = vpop.f32.mrb[0].mxu0
      %v4764 = vadd.f32 0.0, %v4763
      %v4765 = vpop.f32.mrb[0].mxu0
      %4766 = vmatprep.mubr.bf16.mxu0 0
      %4767 = vmatmul.mubr.bf16.gmra.mrb[0].mxu0 %v4598
      %v4768 = vpop.f32.mrb[0].mxu0
      %v4769 = vadd.f32 0.0, %v4768
      %v4770 = vpop.f32.mrb[0].mxu0
      %v4771 = vpop.f32.mrb[0].mxu0
      %v4772 = vadd.f32 0.0, %v4771
      %v4773 = vpop.f32.mrb[0].mxu0
      %4774 = vmatprep.mubr.bf16.mxu0 0
      %4775 = vmatmul.mubr.bf16.gmra.mrb[0].mxu0 %v4601
      %v4776 = vpop.f32.mrb[0].mxu0
      %v4777 = vadd.f32 0.0, %v4776
      %v4778 = vpop.f32.mrb[0].mxu0
      %v4779 = vpop.f32.mrb[0].mxu0
      %v4780 = vadd.f32 0.0, %v4779
      %v4781 = vpop.f32.mrb[0].mxu0
      %4782 = vdwg.mxu0
      %v4783 = vadd.f32 %v4511, %v4641
      %v4784 = vadd.f32 %v4512, %v4644
      %v4785 = vadd.f32 %v4513, %v4649
      %v4786 = vadd.f32 %v4514, %v4652
      %v4787 = vadd.f32 %v4515, %v4657
      %v4788 = vadd.f32 %v4516, %v4660
      %v4789 = vadd.f32 %v4517, %v4665
      %v4790 = vadd.f32 %v4518, %v4668
      %v4791 = vadd.f32 %v4519, %v4673
      %v4792 = vadd.f32 %v4520, %v4676
      %v4793 = vadd.f32 %v4521, %v4681
      %v4794 = vadd.f32 %v4522, %v4684
      %v4795 = vadd.f32 %v4523, %v4689
      %v4796 = vadd.f32 %v4524, %v4692
      %v4797 = vadd.f32 %v4525, %v4697
      %v4798 = vadd.f32 %v4526, %v4700
      %v4799 = vadd.f32 %v4527, %v4705
      %v4800 = vadd.f32 %v4528, %v4708
      %v4801 = vadd.f32 %v4529, %v4713
      %v4802 = vadd.f32 %v4530, %v4716
      %v4803 = vadd.f32 %v4531, %v4721
      %v4804 = vadd.f32 %v4532, %v4724
      %v4805 = vadd.f32 %v4533, %v4729
      %v4806 = vadd.f32 %v4534, %v4732
      %v4807 = vadd.f32 %v4535, %v4737
      %v4808 = vadd.f32 %v4536, %v4740
      %v4809 = vadd.f32 %v4537, %v4745
      %v4810 = vadd.f32 %v4538, %v4748
      %v4811 = vadd.f32 %v4539, %v4753
      %v4812 = vadd.f32 %v4540, %v4756
      %v4813 = vadd.f32 %v4541, %v4761
      %v4814 = vadd.f32 %v4542, %v4764
      %v4815 = vadd.f32 %v4543, %v4769
      %v4816 = vadd.f32 %v4544, %v4772
      %v4817 = vadd.f32 %v4545, %v4777
      %v4818 = vadd.f32 %v4546, %v4780
      %v4819 = vld [vmem:[%s315 + $0x25] sm:$0xff]
      %v4820 = vld [vmem:[%s315 + $0x2d] sm:$0xff]
      %v4821 = vld [vmem:[%s315 + $0x35] sm:$0xff]
      %v4822 = vld [vmem:[%s315 + $0x3d] sm:$0xff]
      %v4823 = vld [vmem:[%s315 + $0x45] sm:$0xff]
      %v4824 = vld [vmem:[%s315 + $0x4d] sm:$0xff]
      %v4825 = vld [vmem:[%s315 + $0x55] sm:$0xff]
      %v4826 = vld [vmem:[%s315 + $0x5d] sm:$0xff]
      %v4827 = vld [vmem:[%s315 + $0x65] sm:$0xff]
      %v4828 = vld [vmem:[%s315 + $0x6d] sm:$0xff]
      %v4829 = vld [vmem:[%s315 + $0x75] sm:$0xff]
      %v4830 = vld [vmem:[%s315 + $0x7d] sm:$0xff]
      %v4831 = vld [vmem:[%s315 + $0x85] sm:$0xff]
      %v4832 = vld [vmem:[%s315 + $0x8d] sm:$0xff]
      %v4833 = vld [vmem:[%s315 + $0x95] sm:$0xff]
      %v4834 = vld [vmem:[%s315 + $0x9d] sm:$0xff]
      %v4835 = vld [vmem:[%s315 + $0xa5] sm:$0xff]
      %v4836 = vld [vmem:[%s315 + $0xad] sm:$0xff]
      %v4837 = vld [vmem:[%s315 + $0xb5] sm:$0xff]
      %v4838 = vld [vmem:[%s315 + $0xbd] sm:$0xff]
      %v4839 = vld [vmem:[%s315 + $0xc5] sm:$0xff]
      %v4840 = vld [vmem:[%s315 + $0xcd] sm:$0xff]
      %v4841 = vld [vmem:[%s315 + $0xd5] sm:$0xff]
      %v4842 = vld [vmem:[%s315 + $0xdd] sm:$0xff]
      %v4843 = vld [vmem:[%s315 + $0xe5] sm:$0xff]
      %v4844 = vld [vmem:[%s315 + $0xed] sm:$0xff]
      %v4845 = vld [vmem:[%s315 + $0xf5] sm:$0xff]
      %v4846 = vld [vmem:[%s315 + $0xfd] sm:$0xff]
      %v4847 = vld [vmem:[%s315 + $0x105] sm:$0xff]
      %v4848 = vld [vmem:[%s315 + $0x10d] sm:$0xff]
      %v4849 = vld [vmem:[%s315 + $0x115] sm:$0xff]
      %v4850 = vld [vmem:[%s315 + $0x11d] sm:$0xff]
      %v4851 = vld [vmem:[%s315 + $0x125] sm:$0xff]
      %v4852 = vld [vmem:[%s315 + $0x12d] sm:$0xff]
      %v4853 = vld [vmem:[%s315 + $0x135] sm:$0xff]
      %v4854 = vld [vmem:[%s315 + $0x13d] sm:$0xff]
      %v4855 = vpack.c.bf16 %v4820, %v4819
      %v4856 = vpack.c.bf16 %v4822, %v4821
      %v4857 = vpack.c.bf16 %v4824, %v4823
      %v4858 = vpack.c.bf16 %v4826, %v4825
      %v4859 = vpack.c.bf16 %v4828, %v4827
      %v4860 = vpack.c.bf16 %v4830, %v4829
      %v4861 = vpack.c.bf16 %v4832, %v4831
      %v4862 = vpack.c.bf16 %v4834, %v4833
      %v4863 = vpack.c.bf16 %v4836, %v4835
      %v4864 = vpack.c.bf16 %v4838, %v4837
      %v4865 = vpack.c.bf16 %v4840, %v4839
      %v4866 = vpack.c.bf16 %v4842, %v4841
      %v4867 = vpack.c.bf16 %v4844, %v4843
      %v4868 = vpack.c.bf16 %v4846, %v4845
      %v4869 = vpack.c.bf16 %v4848, %v4847
      %v4870 = vpack.c.bf16 %v4850, %v4849
      %v4871 = vpack.c.bf16 %v4852, %v4851
      %v4872 = vpack.c.bf16 %v4854, %v4853
      %v4873 = vld [vmem:[%s320 + $0x25] sm:$0xff]
      %v4874 = vld [vmem:[%s320 + $0x2d] sm:$0xff]
      %v4875 = vld [vmem:[%s320 + $0x35] sm:$0xff]
      %v4876 = vld [vmem:[%s320 + $0x3d] sm:$0xff]
      %v4877 = vld [vmem:[%s320 + $0x45] sm:$0xff]
      %v4878 = vld [vmem:[%s320 + $0x4d] sm:$0xff]
      %v4879 = vld [vmem:[%s320 + $0x55] sm:$0xff]
      %v4880 = vld [vmem:[%s320 + $0x5d] sm:$0xff]
      %v4881 = vld [vmem:[%s320 + $0x65] sm:$0xff]
      %v4882 = vld [vmem:[%s320 + $0x6d] sm:$0xff]
      %v4883 = vld [vmem:[%s320 + $0x75] sm:$0xff]
      %v4884 = vld [vmem:[%s320 + $0x7d] sm:$0xff]
      %v4885 = vld [vmem:[%s320 + $0x85] sm:$0xff]
      %v4886 = vld [vmem:[%s320 + $0x8d] sm:$0xff]
      %v4887 = vld [vmem:[%s320 + $0x95] sm:$0xff]
      %v4888 = vld [vmem:[%s320 + $0x9d] sm:$0xff]
      %v4889 = vld [vmem:[%s320 + $0xa5] sm:$0xff]
      %v4890 = vld [vmem:[%s320 + $0xad] sm:$0xff]
      %v4891 = vld [vmem:[%s320 + $0xb5] sm:$0xff]
      %v4892 = vld [vmem:[%s320 + $0xbd] sm:$0xff]
      %v4893 = vld [vmem:[%s320 + $0xc5] sm:$0xff]
      %v4894 = vld [vmem:[%s320 + $0xcd] sm:$0xff]
      %v4895 = vld [vmem:[%s320 + $0xd5] sm:$0xff]
      %v4896 = vld [vmem:[%s320 + $0xdd] sm:$0xff]
      %v4897 = vld [vmem:[%s320 + $0xe5] sm:$0xff]
      %v4898 = vld [vmem:[%s320 + $0xed] sm:$0xff]
      %v4899 = vld [vmem:[%s320 + $0xf5] sm:$0xff]
      %v4900 = vld [vmem:[%s320 + $0xfd] sm:$0xff]
      %v4901 = vld [vmem:[%s320 + $0x105] sm:$0xff]
      %v4902 = vld [vmem:[%s320 + $0x10d] sm:$0xff]
      %v4903 = vld [vmem:[%s320 + $0x115] sm:$0xff]
      %v4904 = vld [vmem:[%s320 + $0x11d] sm:$0xff]
      %v4905 = vld [vmem:[%s320 + $0x125] sm:$0xff]
      %v4906 = vld [vmem:[%s320 + $0x12d] sm:$0xff]
      %v4907 = vld [vmem:[%s320 + $0x135] sm:$0xff]
      %v4908 = vld [vmem:[%s320 + $0x13d] sm:$0xff]
      %v4909 = vpack.c.bf16 %v4874, %v4873
      %v4910 = vpack.c.bf16 %v4876, %v4875
      %v4911 = vpack.c.bf16 %v4878, %v4877
      %v4912 = vpack.c.bf16 %v4880, %v4879
      %v4913 = vpack.c.bf16 %v4882, %v4881
      %v4914 = vpack.c.bf16 %v4884, %v4883
      %v4915 = vpack.c.bf16 %v4886, %v4885
      %v4916 = vpack.c.bf16 %v4888, %v4887
      %v4917 = vpack.c.bf16 %v4890, %v4889
      %v4918 = vpack.c.bf16 %v4892, %v4891
      %v4919 = vpack.c.bf16 %v4894, %v4893
      %v4920 = vpack.c.bf16 %v4896, %v4895
      %v4921 = vpack.c.bf16 %v4898, %v4897
      %v4922 = vpack.c.bf16 %v4900, %v4899
      %v4923 = vpack.c.bf16 %v4902, %v4901
      %v4924 = vpack.c.bf16 %v4904, %v4903
      %v4925 = vpack.c.bf16 %v4906, %v4905
      %v4926 = vpack.c.bf16 %v4908, %v4907
      %s4927 = scalar_lea.vmem %s3, 14
      %v4928 = vld [vmem:[%s4927] sm:$0x3]
      %v4930 = vsel %vm437, %v4855, 0
      %v4933 = vsel %vm437, %v4856, 0
      %v4936 = vsel %vm437, %v4857, 0
      %v4939 = vsel %vm437, %v4858, 0
      %v4942 = vsel %vm437, %v4859, 0
      %v4945 = vsel %vm437, %v4860, 0
      %v4948 = vsel %vm437, %v4861, 0
      %v4951 = vsel %vm437, %v4862, 0
      %v4954 = vsel %vm437, %v4863, 0
      %v4957 = vsel %vm437, %v4864, 0
      %v4960 = vsel %vm437, %v4865, 0
      %v4963 = vsel %vm437, %v4866, 0
      %v4966 = vsel %vm437, %v4867, 0
      %v4969 = vsel %vm437, %v4868, 0
      %v4972 = vsel %vm437, %v4869, 0
      %v4975 = vsel %vm437, %v4870, 0
      %v4978 = vsel %vm437, %v4871, 0
      %v4981 = vsel %vm437, %v4872, 0
      %v4984 = vsel %vm492, %v4928, 0
      %4986 = vmatprep.subr.bf16.mxu0 0
      %4987 = vmatpush1.bf16.msra.mxu0 %v4984
      %4988 = vmatprep.subr.bf16.mxu0 0
      %4989 = vmatpush1.bf16.msra.mxu0 0
      %4990 = vmatprep.subr.bf16.mxu0 0
      %4991 = vmatpush1.bf16.msra.mxu0 0
      %4992 = vmatprep.subr.bf16.mxu0 0
      %4993 = vmatpush1.bf16.msra.mxu0 0
      %4994 = vmatprep.subr.bf16.mxu0 0
      %4995 = vmatpush1.bf16.msra.mxu0 0
      %4996 = vmatprep.subr.bf16.mxu0 0
      %4997 = vmatpush1.bf16.msra.mxu0 0
      %4998 = vmatprep.subr.bf16.mxu0 0
      %4999 = vmatpush1.bf16.msra.mxu0 0
      %5000 = vmatprep.subr.bf16.mxu0 0
      %5001 = vmatpush1.bf16.msra.mxu0 0
      %5002 = vmatprep.subr.bf16.mxu0 0
      %5003 = vmatpush1.bf16.msra.mxu0 0
      %5004 = vmatprep.subr.bf16.mxu0 0
      %5005 = vmatpush1.bf16.msra.mxu0 0
      %5006 = vmatprep.subr.bf16.mxu0 0
      %5007 = vmatpush1.bf16.msra.mxu0 0
      %5008 = vmatprep.subr.bf16.mxu0 0
      %5009 = vmatpush1.bf16.msra.mxu0 0
      %5010 = vmatprep.subr.bf16.mxu0 0
      %5011 = vmatpush1.bf16.msra.mxu0 0
      %5012 = vmatprep.subr.bf16.mxu0 0
      %5013 = vmatpush1.bf16.msra.mxu0 0
      %5014 = vmatprep.subr.bf16.mxu0 0
      %5015 = vmatpush1.bf16.msra.mxu0 0
      %5016 = vmatprep.subr.bf16.mxu0 0
      %5017 = vmatpush1.bf16.msra.mxu0 0
      %5018 = vmatprep.mubr.bf16.mxu0 0
      %5019 = vmatmul.mubr.bf16.gmra.mrb[0].mxu0 %v4930
      %v5020 = vpop.f32.mrb[0].mxu0
      %v5021 = vadd.f32 0.0, %v5020
      %v5022 = vpop.f32.mrb[0].mxu0
      %v5023 = vpop.f32.mrb[0].mxu0
      %v5024 = vadd.f32 0.0, %v5023
      %v5025 = vpop.f32.mrb[0].mxu0
      %5026 = vmatprep.mubr.bf16.mxu0 0
      %5027 = vmatmul.mubr.bf16.gmra.mrb[0].mxu0 %v4933
      %v5028 = vpop.f32.mrb[0].mxu0
      %v5029 = vadd.f32 0.0, %v5028
      %v5030 = vpop.f32.mrb[0].mxu0
      %v5031 = vpop.f32.mrb[0].mxu0
      %v5032 = vadd.f32 0.0, %v5031
      %v5033 = vpop.f32.mrb[0].mxu0
      %5034 = vmatprep.mubr.bf16.mxu0 0
      %5035 = vmatmul.mubr.bf16.gmra.mrb[0].mxu0 %v4936
      %v5036 = vpop.f32.mrb[0].mxu0
      %v5037 = vadd.f32 0.0, %v5036
      %v5038 = vpop.f32.mrb[0].mxu0
      %v5039 = vpop.f32.mrb[0].mxu0
      %v5040 = vadd.f32 0.0, %v5039
      %v5041 = vpop.f32.mrb[0].mxu0
      %5042 = vmatprep.mubr.bf16.mxu0 0
      %5043 = vmatmul.mubr.bf16.gmra.mrb[0].mxu0 %v4939
      %v5044 = vpop.f32.mrb[0].mxu0
      %v5045 = vadd.f32 0.0, %v5044
      %v5046 = vpop.f32.mrb[0].mxu0
      %v5047 = vpop.f32.mrb[0].mxu0
      %v5048 = vadd.f32 0.0, %v5047
      %v5049 = vpop.f32.mrb[0].mxu0
      %5050 = vmatprep.mubr.bf16.mxu0 0
      %5051 = vmatmul.mubr.bf16.gmra.mrb[0].mxu0 %v4942
      %v5052 = vpop.f32.mrb[0].mxu0
      %v5053 = vadd.f32 0.0, %v5052
      %v5054 = vpop.f32.mrb[0].mxu0
      %v5055 = vpop.f32.mrb[0].mxu0
      %v5056 = vadd.f32 0.0, %v5055
      %v5057 = vpop.f32.mrb[0].mxu0
      %5058 = vmatprep.mubr.bf16.mxu0 0
      %5059 = vmatmul.mubr.bf16.gmra.mrb[0].mxu0 %v4945
      %v5060 = vpop.f32.mrb[0].mxu0
      %v5061 = vadd.f32 0.0, %v5060
      %v5062 = vpop.f32.mrb[0].mxu0
      %v5063 = vpop.f32.mrb[0].mxu0
      %v5064 = vadd.f32 0.0, %v5063
      %v5065 = vpop.f32.mrb[0].mxu0
      %5066 = vmatprep.mubr.bf16.mxu0 0
      %5067 = vmatmul.mubr.bf16.gmra.mrb[0].mxu0 %v4948
      %v5068 = vpop.f32.mrb[0].mxu0
      %v5069 = vadd.f32 0.0, %v5068
      %v5070 = vpop.f32.mrb[0].mxu0
      %v5071 = vpop.f32.mrb[0].mxu0
      %v5072 = vadd.f32 0.0, %v5071
      %v5073 = vpop.f32.mrb[0].mxu0
      %5074 = vmatprep.mubr.bf16.mxu0 0
      %5075 = vmatmul.mubr.bf16.gmra.mrb[0].mxu0 %v4951
      %v5076 = vpop.f32.mrb[0].mxu0
      %v5077 = vadd.f32 0.0, %v5076
      %v5078 = vpop.f32.mrb[0].mxu0
      %v5079 = vpop.f32.mrb[0].mxu0
      %v5080 = vadd.f32 0.0, %v5079
      %v5081 = vpop.f32.mrb[0].mxu0
      %5082 = vmatprep.mubr.bf16.mxu0 0
      %5083 = vmatmul.mubr.bf16.gmra.mrb[0].mxu0 %v4954
      %v5084 = vpop.f32.mrb[0].mxu0
      %v5085 = vadd.f32 0.0, %v5084
      %v5086 = vpop.f32.mrb[0].mxu0
      %v5087 = vpop.f32.mrb[0].mxu0
      %v5088 = vadd.f32 0.0, %v5087
      %v5089 = vpop.f32.mrb[0].mxu0
      %5090 = vmatprep.mubr.bf16.mxu0 0
      %5091 = vmatmul.mubr.bf16.gmra.mrb[0].mxu0 %v4957
      %v5092 = vpop.f32.mrb[0].mxu0
      %v5093 = vadd.f32 0.0, %v5092
      %v5094 = vpop.f32.mrb[0].mxu0
      %v5095 = vpop.f32.mrb[0].mxu0
      %v5096 = vadd.f32 0.0, %v5095
      %v5097 = vpop.f32.mrb[0].mxu0
      %5098 = vmatprep.mubr.bf16.mxu0 0
      %5099 = vmatmul.mubr.bf16.gmra.mrb[0].mxu0 %v4960
      %v5100 = vpop.f32.mrb[0].mxu0
      %v5101 = vadd.f32 0.0, %v5100
      %v5102 = vpop.f32.mrb[0].mxu0
      %v5103 = vpop.f32.mrb[0].mxu0
      %v5104 = vadd.f32 0.0, %v5103
      %v5105 = vpop.f32.mrb[0].mxu0
      %5106 = vmatprep.mubr.bf16.mxu0 0
      %5107 = vmatmul.mubr.bf16.gmra.mrb[0].mxu0 %v4963
      %v5108 = vpop.f32.mrb[0].mxu0
      %v5109 = vadd.f32 0.0, %v5108
      %v5110 = vpop.f32.mrb[0].mxu0
      %v5111 = vpop.f32.mrb[0].mxu0
      %v5112 = vadd.f32 0.0, %v5111
      %v5113 = vpop.f32.mrb[0].mxu0
      %5114 = vmatprep.mubr.bf16.mxu0 0
      %5115 = vmatmul.mubr.bf16.gmra.mrb[0].mxu0 %v4966
      %v5116 = vpop.f32.mrb[0].mxu0
      %v5117 = vadd.f32 0.0, %v5116
      %v5118 = vpop.f32.mrb[0].mxu0
      %v5119 = vpop.f32.mrb[0].mxu0
      %v5120 = vadd.f32 0.0, %v5119
      %v5121 = vpop.f32.mrb[0].mxu0
      %5122 = vmatprep.mubr.bf16.mxu0 0
      %5123 = vmatmul.mubr.bf16.gmra.mrb[0].mxu0 %v4969
      %v5124 = vpop.f32.mrb[0].mxu0
      %v5125 = vadd.f32 0.0, %v5124
      %v5126 = vpop.f32.mrb[0].mxu0
      %v5127 = vpop.f32.mrb[0].mxu0
      %v5128 = vadd.f32 0.0, %v5127
      %v5129 = vpop.f32.mrb[0].mxu0
      %5130 = vmatprep.mubr.bf16.mxu0 0
      %5131 = vmatmul.mubr.bf16.gmra.mrb[0].mxu0 %v4972
      %v5132 = vpop.f32.mrb[0].mxu0
      %v5133 = vadd.f32 0.0, %v5132
      %v5134 = vpop.f32.mrb[0].mxu0
      %v5135 = vpop.f32.mrb[0].mxu0
      %v5136 = vadd.f32 0.0, %v5135
      %v5137 = vpop.f32.mrb[0].mxu0
      %5138 = vmatprep.mubr.bf16.mxu0 0
      %5139 = vmatmul.mubr.bf16.gmra.mrb[0].mxu0 %v4975
      %v5140 = vpop.f32.mrb[0].mxu0
      %v5141 = vadd.f32 0.0, %v5140
      %v5142 = vpop.f32.mrb[0].mxu0
      %v5143 = vpop.f32.mrb[0].mxu0
      %v5144 = vadd.f32 0.0, %v5143
      %v5145 = vpop.f32.mrb[0].mxu0
      %5146 = vmatprep.mubr.bf16.mxu0 0
      %5147 = vmatmul.mubr.bf16.gmra.mrb[0].mxu0 %v4978
      %v5148 = vpop.f32.mrb[0].mxu0
      %v5149 = vadd.f32 0.0, %v5148
      %v5150 = vpop.f32.mrb[0].mxu0
      %v5151 = vpop.f32.mrb[0].mxu0
      %v5152 = vadd.f32 0.0, %v5151
      %v5153 = vpop.f32.mrb[0].mxu0
      %5154 = vmatprep.mubr.bf16.mxu0 0
      %5155 = vmatmul.mubr.bf16.gmra.mrb[0].mxu0 %v4981
      %v5156 = vpop.f32.mrb[0].mxu0
      %v5157 = vadd.f32 0.0, %v5156
      %v5158 = vpop.f32.mrb[0].mxu0
      %v5159 = vpop.f32.mrb[0].mxu0
      %v5160 = vadd.f32 0.0, %v5159
      %v5161 = vpop.f32.mrb[0].mxu0
      %5162 = vdwg.mxu0
      %v5163 = vadd.f32 %v4783, %v5021
      %v5164 = vadd.f32 %v4784, %v5024
      %v5165 = vadd.f32 %v4785, %v5029
      %v5166 = vadd.f32 %v4786, %v5032
      %v5167 = vadd.f32 %v4787, %v5037
      %v5168 = vadd.f32 %v4788, %v5040
      %v5169 = vadd.f32 %v4789, %v5045
      %v5170 = vadd.f32 %v4790, %v5048
      %v5171 = vadd.f32 %v4791, %v5053
      %v5172 = vadd.f32 %v4792, %v5056
      %v5173 = vadd.f32 %v4793, %v5061
      %v5174 = vadd.f32 %v4794, %v5064
      %v5175 = vadd.f32 %v4795, %v5069
      %v5176 = vadd.f32 %v4796, %v5072
      %v5177 = vadd.f32 %v4797, %v5077
      %v5178 = vadd.f32 %v4798, %v5080
      %v5179 = vadd.f32 %v4799, %v5085
      %v5180 = vadd.f32 %v4800, %v5088
      %v5181 = vadd.f32 %v4801, %v5093
      %v5182 = vadd.f32 %v4802, %v5096
      %v5183 = vadd.f32 %v4803, %v5101
      %v5184 = vadd.f32 %v4804, %v5104
      %v5185 = vadd.f32 %v4805, %v5109
      %v5186 = vadd.f32 %v4806, %v5112
      %v5187 = vadd.f32 %v4807, %v5117
      %v5188 = vadd.f32 %v4808, %v5120
      %v5189 = vadd.f32 %v4809, %v5125
      %v5190 = vadd.f32 %v4810, %v5128
      %v5191 = vadd.f32 %v4811, %v5133
      %v5192 = vadd.f32 %v4812, %v5136
      %v5193 = vadd.f32 %v4813, %v5141
      %v5194 = vadd.f32 %v4814, %v5144
      %v5195 = vadd.f32 %v4815, %v5149
      %v5196 = vadd.f32 %v4816, %v5152
      %v5197 = vadd.f32 %v4817, %v5157
      %v5198 = vadd.f32 %v4818, %v5160
      %s5199 = scalar_lea.vmem %s4, 14
      %v5200 = vld [vmem:[%s5199] sm:$0x3]
      %v5202 = vsel %vm437, %v4909, 0
      %v5205 = vsel %vm437, %v4910, 0
      %v5208 = vsel %vm437, %v4911, 0
      %v5211 = vsel %vm437, %v4912, 0
      %v5214 = vsel %vm437, %v4913, 0
      %v5217 = vsel %vm437, %v4914, 0
      %v5220 = vsel %vm437, %v4915, 0
      %v5223 = vsel %vm437, %v4916, 0
      %v5226 = vsel %vm437, %v4917, 0
      %v5229 = vsel %vm437, %v4918, 0
      %v5232 = vsel %vm437, %v4919, 0
      %v5235 = vsel %vm437, %v4920, 0
      %v5238 = vsel %vm437, %v4921, 0
      %v5241 = vsel %vm437, %v4922, 0
      %v5244 = vsel %vm437, %v4923, 0
      %v5247 = vsel %vm437, %v4924, 0
      %v5250 = vsel %vm437, %v4925, 0
      %v5253 = vsel %vm437, %v4926, 0
      %v5256 = vsel %vm492, %v5200, 0
      %5258 = vmatprep.subr.bf16.mxu0 0
      %5259 = vmatpush1.bf16.msra.mxu0 %v5256
      %5260 = vmatprep.subr.bf16.mxu0 0
      %5261 = vmatpush1.bf16.msra.mxu0 0
      %5262 = vmatprep.subr.bf16.mxu0 0
      %5263 = vmatpush1.bf16.msra.mxu0 0
      %5264 = vmatprep.subr.bf16.mxu0 0
      %5265 = vmatpush1.bf16.msra.mxu0 0
      %5266 = vmatprep.subr.bf16.mxu0 0
      %5267 = vmatpush1.bf16.msra.mxu0 0
      %5268 = vmatprep.subr.bf16.mxu0 0
      %5269 = vmatpush1.bf16.msra.mxu0 0
      %5270 = vmatprep.subr.bf16.mxu0 0
      %5271 = vmatpush1.bf16.msra.mxu0 0
      %5272 = vmatprep.subr.bf16.mxu0 0
      %5273 = vmatpush1.bf16.msra.mxu0 0
      %5274 = vmatprep.subr.bf16.mxu0 0
      %5275 = vmatpush1.bf16.msra.mxu0 0
      %5276 = vmatprep.subr.bf16.mxu0 0
      %5277 = vmatpush1.bf16.msra.mxu0 0
      %5278 = vmatprep.subr.bf16.mxu0 0
      %5279 = vmatpush1.bf16.msra.mxu0 0
      %5280 = vmatprep.subr.bf16.mxu0 0
      %5281 = vmatpush1.bf16.msra.mxu0 0
      %5282 = vmatprep.subr.bf16.mxu0 0
      %5283 = vmatpush1.bf16.msra.mxu0 0
      %5284 = vmatprep.subr.bf16.mxu0 0
      %5285 = vmatpush1.bf16.msra.mxu0 0
      %5286 = vmatprep.subr.bf16.mxu0 0
      %5287 = vmatpush1.bf16.msra.mxu0 0
      %5288 = vmatprep.subr.bf16.mxu0 0
      %5289 = vmatpush1.bf16.msra.mxu0 0
      %5290 = vmatprep.mubr.bf16.mxu0 0
      %5291 = vmatmul.mubr.bf16.gmra.mrb[0].mxu0 %v5202
      %v5292 = vpop.f32.mrb[0].mxu0
      %v5293 = vadd.f32 0.0, %v5292
      %v5294 = vpop.f32.mrb[0].mxu0
      %v5295 = vpop.f32.mrb[0].mxu0
      %v5296 = vadd.f32 0.0, %v5295
      %v5297 = vpop.f32.mrb[0].mxu0
      %5298 = vmatprep.mubr.bf16.mxu0 0
      %5299 = vmatmul.mubr.bf16.gmra.mrb[0].mxu0 %v5205
      %v5300 = vpop.f32.mrb[0].mxu0
      %v5301 = vadd.f32 0.0, %v5300
      %v5302 = vpop.f32.mrb[0].mxu0
      %v5303 = vpop.f32.mrb[0].mxu0
      %v5304 = vadd.f32 0.0, %v5303
      %v5305 = vpop.f32.mrb[0].mxu0
      %5306 = vmatprep.mubr.bf16.mxu0 0
      %5307 = vmatmul.mubr.bf16.gmra.mrb[0].mxu0 %v5208
      %v5308 = vpop.f32.mrb[0].mxu0
      %v5309 = vadd.f32 0.0, %v5308
      %v5310 = vpop.f32.mrb[0].mxu0
      %v5311 = vpop.f32.mrb[0].mxu0
      %v5312 = vadd.f32 0.0, %v5311
      %v5313 = vpop.f32.mrb[0].mxu0
      %5314 = vmatprep.mubr.bf16.mxu0 0
      %5315 = vmatmul.mubr.bf16.gmra.mrb[0].mxu0 %v5211
      %v5316 = vpop.f32.mrb[0].mxu0
      %v5317 = vadd.f32 0.0, %v5316
      %v5318 = vpop.f32.mrb[0].mxu0
      %v5319 = vpop.f32.mrb[0].mxu0
      %v5320 = vadd.f32 0.0, %v5319
      %v5321 = vpop.f32.mrb[0].mxu0
      %5322 = vmatprep.mubr.bf16.mxu0 0
      %5323 = vmatmul.mubr.bf16.gmra.mrb[0].mxu0 %v5214
      %v5324 = vpop.f32.mrb[0].mxu0
      %v5325 = vadd.f32 0.0, %v5324
      %v5326 = vpop.f32.mrb[0].mxu0
      %v5327 = vpop.f32.mrb[0].mxu0
      %v5328 = vadd.f32 0.0, %v5327
      %v5329 = vpop.f32.mrb[0].mxu0
      %5330 = vmatprep.mubr.bf16.mxu0 0
      %5331 = vmatmul.mubr.bf16.gmra.mrb[0].mxu0 %v5217
      %v5332 = vpop.f32.mrb[0].mxu0
      %v5333 = vadd.f32 0.0, %v5332
      %v5334 = vpop.f32.mrb[0].mxu0
      %v5335 = vpop.f32.mrb[0].mxu0
      %v5336 = vadd.f32 0.0, %v5335
      %v5337 = vpop.f32.mrb[0].mxu0
      %5338 = vmatprep.mubr.bf16.mxu0 0
      %5339 = vmatmul.mubr.bf16.gmra.mrb[0].mxu0 %v5220
      %v5340 = vpop.f32.mrb[0].mxu0
      %v5341 = vadd.f32 0.0, %v5340
      %v5342 = vpop.f32.mrb[0].mxu0
      %v5343 = vpop.f32.mrb[0].mxu0
      %v5344 = vadd.f32 0.0, %v5343
      %v5345 = vpop.f32.mrb[0].mxu0
      %5346 = vmatprep.mubr.bf16.mxu0 0
      %5347 = vmatmul.mubr.bf16.gmra.mrb[0].mxu0 %v5223
      %v5348 = vpop.f32.mrb[0].mxu0
      %v5349 = vadd.f32 0.0, %v5348
      %v5350 = vpop.f32.mrb[0].mxu0
      %v5351 = vpop.f32.mrb[0].mxu0
      %v5352 = vadd.f32 0.0, %v5351
      %v5353 = vpop.f32.mrb[0].mxu0
      %5354 = vmatprep.mubr.bf16.mxu0 0
      %5355 = vmatmul.mubr.bf16.gmra.mrb[0].mxu0 %v5226
      %v5356 = vpop.f32.mrb[0].mxu0
      %v5357 = vadd.f32 0.0, %v5356
      %v5358 = vpop.f32.mrb[0].mxu0
      %v5359 = vpop.f32.mrb[0].mxu0
      %v5360 = vadd.f32 0.0, %v5359
      %v5361 = vpop.f32.mrb[0].mxu0
      %5362 = vmatprep.mubr.bf16.mxu0 0
      %5363 = vmatmul.mubr.bf16.gmra.mrb[0].mxu0 %v5229
      %v5364 = vpop.f32.mrb[0].mxu0
      %v5365 = vadd.f32 0.0, %v5364
      %v5366 = vpop.f32.mrb[0].mxu0
      %v5367 = vpop.f32.mrb[0].mxu0
      %v5368 = vadd.f32 0.0, %v5367
      %v5369 = vpop.f32.mrb[0].mxu0
      %5370 = vmatprep.mubr.bf16.mxu0 0
      %5371 = vmatmul.mubr.bf16.gmra.mrb[0].mxu0 %v5232
      %v5372 = vpop.f32.mrb[0].mxu0
      %v5373 = vadd.f32 0.0, %v5372
      %v5374 = vpop.f32.mrb[0].mxu0
      %v5375 = vpop.f32.mrb[0].mxu0
      %v5376 = vadd.f32 0.0, %v5375
      %v5377 = vpop.f32.mrb[0].mxu0
      %5378 = vmatprep.mubr.bf16.mxu0 0
      %5379 = vmatmul.mubr.bf16.gmra.mrb[0].mxu0 %v5235
      %v5380 = vpop.f32.mrb[0].mxu0
      %v5381 = vadd.f32 0.0, %v5380
      %v5382 = vpop.f32.mrb[0].mxu0
      %v5383 = vpop.f32.mrb[0].mxu0
      %v5384 = vadd.f32 0.0, %v5383
      %v5385 = vpop.f32.mrb[0].mxu0
      %5386 = vmatprep.mubr.bf16.mxu0 0
      %5387 = vmatmul.mubr.bf16.gmra.mrb[0].mxu0 %v5238
      %v5388 = vpop.f32.mrb[0].mxu0
      %v5389 = vadd.f32 0.0, %v5388
      %v5390 = vpop.f32.mrb[0].mxu0
      %v5391 = vpop.f32.mrb[0].mxu0
      %v5392 = vadd.f32 0.0, %v5391
      %v5393 = vpop.f32.mrb[0].mxu0
      %5394 = vmatprep.mubr.bf16.mxu0 0
      %5395 = vmatmul.mubr.bf16.gmra.mrb[0].mxu0 %v5241
      %v5396 = vpop.f32.mrb[0].mxu0
      %v5397 = vadd.f32 0.0, %v5396
      %v5398 = vpop.f32.mrb[0].mxu0
      %v5399 = vpop.f32.mrb[0].mxu0
      %v5400 = vadd.f32 0.0, %v5399
      %v5401 = vpop.f32.mrb[0].mxu0
      %5402 = vmatprep.mubr.bf16.mxu0 0
      %5403 = vmatmul.mubr.bf16.gmra.mrb[0].mxu0 %v5244
      %v5404 = vpop.f32.mrb[0].mxu0
      %v5405 = vadd.f32 0.0, %v5404
      %v5406 = vpop.f32.mrb[0].mxu0
      %v5407 = vpop.f32.mrb[0].mxu0
      %v5408 = vadd.f32 0.0, %v5407
      %v5409 = vpop.f32.mrb[0].mxu0
      %5410 = vmatprep.mubr.bf16.mxu0 0
      %5411 = vmatmul.mubr.bf16.gmra.mrb[0].mxu0 %v5247
      %v5412 = vpop.f32.mrb[0].mxu0
      %v5413 = vadd.f32 0.0, %v5412
      %v5414 = vpop.f32.mrb[0].mxu0
      %v5415 = vpop.f32.mrb[0].mxu0
      %v5416 = vadd.f32 0.0, %v5415
      %v5417 = vpop.f32.mrb[0].mxu0
      %5418 = vmatprep.mubr.bf16.mxu0 0
      %5419 = vmatmul.mubr.bf16.gmra.mrb[0].mxu0 %v5250
      %v5420 = vpop.f32.mrb[0].mxu0
      %v5421 = vadd.f32 0.0, %v5420
      %v5422 = vpop.f32.mrb[0].mxu0
      %v5423 = vpop.f32.mrb[0].mxu0
      %v5424 = vadd.f32 0.0, %v5423
      %v5425 = vpop.f32.mrb[0].mxu0
      %5426 = vmatprep.mubr.bf16.mxu0 0
      %5427 = vmatmul.mubr.bf16.gmra.mrb[0].mxu0 %v5253
      %v5428 = vpop.f32.mrb[0].mxu0
      %v5429 = vadd.f32 0.0, %v5428
      %v5430 = vpop.f32.mrb[0].mxu0
      %v5431 = vpop.f32.mrb[0].mxu0
      %v5432 = vadd.f32 0.0, %v5431
      %v5433 = vpop.f32.mrb[0].mxu0
      %5434 = vdwg.mxu0
      %v5435 = vadd.f32 %v5163, %v5293
      %v5436 = vadd.f32 %v5164, %v5296
      %v5437 = vadd.f32 %v5165, %v5301
      %v5438 = vadd.f32 %v5166, %v5304
      %v5439 = vadd.f32 %v5167, %v5309
      %v5440 = vadd.f32 %v5168, %v5312
      %v5441 = vadd.f32 %v5169, %v5317
      %v5442 = vadd.f32 %v5170, %v5320
      %v5443 = vadd.f32 %v5171, %v5325
      %v5444 = vadd.f32 %v5172, %v5328
      %v5445 = vadd.f32 %v5173, %v5333
      %v5446 = vadd.f32 %v5174, %v5336
      %v5447 = vadd.f32 %v5175, %v5341
      %v5448 = vadd.f32 %v5176, %v5344
      %v5449 = vadd.f32 %v5177, %v5349
      %v5450 = vadd.f32 %v5178, %v5352
      %v5451 = vadd.f32 %v5179, %v5357
      %v5452 = vadd.f32 %v5180, %v5360
      %v5453 = vadd.f32 %v5181, %v5365
      %v5454 = vadd.f32 %v5182, %v5368
      %v5455 = vadd.f32 %v5183, %v5373
      %v5456 = vadd.f32 %v5184, %v5376
      %v5457 = vadd.f32 %v5185, %v5381
      %v5458 = vadd.f32 %v5186, %v5384
      %v5459 = vadd.f32 %v5187, %v5389
      %v5460 = vadd.f32 %v5188, %v5392
      %v5461 = vadd.f32 %v5189, %v5397
      %v5462 = vadd.f32 %v5190, %v5400
      %v5463 = vadd.f32 %v5191, %v5405
      %v5464 = vadd.f32 %v5192, %v5408
      %v5465 = vadd.f32 %v5193, %v5413
      %v5466 = vadd.f32 %v5194, %v5416
      %v5467 = vadd.f32 %v5195, %v5421
      %v5468 = vadd.f32 %v5196, %v5424
      %v5469 = vadd.f32 %v5197, %v5429
      %v5470 = vadd.f32 %v5198, %v5432
      %v5471 = vld [vmem:[%s315 + $0x26] sm:$0xff]
      %v5472 = vld [vmem:[%s315 + $0x2e] sm:$0xff]
      %v5473 = vld [vmem:[%s315 + $0x36] sm:$0xff]
      %v5474 = vld [vmem:[%s315 + $0x3e] sm:$0xff]
      %v5475 = vld [vmem:[%s315 + $0x46] sm:$0xff]
      %v5476 = vld [vmem:[%s315 + $0x4e] sm:$0xff]
      %v5477 = vld [vmem:[%s315 + $0x56] sm:$0xff]
      %v5478 = vld [vmem:[%s315 + $0x5e] sm:$0xff]
      %v5479 = vld [vmem:[%s315 + $0x66] sm:$0xff]
      %v5480 = vld [vmem:[%s315 + $0x6e] sm:$0xff]
      %v5481 = vld [vmem:[%s315 + $0x76] sm:$0xff]
      %v5482 = vld [vmem:[%s315 + $0x7e] sm:$0xff]
      %v5483 = vld [vmem:[%s315 + $0x86] sm:$0xff]
      %v5484 = vld [vmem:[%s315 + $0x8e] sm:$0xff]
      %v5485 = vld [vmem:[%s315 + $0x96] sm:$0xff]
      %v5486 = vld [vmem:[%s315 + $0x9e] sm:$0xff]
      %v5487 = vld [vmem:[%s315 + $0xa6] sm:$0xff]
      %v5488 = vld [vmem:[%s315 + $0xae] sm:$0xff]
      %v5489 = vld [vmem:[%s315 + $0xb6] sm:$0xff]
      %v5490 = vld [vmem:[%s315 + $0xbe] sm:$0xff]
      %v5491 = vld [vmem:[%s315 + $0xc6] sm:$0xff]
      %v5492 = vld [vmem:[%s315 + $0xce] sm:$0xff]
      %v5493 = vld [vmem:[%s315 + $0xd6] sm:$0xff]
      %v5494 = vld [vmem:[%s315 + $0xde] sm:$0xff]
      %v5495 = vld [vmem:[%s315 + $0xe6] sm:$0xff]
      %v5496 = vld [vmem:[%s315 + $0xee] sm:$0xff]
      %v5497 = vld [vmem:[%s315 + $0xf6] sm:$0xff]
      %v5498 = vld [vmem:[%s315 + $0xfe] sm:$0xff]
      %v5499 = vld [vmem:[%s315 + $0x106] sm:$0xff]
      %v5500 = vld [vmem:[%s315 + $0x10e] sm:$0xff]
      %v5501 = vld [vmem:[%s315 + $0x116] sm:$0xff]
      %v5502 = vld [vmem:[%s315 + $0x11e] sm:$0xff]
      %v5503 = vld [vmem:[%s315 + $0x126] sm:$0xff]
      %v5504 = vld [vmem:[%s315 + $0x12e] sm:$0xff]
      %v5505 = vld [vmem:[%s315 + $0x136] sm:$0xff]
      %v5506 = vld [vmem:[%s315 + $0x13e] sm:$0xff]
      %v5507 = vpack.c.bf16 %v5472, %v5471
      %v5508 = vpack.c.bf16 %v5474, %v5473
      %v5509 = vpack.c.bf16 %v5476, %v5475
      %v5510 = vpack.c.bf16 %v5478, %v5477
      %v5511 = vpack.c.bf16 %v5480, %v5479
      %v5512 = vpack.c.bf16 %v5482, %v5481
      %v5513 = vpack.c.bf16 %v5484, %v5483
      %v5514 = vpack.c.bf16 %v5486, %v5485
      %v5515 = vpack.c.bf16 %v5488, %v5487
      %v5516 = vpack.c.bf16 %v5490, %v5489
      %v5517 = vpack.c.bf16 %v5492, %v5491
      %v5518 = vpack.c.bf16 %v5494, %v5493
      %v5519 = vpack.c.bf16 %v5496, %v5495
      %v5520 = vpack.c.bf16 %v5498, %v5497
      %v5521 = vpack.c.bf16 %v5500, %v5499
      %v5522 = vpack.c.bf16 %v5502, %v5501
      %v5523 = vpack.c.bf16 %v5504, %v5503
      %v5524 = vpack.c.bf16 %v5506, %v5505
      %v5525 = vld [vmem:[%s320 + $0x26] sm:$0xff]
      %v5526 = vld [vmem:[%s320 + $0x2e] sm:$0xff]
      %v5527 = vld [vmem:[%s320 + $0x36] sm:$0xff]
      %v5528 = vld [vmem:[%s320 + $0x3e] sm:$0xff]
      %v5529 = vld [vmem:[%s320 + $0x46] sm:$0xff]
      %v5530 = vld [vmem:[%s320 + $0x4e] sm:$0xff]
      %v5531 = vld [vmem:[%s320 + $0x56] sm:$0xff]
      %v5532 = vld [vmem:[%s320 + $0x5e] sm:$0xff]
      %v5533 = vld [vmem:[%s320 + $0x66] sm:$0xff]
      %v5534 = vld [vmem:[%s320 + $0x6e] sm:$0xff]
      %v5535 = vld [vmem:[%s320 + $0x76] sm:$0xff]
      %v5536 = vld [vmem:[%s320 + $0x7e] sm:$0xff]
      %v5537 = vld [vmem:[%s320 + $0x86] sm:$0xff]
      %v5538 = vld [vmem:[%s320 + $0x8e] sm:$0xff]
      %v5539 = vld [vmem:[%s320 + $0x96] sm:$0xff]
      %v5540 = vld [vmem:[%s320 + $0x9e] sm:$0xff]
      %v5541 = vld [vmem:[%s320 + $0xa6] sm:$0xff]
      %v5542 = vld [vmem:[%s320 + $0xae] sm:$0xff]
      %v5543 = vld [vmem:[%s320 + $0xb6] sm:$0xff]
      %v5544 = vld [vmem:[%s320 + $0xbe] sm:$0xff]
      %v5545 = vld [vmem:[%s320 + $0xc6] sm:$0xff]
      %v5546 = vld [vmem:[%s320 + $0xce] sm:$0xff]
      %v5547 = vld [vmem:[%s320 + $0xd6] sm:$0xff]
      %v5548 = vld [vmem:[%s320 + $0xde] sm:$0xff]
      %v5549 = vld [vmem:[%s320 + $0xe6] sm:$0xff]
      %v5550 = vld [vmem:[%s320 + $0xee] sm:$0xff]
      %v5551 = vld [vmem:[%s320 + $0xf6] sm:$0xff]
      %v5552 = vld [vmem:[%s320 + $0xfe] sm:$0xff]
      %v5553 = vld [vmem:[%s320 + $0x106] sm:$0xff]
      %v5554 = vld [vmem:[%s320 + $0x10e] sm:$0xff]
      %v5555 = vld [vmem:[%s320 + $0x116] sm:$0xff]
      %v5556 = vld [vmem:[%s320 + $0x11e] sm:$0xff]
      %v5557 = vld [vmem:[%s320 + $0x126] sm:$0xff]
      %v5558 = vld [vmem:[%s320 + $0x12e] sm:$0xff]
      %v5559 = vld [vmem:[%s320 + $0x136] sm:$0xff]
      %v5560 = vld [vmem:[%s320 + $0x13e] sm:$0xff]
      %v5561 = vpack.c.bf16 %v5526, %v5525
      %v5562 = vpack.c.bf16 %v5528, %v5527
      %v5563 = vpack.c.bf16 %v5530, %v5529
      %v5564 = vpack.c.bf16 %v5532, %v5531
      %v5565 = vpack.c.bf16 %v5534, %v5533
      %v5566 = vpack.c.bf16 %v5536, %v5535
      %v5567 = vpack.c.bf16 %v5538, %v5537
      %v5568 = vpack.c.bf16 %v5540, %v5539
      %v5569 = vpack.c.bf16 %v5542, %v5541
      %v5570 = vpack.c.bf16 %v5544, %v5543
      %v5571 = vpack.c.bf16 %v5546, %v5545
      %v5572 = vpack.c.bf16 %v5548, %v5547
      %v5573 = vpack.c.bf16 %v5550, %v5549
      %v5574 = vpack.c.bf16 %v5552, %v5551
      %v5575 = vpack.c.bf16 %v5554, %v5553
      %v5576 = vpack.c.bf16 %v5556, %v5555
      %v5577 = vpack.c.bf16 %v5558, %v5557
      %v5578 = vpack.c.bf16 %v5560, %v5559
      %s5579 = scalar_lea.vmem %s3, 16
      %v5580 = vld [vmem:[%s5579] sm:$0x3]
      %v5582 = vsel %vm437, %v5507, 0
      %v5585 = vsel %vm437, %v5508, 0
      %v5588 = vsel %vm437, %v5509, 0
      %v5591 = vsel %vm437, %v5510, 0
      %v5594 = vsel %vm437, %v5511, 0
      %v5597 = vsel %vm437, %v5512, 0
      %v5600 = vsel %vm437, %v5513, 0
      %v5603 = vsel %vm437, %v5514, 0
      %v5606 = vsel %vm437, %v5515, 0
      %v5609 = vsel %vm437, %v5516, 0
      %v5612 = vsel %vm437, %v5517, 0
      %v5615 = vsel %vm437, %v5518, 0
      %v5618 = vsel %vm437, %v5519, 0
      %v5621 = vsel %vm437, %v5520, 0
      %v5624 = vsel %vm437, %v5521, 0
      %v5627 = vsel %vm437, %v5522, 0
      %v5630 = vsel %vm437, %v5523, 0
      %v5633 = vsel %vm437, %v5524, 0
      %v5636 = vsel %vm492, %v5580, 0
      %5638 = vmatprep.subr.bf16.mxu0 0
      %5639 = vmatpush1.bf16.msra.mxu0 %v5636
      %5640 = vmatprep.subr.bf16.mxu0 0
      %5641 = vmatpush1.bf16.msra.mxu0 0
      %5642 = vmatprep.subr.bf16.mxu0 0
      %5643 = vmatpush1.bf16.msra.mxu0 0
      %5644 = vmatprep.subr.bf16.mxu0 0
      %5645 = vmatpush1.bf16.msra.mxu0 0
      %5646 = vmatprep.subr.bf16.mxu0 0
      %5647 = vmatpush1.bf16.msra.mxu0 0
      %5648 = vmatprep.subr.bf16.mxu0 0
      %5649 = vmatpush1.bf16.msra.mxu0 0
      %5650 = vmatprep.subr.bf16.mxu0 0
      %5651 = vmatpush1.bf16.msra.mxu0 0
      %5652 = vmatprep.subr.bf16.mxu0 0
      %5653 = vmatpush1.bf16.msra.mxu0 0
      %5654 = vmatprep.subr.bf16.mxu0 0
      %5655 = vmatpush1.bf16.msra.mxu0 0
      %5656 = vmatprep.subr.bf16.mxu0 0
      %5657 = vmatpush1.bf16.msra.mxu0 0
      %5658 = vmatprep.subr.bf16.mxu0 0
      %5659 = vmatpush1.bf16.msra.mxu0 0
      %5660 = vmatprep.subr.bf16.mxu0 0
      %5661 = vmatpush1.bf16.msra.mxu0 0
      %5662 = vmatprep.subr.bf16.mxu0 0
      %5663 = vmatpush1.bf16.msra.mxu0 0
      %5664 = vmatprep.subr.bf16.mxu0 0
      %5665 = vmatpush1.bf16.msra.mxu0 0
      %5666 = vmatprep.subr.bf16.mxu0 0
      %5667 = vmatpush1.bf16.msra.mxu0 0
      %5668 = vmatprep.subr.bf16.mxu0 0
      %5669 = vmatpush1.bf16.msra.mxu0 0
      %5670 = vmatprep.mubr.bf16.mxu0 0
      %5671 = vmatmul.mubr.bf16.gmra.mrb[0].mxu0 %v5582
      %v5672 = vpop.f32.mrb[0].mxu0
      %v5673 = vadd.f32 0.0, %v5672
      %v5674 = vpop.f32.mrb[0].mxu0
      %v5675 = vpop.f32.mrb[0].mxu0
      %v5676 = vadd.f32 0.0, %v5675
      %v5677 = vpop.f32.mrb[0].mxu0
      %5678 = vmatprep.mubr.bf16.mxu0 0
      %5679 = vmatmul.mubr.bf16.gmra.mrb[0].mxu0 %v5585
      %v5680 = vpop.f32.mrb[0].mxu0
      %v5681 = vadd.f32 0.0, %v5680
      %v5682 = vpop.f32.mrb[0].mxu0
      %v5683 = vpop.f32.mrb[0].mxu0
      %v5684 = vadd.f32 0.0, %v5683
      %v5685 = vpop.f32.mrb[0].mxu0
      %5686 = vmatprep.mubr.bf16.mxu0 0
      %5687 = vmatmul.mubr.bf16.gmra.mrb[0].mxu0 %v5588
      %v5688 = vpop.f32.mrb[0].mxu0
      %v5689 = vadd.f32 0.0, %v5688
      %v5690 = vpop.f32.mrb[0].mxu0
      %v5691 = vpop.f32.mrb[0].mxu0
      %v5692 = vadd.f32 0.0, %v5691
      %v5693 = vpop.f32.mrb[0].mxu0
      %5694 = vmatprep.mubr.bf16.mxu0 0
      %5695 = vmatmul.mubr.bf16.gmra.mrb[0].mxu0 %v5591
      %v5696 = vpop.f32.mrb[0].mxu0
      %v5697 = vadd.f32 0.0, %v5696
      %v5698 = vpop.f32.mrb[0].mxu0
      %v5699 = vpop.f32.mrb[0].mxu0
      %v5700 = vadd.f32 0.0, %v5699
      %v5701 = vpop.f32.mrb[0].mxu0
      %5702 = vmatprep.mubr.bf16.mxu0 0
      %5703 = vmatmul.mubr.bf16.gmra.mrb[0].mxu0 %v5594
      %v5704 = vpop.f32.mrb[0].mxu0
      %v5705 = vadd.f32 0.0, %v5704
      %v5706 = vpop.f32.mrb[0].mxu0
      %v5707 = vpop.f32.mrb[0].mxu0
      %v5708 = vadd.f32 0.0, %v5707
      %v5709 = vpop.f32.mrb[0].mxu0
      %5710 = vmatprep.mubr.bf16.mxu0 0
      %5711 = vmatmul.mubr.bf16.gmra.mrb[0].mxu0 %v5597
      %v5712 = vpop.f32.mrb[0].mxu0
      %v5713 = vadd.f32 0.0, %v5712
      %v5714 = vpop.f32.mrb[0].mxu0
      %v5715 = vpop.f32.mrb[0].mxu0
      %v5716 = vadd.f32 0.0, %v5715
      %v5717 = vpop.f32.mrb[0].mxu0
      %5718 = vmatprep.mubr.bf16.mxu0 0
      %5719 = vmatmul.mubr.bf16.gmra.mrb[0].mxu0 %v5600
      %v5720 = vpop.f32.mrb[0].mxu0
      %v5721 = vadd.f32 0.0, %v5720
      %v5722 = vpop.f32.mrb[0].mxu0
      %v5723 = vpop.f32.mrb[0].mxu0
      %v5724 = vadd.f32 0.0, %v5723
      %v5725 = vpop.f32.mrb[0].mxu0
      %5726 = vmatprep.mubr.bf16.mxu0 0
      %5727 = vmatmul.mubr.bf16.gmra.mrb[0].mxu0 %v5603
      %v5728 = vpop.f32.mrb[0].mxu0
      %v5729 = vadd.f32 0.0, %v5728
      %v5730 = vpop.f32.mrb[0].mxu0
      %v5731 = vpop.f32.mrb[0].mxu0
      %v5732 = vadd.f32 0.0, %v5731
      %v5733 = vpop.f32.mrb[0].mxu0
      %5734 = vmatprep.mubr.bf16.mxu0 0
      %5735 = vmatmul.mubr.bf16.gmra.mrb[0].mxu0 %v5606
      %v5736 = vpop.f32.mrb[0].mxu0
      %v5737 = vadd.f32 0.0, %v5736
      %v5738 = vpop.f32.mrb[0].mxu0
      %v5739 = vpop.f32.mrb[0].mxu0
      %v5740 = vadd.f32 0.0, %v5739
      %v5741 = vpop.f32.mrb[0].mxu0
      %5742 = vmatprep.mubr.bf16.mxu0 0
      %5743 = vmatmul.mubr.bf16.gmra.mrb[0].mxu0 %v5609
      %v5744 = vpop.f32.mrb[0].mxu0
      %v5745 = vadd.f32 0.0, %v5744
      %v5746 = vpop.f32.mrb[0].mxu0
      %v5747 = vpop.f32.mrb[0].mxu0
      %v5748 = vadd.f32 0.0, %v5747
      %v5749 = vpop.f32.mrb[0].mxu0
      %5750 = vmatprep.mubr.bf16.mxu0 0
      %5751 = vmatmul.mubr.bf16.gmra.mrb[0].mxu0 %v5612
      %v5752 = vpop.f32.mrb[0].mxu0
      %v5753 = vadd.f32 0.0, %v5752
      %v5754 = vpop.f32.mrb[0].mxu0
      %v5755 = vpop.f32.mrb[0].mxu0
      %v5756 = vadd.f32 0.0, %v5755
      %v5757 = vpop.f32.mrb[0].mxu0
      %5758 = vmatprep.mubr.bf16.mxu0 0
      %5759 = vmatmul.mubr.bf16.gmra.mrb[0].mxu0 %v5615
      %v5760 = vpop.f32.mrb[0].mxu0
      %v5761 = vadd.f32 0.0, %v5760
      %v5762 = vpop.f32.mrb[0].mxu0
      %v5763 = vpop.f32.mrb[0].mxu0
      %v5764 = vadd.f32 0.0, %v5763
      %v5765 = vpop.f32.mrb[0].mxu0
      %5766 = vmatprep.mubr.bf16.mxu0 0
      %5767 = vmatmul.mubr.bf16.gmra.mrb[0].mxu0 %v5618
      %v5768 = vpop.f32.mrb[0].mxu0
      %v5769 = vadd.f32 0.0, %v5768
      %v5770 = vpop.f32.mrb[0].mxu0
      %v5771 = vpop.f32.mrb[0].mxu0
      %v5772 = vadd.f32 0.0, %v5771
      %v5773 = vpop.f32.mrb[0].mxu0
      %5774 = vmatprep.mubr.bf16.mxu0 0
      %5775 = vmatmul.mubr.bf16.gmra.mrb[0].mxu0 %v5621
      %v5776 = vpop.f32.mrb[0].mxu0
      %v5777 = vadd.f32 0.0, %v5776
      %v5778 = vpop.f32.mrb[0].mxu0
      %v5779 = vpop.f32.mrb[0].mxu0
      %v5780 = vadd.f32 0.0, %v5779
      %v5781 = vpop.f32.mrb[0].mxu0
      %5782 = vmatprep.mubr.bf16.mxu0 0
      %5783 = vmatmul.mubr.bf16.gmra.mrb[0].mxu0 %v5624
      %v5784 = vpop.f32.mrb[0].mxu0
      %v5785 = vadd.f32 0.0, %v5784
      %v5786 = vpop.f32.mrb[0].mxu0
      %v5787 = vpop.f32.mrb[0].mxu0
      %v5788 = vadd.f32 0.0, %v5787
      %v5789 = vpop.f32.mrb[0].mxu0
      %5790 = vmatprep.mubr.bf16.mxu0 0
      %5791 = vmatmul.mubr.bf16.gmra.mrb[0].mxu0 %v5627
      %v5792 = vpop.f32.mrb[0].mxu0
      %v5793 = vadd.f32 0.0, %v5792
      %v5794 = vpop.f32.mrb[0].mxu0
      %v5795 = vpop.f32.mrb[0].mxu0
      %v5796 = vadd.f32 0.0, %v5795
      %v5797 = vpop.f32.mrb[0].mxu0
      %5798 = vmatprep.mubr.bf16.mxu0 0
      %5799 = vmatmul.mubr.bf16.gmra.mrb[0].mxu0 %v5630
      %v5800 = vpop.f32.mrb[0].mxu0
      %v5801 = vadd.f32 0.0, %v5800
      %v5802 = vpop.f32.mrb[0].mxu0
      %v5803 = vpop.f32.mrb[0].mxu0
      %v5804 = vadd.f32 0.0, %v5803
      %v5805 = vpop.f32.mrb[0].mxu0
      %5806 = vmatprep.mubr.bf16.mxu0 0
      %5807 = vmatmul.mubr.bf16.gmra.mrb[0].mxu0 %v5633
      %v5808 = vpop.f32.mrb[0].mxu0
      %v5809 = vadd.f32 0.0, %v5808
      %v5810 = vpop.f32.mrb[0].mxu0
      %v5811 = vpop.f32.mrb[0].mxu0
      %v5812 = vadd.f32 0.0, %v5811
      %v5813 = vpop.f32.mrb[0].mxu0
      %5814 = vdwg.mxu0
      %v5815 = vadd.f32 %v5435, %v5673
      %v5816 = vadd.f32 %v5436, %v5676
      %v5817 = vadd.f32 %v5437, %v5681
      %v5818 = vadd.f32 %v5438, %v5684
      %v5819 = vadd.f32 %v5439, %v5689
      %v5820 = vadd.f32 %v5440, %v5692
      %v5821 = vadd.f32 %v5441, %v5697
      %v5822 = vadd.f32 %v5442, %v5700
      %v5823 = vadd.f32 %v5443, %v5705
      %v5824 = vadd.f32 %v5444, %v5708
      %v5825 = vadd.f32 %v5445, %v5713
      %v5826 = vadd.f32 %v5446, %v5716
      %v5827 = vadd.f32 %v5447, %v5721
      %v5828 = vadd.f32 %v5448, %v5724
      %v5829 = vadd.f32 %v5449, %v5729
      %v5830 = vadd.f32 %v5450, %v5732
      %v5831 = vadd.f32 %v5451, %v5737
      %v5832 = vadd.f32 %v5452, %v5740
      %v5833 = vadd.f32 %v5453, %v5745
      %v5834 = vadd.f32 %v5454, %v5748
      %v5835 = vadd.f32 %v5455, %v5753
      %v5836 = vadd.f32 %v5456, %v5756
      %v5837 = vadd.f32 %v5457, %v5761
      %v5838 = vadd.f32 %v5458, %v5764
      %v5839 = vadd.f32 %v5459, %v5769
      %v5840 = vadd.f32 %v5460, %v5772
      %v5841 = vadd.f32 %v5461, %v5777
      %v5842 = vadd.f32 %v5462, %v5780
      %v5843 = vadd.f32 %v5463, %v5785
      %v5844 = vadd.f32 %v5464, %v5788
      %v5845 = vadd.f32 %v5465, %v5793
      %v5846 = vadd.f32 %v5466, %v5796
      %v5847 = vadd.f32 %v5467, %v5801
      %v5848 = vadd.f32 %v5468, %v5804
      %v5849 = vadd.f32 %v5469, %v5809
      %v5850 = vadd.f32 %v5470, %v5812
      %s5851 = scalar_lea.vmem %s4, 16
      %v5852 = vld [vmem:[%s5851] sm:$0x3]
      %v5854 = vsel %vm437, %v5561, 0
      %v5857 = vsel %vm437, %v5562, 0
      %v5860 = vsel %vm437, %v5563, 0
      %v5863 = vsel %vm437, %v5564, 0
      %v5866 = vsel %vm437, %v5565, 0
      %v5869 = vsel %vm437, %v5566, 0
      %v5872 = vsel %vm437, %v5567, 0
      %v5875 = vsel %vm437, %v5568, 0
      %v5878 = vsel %vm437, %v5569, 0
      %v5881 = vsel %vm437, %v5570, 0
      %v5884 = vsel %vm437, %v5571, 0
      %v5887 = vsel %vm437, %v5572, 0
      %v5890 = vsel %vm437, %v5573, 0
      %v5893 = vsel %vm437, %v5574, 0
      %v5896 = vsel %vm437, %v5575, 0
      %v5899 = vsel %vm437, %v5576, 0
      %v5902 = vsel %vm437, %v5577, 0
      %v5905 = vsel %vm437, %v5578, 0
      %v5908 = vsel %vm492, %v5852, 0
      %5910 = vmatprep.subr.bf16.mxu0 0
      %5911 = vmatpush1.bf16.msra.mxu0 %v5908
      %5912 = vmatprep.subr.bf16.mxu0 0
      %5913 = vmatpush1.bf16.msra.mxu0 0
      %5914 = vmatprep.subr.bf16.mxu0 0
      %5915 = vmatpush1.bf16.msra.mxu0 0
      %5916 = vmatprep.subr.bf16.mxu0 0
      %5917 = vmatpush1.bf16.msra.mxu0 0
      %5918 = vmatprep.subr.bf16.mxu0 0
      %5919 = vmatpush1.bf16.msra.mxu0 0
      %5920 = vmatprep.subr.bf16.mxu0 0
      %5921 = vmatpush1.bf16.msra.mxu0 0
      %5922 = vmatprep.subr.bf16.mxu0 0
      %5923 = vmatpush1.bf16.msra.mxu0 0
      %5924 = vmatprep.subr.bf16.mxu0 0
      %5925 = vmatpush1.bf16.msra.mxu0 0
      %5926 = vmatprep.subr.bf16.mxu0 0
      %5927 = vmatpush1.bf16.msra.mxu0 0
      %5928 = vmatprep.subr.bf16.mxu0 0
      %5929 = vmatpush1.bf16.msra.mxu0 0
      %5930 = vmatprep.subr.bf16.mxu0 0
      %5931 = vmatpush1.bf16.msra.mxu0 0
      %5932 = vmatprep.subr.bf16.mxu0 0
      %5933 = vmatpush1.bf16.msra.mxu0 0
      %5934 = vmatprep.subr.bf16.mxu0 0
      %5935 = vmatpush1.bf16.msra.mxu0 0
      %5936 = vmatprep.subr.bf16.mxu0 0
      %5937 = vmatpush1.bf16.msra.mxu0 0
      %5938 = vmatprep.subr.bf16.mxu0 0
      %5939 = vmatpush1.bf16.msra.mxu0 0
      %5940 = vmatprep.subr.bf16.mxu0 0
      %5941 = vmatpush1.bf16.msra.mxu0 0
      %5942 = vmatprep.mubr.bf16.mxu0 0
      %5943 = vmatmul.mubr.bf16.gmra.mrb[0].mxu0 %v5854
      %v5944 = vpop.f32.mrb[0].mxu0
      %v5945 = vadd.f32 0.0, %v5944
      %v5946 = vpop.f32.mrb[0].mxu0
      %v5947 = vpop.f32.mrb[0].mxu0
      %v5948 = vadd.f32 0.0, %v5947
      %v5949 = vpop.f32.mrb[0].mxu0
      %5950 = vmatprep.mubr.bf16.mxu0 0
      %5951 = vmatmul.mubr.bf16.gmra.mrb[0].mxu0 %v5857
      %v5952 = vpop.f32.mrb[0].mxu0
      %v5953 = vadd.f32 0.0, %v5952
      %v5954 = vpop.f32.mrb[0].mxu0
      %v5955 = vpop.f32.mrb[0].mxu0
      %v5956 = vadd.f32 0.0, %v5955
      %v5957 = vpop.f32.mrb[0].mxu0
      %5958 = vmatprep.mubr.bf16.mxu0 0
      %5959 = vmatmul.mubr.bf16.gmra.mrb[0].mxu0 %v5860
      %v5960 = vpop.f32.mrb[0].mxu0
      %v5961 = vadd.f32 0.0, %v5960
      %v5962 = vpop.f32.mrb[0].mxu0
      %v5963 = vpop.f32.mrb[0].mxu0
      %v5964 = vadd.f32 0.0, %v5963
      %v5965 = vpop.f32.mrb[0].mxu0
      %5966 = vmatprep.mubr.bf16.mxu0 0
      %5967 = vmatmul.mubr.bf16.gmra.mrb[0].mxu0 %v5863
      %v5968 = vpop.f32.mrb[0].mxu0
      %v5969 = vadd.f32 0.0, %v5968
      %v5970 = vpop.f32.mrb[0].mxu0
      %v5971 = vpop.f32.mrb[0].mxu0
      %v5972 = vadd.f32 0.0, %v5971
      %v5973 = vpop.f32.mrb[0].mxu0
      %5974 = vmatprep.mubr.bf16.mxu0 0
      %5975 = vmatmul.mubr.bf16.gmra.mrb[0].mxu0 %v5866
      %v5976 = vpop.f32.mrb[0].mxu0
      %v5977 = vadd.f32 0.0, %v5976
      %v5978 = vpop.f32.mrb[0].mxu0
      %v5979 = vpop.f32.mrb[0].mxu0
      %v5980 = vadd.f32 0.0, %v5979
      %v5981 = vpop.f32.mrb[0].mxu0
      %5982 = vmatprep.mubr.bf16.mxu0 0
      %5983 = vmatmul.mubr.bf16.gmra.mrb[0].mxu0 %v5869
      %v5984 = vpop.f32.mrb[0].mxu0
      %v5985 = vadd.f32 0.0, %v5984
      %v5986 = vpop.f32.mrb[0].mxu0
      %v5987 = vpop.f32.mrb[0].mxu0
      %v5988 = vadd.f32 0.0, %v5987
      %v5989 = vpop.f32.mrb[0].mxu0
      %5990 = vmatprep.mubr.bf16.mxu0 0
      %5991 = vmatmul.mubr.bf16.gmra.mrb[0].mxu0 %v5872
      %v5992 = vpop.f32.mrb[0].mxu0
      %v5993 = vadd.f32 0.0, %v5992
      %v5994 = vpop.f32.mrb[0].mxu0
      %v5995 = vpop.f32.mrb[0].mxu0
      %v5996 = vadd.f32 0.0, %v5995
      %v5997 = vpop.f32.mrb[0].mxu0
      %5998 = vmatprep.mubr.bf16.mxu0 0
      %5999 = vmatmul.mubr.bf16.gmra.mrb[0].mxu0 %v5875
      %v6000 = vpop.f32.mrb[0].mxu0
      %v6001 = vadd.f32 0.0, %v6000
      %v6002 = vpop.f32.mrb[0].mxu0
      %v6003 = vpop.f32.mrb[0].mxu0
      %v6004 = vadd.f32 0.0, %v6003
      %v6005 = vpop.f32.mrb[0].mxu0
      %6006 = vmatprep.mubr.bf16.mxu0 0
      %6007 = vmatmul.mubr.bf16.gmra.mrb[0].mxu0 %v5878
      %v6008 = vpop.f32.mrb[0].mxu0
      %v6009 = vadd.f32 0.0, %v6008
      %v6010 = vpop.f32.mrb[0].mxu0
      %v6011 = vpop.f32.mrb[0].mxu0
      %v6012 = vadd.f32 0.0, %v6011
      %v6013 = vpop.f32.mrb[0].mxu0
      %6014 = vmatprep.mubr.bf16.mxu0 0
      %6015 = vmatmul.mubr.bf16.gmra.mrb[0].mxu0 %v5881
      %v6016 = vpop.f32.mrb[0].mxu0
      %v6017 = vadd.f32 0.0, %v6016
      %v6018 = vpop.f32.mrb[0].mxu0
      %v6019 = vpop.f32.mrb[0].mxu0
      %v6020 = vadd.f32 0.0, %v6019
      %v6021 = vpop.f32.mrb[0].mxu0
      %6022 = vmatprep.mubr.bf16.mxu0 0
      %6023 = vmatmul.mubr.bf16.gmra.mrb[0].mxu0 %v5884
      %v6024 = vpop.f32.mrb[0].mxu0
      %v6025 = vadd.f32 0.0, %v6024
      %v6026 = vpop.f32.mrb[0].mxu0
      %v6027 = vpop.f32.mrb[0].mxu0
      %v6028 = vadd.f32 0.0, %v6027
      %v6029 = vpop.f32.mrb[0].mxu0
      %6030 = vmatprep.mubr.bf16.mxu0 0
      %6031 = vmatmul.mubr.bf16.gmra.mrb[0].mxu0 %v5887
      %v6032 = vpop.f32.mrb[0].mxu0
      %v6033 = vadd.f32 0.0, %v6032
      %v6034 = vpop.f32.mrb[0].mxu0
      %v6035 = vpop.f32.mrb[0].mxu0
      %v6036 = vadd.f32 0.0, %v6035
      %v6037 = vpop.f32.mrb[0].mxu0
      %6038 = vmatprep.mubr.bf16.mxu0 0
      %6039 = vmatmul.mubr.bf16.gmra.mrb[0].mxu0 %v5890
      %v6040 = vpop.f32.mrb[0].mxu0
      %v6041 = vadd.f32 0.0, %v6040
      %v6042 = vpop.f32.mrb[0].mxu0
      %v6043 = vpop.f32.mrb[0].mxu0
      %v6044 = vadd.f32 0.0, %v6043
      %v6045 = vpop.f32.mrb[0].mxu0
      %6046 = vmatprep.mubr.bf16.mxu0 0
      %6047 = vmatmul.mubr.bf16.gmra.mrb[0].mxu0 %v5893
      %v6048 = vpop.f32.mrb[0].mxu0
      %v6049 = vadd.f32 0.0, %v6048
      %v6050 = vpop.f32.mrb[0].mxu0
      %v6051 = vpop.f32.mrb[0].mxu0
      %v6052 = vadd.f32 0.0, %v6051
      %v6053 = vpop.f32.mrb[0].mxu0
      %6054 = vmatprep.mubr.bf16.mxu0 0
      %6055 = vmatmul.mubr.bf16.gmra.mrb[0].mxu0 %v5896
      %v6056 = vpop.f32.mrb[0].mxu0
      %v6057 = vadd.f32 0.0, %v6056
      %v6058 = vpop.f32.mrb[0].mxu0
      %v6059 = vpop.f32.mrb[0].mxu0
      %v6060 = vadd.f32 0.0, %v6059
      %v6061 = vpop.f32.mrb[0].mxu0
      %6062 = vmatprep.mubr.bf16.mxu0 0
      %6063 = vmatmul.mubr.bf16.gmra.mrb[0].mxu0 %v5899
      %v6064 = vpop.f32.mrb[0].mxu0
      %v6065 = vadd.f32 0.0, %v6064
      %v6066 = vpop.f32.mrb[0].mxu0
      %v6067 = vpop.f32.mrb[0].mxu0
      %v6068 = vadd.f32 0.0, %v6067
      %v6069 = vpop.f32.mrb[0].mxu0
      %6070 = vmatprep.mubr.bf16.mxu0 0
      %6071 = vmatmul.mubr.bf16.gmra.mrb[0].mxu0 %v5902
      %v6072 = vpop.f32.mrb[0].mxu0
      %v6073 = vadd.f32 0.0, %v6072
      %v6074 = vpop.f32.mrb[0].mxu0
      %v6075 = vpop.f32.mrb[0].mxu0
      %v6076 = vadd.f32 0.0, %v6075
      %v6077 = vpop.f32.mrb[0].mxu0
      %6078 = vmatprep.mubr.bf16.mxu0 0
      %6079 = vmatmul.mubr.bf16.gmra.mrb[0].mxu0 %v5905
      %v6080 = vpop.f32.mrb[0].mxu0
      %v6081 = vadd.f32 0.0, %v6080
      %v6082 = vpop.f32.mrb[0].mxu0
      %v6083 = vpop.f32.mrb[0].mxu0
      %v6084 = vadd.f32 0.0, %v6083
      %v6085 = vpop.f32.mrb[0].mxu0
      %6086 = vdwg.mxu0
      %v6087 = vadd.f32 %v5815, %v5945
      %v6088 = vadd.f32 %v5816, %v5948
      %v6089 = vadd.f32 %v5817, %v5953
      %v6090 = vadd.f32 %v5818, %v5956
      %v6091 = vadd.f32 %v5819, %v5961
      %v6092 = vadd.f32 %v5820, %v5964
      %v6093 = vadd.f32 %v5821, %v5969
      %v6094 = vadd.f32 %v5822, %v5972
      %v6095 = vadd.f32 %v5823, %v5977
      %v6096 = vadd.f32 %v5824, %v5980
      %v6097 = vadd.f32 %v5825, %v5985
      %v6098 = vadd.f32 %v5826, %v5988
      %v6099 = vadd.f32 %v5827, %v5993
      %v6100 = vadd.f32 %v5828, %v5996
      %v6101 = vadd.f32 %v5829, %v6001
      %v6102 = vadd.f32 %v5830, %v6004
      %v6103 = vadd.f32 %v5831, %v6009
      %v6104 = vadd.f32 %v5832, %v6012
      %v6105 = vadd.f32 %v5833, %v6017
      %v6106 = vadd.f32 %v5834, %v6020
      %v6107 = vadd.f32 %v5835, %v6025
      %v6108 = vadd.f32 %v5836, %v6028
      %v6109 = vadd.f32 %v5837, %v6033
      %v6110 = vadd.f32 %v5838, %v6036
      %v6111 = vadd.f32 %v5839, %v6041
      %v6112 = vadd.f32 %v5840, %v6044
      %v6113 = vadd.f32 %v5841, %v6049
      %v6114 = vadd.f32 %v5842, %v6052
      %v6115 = vadd.f32 %v5843, %v6057
      %v6116 = vadd.f32 %v5844, %v6060
      %v6117 = vadd.f32 %v5845, %v6065
      %v6118 = vadd.f32 %v5846, %v6068
      %v6119 = vadd.f32 %v5847, %v6073
      %v6120 = vadd.f32 %v5848, %v6076
      %v6121 = vadd.f32 %v5849, %v6081
      %v6122 = vadd.f32 %v5850, %v6084
      %v6123 = vld [vmem:[%s5] sm:$0x1]
      %v6125 = vlaneseq
      %v6126 = vshrl.u32 %v6125, 7
      %v6127 = vsub.s32 0, %v6126
      %v6128 = vrot.slane %v6123, %v6127
      %v6130 = vadd.f32 %v6087, %v6128
      %v6131 = vadd.f32 %v6088, %v6128
      %v6132 = vadd.f32 %v6089, %v6128
      %v6133 = vadd.f32 %v6090, %v6128
      %v6134 = vadd.f32 %v6091, %v6128
      %v6135 = vadd.f32 %v6092, %v6128
      %v6136 = vadd.f32 %v6093, %v6128
      %v6137 = vadd.f32 %v6094, %v6128
      %v6138 = vadd.f32 %v6095, %v6128
      %v6139 = vadd.f32 %v6096, %v6128
      %v6140 = vadd.f32 %v6097, %v6128
      %v6141 = vadd.f32 %v6098, %v6128
      %v6142 = vadd.f32 %v6099, %v6128
      %v6143 = vadd.f32 %v6100, %v6128
      %v6144 = vadd.f32 %v6101, %v6128
      %v6145 = vadd.f32 %v6102, %v6128
      %v6146 = vadd.f32 %v6103, %v6128
      %v6147 = vadd.f32 %v6104, %v6128
      %v6148 = vadd.f32 %v6105, %v6128
      %v6149 = vadd.f32 %v6106, %v6128
      %v6150 = vadd.f32 %v6107, %v6128
      %v6151 = vadd.f32 %v6108, %v6128
      %v6152 = vadd.f32 %v6109, %v6128
      %v6153 = vadd.f32 %v6110, %v6128
      %v6154 = vadd.f32 %v6111, %v6128
      %v6155 = vadd.f32 %v6112, %v6128
      %v6156 = vadd.f32 %v6113, %v6128
      %v6157 = vadd.f32 %v6114, %v6128
      %v6158 = vadd.f32 %v6115, %v6128
      %v6159 = vadd.f32 %v6116, %v6128
      %v6160 = vadd.f32 %v6117, %v6128
      %v6161 = vadd.f32 %v6118, %v6128
      %v6162 = vadd.f32 %v6119, %v6128
      %v6163 = vadd.f32 %v6120, %v6128
      %v6164 = vadd.f32 %v6121, %v6128
      %v6165 = vadd.f32 %v6122, %v6128
      %vm6166 = vcmp.ge.f32.partialorder %v6130, 0.0
      %vm6167 = vcmp.ge.f32.partialorder %v6131, 0.0
      %vm6168 = vcmp.ge.f32.partialorder %v6132, 0.0
      %vm6169 = vcmp.ge.f32.partialorder %v6133, 0.0
      %vm6170 = vcmp.ge.f32.partialorder %v6134, 0.0
      %vm6171 = vcmp.ge.f32.partialorder %v6135, 0.0
      %vm6172 = vcmp.ge.f32.partialorder %v6136, 0.0
      %vm6173 = vcmp.ge.f32.partialorder %v6137, 0.0
      %vm6174 = vcmp.ge.f32.partialorder %v6138, 0.0
      %vm6175 = vcmp.ge.f32.partialorder %v6139, 0.0
      %vm6176 = vcmp.ge.f32.partialorder %v6140, 0.0
      %vm6177 = vcmp.ge.f32.partialorder %v6141, 0.0
      %vm6178 = vcmp.ge.f32.partialorder %v6142, 0.0
      %vm6179 = vcmp.ge.f32.partialorder %v6143, 0.0
      %vm6180 = vcmp.ge.f32.partialorder %v6144, 0.0
      %vm6181 = vcmp.ge.f32.partialorder %v6145, 0.0
      %vm6182 = vcmp.ge.f32.partialorder %v6146, 0.0
      %vm6183 = vcmp.ge.f32.partialorder %v6147, 0.0
      %vm6184 = vcmp.ge.f32.partialorder %v6148, 0.0
      %vm6185 = vcmp.ge.f32.partialorder %v6149, 0.0
      %vm6186 = vcmp.ge.f32.partialorder %v6150, 0.0
      %vm6187 = vcmp.ge.f32.partialorder %v6151, 0.0
      %vm6188 = vcmp.ge.f32.partialorder %v6152, 0.0
      %vm6189 = vcmp.ge.f32.partialorder %v6153, 0.0
      %vm6190 = vcmp.ge.f32.partialorder %v6154, 0.0
      %vm6191 = vcmp.ge.f32.partialorder %v6155, 0.0
      %vm6192 = vcmp.ge.f32.partialorder %v6156, 0.0
      %vm6193 = vcmp.ge.f32.partialorder %v6157, 0.0
      %vm6194 = vcmp.ge.f32.partialorder %v6158, 0.0
      %vm6195 = vcmp.ge.f32.partialorder %v6159, 0.0
      %vm6196 = vcmp.ge.f32.partialorder %v6160, 0.0
      %vm6197 = vcmp.ge.f32.partialorder %v6161, 0.0
      %vm6198 = vcmp.ge.f32.partialorder %v6162, 0.0
      %vm6199 = vcmp.ge.f32.partialorder %v6163, 0.0
      %vm6200 = vcmp.ge.f32.partialorder %v6164, 0.0
      %vm6201 = vcmp.ge.f32.partialorder %v6165, 0.0
      %v6202 = vmul.f32 %v6130, 0.2
      %v6203 = vmul.f32 %v6131, 0.2
      %v6204 = vmul.f32 %v6132, 0.2
      %v6205 = vmul.f32 %v6133, 0.2
      %v6206 = vmul.f32 %v6134, 0.2
      %v6207 = vmul.f32 %v6135, 0.2
      %v6208 = vmul.f32 %v6136, 0.2
      %v6209 = vmul.f32 %v6137, 0.2
      %v6210 = vmul.f32 %v6138, 0.2
      %v6211 = vmul.f32 %v6139, 0.2
      %v6212 = vmul.f32 %v6140, 0.2
      %v6213 = vmul.f32 %v6141, 0.2
      %v6214 = vmul.f32 %v6142, 0.2
      %v6215 = vmul.f32 %v6143, 0.2
      %v6216 = vmul.f32 %v6144, 0.2
      %v6217 = vmul.f32 %v6145, 0.2
      %v6218 = vmul.f32 %v6146, 0.2
      %v6219 = vmul.f32 %v6147, 0.2
      %v6220 = vmul.f32 %v6148, 0.2
      %v6221 = vmul.f32 %v6149, 0.2
      %v6222 = vmul.f32 %v6150, 0.2
      %v6223 = vmul.f32 %v6151, 0.2
      %v6224 = vmul.f32 %v6152, 0.2
      %v6225 = vmul.f32 %v6153, 0.2
      %v6226 = vmul.f32 %v6154, 0.2
      %v6227 = vmul.f32 %v6155, 0.2
      %v6228 = vmul.f32 %v6156, 0.2
      %v6229 = vmul.f32 %v6157, 0.2
      %v6230 = vmul.f32 %v6158, 0.2
      %v6231 = vmul.f32 %v6159, 0.2
      %v6232 = vmul.f32 %v6160, 0.2
      %v6233 = vmul.f32 %v6161, 0.2
      %v6234 = vmul.f32 %v6162, 0.2
      %v6235 = vmul.f32 %v6163, 0.2
      %v6236 = vmul.f32 %v6164, 0.2
      %v6237 = vmul.f32 %v6165, 0.2
      %v6238 = vsel %vm6166, %v6130, %v6202
      %v6239 = vsel %vm6167, %v6131, %v6203
      %v6240 = vsel %vm6168, %v6132, %v6204
      %v6241 = vsel %vm6169, %v6133, %v6205
      %v6242 = vsel %vm6170, %v6134, %v6206
      %v6243 = vsel %vm6171, %v6135, %v6207
      %v6244 = vsel %vm6172, %v6136, %v6208
      %v6245 = vsel %vm6173, %v6137, %v6209
      %v6246 = vsel %vm6174, %v6138, %v6210
      %v6247 = vsel %vm6175, %v6139, %v6211
      %v6248 = vsel %vm6176, %v6140, %v6212
      %v6249 = vsel %vm6177, %v6141, %v6213
      %v6250 = vsel %vm6178, %v6142, %v6214
      %v6251 = vsel %vm6179, %v6143, %v6215
      %v6252 = vsel %vm6180, %v6144, %v6216
      %v6253 = vsel %vm6181, %v6145, %v6217
      %v6254 = vsel %vm6182, %v6146, %v6218
      %v6255 = vsel %vm6183, %v6147, %v6219
      %v6256 = vsel %vm6184, %v6148, %v6220
      %v6257 = vsel %vm6185, %v6149, %v6221
      %v6258 = vsel %vm6186, %v6150, %v6222
      %v6259 = vsel %vm6187, %v6151, %v6223
      %v6260 = vsel %vm6188, %v6152, %v6224
      %v6261 = vsel %vm6189, %v6153, %v6225
      %v6262 = vsel %vm6190, %v6154, %v6226
      %v6263 = vsel %vm6191, %v6155, %v6227
      %v6264 = vsel %vm6192, %v6156, %v6228
      %v6265 = vsel %vm6193, %v6157, %v6229
      %v6266 = vsel %vm6194, %v6158, %v6230
      %v6267 = vsel %vm6195, %v6159, %v6231
      %v6268 = vsel %vm6196, %v6160, %v6232
      %v6269 = vsel %vm6197, %v6161, %v6233
      %v6270 = vsel %vm6198, %v6162, %v6234
      %v6271 = vsel %vm6199, %v6163, %v6235
      %v6272 = vsel %vm6200, %v6164, %v6236
      %v6273 = vsel %vm6201, %v6165, %v6237
      %v6274 = vld [vmem:[%s2] sm:$0xff]
      %v6275 = vld [vmem:[%s2 + $0x8] sm:$0xff]
      %v6276 = vld [vmem:[%s2 + $0x10] sm:$0xff]
      %v6277 = vld [vmem:[%s2 + $0x18] sm:$0xff]
      %v6278 = vld [vmem:[%s2 + $0x20] sm:$0xff]
      %v6279 = vld [vmem:[%s2 + $0x28] sm:$0xff]
      %v6280 = vld [vmem:[%s2 + $0x30] sm:$0xff]
      %v6281 = vld [vmem:[%s2 + $0x38] sm:$0xff]
      %v6282 = vld [vmem:[%s2 + $0x40] sm:$0xff]
      %v6283 = vld [vmem:[%s2 + $0x48] sm:$0xff]
      %v6284 = vld [vmem:[%s2 + $0x50] sm:$0xff]
      %v6285 = vld [vmem:[%s2 + $0x58] sm:$0xff]
      %v6286 = vld [vmem:[%s2 + $0x60] sm:$0xff]
      %v6287 = vld [vmem:[%s2 + $0x68] sm:$0xff]
      %v6288 = vld [vmem:[%s2 + $0x70] sm:$0xff]
      %v6289 = vld [vmem:[%s2 + $0x78] sm:$0xff]
      %v6290 = vld [vmem:[%s2 + $0x80] sm:$0xff]
      %v6291 = vld [vmem:[%s2 + $0x88] sm:$0xff]
      %v6292 = vld [vmem:[%s2 + $0x90] sm:$0xff]
      %v6293 = vld [vmem:[%s2 + $0x98] sm:$0xff]
      %v6294 = vld [vmem:[%s2 + $0xa0] sm:$0xff]
      %v6295 = vld [vmem:[%s2 + $0xa8] sm:$0xff]
      %v6296 = vld [vmem:[%s2 + $0xb0] sm:$0xff]
      %v6297 = vld [vmem:[%s2 + $0xb8] sm:$0xff]
      %v6298 = vld [vmem:[%s2 + $0xc0] sm:$0xff]
      %v6299 = vld [vmem:[%s2 + $0xc8] sm:$0xff]
      %v6300 = vld [vmem:[%s2 + $0xd0] sm:$0xff]
      %v6301 = vld [vmem:[%s2 + $0xd8] sm:$0xff]
      %v6302 = vld [vmem:[%s2 + $0xe0] sm:$0xff]
      %v6303 = vld [vmem:[%s2 + $0xe8] sm:$0xff]
      %v6304 = vld [vmem:[%s2 + $0xf0] sm:$0xff]
      %v6305 = vld [vmem:[%s2 + $0xf8] sm:$0xff]
      %v6306 = vld [vmem:[%s2 + $0x100] sm:$0xff]
      %v6307 = vld [vmem:[%s2 + $0x108] sm:$0xff]
      %v6308 = vld [vmem:[%s2 + $0x110] sm:$0xff]
      %v6309 = vld [vmem:[%s2 + $0x118] sm:$0xff]
      %6311 = vset.pattern.permute.xlu0 0
      %6312 = vperm.xlu0 %6311, %v6274
      %v6313 = vpop.permute.xlu0 %6312
      %6316 = vset.pattern.permute.xlu0 0
      %6317 = vperm.xlu0 %6316, %v6275
      %v6318 = vpop.permute.xlu0 %6317
      %6321 = vset.pattern.permute.xlu0 0
      %6322 = vperm.xlu0 %6321, %v6276
      %v6323 = vpop.permute.xlu0 %6322
      %6326 = vset.pattern.permute.xlu0 0
      %6327 = vperm.xlu0 %6326, %v6277
      %v6328 = vpop.permute.xlu0 %6327
      %6331 = vset.pattern.permute.xlu0 0
      %6332 = vperm.xlu0 %6331, %v6278
      %v6333 = vpop.permute.xlu0 %6332
      %6336 = vset.pattern.permute.xlu0 0
      %6337 = vperm.xlu0 %6336, %v6279
      %v6338 = vpop.permute.xlu0 %6337
      %6341 = vset.pattern.permute.xlu0 0
      %6342 = vperm.xlu0 %6341, %v6280
      %v6343 = vpop.permute.xlu0 %6342
      %6346 = vset.pattern.permute.xlu0 0
      %6347 = vperm.xlu0 %6346, %v6281
      %v6348 = vpop.permute.xlu0 %6347
      %6351 = vset.pattern.permute.xlu0 0
      %6352 = vperm.xlu0 %6351, %v6282
      %v6353 = vpop.permute.xlu0 %6352
      %6356 = vset.pattern.permute.xlu0 0
      %6357 = vperm.xlu0 %6356, %v6283
      %v6358 = vpop.permute.xlu0 %6357
      %6361 = vset.pattern.permute.xlu0 0
      %6362 = vperm.xlu0 %6361, %v6284
      %v6363 = vpop.permute.xlu0 %6362
      %6366 = vset.pattern.permute.xlu0 0
      %6367 = vperm.xlu0 %6366, %v6285
      %v6368 = vpop.permute.xlu0 %6367
      %6371 = vset.pattern.permute.xlu0 0
      %6372 = vperm.xlu0 %6371, %v6286
      %v6373 = vpop.permute.xlu0 %6372
      %6376 = vset.pattern.permute.xlu0 0
      %6377 = vperm.xlu0 %6376, %v6287
      %v6378 = vpop.permute.xlu0 %6377
      %6381 = vset.pattern.permute.xlu0 0
      %6382 = vperm.xlu0 %6381, %v6288
      %v6383 = vpop.permute.xlu0 %6382
      %6386 = vset.pattern.permute.xlu0 0
      %6387 = vperm.xlu0 %6386, %v6289
      %v6388 = vpop.permute.xlu0 %6387
      %6391 = vset.pattern.permute.xlu0 0
      %6392 = vperm.xlu0 %6391, %v6290
      %v6393 = vpop.permute.xlu0 %6392
      %6396 = vset.pattern.permute.xlu0 0
      %6397 = vperm.xlu0 %6396, %v6291
      %v6398 = vpop.permute.xlu0 %6397
      %6401 = vset.pattern.permute.xlu0 0
      %6402 = vperm.xlu0 %6401, %v6292
      %v6403 = vpop.permute.xlu0 %6402
      %6406 = vset.pattern.permute.xlu0 0
      %6407 = vperm.xlu0 %6406, %v6293
      %v6408 = vpop.permute.xlu0 %6407
      %6411 = vset.pattern.permute.xlu0 0
      %6412 = vperm.xlu0 %6411, %v6294
      %v6413 = vpop.permute.xlu0 %6412
      %6416 = vset.pattern.permute.xlu0 0
      %6417 = vperm.xlu0 %6416, %v6295
      %v6418 = vpop.permute.xlu0 %6417
      %6421 = vset.pattern.permute.xlu0 0
      %6422 = vperm.xlu0 %6421, %v6296
      %v6423 = vpop.permute.xlu0 %6422
      %6426 = vset.pattern.permute.xlu0 0
      %6427 = vperm.xlu0 %6426, %v6297
      %v6428 = vpop.permute.xlu0 %6427
      %6431 = vset.pattern.permute.xlu0 0
      %6432 = vperm.xlu0 %6431, %v6298
      %v6433 = vpop.permute.xlu0 %6432
      %6436 = vset.pattern.permute.xlu0 0
      %6437 = vperm.xlu0 %6436, %v6299
      %v6438 = vpop.permute.xlu0 %6437
      %6441 = vset.pattern.permute.xlu0 0
      %6442 = vperm.xlu0 %6441, %v6300
      %v6443 = vpop.permute.xlu0 %6442
      %6446 = vset.pattern.permute.xlu0 0
      %6447 = vperm.xlu0 %6446, %v6301
      %v6448 = vpop.permute.xlu0 %6447
      %6451 = vset.pattern.permute.xlu0 0
      %6452 = vperm.xlu0 %6451, %v6302
      %v6453 = vpop.permute.xlu0 %6452
      %6456 = vset.pattern.permute.xlu0 0
      %6457 = vperm.xlu0 %6456, %v6303
      %v6458 = vpop.permute.xlu0 %6457
      %6461 = vset.pattern.permute.xlu0 0
      %6462 = vperm.xlu0 %6461, %v6304
      %v6463 = vpop.permute.xlu0 %6462
      %6466 = vset.pattern.permute.xlu0 0
      %6467 = vperm.xlu0 %6466, %v6305
      %v6468 = vpop.permute.xlu0 %6467
      %6471 = vset.pattern.permute.xlu0 0
      %6472 = vperm.xlu0 %6471, %v6306
      %v6473 = vpop.permute.xlu0 %6472
      %6476 = vset.pattern.permute.xlu0 0
      %6477 = vperm.xlu0 %6476, %v6307
      %v6478 = vpop.permute.xlu0 %6477
      %6481 = vset.pattern.permute.xlu0 0
      %6482 = vperm.xlu0 %6481, %v6308
      %v6483 = vpop.permute.xlu0 %6482
      %6486 = vset.pattern.permute.xlu0 0
      %6487 = vperm.xlu0 %6486, %v6309
      %v6488 = vpop.permute.xlu0 %6487
      %v6490 = vmul.f32 %v6238, %v6313
      %v6491 = vmul.f32 %v6239, %v6318
      %v6492 = vmul.f32 %v6240, %v6323
      %v6493 = vmul.f32 %v6241, %v6328
      %v6494 = vmul.f32 %v6242, %v6333
      %v6495 = vmul.f32 %v6243, %v6338
      %v6496 = vmul.f32 %v6244, %v6343
      %v6497 = vmul.f32 %v6245, %v6348
      %v6498 = vmul.f32 %v6246, %v6353
      %v6499 = vmul.f32 %v6247, %v6358
      %v6500 = vmul.f32 %v6248, %v6363
      %v6501 = vmul.f32 %v6249, %v6368
      %v6502 = vmul.f32 %v6250, %v6373
      %v6503 = vmul.f32 %v6251, %v6378
      %v6504 = vmul.f32 %v6252, %v6383
      %v6505 = vmul.f32 %v6253, %v6388
      %v6506 = vmul.f32 %v6254, %v6393
      %v6507 = vmul.f32 %v6255, %v6398
      %v6508 = vmul.f32 %v6256, %v6403
      %v6509 = vmul.f32 %v6257, %v6408
      %v6510 = vmul.f32 %v6258, %v6413
      %v6511 = vmul.f32 %v6259, %v6418
      %v6512 = vmul.f32 %v6260, %v6423
      %v6513 = vmul.f32 %v6261, %v6428
      %v6514 = vmul.f32 %v6262, %v6433
      %v6515 = vmul.f32 %v6263, %v6438
      %v6516 = vmul.f32 %v6264, %v6443
      %v6517 = vmul.f32 %v6265, %v6448
      %v6518 = vmul.f32 %v6266, %v6453
      %v6519 = vmul.f32 %v6267, %v6458
      %v6520 = vmul.f32 %v6268, %v6463
      %v6521 = vmul.f32 %v6269, %v6468
      %v6522 = vmul.f32 %v6270, %v6473
      %v6523 = vmul.f32 %v6271, %v6478
      %v6524 = vmul.f32 %v6272, %v6483
      %v6525 = vmul.f32 %v6273, %v6488
      %vm6526 = vcmask 64512
      %6527 = vst.msk [vmem:[#allocation2] sm:$0xff] %vm6526, 0.0
      %6528 = vst.msk [vmem:[#allocation2 + $0x8] sm:$0xff] %vm6526, 0.0
      %6529 = vst.msk [vmem:[#allocation2 + $0x10] sm:$0xff] %vm6526, 0.0
      %6530 = vst.msk [vmem:[#allocation2 + $0x18] sm:$0xff] %vm6526, 0.0
      %6531 = vst.msk [vmem:[#allocation2 + $0x20] sm:$0xff] %vm6526, 0.0
      %6532 = vst.msk [vmem:[#allocation2 + $0x28] sm:$0xff] %vm6526, 0.0
      %6533 = vst.msk [vmem:[#allocation2 + $0x30] sm:$0xff] %vm6526, 0.0
      %6534 = vst.msk [vmem:[#allocation2 + $0x38] sm:$0xff] %vm6526, 0.0
      %6535 = vst.msk [vmem:[#allocation2 + $0x40] sm:$0xff] %vm6526, 0.0
      %6536 = vst.msk [vmem:[#allocation2 + $0x48] sm:$0xff] %vm6526, 0.0
      %6537 = vst.msk [vmem:[#allocation2 + $0x50] sm:$0xff] %vm6526, 0.0
      %6538 = vst.msk [vmem:[#allocation2 + $0x58] sm:$0xff] %vm6526, 0.0
      %6539 = vst.msk [vmem:[#allocation2 + $0x60] sm:$0xff] %vm6526, 0.0
      %6540 = vst.msk [vmem:[#allocation2 + $0x68] sm:$0xff] %vm6526, 0.0
      %6541 = vst.msk [vmem:[#allocation2 + $0x70] sm:$0xff] %vm6526, 0.0
      %6542 = vst.msk [vmem:[#allocation2 + $0x78] sm:$0xff] %vm6526, 0.0
      %6543 = vst.msk [vmem:[#allocation2 + $0x80] sm:$0xff] %vm6526, 0.0
      %6544 = vst.msk [vmem:[#allocation2 + $0x88] sm:$0xff] %vm6526, 0.0
      %6545 = vst.msk [vmem:[#allocation2 + $0x90] sm:$0xff] %vm6526, 0.0
      %6546 = vst.msk [vmem:[#allocation2 + $0x98] sm:$0xff] %vm6526, 0.0
      %6547 = vst.msk [vmem:[#allocation2 + $0xa0] sm:$0xff] %vm6526, 0.0
      %6548 = vst.msk [vmem:[#allocation2 + $0xa8] sm:$0xff] %vm6526, 0.0
      %6549 = vst.msk [vmem:[#allocation2 + $0xb0] sm:$0xff] %vm6526, 0.0
      %6550 = vst.msk [vmem:[#allocation2 + $0xb8] sm:$0xff] %vm6526, 0.0
      %6551 = vst.msk [vmem:[#allocation2 + $0xc0] sm:$0xff] %vm6526, 0.0
      %6552 = vst.msk [vmem:[#allocation2 + $0xc8] sm:$0xff] %vm6526, 0.0
      %6553 = vst.msk [vmem:[#allocation2 + $0xd0] sm:$0xff] %vm6526, 0.0
      %6554 = vst.msk [vmem:[#allocation2 + $0xd8] sm:$0xff] %vm6526, 0.0
      %6555 = vst.msk [vmem:[#allocation2 + $0xe0] sm:$0xff] %vm6526, 0.0
      %6556 = vst.msk [vmem:[#allocation2 + $0xe8] sm:$0xff] %vm6526, 0.0
      %6557 = vst.msk [vmem:[#allocation2 + $0xf0] sm:$0xff] %vm6526, 0.0
      %6558 = vst.msk [vmem:[#allocation2 + $0xf8] sm:$0xff] %vm6526, 0.0
      %6559 = vst.msk [vmem:[#allocation2 + $0x100] sm:$0xff] %vm6526, 0.0
      %6560 = vst.msk [vmem:[#allocation2 + $0x108] sm:$0xff] %vm6526, 0.0
      %6561 = vst.msk [vmem:[#allocation2 + $0x110] sm:$0xff] %vm6526, 0.0
      %6562 = vst.msk [vmem:[#allocation2 + $0x118] sm:$0xff] %vm6526, 0.0
      %6563 = vst.msk [vmem:[#allocation2 + $0x120] sm:$0xff] %vm6526, 0.0
      %6564 = vst.msk [vmem:[#allocation2 + $0x128] sm:$0xff] %vm6526, 0.0
      %6565 = vst.msk [vmem:[#allocation2 + $0x130] sm:$0xff] %vm6526, 0.0
      %6566 = vst.msk [vmem:[#allocation2 + $0x138] sm:$0xff] %vm6526, 0.0
      %6567 = vst.msk [vmem:[#allocation2 + $0x140] sm:$0xff] %vm6526, 0.0
      %6568 = vst.msk [vmem:[#allocation2 + $0x148] sm:$0xff] %vm6526, 0.0
      %vm6569 = vcmask 62464
      %6570 = vst.msk [vmem:[#allocation2 + $0x150] sm:$0x3f] %vm6569, 0.0
      %6571 = vst.msk [vmem:[#allocation2 + $0x13] sm:$0xff] %vm6526, %v6490
      %6572 = vst.msk [vmem:[#allocation2 + $0x1b] sm:$0xff] %vm6526, %v6491
      %6573 = vst.msk [vmem:[#allocation2 + $0x23] sm:$0xff] %vm6526, %v6492
      %6574 = vst.msk [vmem:[#allocation2 + $0x2b] sm:$0xff] %vm6526, %v6493
      %6575 = vst.msk [vmem:[#allocation2 + $0x33] sm:$0xff] %vm6526, %v6494
      %6576 = vst.msk [vmem:[#allocation2 + $0x3b] sm:$0xff] %vm6526, %v6495
      %6577 = vst.msk [vmem:[#allocation2 + $0x43] sm:$0xff] %vm6526, %v6496
      %6578 = vst.msk [vmem:[#allocation2 + $0x4b] sm:$0xff] %vm6526, %v6497
      %6579 = vst.msk [vmem:[#allocation2 + $0x53] sm:$0xff] %vm6526, %v6498
      %6580 = vst.msk [vmem:[#allocation2 + $0x5b] sm:$0xff] %vm6526, %v6499
      %6581 = vst.msk [vmem:[#allocation2 + $0x63] sm:$0xff] %vm6526, %v6500
      %6582 = vst.msk [vmem:[#allocation2 + $0x6b] sm:$0xff] %vm6526, %v6501
      %6583 = vst.msk [vmem:[#allocation2 + $0x73] sm:$0xff] %vm6526, %v6502
      %6584 = vst.msk [vmem:[#allocation2 + $0x7b] sm:$0xff] %vm6526, %v6503
      %6585 = vst.msk [vmem:[#allocation2 + $0x83] sm:$0xff] %vm6526, %v6504
      %6586 = vst.msk [vmem:[#allocation2 + $0x8b] sm:$0xff] %vm6526, %v6505
      %6587 = vst.msk [vmem:[#allocation2 + $0x93] sm:$0xff] %vm6526, %v6506
      %6588 = vst.msk [vmem:[#allocation2 + $0x9b] sm:$0xff] %vm6526, %v6507
      %6589 = vst.msk [vmem:[#allocation2 + $0xa3] sm:$0xff] %vm6526, %v6508
      %6590 = vst.msk [vmem:[#allocation2 + $0xab] sm:$0xff] %vm6526, %v6509
      %6591 = vst.msk [vmem:[#allocation2 + $0xb3] sm:$0xff] %vm6526, %v6510
      %6592 = vst.msk [vmem:[#allocation2 + $0xbb] sm:$0xff] %vm6526, %v6511
      %6593 = vst.msk [vmem:[#allocation2 + $0xc3] sm:$0xff] %vm6526, %v6512
      %6594 = vst.msk [vmem:[#allocation2 + $0xcb] sm:$0xff] %vm6526, %v6513
      %6595 = vst.msk [vmem:[#allocation2 + $0xd3] sm:$0xff] %vm6526, %v6514
      %6596 = vst.msk [vmem:[#allocation2 + $0xdb] sm:$0xff] %vm6526, %v6515
      %6597 = vst.msk [vmem:[#allocation2 + $0xe3] sm:$0xff] %vm6526, %v6516
      %6598 = vst.msk [vmem:[#allocation2 + $0xeb] sm:$0xff] %vm6526, %v6517
      %6599 = vst.msk [vmem:[#allocation2 + $0xf3] sm:$0xff] %vm6526, %v6518
      %6600 = vst.msk [vmem:[#allocation2 + $0xfb] sm:$0xff] %vm6526, %v6519
      %6601 = vst.msk [vmem:[#allocation2 + $0x103] sm:$0xff] %vm6526, %v6520
      %6602 = vst.msk [vmem:[#allocation2 + $0x10b] sm:$0xff] %vm6526, %v6521
      %6603 = vst.msk [vmem:[#allocation2 + $0x113] sm:$0xff] %vm6526, %v6522
      %6604 = vst.msk [vmem:[#allocation2 + $0x11b] sm:$0xff] %vm6526, %v6523
      %6605 = vst.msk [vmem:[#allocation2 + $0x123] sm:$0xff] %vm6526, %v6524
      %6606 = vst.msk [vmem:[#allocation2 + $0x12b] sm:$0xff] %vm6526, %v6525
      %v6607 = vld [vmem:[#allocation2] sm:$0xff]
      %v6608 = vld [vmem:[#allocation2 + $0x8] sm:$0xff]
      %v6609 = vld [vmem:[#allocation2 + $0x10] sm:$0xff]
      %v6610 = vld [vmem:[#allocation2 + $0x18] sm:$0xff]
      %v6611 = vld [vmem:[#allocation2 + $0x20] sm:$0xff]
      %v6612 = vld [vmem:[#allocation2 + $0x28] sm:$0xff]
      %v6613 = vld [vmem:[#allocation2 + $0x30] sm:$0xff]
      %v6614 = vld [vmem:[#allocation2 + $0x38] sm:$0xff]
      %v6615 = vld [vmem:[#allocation2 + $0x40] sm:$0xff]
      %v6616 = vld [vmem:[#allocation2 + $0x48] sm:$0xff]
      %v6617 = vld [vmem:[#allocation2 + $0x50] sm:$0xff]
      %v6618 = vld [vmem:[#allocation2 + $0x58] sm:$0xff]
      %v6619 = vld [vmem:[#allocation2 + $0x60] sm:$0xff]
      %v6620 = vld [vmem:[#allocation2 + $0x68] sm:$0xff]
      %v6621 = vld [vmem:[#allocation2 + $0x70] sm:$0xff]
      %v6622 = vld [vmem:[#allocation2 + $0x78] sm:$0xff]
      %v6623 = vld [vmem:[#allocation2 + $0x80] sm:$0xff]
      %v6624 = vld [vmem:[#allocation2 + $0x88] sm:$0xff]
      %v6625 = vld [vmem:[#allocation2 + $0x90] sm:$0xff]
      %v6626 = vld [vmem:[#allocation2 + $0x98] sm:$0xff]
      %v6627 = vld [vmem:[#allocation2 + $0xa0] sm:$0xff]
      %v6628 = vld [vmem:[#allocation2 + $0xa8] sm:$0xff]
      %v6629 = vld [vmem:[#allocation2 + $0xb0] sm:$0xff]
      %v6630 = vld [vmem:[#allocation2 + $0xb8] sm:$0xff]
      %v6631 = vld [vmem:[#allocation2 + $0xc0] sm:$0xff]
      %v6632 = vld [vmem:[#allocation2 + $0xc8] sm:$0xff]
      %v6633 = vld [vmem:[#allocation2 + $0xd0] sm:$0xff]
      %v6634 = vld [vmem:[#allocation2 + $0xd8] sm:$0xff]
      %v6635 = vld [vmem:[#allocation2 + $0xe0] sm:$0xff]
      %v6636 = vld [vmem:[#allocation2 + $0xe8] sm:$0xff]
      %v6637 = vld [vmem:[#allocation2 + $0xf0] sm:$0xff]
      %v6638 = vld [vmem:[#allocation2 + $0xf8] sm:$0xff]
      %v6639 = vld [vmem:[#allocation2 + $0x100] sm:$0xff]
      %v6640 = vld [vmem:[#allocation2 + $0x108] sm:$0xff]
      %v6641 = vld [vmem:[#allocation2 + $0x110] sm:$0xff]
      %v6642 = vld [vmem:[#allocation2 + $0x118] sm:$0xff]
      %v6643 = vpack.c.bf16 %v6608, %v6607
      %v6644 = vpack.c.bf16 %v6610, %v6609
      %v6645 = vpack.c.bf16 %v6612, %v6611
      %v6646 = vpack.c.bf16 %v6614, %v6613
      %v6647 = vpack.c.bf16 %v6616, %v6615
      %v6648 = vpack.c.bf16 %v6618, %v6617
      %v6649 = vpack.c.bf16 %v6620, %v6619
      %v6650 = vpack.c.bf16 %v6622, %v6621
      %v6651 = vpack.c.bf16 %v6624, %v6623
      %v6652 = vpack.c.bf16 %v6626, %v6625
      %v6653 = vpack.c.bf16 %v6628, %v6627
      %v6654 = vpack.c.bf16 %v6630, %v6629
      %v6655 = vpack.c.bf16 %v6632, %v6631
      %v6656 = vpack.c.bf16 %v6634, %v6633
      %v6657 = vpack.c.bf16 %v6636, %v6635
      %v6658 = vpack.c.bf16 %v6638, %v6637
      %v6659 = vpack.c.bf16 %v6640, %v6639
      %v6660 = vpack.c.bf16 %v6642, %v6641
      %v6661 = vld [vmem:[%s6] sm:$0xf]
      %v6662 = vld [vmem:[#allocation2 + $0x1] sm:$0xff]
      %v6663 = vld [vmem:[#allocation2 + $0x9] sm:$0xff]
      %v6664 = vld [vmem:[#allocation2 + $0x11] sm:$0xff]
      %v6665 = vld [vmem:[#allocation2 + $0x19] sm:$0xff]
      %v6666 = vld [vmem:[#allocation2 + $0x21] sm:$0xff]
      %v6667 = vld [vmem:[#allocation2 + $0x29] sm:$0xff]
      %v6668 = vld [vmem:[#allocation2 + $0x31] sm:$0xff]
      %v6669 = vld [vmem:[#allocation2 + $0x39] sm:$0xff]
      %v6670 = vld [vmem:[#allocation2 + $0x41] sm:$0xff]
      %v6671 = vld [vmem:[#allocation2 + $0x49] sm:$0xff]
      %v6672 = vld [vmem:[#allocation2 + $0x51] sm:$0xff]
      %v6673 = vld [vmem:[#allocation2 + $0x59] sm:$0xff]
      %v6674 = vld [vmem:[#allocation2 + $0x61] sm:$0xff]
      %v6675 = vld [vmem:[#allocation2 + $0x69] sm:$0xff]
      %v6676 = vld [vmem:[#allocation2 + $0x71] sm:$0xff]
      %v6677 = vld [vmem:[#allocation2 + $0x79] sm:$0xff]
      %v6678 = vld [vmem:[#allocation2 + $0x81] sm:$0xff]
      %v6679 = vld [vmem:[#allocation2 + $0x89] sm:$0xff]
      %v6680 = vld [vmem:[#allocation2 + $0x91] sm:$0xff]
      %v6681 = vld [vmem:[#allocation2 + $0x99] sm:$0xff]
      %v6682 = vld [vmem:[#allocation2 + $0xa1] sm:$0xff]
      %v6683 = vld [vmem:[#allocation2 + $0xa9] sm:$0xff]
      %v6684 = vld [vmem:[#allocation2 + $0xb1] sm:$0xff]
      %v6685 = vld [vmem:[#allocation2 + $0xb9] sm:$0xff]
      %v6686 = vld [vmem:[#allocation2 + $0xc1] sm:$0xff]
      %v6687 = vld [vmem:[#allocation2 + $0xc9] sm:$0xff]
      %v6688 = vld [vmem:[#allocation2 + $0xd1] sm:$0xff]
      %v6689 = vld [vmem:[#allocation2 + $0xd9] sm:$0xff]
      %v6690 = vld [vmem:[#allocation2 + $0xe1] sm:$0xff]
      %v6691 = vld [vmem:[#allocation2 + $0xe9] sm:$0xff]
      %v6692 = vld [vmem:[#allocation2 + $0xf1] sm:$0xff]
      %v6693 = vld [vmem:[#allocation2 + $0xf9] sm:$0xff]
      %v6694 = vld [vmem:[#allocation2 + $0x101] sm:$0xff]
      %v6695 = vld [vmem:[#allocation2 + $0x109] sm:$0xff]
      %v6696 = vld [vmem:[#allocation2 + $0x111] sm:$0xff]
      %v6697 = vld [vmem:[#allocation2 + $0x119] sm:$0xff]
      %v6698 = vpack.c.bf16 %v6663, %v6662
      %v6699 = vpack.c.bf16 %v6665, %v6664
      %v6700 = vpack.c.bf16 %v6667, %v6666
      %v6701 = vpack.c.bf16 %v6669, %v6668
      %v6702 = vpack.c.bf16 %v6671, %v6670
      %v6703 = vpack.c.bf16 %v6673, %v6672
      %v6704 = vpack.c.bf16 %v6675, %v6674
      %v6705 = vpack.c.bf16 %v6677, %v6676
      %v6706 = vpack.c.bf16 %v6679, %v6678
      %v6707 = vpack.c.bf16 %v6681, %v6680
      %v6708 = vpack.c.bf16 %v6683, %v6682
      %v6709 = vpack.c.bf16 %v6685, %v6684
      %v6710 = vpack.c.bf16 %v6687, %v6686
      %v6711 = vpack.c.bf16 %v6689, %v6688
      %v6712 = vpack.c.bf16 %v6691, %v6690
      %v6713 = vpack.c.bf16 %v6693, %v6692
      %v6714 = vpack.c.bf16 %v6695, %v6694
      %v6715 = vpack.c.bf16 %v6697, %v6696
      %s6716 = scalar_lea.vmem %s6, 4
      %v6717 = vld [vmem:[%s6716] sm:$0xf]
      %v6719 = vsel %vm6526, %v6698, 0
      %v6722 = vsel %vm6526, %v6699, 0
      %v6725 = vsel %vm6526, %v6700, 0
      %v6728 = vsel %vm6526, %v6701, 0
      %v6731 = vsel %vm6526, %v6702, 0
      %v6734 = vsel %vm6526, %v6703, 0
      %v6737 = vsel %vm6526, %v6704, 0
      %v6740 = vsel %vm6526, %v6705, 0
      %v6743 = vsel %vm6526, %v6706, 0
      %v6746 = vsel %vm6526, %v6707, 0
      %v6749 = vsel %vm6526, %v6708, 0
      %v6752 = vsel %vm6526, %v6709, 0
      %v6755 = vsel %vm6526, %v6710, 0
      %v6758 = vsel %vm6526, %v6711, 0
      %v6761 = vsel %vm6526, %v6712, 0
      %v6764 = vsel %vm6526, %v6713, 0
      %v6767 = vsel %vm6526, %v6714, 0
      %v6770 = vsel %vm6526, %v6715, 0
      %vm6772 = vcmask 1043456
      %v6774 = vsel %vm6772, %v6717, 0
      %6776 = vmatprep.subr.bf16.mxu0 0
      %6777 = vmatpush1.bf16.msra.mxu0 %v6774
      %6778 = vmatprep.subr.bf16.mxu0 0
      %6779 = vmatpush1.bf16.msra.mxu0 0
      %6780 = vmatprep.subr.bf16.mxu0 0
      %6781 = vmatpush1.bf16.msra.mxu0 0
      %6782 = vmatprep.subr.bf16.mxu0 0
      %6783 = vmatpush1.bf16.msra.mxu0 0
      %6784 = vmatprep.subr.bf16.mxu0 0
      %6785 = vmatpush1.bf16.msra.mxu0 0
      %6786 = vmatprep.subr.bf16.mxu0 0
      %6787 = vmatpush1.bf16.msra.mxu0 0
      %6788 = vmatprep.subr.bf16.mxu0 0
      %6789 = vmatpush1.bf16.msra.mxu0 0
      %6790 = vmatprep.subr.bf16.mxu0 0
      %6791 = vmatpush1.bf16.msra.mxu0 0
      %6792 = vmatprep.subr.bf16.mxu0 0
      %6793 = vmatpush1.bf16.msra.mxu0 0
      %6794 = vmatprep.subr.bf16.mxu0 0
      %6795 = vmatpush1.bf16.msra.mxu0 0
      %6796 = vmatprep.subr.bf16.mxu0 0
      %6797 = vmatpush1.bf16.msra.mxu0 0
      %6798 = vmatprep.subr.bf16.mxu0 0
      %6799 = vmatpush1.bf16.msra.mxu0 0
      %6800 = vmatprep.subr.bf16.mxu0 0
      %6801 = vmatpush1.bf16.msra.mxu0 0
      %6802 = vmatprep.subr.bf16.mxu0 0
      %6803 = vmatpush1.bf16.msra.mxu0 0
      %6804 = vmatprep.subr.bf16.mxu0 0
      %6805 = vmatpush1.bf16.msra.mxu0 0
      %6806 = vmatprep.subr.bf16.mxu0 0
      %6807 = vmatpush1.bf16.msra.mxu0 0
      %6808 = vmatprep.mubr.bf16.mxu0 0
      %6809 = vmatmul.mubr.bf16.gmra.mrb[0].mxu0 %v6719
      %v6810 = vpop.f32.mrb[0].mxu0
      %v6811 = vadd.f32 0.0, %v6810
      %v6812 = vpop.f32.mrb[0].mxu0
      %v6813 = vpop.f32.mrb[0].mxu0
      %v6814 = vadd.f32 0.0, %v6813
      %v6815 = vpop.f32.mrb[0].mxu0
      %6816 = vmatprep.mubr.bf16.mxu0 0
      %6817 = vmatmul.mubr.bf16.gmra.mrb[0].mxu0 %v6722
      %v6818 = vpop.f32.mrb[0].mxu0
      %v6819 = vadd.f32 0.0, %v6818
      %v6820 = vpop.f32.mrb[0].mxu0
      %v6821 = vpop.f32.mrb[0].mxu0
      %v6822 = vadd.f32 0.0, %v6821
      %v6823 = vpop.f32.mrb[0].mxu0
      %6824 = vmatprep.mubr.bf16.mxu0 0
      %6825 = vmatmul.mubr.bf16.gmra.mrb[0].mxu0 %v6725
      %v6826 = vpop.f32.mrb[0].mxu0
      %v6827 = vadd.f32 0.0, %v6826
      %v6828 = vpop.f32.mrb[0].mxu0
      %v6829 = vpop.f32.mrb[0].mxu0
      %v6830 = vadd.f32 0.0, %v6829
      %v6831 = vpop.f32.mrb[0].mxu0
      %6832 = vmatprep.mubr.bf16.mxu0 0
      %6833 = vmatmul.mubr.bf16.gmra.mrb[0].mxu0 %v6728
      %v6834 = vpop.f32.mrb[0].mxu0
      %v6835 = vadd.f32 0.0, %v6834
      %v6836 = vpop.f32.mrb[0].mxu0
      %v6837 = vpop.f32.mrb[0].mxu0
      %v6838 = vadd.f32 0.0, %v6837
      %v6839 = vpop.f32.mrb[0].mxu0
      %6840 = vmatprep.mubr.bf16.mxu0 0
      %6841 = vmatmul.mubr.bf16.gmra.mrb[0].mxu0 %v6731
      %v6842 = vpop.f32.mrb[0].mxu0
      %v6843 = vadd.f32 0.0, %v6842
      %v6844 = vpop.f32.mrb[0].mxu0
      %v6845 = vpop.f32.mrb[0].mxu0
      %v6846 = vadd.f32 0.0, %v6845
      %v6847 = vpop.f32.mrb[0].mxu0
      %6848 = vmatprep.mubr.bf16.mxu0 0
      %6849 = vmatmul.mubr.bf16.gmra.mrb[0].mxu0 %v6734
      %v6850 = vpop.f32.mrb[0].mxu0
      %v6851 = vadd.f32 0.0, %v6850
      %v6852 = vpop.f32.mrb[0].mxu0
      %v6853 = vpop.f32.mrb[0].mxu0
      %v6854 = vadd.f32 0.0, %v6853
      %v6855 = vpop.f32.mrb[0].mxu0
      %6856 = vmatprep.mubr.bf16.mxu0 0
      %6857 = vmatmul.mubr.bf16.gmra.mrb[0].mxu0 %v6737
      %v6858 = vpop.f32.mrb[0].mxu0
      %v6859 = vadd.f32 0.0, %v6858
      %v6860 = vpop.f32.mrb[0].mxu0
      %v6861 = vpop.f32.mrb[0].mxu0
      %v6862 = vadd.f32 0.0, %v6861
      %v6863 = vpop.f32.mrb[0].mxu0
      %6864 = vmatprep.mubr.bf16.mxu0 0
      %6865 = vmatmul.mubr.bf16.gmra.mrb[0].mxu0 %v6740
      %v6866 = vpop.f32.mrb[0].mxu0
      %v6867 = vadd.f32 0.0, %v6866
      %v6868 = vpop.f32.mrb[0].mxu0
      %v6869 = vpop.f32.mrb[0].mxu0
      %v6870 = vadd.f32 0.0, %v6869
      %v6871 = vpop.f32.mrb[0].mxu0
      %6872 = vmatprep.mubr.bf16.mxu0 0
      %6873 = vmatmul.mubr.bf16.gmra.mrb[0].mxu0 %v6743
      %v6874 = vpop.f32.mrb[0].mxu0
      %v6875 = vadd.f32 0.0, %v6874
      %v6876 = vpop.f32.mrb[0].mxu0
      %v6877 = vpop.f32.mrb[0].mxu0
      %v6878 = vadd.f32 0.0, %v6877
      %v6879 = vpop.f32.mrb[0].mxu0
      %6880 = vmatprep.mubr.bf16.mxu0 0
      %6881 = vmatmul.mubr.bf16.gmra.mrb[0].mxu0 %v6746
      %v6882 = vpop.f32.mrb[0].mxu0
      %v6883 = vadd.f32 0.0, %v6882
      %v6884 = vpop.f32.mrb[0].mxu0
      %v6885 = vpop.f32.mrb[0].mxu0
      %v6886 = vadd.f32 0.0, %v6885
      %v6887 = vpop.f32.mrb[0].mxu0
      %6888 = vmatprep.mubr.bf16.mxu0 0
      %6889 = vmatmul.mubr.bf16.gmra.mrb[0].mxu0 %v6749
      %v6890 = vpop.f32.mrb[0].mxu0
      %v6891 = vadd.f32 0.0, %v6890
      %v6892 = vpop.f32.mrb[0].mxu0
      %v6893 = vpop.f32.mrb[0].mxu0
      %v6894 = vadd.f32 0.0, %v6893
      %v6895 = vpop.f32.mrb[0].mxu0
      %6896 = vmatprep.mubr.bf16.mxu0 0
      %6897 = vmatmul.mubr.bf16.gmra.mrb[0].mxu0 %v6752
      %v6898 = vpop.f32.mrb[0].mxu0
      %v6899 = vadd.f32 0.0, %v6898
      %v6900 = vpop.f32.mrb[0].mxu0
      %v6901 = vpop.f32.mrb[0].mxu0
      %v6902 = vadd.f32 0.0, %v6901
      %v6903 = vpop.f32.mrb[0].mxu0
      %6904 = vmatprep.mubr.bf16.mxu0 0
      %6905 = vmatmul.mubr.bf16.gmra.mrb[0].mxu0 %v6755
      %v6906 = vpop.f32.mrb[0].mxu0
      %v6907 = vadd.f32 0.0, %v6906
      %v6908 = vpop.f32.mrb[0].mxu0
      %v6909 = vpop.f32.mrb[0].mxu0
      %v6910 = vadd.f32 0.0, %v6909
      %v6911 = vpop.f32.mrb[0].mxu0
      %6912 = vmatprep.mubr.bf16.mxu0 0
      %6913 = vmatmul.mubr.bf16.gmra.mrb[0].mxu0 %v6758
      %v6914 = vpop.f32.mrb[0].mxu0
      %v6915 = vadd.f32 0.0, %v6914
      %v6916 = vpop.f32.mrb[0].mxu0
      %v6917 = vpop.f32.mrb[0].mxu0
      %v6918 = vadd.f32 0.0, %v6917
      %v6919 = vpop.f32.mrb[0].mxu0
      %6920 = vmatprep.mubr.bf16.mxu0 0
      %6921 = vmatmul.mubr.bf16.gmra.mrb[0].mxu0 %v6761
      %v6922 = vpop.f32.mrb[0].mxu0
      %v6923 = vadd.f32 0.0, %v6922
      %v6924 = vpop.f32.mrb[0].mxu0
      %v6925 = vpop.f32.mrb[0].mxu0
      %v6926 = vadd.f32 0.0, %v6925
      %v6927 = vpop.f32.mrb[0].mxu0
      %6928 = vmatprep.mubr.bf16.mxu0 0
      %6929 = vmatmul.mubr.bf16.gmra.mrb[0].mxu0 %v6764
      %v6930 = vpop.f32.mrb[0].mxu0
      %v6931 = vadd.f32 0.0, %v6930
      %v6932 = vpop.f32.mrb[0].mxu0
      %v6933 = vpop.f32.mrb[0].mxu0
      %v6934 = vadd.f32 0.0, %v6933
      %v6935 = vpop.f32.mrb[0].mxu0
      %6936 = vmatprep.mubr.bf16.mxu0 0
      %6937 = vmatmul.mubr.bf16.gmra.mrb[0].mxu0 %v6767
      %v6938 = vpop.f32.mrb[0].mxu0
      %v6939 = vadd.f32 0.0, %v6938
      %v6940 = vpop.f32.mrb[0].mxu0
      %v6941 = vpop.f32.mrb[0].mxu0
      %v6942 = vadd.f32 0.0, %v6941
      %v6943 = vpop.f32.mrb[0].mxu0
      %6944 = vmatprep.mubr.bf16.mxu0 0
      %6945 = vmatmul.mubr.bf16.gmra.mrb[0].mxu0 %v6770
      %v6946 = vpop.f32.mrb[0].mxu0
      %v6947 = vadd.f32 0.0, %v6946
      %v6948 = vpop.f32.mrb[0].mxu0
      %v6949 = vpop.f32.mrb[0].mxu0
      %v6950 = vadd.f32 0.0, %v6949
      %v6951 = vpop.f32.mrb[0].mxu0
      %6952 = vdwg.mxu0
      %v6954 = vsel %vm6526, %v6643, 0
      %v6957 = vsel %vm6526, %v6644, 0
      %v6960 = vsel %vm6526, %v6645, 0
      %v6963 = vsel %vm6526, %v6646, 0
      %v6966 = vsel %vm6526, %v6647, 0
      %v6969 = vsel %vm6526, %v6648, 0
      %v6972 = vsel %vm6526, %v6649, 0
      %v6975 = vsel %vm6526, %v6650, 0
      %v6978 = vsel %vm6526, %v6651, 0
      %v6981 = vsel %vm6526, %v6652, 0
      %v6984 = vsel %vm6526, %v6653, 0
      %v6987 = vsel %vm6526, %v6654, 0
      %v6990 = vsel %vm6526, %v6655, 0
      %v6993 = vsel %vm6526, %v6656, 0
      %v6996 = vsel %vm6526, %v6657, 0
      %v6999 = vsel %vm6526, %v6658, 0
      %v7002 = vsel %vm6526, %v6659, 0
      %v7005 = vsel %vm6526, %v6660, 0
      %v7008 = vsel %vm6772, %v6661, 0
      %7010 = vmatprep.subr.bf16.mxu0 0
      %7011 = vmatpush1.bf16.msra.mxu0 %v7008
      %7012 = vmatprep.subr.bf16.mxu0 0
      %7013 = vmatpush1.bf16.msra.mxu0 0
      %7014 = vmatprep.subr.bf16.mxu0 0
      %7015 = vmatpush1.bf16.msra.mxu0 0
      %7016 = vmatprep.subr.bf16.mxu0 0
      %7017 = vmatpush1.bf16.msra.mxu0 0
      %7018 = vmatprep.subr.bf16.mxu0 0
      %7019 = vmatpush1.bf16.msra.mxu0 0
      %7020 = vmatprep.subr.bf16.mxu0 0
      %7021 = vmatpush1.bf16.msra.mxu0 0
      %7022 = vmatprep.subr.bf16.mxu0 0
      %7023 = vmatpush1.bf16.msra.mxu0 0
      %7024 = vmatprep.subr.bf16.mxu0 0
      %7025 = vmatpush1.bf16.msra.mxu0 0
      %7026 = vmatprep.subr.bf16.mxu0 0
      %7027 = vmatpush1.bf16.msra.mxu0 0
      %7028 = vmatprep.subr.bf16.mxu0 0
      %7029 = vmatpush1.bf16.msra.mxu0 0
      %7030 = vmatprep.subr.bf16.mxu0 0
      %7031 = vmatpush1.bf16.msra.mxu0 0
      %7032 = vmatprep.subr.bf16.mxu0 0
      %7033 = vmatpush1.bf16.msra.mxu0 0
      %7034 = vmatprep.subr.bf16.mxu0 0
      %7035 = vmatpush1.bf16.msra.mxu0 0
      %7036 = vmatprep.subr.bf16.mxu0 0
      %7037 = vmatpush1.bf16.msra.mxu0 0
      %7038 = vmatprep.subr.bf16.mxu0 0
      %7039 = vmatpush1.bf16.msra.mxu0 0
      %7040 = vmatprep.subr.bf16.mxu0 0
      %7041 = vmatpush1.bf16.msra.mxu0 0
      %7042 = vmatprep.mubr.bf16.mxu0 0
      %7043 = vmatmul.mubr.bf16.gmra.mrb[0].mxu0 %v6954
      %v7044 = vpop.f32.mrb[0].mxu0
      %v7045 = vadd.f32 %v6811, %v7044
      %v7046 = vpop.f32.mrb[0].mxu0
      %v7047 = vpop.f32.mrb[0].mxu0
      %v7048 = vadd.f32 %v6814, %v7047
      %v7049 = vpop.f32.mrb[0].mxu0
      %7050 = vmatprep.mubr.bf16.mxu0 0
      %7051 = vmatmul.mubr.bf16.gmra.mrb[0].mxu0 %v6957
      %v7052 = vpop.f32.mrb[0].mxu0
      %v7053 = vadd.f32 %v6819, %v7052
      %v7054 = vpop.f32.mrb[0].mxu0
      %v7055 = vpop.f32.mrb[0].mxu0
      %v7056 = vadd.f32 %v6822, %v7055
      %v7057 = vpop.f32.mrb[0].mxu0
      %7058 = vmatprep.mubr.bf16.mxu0 0
      %7059 = vmatmul.mubr.bf16.gmra.mrb[0].mxu0 %v6960
      %v7060 = vpop.f32.mrb[0].mxu0
      %v7061 = vadd.f32 %v6827, %v7060
      %v7062 = vpop.f32.mrb[0].mxu0
      %v7063 = vpop.f32.mrb[0].mxu0
      %v7064 = vadd.f32 %v6830, %v7063
      %v7065 = vpop.f32.mrb[0].mxu0
      %7066 = vmatprep.mubr.bf16.mxu0 0
      %7067 = vmatmul.mubr.bf16.gmra.mrb[0].mxu0 %v6963
      %v7068 = vpop.f32.mrb[0].mxu0
      %v7069 = vadd.f32 %v6835, %v7068
      %v7070 = vpop.f32.mrb[0].mxu0
      %v7071 = vpop.f32.mrb[0].mxu0
      %v7072 = vadd.f32 %v6838, %v7071
      %v7073 = vpop.f32.mrb[0].mxu0
      %7074 = vmatprep.mubr.bf16.mxu0 0
      %7075 = vmatmul.mubr.bf16.gmra.mrb[0].mxu0 %v6966
      %v7076 = vpop.f32.mrb[0].mxu0
      %v7077 = vadd.f32 %v6843, %v7076
      %v7078 = vpop.f32.mrb[0].mxu0
      %v7079 = vpop.f32.mrb[0].mxu0
      %v7080 = vadd.f32 %v6846, %v7079
      %v7081 = vpop.f32.mrb[0].mxu0
      %7082 = vmatprep.mubr.bf16.mxu0 0
      %7083 = vmatmul.mubr.bf16.gmra.mrb[0].mxu0 %v6969
      %v7084 = vpop.f32.mrb[0].mxu0
      %v7085 = vadd.f32 %v6851, %v7084
      %v7086 = vpop.f32.mrb[0].mxu0
      %v7087 = vpop.f32.mrb[0].mxu0
      %v7088 = vadd.f32 %v6854, %v7087
      %v7089 = vpop.f32.mrb[0].mxu0
      %7090 = vmatprep.mubr.bf16.mxu0 0
      %7091 = vmatmul.mubr.bf16.gmra.mrb[0].mxu0 %v6972
      %v7092 = vpop.f32.mrb[0].mxu0
      %v7093 = vadd.f32 %v6859, %v7092
      %v7094 = vpop.f32.mrb[0].mxu0
      %v7095 = vpop.f32.mrb[0].mxu0
      %v7096 = vadd.f32 %v6862, %v7095
      %v7097 = vpop.f32.mrb[0].mxu0
      %7098 = vmatprep.mubr.bf16.mxu0 0
      %7099 = vmatmul.mubr.bf16.gmra.mrb[0].mxu0 %v6975
      %v7100 = vpop.f32.mrb[0].mxu0
      %v7101 = vadd.f32 %v6867, %v7100
      %v7102 = vpop.f32.mrb[0].mxu0
      %v7103 = vpop.f32.mrb[0].mxu0
      %v7104 = vadd.f32 %v6870, %v7103
      %v7105 = vpop.f32.mrb[0].mxu0
      %7106 = vmatprep.mubr.bf16.mxu0 0
      %7107 = vmatmul.mubr.bf16.gmra.mrb[0].mxu0 %v6978
      %v7108 = vpop.f32.mrb[0].mxu0
      %v7109 = vadd.f32 %v6875, %v7108
      %v7110 = vpop.f32.mrb[0].mxu0
      %v7111 = vpop.f32.mrb[0].mxu0
      %v7112 = vadd.f32 %v6878, %v7111
      %v7113 = vpop.f32.mrb[0].mxu0
      %7114 = vmatprep.mubr.bf16.mxu0 0
      %7115 = vmatmul.mubr.bf16.gmra.mrb[0].mxu0 %v6981
      %v7116 = vpop.f32.mrb[0].mxu0
      %v7117 = vadd.f32 %v6883, %v7116
      %v7118 = vpop.f32.mrb[0].mxu0
      %v7119 = vpop.f32.mrb[0].mxu0
      %v7120 = vadd.f32 %v6886, %v7119
      %v7121 = vpop.f32.mrb[0].mxu0
      %7122 = vmatprep.mubr.bf16.mxu0 0
      %7123 = vmatmul.mubr.bf16.gmra.mrb[0].mxu0 %v6984
      %v7124 = vpop.f32.mrb[0].mxu0
      %v7125 = vadd.f32 %v6891, %v7124
      %v7126 = vpop.f32.mrb[0].mxu0
      %v7127 = vpop.f32.mrb[0].mxu0
      %v7128 = vadd.f32 %v6894, %v7127
      %v7129 = vpop.f32.mrb[0].mxu0
      %7130 = vmatprep.mubr.bf16.mxu0 0
      %7131 = vmatmul.mubr.bf16.gmra.mrb[0].mxu0 %v6987
      %v7132 = vpop.f32.mrb[0].mxu0
      %v7133 = vadd.f32 %v6899, %v7132
      %v7134 = vpop.f32.mrb[0].mxu0
      %v7135 = vpop.f32.mrb[0].mxu0
      %v7136 = vadd.f32 %v6902, %v7135
      %v7137 = vpop.f32.mrb[0].mxu0
      %7138 = vmatprep.mubr.bf16.mxu0 0
      %7139 = vmatmul.mubr.bf16.gmra.mrb[0].mxu0 %v6990
      %v7140 = vpop.f32.mrb[0].mxu0
      %v7141 = vadd.f32 %v6907, %v7140
      %v7142 = vpop.f32.mrb[0].mxu0
      %v7143 = vpop.f32.mrb[0].mxu0
      %v7144 = vadd.f32 %v6910, %v7143
      %v7145 = vpop.f32.mrb[0].mxu0
      %7146 = vmatprep.mubr.bf16.mxu0 0
      %7147 = vmatmul.mubr.bf16.gmra.mrb[0].mxu0 %v6993
      %v7148 = vpop.f32.mrb[0].mxu0
      %v7149 = vadd.f32 %v6915, %v7148
      %v7150 = vpop.f32.mrb[0].mxu0
      %v7151 = vpop.f32.mrb[0].mxu0
      %v7152 = vadd.f32 %v6918, %v7151
      %v7153 = vpop.f32.mrb[0].mxu0
      %7154 = vmatprep.mubr.bf16.mxu0 0
      %7155 = vmatmul.mubr.bf16.gmra.mrb[0].mxu0 %v6996
      %v7156 = vpop.f32.mrb[0].mxu0
      %v7157 = vadd.f32 %v6923, %v7156
      %v7158 = vpop.f32.mrb[0].mxu0
      %v7159 = vpop.f32.mrb[0].mxu0
      %v7160 = vadd.f32 %v6926, %v7159
      %v7161 = vpop.f32.mrb[0].mxu0
      %7162 = vmatprep.mubr.bf16.mxu0 0
      %7163 = vmatmul.mubr.bf16.gmra.mrb[0].mxu0 %v6999
      %v7164 = vpop.f32.mrb[0].mxu0
      %v7165 = vadd.f32 %v6931, %v7164
      %v7166 = vpop.f32.mrb[0].mxu0
      %v7167 = vpop.f32.mrb[0].mxu0
      %v7168 = vadd.f32 %v6934, %v7167
      %v7169 = vpop.f32.mrb[0].mxu0
      %7170 = vmatprep.mubr.bf16.mxu0 0
      %7171 = vmatmul.mubr.bf16.gmra.mrb[0].mxu0 %v7002
      %v7172 = vpop.f32.mrb[0].mxu0
      %v7173 = vadd.f32 %v6939, %v7172
      %v7174 = vpop.f32.mrb[0].mxu0
      %v7175 = vpop.f32.mrb[0].mxu0
      %v7176 = vadd.f32 %v6942, %v7175
      %v7177 = vpop.f32.mrb[0].mxu0
      %7178 = vmatprep.mubr.bf16.mxu0 0
      %7179 = vmatmul.mubr.bf16.gmra.mrb[0].mxu0 %v7005
      %v7180 = vpop.f32.mrb[0].mxu0
      %v7181 = vadd.f32 %v6947, %v7180
      %v7182 = vpop.f32.mrb[0].mxu0
      %v7183 = vpop.f32.mrb[0].mxu0
      %v7184 = vadd.f32 %v6950, %v7183
      %v7185 = vpop.f32.mrb[0].mxu0
      %7186 = vdwg.mxu0
      %v7187 = vld [vmem:[#allocation2 + $0x2] sm:$0xff]
      %v7188 = vld [vmem:[#allocation2 + $0xa] sm:$0xff]
      %v7189 = vld [vmem:[#allocation2 + $0x12] sm:$0xff]
      %v7190 = vld [vmem:[#allocation2 + $0x1a] sm:$0xff]
      %v7191 = vld [vmem:[#allocation2 + $0x22] sm:$0xff]
      %v7192 = vld [vmem:[#allocation2 + $0x2a] sm:$0xff]
      %v7193 = vld [vmem:[#allocation2 + $0x32] sm:$0xff]
      %v7194 = vld [vmem:[#allocation2 + $0x3a] sm:$0xff]
      %v7195 = vld [vmem:[#allocation2 + $0x42] sm:$0xff]
      %v7196 = vld [vmem:[#allocation2 + $0x4a] sm:$0xff]
      %v7197 = vld [vmem:[#allocation2 + $0x52] sm:$0xff]
      %v7198 = vld [vmem:[#allocation2 + $0x5a] sm:$0xff]
      %v7199 = vld [vmem:[#allocation2 + $0x62] sm:$0xff]
      %v7200 = vld [vmem:[#allocation2 + $0x6a] sm:$0xff]
      %v7201 = vld [vmem:[#allocation2 + $0x72] sm:$0xff]
      %v7202 = vld [vmem:[#allocation2 + $0x7a] sm:$0xff]
      %v7203 = vld [vmem:[#allocation2 + $0x82] sm:$0xff]
      %v7204 = vld [vmem:[#allocation2 + $0x8a] sm:$0xff]
      %v7205 = vld [vmem:[#allocation2 + $0x92] sm:$0xff]
      %v7206 = vld [vmem:[#allocation2 + $0x9a] sm:$0xff]
      %v7207 = vld [vmem:[#allocation2 + $0xa2] sm:$0xff]
      %v7208 = vld [vmem:[#allocation2 + $0xaa] sm:$0xff]
      %v7209 = vld [vmem:[#allocation2 + $0xb2] sm:$0xff]
      %v7210 = vld [vmem:[#allocation2 + $0xba] sm:$0xff]
      %v7211 = vld [vmem:[#allocation2 + $0xc2] sm:$0xff]
      %v7212 = vld [vmem:[#allocation2 + $0xca] sm:$0xff]
      %v7213 = vld [vmem:[#allocation2 + $0xd2] sm:$0xff]
      %v7214 = vld [vmem:[#allocation2 + $0xda] sm:$0xff]
      %v7215 = vld [vmem:[#allocation2 + $0xe2] sm:$0xff]
      %v7216 = vld [vmem:[#allocation2 + $0xea] sm:$0xff]
      %v7217 = vld [vmem:[#allocation2 + $0xf2] sm:$0xff]
      %v7218 = vld [vmem:[#allocation2 + $0xfa] sm:$0xff]
      %v7219 = vld [vmem:[#allocation2 + $0x102] sm:$0xff]
      %v7220 = vld [vmem:[#allocation2 + $0x10a] sm:$0xff]
      %v7221 = vld [vmem:[#allocation2 + $0x112] sm:$0xff]
      %v7222 = vld [vmem:[#allocation2 + $0x11a] sm:$0xff]
      %v7223 = vpack.c.bf16 %v7188, %v7187
      %v7224 = vpack.c.bf16 %v7190, %v7189
      %v7225 = vpack.c.bf16 %v7192, %v7191
      %v7226 = vpack.c.bf16 %v7194, %v7193
      %v7227 = vpack.c.bf16 %v7196, %v7195
      %v7228 = vpack.c.bf16 %v7198, %v7197
      %v7229 = vpack.c.bf16 %v7200, %v7199
      %v7230 = vpack.c.bf16 %v7202, %v7201
      %v7231 = vpack.c.bf16 %v7204, %v7203
      %v7232 = vpack.c.bf16 %v7206, %v7205
      %v7233 = vpack.c.bf16 %v7208, %v7207
      %v7234 = vpack.c.bf16 %v7210, %v7209
      %v7235 = vpack.c.bf16 %v7212, %v7211
      %v7236 = vpack.c.bf16 %v7214, %v7213
      %v7237 = vpack.c.bf16 %v7216, %v7215
      %v7238 = vpack.c.bf16 %v7218, %v7217
      %v7239 = vpack.c.bf16 %v7220, %v7219
      %v7240 = vpack.c.bf16 %v7222, %v7221
      %s7241 = scalar_lea.vmem %s6, 8
      %v7242 = vld [vmem:[%s7241] sm:$0xf]
      %v7244 = vsel %vm6526, %v7223, 0
      %v7247 = vsel %vm6526, %v7224, 0
      %v7250 = vsel %vm6526, %v7225, 0
      %v7253 = vsel %vm6526, %v7226, 0
      %v7256 = vsel %vm6526, %v7227, 0
      %v7259 = vsel %vm6526, %v7228, 0
      %v7262 = vsel %vm6526, %v7229, 0
      %v7265 = vsel %vm6526, %v7230, 0
      %v7268 = vsel %vm6526, %v7231, 0
      %v7271 = vsel %vm6526, %v7232, 0
      %v7274 = vsel %vm6526, %v7233, 0
      %v7277 = vsel %vm6526, %v7234, 0
      %v7280 = vsel %vm6526, %v7235, 0
      %v7283 = vsel %vm6526, %v7236, 0
      %v7286 = vsel %vm6526, %v7237, 0
      %v7289 = vsel %vm6526, %v7238, 0
      %v7292 = vsel %vm6526, %v7239, 0
      %v7295 = vsel %vm6526, %v7240, 0
      %v7298 = vsel %vm6772, %v7242, 0
      %7300 = vmatprep.subr.bf16.mxu0 0
      %7301 = vmatpush1.bf16.msra.mxu0 %v7298
      %7302 = vmatprep.subr.bf16.mxu0 0
      %7303 = vmatpush1.bf16.msra.mxu0 0
      %7304 = vmatprep.subr.bf16.mxu0 0
      %7305 = vmatpush1.bf16.msra.mxu0 0
      %7306 = vmatprep.subr.bf16.mxu0 0
      %7307 = vmatpush1.bf16.msra.mxu0 0
      %7308 = vmatprep.subr.bf16.mxu0 0
      %7309 = vmatpush1.bf16.msra.mxu0 0
      %7310 = vmatprep.subr.bf16.mxu0 0
      %7311 = vmatpush1.bf16.msra.mxu0 0
      %7312 = vmatprep.subr.bf16.mxu0 0
      %7313 = vmatpush1.bf16.msra.mxu0 0
      %7314 = vmatprep.subr.bf16.mxu0 0
      %7315 = vmatpush1.bf16.msra.mxu0 0
      %7316 = vmatprep.subr.bf16.mxu0 0
      %7317 = vmatpush1.bf16.msra.mxu0 0
      %7318 = vmatprep.subr.bf16.mxu0 0
      %7319 = vmatpush1.bf16.msra.mxu0 0
      %7320 = vmatprep.subr.bf16.mxu0 0
      %7321 = vmatpush1.bf16.msra.mxu0 0
      %7322 = vmatprep.subr.bf16.mxu0 0
      %7323 = vmatpush1.bf16.msra.mxu0 0
      %7324 = vmatprep.subr.bf16.mxu0 0
      %7325 = vmatpush1.bf16.msra.mxu0 0
      %7326 = vmatprep.subr.bf16.mxu0 0
      %7327 = vmatpush1.bf16.msra.mxu0 0
      %7328 = vmatprep.subr.bf16.mxu0 0
      %7329 = vmatpush1.bf16.msra.mxu0 0
      %7330 = vmatprep.subr.bf16.mxu0 0
      %7331 = vmatpush1.bf16.msra.mxu0 0
      %7332 = vmatprep.mubr.bf16.mxu0 0
      %7333 = vmatmul.mubr.bf16.gmra.mrb[0].mxu0 %v7244
      %v7334 = vpop.f32.mrb[0].mxu0
      %v7335 = vadd.f32 0.0, %v7334
      %v7336 = vpop.f32.mrb[0].mxu0
      %v7337 = vpop.f32.mrb[0].mxu0
      %v7338 = vadd.f32 0.0, %v7337
      %v7339 = vpop.f32.mrb[0].mxu0
      %7340 = vmatprep.mubr.bf16.mxu0 0
      %7341 = vmatmul.mubr.bf16.gmra.mrb[0].mxu0 %v7247
      %v7342 = vpop.f32.mrb[0].mxu0
      %v7343 = vadd.f32 0.0, %v7342
      %v7344 = vpop.f32.mrb[0].mxu0
      %v7345 = vpop.f32.mrb[0].mxu0
      %v7346 = vadd.f32 0.0, %v7345
      %v7347 = vpop.f32.mrb[0].mxu0
      %7348 = vmatprep.mubr.bf16.mxu0 0
      %7349 = vmatmul.mubr.bf16.gmra.mrb[0].mxu0 %v7250
      %v7350 = vpop.f32.mrb[0].mxu0
      %v7351 = vadd.f32 0.0, %v7350
      %v7352 = vpop.f32.mrb[0].mxu0
      %v7353 = vpop.f32.mrb[0].mxu0
      %v7354 = vadd.f32 0.0, %v7353
      %v7355 = vpop.f32.mrb[0].mxu0
      %7356 = vmatprep.mubr.bf16.mxu0 0
      %7357 = vmatmul.mubr.bf16.gmra.mrb[0].mxu0 %v7253
      %v7358 = vpop.f32.mrb[0].mxu0
      %v7359 = vadd.f32 0.0, %v7358
      %v7360 = vpop.f32.mrb[0].mxu0
      %v7361 = vpop.f32.mrb[0].mxu0
      %v7362 = vadd.f32 0.0, %v7361
      %v7363 = vpop.f32.mrb[0].mxu0
      %7364 = vmatprep.mubr.bf16.mxu0 0
      %7365 = vmatmul.mubr.bf16.gmra.mrb[0].mxu0 %v7256
      %v7366 = vpop.f32.mrb[0].mxu0
      %v7367 = vadd.f32 0.0, %v7366
      %v7368 = vpop.f32.mrb[0].mxu0
      %v7369 = vpop.f32.mrb[0].mxu0
      %v7370 = vadd.f32 0.0, %v7369
      %v7371 = vpop.f32.mrb[0].mxu0
      %7372 = vmatprep.mubr.bf16.mxu0 0
      %7373 = vmatmul.mubr.bf16.gmra.mrb[0].mxu0 %v7259
      %v7374 = vpop.f32.mrb[0].mxu0
      %v7375 = vadd.f32 0.0, %v7374
      %v7376 = vpop.f32.mrb[0].mxu0
      %v7377 = vpop.f32.mrb[0].mxu0
      %v7378 = vadd.f32 0.0, %v7377
      %v7379 = vpop.f32.mrb[0].mxu0
      %7380 = vmatprep.mubr.bf16.mxu0 0
      %7381 = vmatmul.mubr.bf16.gmra.mrb[0].mxu0 %v7262
      %v7382 = vpop.f32.mrb[0].mxu0
      %v7383 = vadd.f32 0.0, %v7382
      %v7384 = vpop.f32.mrb[0].mxu0
      %v7385 = vpop.f32.mrb[0].mxu0
      %v7386 = vadd.f32 0.0, %v7385
      %v7387 = vpop.f32.mrb[0].mxu0
      %7388 = vmatprep.mubr.bf16.mxu0 0
      %7389 = vmatmul.mubr.bf16.gmra.mrb[0].mxu0 %v7265
      %v7390 = vpop.f32.mrb[0].mxu0
      %v7391 = vadd.f32 0.0, %v7390
      %v7392 = vpop.f32.mrb[0].mxu0
      %v7393 = vpop.f32.mrb[0].mxu0
      %v7394 = vadd.f32 0.0, %v7393
      %v7395 = vpop.f32.mrb[0].mxu0
      %7396 = vmatprep.mubr.bf16.mxu0 0
      %7397 = vmatmul.mubr.bf16.gmra.mrb[0].mxu0 %v7268
      %v7398 = vpop.f32.mrb[0].mxu0
      %v7399 = vadd.f32 0.0, %v7398
      %v7400 = vpop.f32.mrb[0].mxu0
      %v7401 = vpop.f32.mrb[0].mxu0
      %v7402 = vadd.f32 0.0, %v7401
      %v7403 = vpop.f32.mrb[0].mxu0
      %7404 = vmatprep.mubr.bf16.mxu0 0
      %7405 = vmatmul.mubr.bf16.gmra.mrb[0].mxu0 %v7271
      %v7406 = vpop.f32.mrb[0].mxu0
      %v7407 = vadd.f32 0.0, %v7406
      %v7408 = vpop.f32.mrb[0].mxu0
      %v7409 = vpop.f32.mrb[0].mxu0
      %v7410 = vadd.f32 0.0, %v7409
      %v7411 = vpop.f32.mrb[0].mxu0
      %7412 = vmatprep.mubr.bf16.mxu0 0
      %7413 = vmatmul.mubr.bf16.gmra.mrb[0].mxu0 %v7274
      %v7414 = vpop.f32.mrb[0].mxu0
      %v7415 = vadd.f32 0.0, %v7414
      %v7416 = vpop.f32.mrb[0].mxu0
      %v7417 = vpop.f32.mrb[0].mxu0
      %v7418 = vadd.f32 0.0, %v7417
      %v7419 = vpop.f32.mrb[0].mxu0
      %7420 = vmatprep.mubr.bf16.mxu0 0
      %7421 = vmatmul.mubr.bf16.gmra.mrb[0].mxu0 %v7277
      %v7422 = vpop.f32.mrb[0].mxu0
      %v7423 = vadd.f32 0.0, %v7422
      %v7424 = vpop.f32.mrb[0].mxu0
      %v7425 = vpop.f32.mrb[0].mxu0
      %v7426 = vadd.f32 0.0, %v7425
      %v7427 = vpop.f32.mrb[0].mxu0
      %7428 = vmatprep.mubr.bf16.mxu0 0
      %7429 = vmatmul.mubr.bf16.gmra.mrb[0].mxu0 %v7280
      %v7430 = vpop.f32.mrb[0].mxu0
      %v7431 = vadd.f32 0.0, %v7430
      %v7432 = vpop.f32.mrb[0].mxu0
      %v7433 = vpop.f32.mrb[0].mxu0
      %v7434 = vadd.f32 0.0, %v7433
      %v7435 = vpop.f32.mrb[0].mxu0
      %7436 = vmatprep.mubr.bf16.mxu0 0
      %7437 = vmatmul.mubr.bf16.gmra.mrb[0].mxu0 %v7283
      %v7438 = vpop.f32.mrb[0].mxu0
      %v7439 = vadd.f32 0.0, %v7438
      %v7440 = vpop.f32.mrb[0].mxu0
      %v7441 = vpop.f32.mrb[0].mxu0
      %v7442 = vadd.f32 0.0, %v7441
      %v7443 = vpop.f32.mrb[0].mxu0
      %7444 = vmatprep.mubr.bf16.mxu0 0
      %7445 = vmatmul.mubr.bf16.gmra.mrb[0].mxu0 %v7286
      %v7446 = vpop.f32.mrb[0].mxu0
      %v7447 = vadd.f32 0.0, %v7446
      %v7448 = vpop.f32.mrb[0].mxu0
      %v7449 = vpop.f32.mrb[0].mxu0
      %v7450 = vadd.f32 0.0, %v7449
      %v7451 = vpop.f32.mrb[0].mxu0
      %7452 = vmatprep.mubr.bf16.mxu0 0
      %7453 = vmatmul.mubr.bf16.gmra.mrb[0].mxu0 %v7289
      %v7454 = vpop.f32.mrb[0].mxu0
      %v7455 = vadd.f32 0.0, %v7454
      %v7456 = vpop.f32.mrb[0].mxu0
      %v7457 = vpop.f32.mrb[0].mxu0
      %v7458 = vadd.f32 0.0, %v7457
      %v7459 = vpop.f32.mrb[0].mxu0
      %7460 = vmatprep.mubr.bf16.mxu0 0
      %7461 = vmatmul.mubr.bf16.gmra.mrb[0].mxu0 %v7292
      %v7462 = vpop.f32.mrb[0].mxu0
      %v7463 = vadd.f32 0.0, %v7462
      %v7464 = vpop.f32.mrb[0].mxu0
      %v7465 = vpop.f32.mrb[0].mxu0
      %v7466 = vadd.f32 0.0, %v7465
      %v7467 = vpop.f32.mrb[0].mxu0
      %7468 = vmatprep.mubr.bf16.mxu0 0
      %7469 = vmatmul.mubr.bf16.gmra.mrb[0].mxu0 %v7295
      %v7470 = vpop.f32.mrb[0].mxu0
      %v7471 = vadd.f32 0.0, %v7470
      %v7472 = vpop.f32.mrb[0].mxu0
      %v7473 = vpop.f32.mrb[0].mxu0
      %v7474 = vadd.f32 0.0, %v7473
      %v7475 = vpop.f32.mrb[0].mxu0
      %7476 = vdwg.mxu0
      %v7477 = vadd.f32 %v7045, %v7335
      %v7478 = vadd.f32 %v7048, %v7338
      %v7479 = vadd.f32 %v7053, %v7343
      %v7480 = vadd.f32 %v7056, %v7346
      %v7481 = vadd.f32 %v7061, %v7351
      %v7482 = vadd.f32 %v7064, %v7354
      %v7483 = vadd.f32 %v7069, %v7359
      %v7484 = vadd.f32 %v7072, %v7362
      %v7485 = vadd.f32 %v7077, %v7367
      %v7486 = vadd.f32 %v7080, %v7370
      %v7487 = vadd.f32 %v7085, %v7375
      %v7488 = vadd.f32 %v7088, %v7378
      %v7489 = vadd.f32 %v7093, %v7383
      %v7490 = vadd.f32 %v7096, %v7386
      %v7491 = vadd.f32 %v7101, %v7391
      %v7492 = vadd.f32 %v7104, %v7394
      %v7493 = vadd.f32 %v7109, %v7399
      %v7494 = vadd.f32 %v7112, %v7402
      %v7495 = vadd.f32 %v7117, %v7407
      %v7496 = vadd.f32 %v7120, %v7410
      %v7497 = vadd.f32 %v7125, %v7415
      %v7498 = vadd.f32 %v7128, %v7418
      %v7499 = vadd.f32 %v7133, %v7423
      %v7500 = vadd.f32 %v7136, %v7426
      %v7501 = vadd.f32 %v7141, %v7431
      %v7502 = vadd.f32 %v7144, %v7434
      %v7503 = vadd.f32 %v7149, %v7439
      %v7504 = vadd.f32 %v7152, %v7442
      %v7505 = vadd.f32 %v7157, %v7447
      %v7506 = vadd.f32 %v7160, %v7450
      %v7507 = vadd.f32 %v7165, %v7455
      %v7508 = vadd.f32 %v7168, %v7458
      %v7509 = vadd.f32 %v7173, %v7463
      %v7510 = vadd.f32 %v7176, %v7466
      %v7511 = vadd.f32 %v7181, %v7471
      %v7512 = vadd.f32 %v7184, %v7474
      %v7513 = vld [vmem:[#allocation2 + $0x12] sm:$0xff]
      %v7514 = vld [vmem:[#allocation2 + $0x1a] sm:$0xff]
      %v7515 = vld [vmem:[#allocation2 + $0x22] sm:$0xff]
      %v7516 = vld [vmem:[#allocation2 + $0x2a] sm:$0xff]
      %v7517 = vld [vmem:[#allocation2 + $0x32] sm:$0xff]
      %v7518 = vld [vmem:[#allocation2 + $0x3a] sm:$0xff]
      %v7519 = vld [vmem:[#allocation2 + $0x42] sm:$0xff]
      %v7520 = vld [vmem:[#allocation2 + $0x4a] sm:$0xff]
      %v7521 = vld [vmem:[#allocation2 + $0x52] sm:$0xff]
      %v7522 = vld [vmem:[#allocation2 + $0x5a] sm:$0xff]
      %v7523 = vld [vmem:[#allocation2 + $0x62] sm:$0xff]
      %v7524 = vld [vmem:[#allocation2 + $0x6a] sm:$0xff]
      %v7525 = vld [vmem:[#allocation2 + $0x72] sm:$0xff]
      %v7526 = vld [vmem:[#allocation2 + $0x7a] sm:$0xff]
      %v7527 = vld [vmem:[#allocation2 + $0x82] sm:$0xff]
      %v7528 = vld [vmem:[#allocation2 + $0x8a] sm:$0xff]
      %v7529 = vld [vmem:[#allocation2 + $0x92] sm:$0xff]
      %v7530 = vld [vmem:[#allocation2 + $0x9a] sm:$0xff]
      %v7531 = vld [vmem:[#allocation2 + $0xa2] sm:$0xff]
      %v7532 = vld [vmem:[#allocation2 + $0xaa] sm:$0xff]
      %v7533 = vld [vmem:[#allocation2 + $0xb2] sm:$0xff]
      %v7534 = vld [vmem:[#allocation2 + $0xba] sm:$0xff]
      %v7535 = vld [vmem:[#allocation2 + $0xc2] sm:$0xff]
      %v7536 = vld [vmem:[#allocation2 + $0xca] sm:$0xff]
      %v7537 = vld [vmem:[#allocation2 + $0xd2] sm:$0xff]
      %v7538 = vld [vmem:[#allocation2 + $0xda] sm:$0xff]
      %v7539 = vld [vmem:[#allocation2 + $0xe2] sm:$0xff]
      %v7540 = vld [vmem:[#allocation2 + $0xea] sm:$0xff]
      %v7541 = vld [vmem:[#allocation2 + $0xf2] sm:$0xff]
      %v7542 = vld [vmem:[#allocation2 + $0xfa] sm:$0xff]
      %v7543 = vld [vmem:[#allocation2 + $0x102] sm:$0xff]
      %v7544 = vld [vmem:[#allocation2 + $0x10a] sm:$0xff]
      %v7545 = vld [vmem:[#allocation2 + $0x112] sm:$0xff]
      %v7546 = vld [vmem:[#allocation2 + $0x11a] sm:$0xff]
      %v7547 = vld [vmem:[#allocation2 + $0x122] sm:$0xff]
      %v7548 = vld [vmem:[#allocation2 + $0x12a] sm:$0xff]
      %v7549 = vpack.c.bf16 %v7514, %v7513
      %v7550 = vpack.c.bf16 %v7516, %v7515
      %v7551 = vpack.c.bf16 %v7518, %v7517
      %v7552 = vpack.c.bf16 %v7520, %v7519
      %v7553 = vpack.c.bf16 %v7522, %v7521
      %v7554 = vpack.c.bf16 %v7524, %v7523
      %v7555 = vpack.c.bf16 %v7526, %v7525
      %v7556 = vpack.c.bf16 %v7528, %v7527
      %v7557 = vpack.c.bf16 %v7530, %v7529
      %v7558 = vpack.c.bf16 %v7532, %v7531
      %v7559 = vpack.c.bf16 %v7534, %v7533
      %v7560 = vpack.c.bf16 %v7536, %v7535
      %v7561 = vpack.c.bf16 %v7538, %v7537
      %v7562 = vpack.c.bf16 %v7540, %v7539
      %v7563 = vpack.c.bf16 %v7542, %v7541
      %v7564 = vpack.c.bf16 %v7544, %v7543
      %v7565 = vpack.c.bf16 %v7546, %v7545
      %v7566 = vpack.c.bf16 %v7548, %v7547
      %s7567 = scalar_lea.vmem %s6, 12
      %v7568 = vld [vmem:[%s7567] sm:$0xf]
      %v7570 = vsel %vm6526, %v7549, 0
      %v7573 = vsel %vm6526, %v7550, 0
      %v7576 = vsel %vm6526, %v7551, 0
      %v7579 = vsel %vm6526, %v7552, 0
      %v7582 = vsel %vm6526, %v7553, 0
      %v7585 = vsel %vm6526, %v7554, 0
      %v7588 = vsel %vm6526, %v7555, 0
      %v7591 = vsel %vm6526, %v7556, 0
      %v7594 = vsel %vm6526, %v7557, 0
      %v7597 = vsel %vm6526, %v7558, 0
      %v7600 = vsel %vm6526, %v7559, 0
      %v7603 = vsel %vm6526, %v7560, 0
      %v7606 = vsel %vm6526, %v7561, 0
      %v7609 = vsel %vm6526, %v7562, 0
      %v7612 = vsel %vm6526, %v7563, 0
      %v7615 = vsel %vm6526, %v7564, 0
      %v7618 = vsel %vm6526, %v7565, 0
      %v7621 = vsel %vm6526, %v7566, 0
      %v7624 = vsel %vm6772, %v7568, 0
      %7626 = vmatprep.subr.bf16.mxu0 0
      %7627 = vmatpush1.bf16.msra.mxu0 %v7624
      %7628 = vmatprep.subr.bf16.mxu0 0
      %7629 = vmatpush1.bf16.msra.mxu0 0
      %7630 = vmatprep.subr.bf16.mxu0 0
      %7631 = vmatpush1.bf16.msra.mxu0 0
      %7632 = vmatprep.subr.bf16.mxu0 0
      %7633 = vmatpush1.bf16.msra.mxu0 0
      %7634 = vmatprep.subr.bf16.mxu0 0
      %7635 = vmatpush1.bf16.msra.mxu0 0
      %7636 = vmatprep.subr.bf16.mxu0 0
      %7637 = vmatpush1.bf16.msra.mxu0 0
      %7638 = vmatprep.subr.bf16.mxu0 0
      %7639 = vmatpush1.bf16.msra.mxu0 0
      %7640 = vmatprep.subr.bf16.mxu0 0
      %7641 = vmatpush1.bf16.msra.mxu0 0
      %7642 = vmatprep.subr.bf16.mxu0 0
      %7643 = vmatpush1.bf16.msra.mxu0 0
      %7644 = vmatprep.subr.bf16.mxu0 0
      %7645 = vmatpush1.bf16.msra.mxu0 0
      %7646 = vmatprep.subr.bf16.mxu0 0
      %7647 = vmatpush1.bf16.msra.mxu0 0
      %7648 = vmatprep.subr.bf16.mxu0 0
      %7649 = vmatpush1.bf16.msra.mxu0 0
      %7650 = vmatprep.subr.bf16.mxu0 0
      %7651 = vmatpush1.bf16.msra.mxu0 0
      %7652 = vmatprep.subr.bf16.mxu0 0
      %7653 = vmatpush1.bf16.msra.mxu0 0
      %7654 = vmatprep.subr.bf16.mxu0 0
      %7655 = vmatpush1.bf16.msra.mxu0 0
      %7656 = vmatprep.subr.bf16.mxu0 0
      %7657 = vmatpush1.bf16.msra.mxu0 0
      %7658 = vmatprep.mubr.bf16.mxu0 0
      %7659 = vmatmul.mubr.bf16.gmra.mrb[0].mxu0 %v7570
      %v7660 = vpop.f32.mrb[0].mxu0
      %v7661 = vadd.f32 0.0, %v7660
      %v7662 = vpop.f32.mrb[0].mxu0
      %v7663 = vpop.f32.mrb[0].mxu0
      %v7664 = vadd.f32 0.0, %v7663
      %v7665 = vpop.f32.mrb[0].mxu0
      %7666 = vmatprep.mubr.bf16.mxu0 0
      %7667 = vmatmul.mubr.bf16.gmra.mrb[0].mxu0 %v7573
      %v7668 = vpop.f32.mrb[0].mxu0
      %v7669 = vadd.f32 0.0, %v7668
      %v7670 = vpop.f32.mrb[0].mxu0
      %v7671 = vpop.f32.mrb[0].mxu0
      %v7672 = vadd.f32 0.0, %v7671
      %v7673 = vpop.f32.mrb[0].mxu0
      %7674 = vmatprep.mubr.bf16.mxu0 0
      %7675 = vmatmul.mubr.bf16.gmra.mrb[0].mxu0 %v7576
      %v7676 = vpop.f32.mrb[0].mxu0
      %v7677 = vadd.f32 0.0, %v7676
      %v7678 = vpop.f32.mrb[0].mxu0
      %v7679 = vpop.f32.mrb[0].mxu0
      %v7680 = vadd.f32 0.0, %v7679
      %v7681 = vpop.f32.mrb[0].mxu0
      %7682 = vmatprep.mubr.bf16.mxu0 0
      %7683 = vmatmul.mubr.bf16.gmra.mrb[0].mxu0 %v7579
      %v7684 = vpop.f32.mrb[0].mxu0
      %v7685 = vadd.f32 0.0, %v7684
      %v7686 = vpop.f32.mrb[0].mxu0
      %v7687 = vpop.f32.mrb[0].mxu0
      %v7688 = vadd.f32 0.0, %v7687
      %v7689 = vpop.f32.mrb[0].mxu0
      %7690 = vmatprep.mubr.bf16.mxu0 0
      %7691 = vmatmul.mubr.bf16.gmra.mrb[0].mxu0 %v7582
      %v7692 = vpop.f32.mrb[0].mxu0
      %v7693 = vadd.f32 0.0, %v7692
      %v7694 = vpop.f32.mrb[0].mxu0
      %v7695 = vpop.f32.mrb[0].mxu0
      %v7696 = vadd.f32 0.0, %v7695
      %v7697 = vpop.f32.mrb[0].mxu0
      %7698 = vmatprep.mubr.bf16.mxu0 0
      %7699 = vmatmul.mubr.bf16.gmra.mrb[0].mxu0 %v7585
      %v7700 = vpop.f32.mrb[0].mxu0
      %v7701 = vadd.f32 0.0, %v7700
      %v7702 = vpop.f32.mrb[0].mxu0
      %v7703 = vpop.f32.mrb[0].mxu0
      %v7704 = vadd.f32 0.0, %v7703
      %v7705 = vpop.f32.mrb[0].mxu0
      %7706 = vmatprep.mubr.bf16.mxu0 0
      %7707 = vmatmul.mubr.bf16.gmra.mrb[0].mxu0 %v7588
      %v7708 = vpop.f32.mrb[0].mxu0
      %v7709 = vadd.f32 0.0, %v7708
      %v7710 = vpop.f32.mrb[0].mxu0
      %v7711 = vpop.f32.mrb[0].mxu0
      %v7712 = vadd.f32 0.0, %v7711
      %v7713 = vpop.f32.mrb[0].mxu0
      %7714 = vmatprep.mubr.bf16.mxu0 0
      %7715 = vmatmul.mubr.bf16.gmra.mrb[0].mxu0 %v7591
      %v7716 = vpop.f32.mrb[0].mxu0
      %v7717 = vadd.f32 0.0, %v7716
      %v7718 = vpop.f32.mrb[0].mxu0
      %v7719 = vpop.f32.mrb[0].mxu0
      %v7720 = vadd.f32 0.0, %v7719
      %v7721 = vpop.f32.mrb[0].mxu0
      %7722 = vmatprep.mubr.bf16.mxu0 0
      %7723 = vmatmul.mubr.bf16.gmra.mrb[0].mxu0 %v7594
      %v7724 = vpop.f32.mrb[0].mxu0
      %v7725 = vadd.f32 0.0, %v7724
      %v7726 = vpop.f32.mrb[0].mxu0
      %v7727 = vpop.f32.mrb[0].mxu0
      %v7728 = vadd.f32 0.0, %v7727
      %v7729 = vpop.f32.mrb[0].mxu0
      %7730 = vmatprep.mubr.bf16.mxu0 0
      %7731 = vmatmul.mubr.bf16.gmra.mrb[0].mxu0 %v7597
      %v7732 = vpop.f32.mrb[0].mxu0
      %v7733 = vadd.f32 0.0, %v7732
      %v7734 = vpop.f32.mrb[0].mxu0
      %v7735 = vpop.f32.mrb[0].mxu0
      %v7736 = vadd.f32 0.0, %v7735
      %v7737 = vpop.f32.mrb[0].mxu0
      %7738 = vmatprep.mubr.bf16.mxu0 0
      %7739 = vmatmul.mubr.bf16.gmra.mrb[0].mxu0 %v7600
      %v7740 = vpop.f32.mrb[0].mxu0
      %v7741 = vadd.f32 0.0, %v7740
      %v7742 = vpop.f32.mrb[0].mxu0
      %v7743 = vpop.f32.mrb[0].mxu0
      %v7744 = vadd.f32 0.0, %v7743
      %v7745 = vpop.f32.mrb[0].mxu0
      %7746 = vmatprep.mubr.bf16.mxu0 0
      %7747 = vmatmul.mubr.bf16.gmra.mrb[0].mxu0 %v7603
      %v7748 = vpop.f32.mrb[0].mxu0
      %v7749 = vadd.f32 0.0, %v7748
      %v7750 = vpop.f32.mrb[0].mxu0
      %v7751 = vpop.f32.mrb[0].mxu0
      %v7752 = vadd.f32 0.0, %v7751
      %v7753 = vpop.f32.mrb[0].mxu0
      %7754 = vmatprep.mubr.bf16.mxu0 0
      %7755 = vmatmul.mubr.bf16.gmra.mrb[0].mxu0 %v7606
      %v7756 = vpop.f32.mrb[0].mxu0
      %v7757 = vadd.f32 0.0, %v7756
      %v7758 = vpop.f32.mrb[0].mxu0
      %v7759 = vpop.f32.mrb[0].mxu0
      %v7760 = vadd.f32 0.0, %v7759
      %v7761 = vpop.f32.mrb[0].mxu0
      %7762 = vmatprep.mubr.bf16.mxu0 0
      %7763 = vmatmul.mubr.bf16.gmra.mrb[0].mxu0 %v7609
      %v7764 = vpop.f32.mrb[0].mxu0
      %v7765 = vadd.f32 0.0, %v7764
      %v7766 = vpop.f32.mrb[0].mxu0
      %v7767 = vpop.f32.mrb[0].mxu0
      %v7768 = vadd.f32 0.0, %v7767
      %v7769 = vpop.f32.mrb[0].mxu0
      %7770 = vmatprep.mubr.bf16.mxu0 0
      %7771 = vmatmul.mubr.bf16.gmra.mrb[0].mxu0 %v7612
      %v7772 = vpop.f32.mrb[0].mxu0
      %v7773 = vadd.f32 0.0, %v7772
      %v7774 = vpop.f32.mrb[0].mxu0
      %v7775 = vpop.f32.mrb[0].mxu0
      %v7776 = vadd.f32 0.0, %v7775
      %v7777 = vpop.f32.mrb[0].mxu0
      %7778 = vmatprep.mubr.bf16.mxu0 0
      %7779 = vmatmul.mubr.bf16.gmra.mrb[0].mxu0 %v7615
      %v7780 = vpop.f32.mrb[0].mxu0
      %v7781 = vadd.f32 0.0, %v7780
      %v7782 = vpop.f32.mrb[0].mxu0
      %v7783 = vpop.f32.mrb[0].mxu0
      %v7784 = vadd.f32 0.0, %v7783
      %v7785 = vpop.f32.mrb[0].mxu0
      %7786 = vmatprep.mubr.bf16.mxu0 0
      %7787 = vmatmul.mubr.bf16.gmra.mrb[0].mxu0 %v7618
      %v7788 = vpop.f32.mrb[0].mxu0
      %v7789 = vadd.f32 0.0, %v7788
      %v7790 = vpop.f32.mrb[0].mxu0
      %v7791 = vpop.f32.mrb[0].mxu0
      %v7792 = vadd.f32 0.0, %v7791
      %v7793 = vpop.f32.mrb[0].mxu0
      %7794 = vmatprep.mubr.bf16.mxu0 0
      %7795 = vmatmul.mubr.bf16.gmra.mrb[0].mxu0 %v7621
      %v7796 = vpop.f32.mrb[0].mxu0
      %v7797 = vadd.f32 0.0, %v7796
      %v7798 = vpop.f32.mrb[0].mxu0
      %v7799 = vpop.f32.mrb[0].mxu0
      %v7800 = vadd.f32 0.0, %v7799
      %v7801 = vpop.f32.mrb[0].mxu0
      %7802 = vdwg.mxu0
      %v7803 = vadd.f32 %v7477, %v7661
      %v7804 = vadd.f32 %v7478, %v7664
      %v7805 = vadd.f32 %v7479, %v7669
      %v7806 = vadd.f32 %v7480, %v7672
      %v7807 = vadd.f32 %v7481, %v7677
      %v7808 = vadd.f32 %v7482, %v7680
      %v7809 = vadd.f32 %v7483, %v7685
      %v7810 = vadd.f32 %v7484, %v7688
      %v7811 = vadd.f32 %v7485, %v7693
      %v7812 = vadd.f32 %v7486, %v7696
      %v7813 = vadd.f32 %v7487, %v7701
      %v7814 = vadd.f32 %v7488, %v7704
      %v7815 = vadd.f32 %v7489, %v7709
      %v7816 = vadd.f32 %v7490, %v7712
      %v7817 = vadd.f32 %v7491, %v7717
      %v7818 = vadd.f32 %v7492, %v7720
      %v7819 = vadd.f32 %v7493, %v7725
      %v7820 = vadd.f32 %v7494, %v7728
      %v7821 = vadd.f32 %v7495, %v7733
      %v7822 = vadd.f32 %v7496, %v7736
      %v7823 = vadd.f32 %v7497, %v7741
      %v7824 = vadd.f32 %v7498, %v7744
      %v7825 = vadd.f32 %v7499, %v7749
      %v7826 = vadd.f32 %v7500, %v7752
      %v7827 = vadd.f32 %v7501, %v7757
      %v7828 = vadd.f32 %v7502, %v7760
      %v7829 = vadd.f32 %v7503, %v7765
      %v7830 = vadd.f32 %v7504, %v7768
      %v7831 = vadd.f32 %v7505, %v7773
      %v7832 = vadd.f32 %v7506, %v7776
      %v7833 = vadd.f32 %v7507, %v7781
      %v7834 = vadd.f32 %v7508, %v7784
      %v7835 = vadd.f32 %v7509, %v7789
      %v7836 = vadd.f32 %v7510, %v7792
      %v7837 = vadd.f32 %v7511, %v7797
      %v7838 = vadd.f32 %v7512, %v7800
      %v7839 = vld [vmem:[#allocation2 + $0x13] sm:$0xff]
      %v7840 = vld [vmem:[#allocation2 + $0x1b] sm:$0xff]
      %v7841 = vld [vmem:[#allocation2 + $0x23] sm:$0xff]
      %v7842 = vld [vmem:[#allocation2 + $0x2b] sm:$0xff]
      %v7843 = vld [vmem:[#allocation2 + $0x33] sm:$0xff]
      %v7844 = vld [vmem:[#allocation2 + $0x3b] sm:$0xff]
      %v7845 = vld [vmem:[#allocation2 + $0x43] sm:$0xff]
      %v7846 = vld [vmem:[#allocation2 + $0x4b] sm:$0xff]
      %v7847 = vld [vmem:[#allocation2 + $0x53] sm:$0xff]
      %v7848 = vld [vmem:[#allocation2 + $0x5b] sm:$0xff]
      %v7849 = vld [vmem:[#allocation2 + $0x63] sm:$0xff]
      %v7850 = vld [vmem:[#allocation2 + $0x6b] sm:$0xff]
      %v7851 = vld [vmem:[#allocation2 + $0x73] sm:$0xff]
      %v7852 = vld [vmem:[#allocation2 + $0x7b] sm:$0xff]
      %v7853 = vld [vmem:[#allocation2 + $0x83] sm:$0xff]
      %v7854 = vld [vmem:[#allocation2 + $0x8b] sm:$0xff]
      %v7855 = vld [vmem:[#allocation2 + $0x93] sm:$0xff]
      %v7856 = vld [vmem:[#allocation2 + $0x9b] sm:$0xff]
      %v7857 = vld [vmem:[#allocation2 + $0xa3] sm:$0xff]
      %v7858 = vld [vmem:[#allocation2 + $0xab] sm:$0xff]
      %v7859 = vld [vmem:[#allocation2 + $0xb3] sm:$0xff]
      %v7860 = vld [vmem:[#allocation2 + $0xbb] sm:$0xff]
      %v7861 = vld [vmem:[#allocation2 + $0xc3] sm:$0xff]
      %v7862 = vld [vmem:[#allocation2 + $0xcb] sm:$0xff]
      %v7863 = vld [vmem:[#allocation2 + $0xd3] sm:$0xff]
      %v7864 = vld [vmem:[#allocation2 + $0xdb] sm:$0xff]
      %v7865 = vld [vmem:[#allocation2 + $0xe3] sm:$0xff]
      %v7866 = vld [vmem:[#allocation2 + $0xeb] sm:$0xff]
      %v7867 = vld [vmem:[#allocation2 + $0xf3] sm:$0xff]
      %v7868 = vld [vmem:[#allocation2 + $0xfb] sm:$0xff]
      %v7869 = vld [vmem:[#allocation2 + $0x103] sm:$0xff]
      %v7870 = vld [vmem:[#allocation2 + $0x10b] sm:$0xff]
      %v7871 = vld [vmem:[#allocation2 + $0x113] sm:$0xff]
      %v7872 = vld [vmem:[#allocation2 + $0x11b] sm:$0xff]
      %v7873 = vld [vmem:[#allocation2 + $0x123] sm:$0xff]
      %v7874 = vld [vmem:[#allocation2 + $0x12b] sm:$0xff]
      %v7875 = vpack.c.bf16 %v7840, %v7839
      %v7876 = vpack.c.bf16 %v7842, %v7841
      %v7877 = vpack.c.bf16 %v7844, %v7843
      %v7878 = vpack.c.bf16 %v7846, %v7845
      %v7879 = vpack.c.bf16 %v7848, %v7847
      %v7880 = vpack.c.bf16 %v7850, %v7849
      %v7881 = vpack.c.bf16 %v7852, %v7851
      %v7882 = vpack.c.bf16 %v7854, %v7853
      %v7883 = vpack.c.bf16 %v7856, %v7855
      %v7884 = vpack.c.bf16 %v7858, %v7857
      %v7885 = vpack.c.bf16 %v7860, %v7859
      %v7886 = vpack.c.bf16 %v7862, %v7861
      %v7887 = vpack.c.bf16 %v7864, %v7863
      %v7888 = vpack.c.bf16 %v7866, %v7865
      %v7889 = vpack.c.bf16 %v7868, %v7867
      %v7890 = vpack.c.bf16 %v7870, %v7869
      %v7891 = vpack.c.bf16 %v7872, %v7871
      %v7892 = vpack.c.bf16 %v7874, %v7873
      %s7893 = scalar_lea.vmem %s6, 16
      %v7894 = vld [vmem:[%s7893] sm:$0xf]
      %v7896 = vsel %vm6526, %v7875, 0
      %v7899 = vsel %vm6526, %v7876, 0
      %v7902 = vsel %vm6526, %v7877, 0
      %v7905 = vsel %vm6526, %v7878, 0
      %v7908 = vsel %vm6526, %v7879, 0
      %v7911 = vsel %vm6526, %v7880, 0
      %v7914 = vsel %vm6526, %v7881, 0
      %v7917 = vsel %vm6526, %v7882, 0
      %v7920 = vsel %vm6526, %v7883, 0
      %v7923 = vsel %vm6526, %v7884, 0
      %v7926 = vsel %vm6526, %v7885, 0
      %v7929 = vsel %vm6526, %v7886, 0
      %v7932 = vsel %vm6526, %v7887, 0
      %v7935 = vsel %vm6526, %v7888, 0
      %v7938 = vsel %vm6526, %v7889, 0
      %v7941 = vsel %vm6526, %v7890, 0
      %v7944 = vsel %vm6526, %v7891, 0
      %v7947 = vsel %vm6526, %v7892, 0
      %v7950 = vsel %vm6772, %v7894, 0
      %7952 = vmatprep.subr.bf16.mxu0 0
      %7953 = vmatpush1.bf16.msra.mxu0 %v7950
      %7954 = vmatprep.subr.bf16.mxu0 0
      %7955 = vmatpush1.bf16.msra.mxu0 0
      %7956 = vmatprep.subr.bf16.mxu0 0
      %7957 = vmatpush1.bf16.msra.mxu0 0
      %7958 = vmatprep.subr.bf16.mxu0 0
      %7959 = vmatpush1.bf16.msra.mxu0 0
      %7960 = vmatprep.subr.bf16.mxu0 0
      %7961 = vmatpush1.bf16.msra.mxu0 0
      %7962 = vmatprep.subr.bf16.mxu0 0
      %7963 = vmatpush1.bf16.msra.mxu0 0
      %7964 = vmatprep.subr.bf16.mxu0 0
      %7965 = vmatpush1.bf16.msra.mxu0 0
      %7966 = vmatprep.subr.bf16.mxu0 0
      %7967 = vmatpush1.bf16.msra.mxu0 0
      %7968 = vmatprep.subr.bf16.mxu0 0
      %7969 = vmatpush1.bf16.msra.mxu0 0
      %7970 = vmatprep.subr.bf16.mxu0 0
      %7971 = vmatpush1.bf16.msra.mxu0 0
      %7972 = vmatprep.subr.bf16.mxu0 0
      %7973 = vmatpush1.bf16.msra.mxu0 0
      %7974 = vmatprep.subr.bf16.mxu0 0
      %7975 = vmatpush1.bf16.msra.mxu0 0
      %7976 = vmatprep.subr.bf16.mxu0 0
      %7977 = vmatpush1.bf16.msra.mxu0 0
      %7978 = vmatprep.subr.bf16.mxu0 0
      %7979 = vmatpush1.bf16.msra.mxu0 0
      %7980 = vmatprep.subr.bf16.mxu0 0
      %7981 = vmatpush1.bf16.msra.mxu0 0
      %7982 = vmatprep.subr.bf16.mxu0 0
      %7983 = vmatpush1.bf16.msra.mxu0 0
      %7984 = vmatprep.mubr.bf16.mxu0 0
      %7985 = vmatmul.mubr.bf16.gmra.mrb[0].mxu0 %v7896
      %v7986 = vpop.f32.mrb[0].mxu0
      %v7987 = vadd.f32 0.0, %v7986
      %v7988 = vpop.f32.mrb[0].mxu0
      %v7989 = vpop.f32.mrb[0].mxu0
      %v7990 = vadd.f32 0.0, %v7989
      %v7991 = vpop.f32.mrb[0].mxu0
      %7992 = vmatprep.mubr.bf16.mxu0 0
      %7993 = vmatmul.mubr.bf16.gmra.mrb[0].mxu0 %v7899
      %v7994 = vpop.f32.mrb[0].mxu0
      %v7995 = vadd.f32 0.0, %v7994
      %v7996 = vpop.f32.mrb[0].mxu0
      %v7997 = vpop.f32.mrb[0].mxu0
      %v7998 = vadd.f32 0.0, %v7997
      %v7999 = vpop.f32.mrb[0].mxu0
      %8000 = vmatprep.mubr.bf16.mxu0 0
      %8001 = vmatmul.mubr.bf16.gmra.mrb[0].mxu0 %v7902
      %v8002 = vpop.f32.mrb[0].mxu0
      %v8003 = vadd.f32 0.0, %v8002
      %v8004 = vpop.f32.mrb[0].mxu0
      %v8005 = vpop.f32.mrb[0].mxu0
      %v8006 = vadd.f32 0.0, %v8005
      %v8007 = vpop.f32.mrb[0].mxu0
      %8008 = vmatprep.mubr.bf16.mxu0 0
      %8009 = vmatmul.mubr.bf16.gmra.mrb[0].mxu0 %v7905
      %v8010 = vpop.f32.mrb[0].mxu0
      %v8011 = vadd.f32 0.0, %v8010
      %v8012 = vpop.f32.mrb[0].mxu0
      %v8013 = vpop.f32.mrb[0].mxu0
      %v8014 = vadd.f32 0.0, %v8013
      %v8015 = vpop.f32.mrb[0].mxu0
      %8016 = vmatprep.mubr.bf16.mxu0 0
      %8017 = vmatmul.mubr.bf16.gmra.mrb[0].mxu0 %v7908
      %v8018 = vpop.f32.mrb[0].mxu0
      %v8019 = vadd.f32 0.0, %v8018
      %v8020 = vpop.f32.mrb[0].mxu0
      %v8021 = vpop.f32.mrb[0].mxu0
      %v8022 = vadd.f32 0.0, %v8021
      %v8023 = vpop.f32.mrb[0].mxu0
      %8024 = vmatprep.mubr.bf16.mxu0 0
      %8025 = vmatmul.mubr.bf16.gmra.mrb[0].mxu0 %v7911
      %v8026 = vpop.f32.mrb[0].mxu0
      %v8027 = vadd.f32 0.0, %v8026
      %v8028 = vpop.f32.mrb[0].mxu0
      %v8029 = vpop.f32.mrb[0].mxu0
      %v8030 = vadd.f32 0.0, %v8029
      %v8031 = vpop.f32.mrb[0].mxu0
      %8032 = vmatprep.mubr.bf16.mxu0 0
      %8033 = vmatmul.mubr.bf16.gmra.mrb[0].mxu0 %v7914
      %v8034 = vpop.f32.mrb[0].mxu0
      %v8035 = vadd.f32 0.0, %v8034
      %v8036 = vpop.f32.mrb[0].mxu0
      %v8037 = vpop.f32.mrb[0].mxu0
      %v8038 = vadd.f32 0.0, %v8037
      %v8039 = vpop.f32.mrb[0].mxu0
      %8040 = vmatprep.mubr.bf16.mxu0 0
      %8041 = vmatmul.mubr.bf16.gmra.mrb[0].mxu0 %v7917
      %v8042 = vpop.f32.mrb[0].mxu0
      %v8043 = vadd.f32 0.0, %v8042
      %v8044 = vpop.f32.mrb[0].mxu0
      %v8045 = vpop.f32.mrb[0].mxu0
      %v8046 = vadd.f32 0.0, %v8045
      %v8047 = vpop.f32.mrb[0].mxu0
      %8048 = vmatprep.mubr.bf16.mxu0 0
      %8049 = vmatmul.mubr.bf16.gmra.mrb[0].mxu0 %v7920
      %v8050 = vpop.f32.mrb[0].mxu0
      %v8051 = vadd.f32 0.0, %v8050
      %v8052 = vpop.f32.mrb[0].mxu0
      %v8053 = vpop.f32.mrb[0].mxu0
      %v8054 = vadd.f32 0.0, %v8053
      %v8055 = vpop.f32.mrb[0].mxu0
      %8056 = vmatprep.mubr.bf16.mxu0 0
      %8057 = vmatmul.mubr.bf16.gmra.mrb[0].mxu0 %v7923
      %v8058 = vpop.f32.mrb[0].mxu0
      %v8059 = vadd.f32 0.0, %v8058
      %v8060 = vpop.f32.mrb[0].mxu0
      %v8061 = vpop.f32.mrb[0].mxu0
      %v8062 = vadd.f32 0.0, %v8061
      %v8063 = vpop.f32.mrb[0].mxu0
      %8064 = vmatprep.mubr.bf16.mxu0 0
      %8065 = vmatmul.mubr.bf16.gmra.mrb[0].mxu0 %v7926
      %v8066 = vpop.f32.mrb[0].mxu0
      %v8067 = vadd.f32 0.0, %v8066
      %v8068 = vpop.f32.mrb[0].mxu0
      %v8069 = vpop.f32.mrb[0].mxu0
      %v8070 = vadd.f32 0.0, %v8069
      %v8071 = vpop.f32.mrb[0].mxu0
      %8072 = vmatprep.mubr.bf16.mxu0 0
      %8073 = vmatmul.mubr.bf16.gmra.mrb[0].mxu0 %v7929
      %v8074 = vpop.f32.mrb[0].mxu0
      %v8075 = vadd.f32 0.0, %v8074
      %v8076 = vpop.f32.mrb[0].mxu0
      %v8077 = vpop.f32.mrb[0].mxu0
      %v8078 = vadd.f32 0.0, %v8077
      %v8079 = vpop.f32.mrb[0].mxu0
      %8080 = vmatprep.mubr.bf16.mxu0 0
      %8081 = vmatmul.mubr.bf16.gmra.mrb[0].mxu0 %v7932
      %v8082 = vpop.f32.mrb[0].mxu0
      %v8083 = vadd.f32 0.0, %v8082
      %v8084 = vpop.f32.mrb[0].mxu0
      %v8085 = vpop.f32.mrb[0].mxu0
      %v8086 = vadd.f32 0.0, %v8085
      %v8087 = vpop.f32.mrb[0].mxu0
      %8088 = vmatprep.mubr.bf16.mxu0 0
      %8089 = vmatmul.mubr.bf16.gmra.mrb[0].mxu0 %v7935
      %v8090 = vpop.f32.mrb[0].mxu0
      %v8091 = vadd.f32 0.0, %v8090
      %v8092 = vpop.f32.mrb[0].mxu0
      %v8093 = vpop.f32.mrb[0].mxu0
      %v8094 = vadd.f32 0.0, %v8093
      %v8095 = vpop.f32.mrb[0].mxu0
      %8096 = vmatprep.mubr.bf16.mxu0 0
      %8097 = vmatmul.mubr.bf16.gmra.mrb[0].mxu0 %v7938
      %v8098 = vpop.f32.mrb[0].mxu0
      %v8099 = vadd.f32 0.0, %v8098
      %v8100 = vpop.f32.mrb[0].mxu0
      %v8101 = vpop.f32.mrb[0].mxu0
      %v8102 = vadd.f32 0.0, %v8101
      %v8103 = vpop.f32.mrb[0].mxu0
      %8104 = vmatprep.mubr.bf16.mxu0 0
      %8105 = vmatmul.mubr.bf16.gmra.mrb[0].mxu0 %v7941
      %v8106 = vpop.f32.mrb[0].mxu0
      %v8107 = vadd.f32 0.0, %v8106
      %v8108 = vpop.f32.mrb[0].mxu0
      %v8109 = vpop.f32.mrb[0].mxu0
      %v8110 = vadd.f32 0.0, %v8109
      %v8111 = vpop.f32.mrb[0].mxu0
      %8112 = vmatprep.mubr.bf16.mxu0 0
      %8113 = vmatmul.mubr.bf16.gmra.mrb[0].mxu0 %v7944
      %v8114 = vpop.f32.mrb[0].mxu0
      %v8115 = vadd.f32 0.0, %v8114
      %v8116 = vpop.f32.mrb[0].mxu0
      %v8117 = vpop.f32.mrb[0].mxu0
      %v8118 = vadd.f32 0.0, %v8117
      %v8119 = vpop.f32.mrb[0].mxu0
      %8120 = vmatprep.mubr.bf16.mxu0 0
      %8121 = vmatmul.mubr.bf16.gmra.mrb[0].mxu0 %v7947
      %v8122 = vpop.f32.mrb[0].mxu0
      %v8123 = vadd.f32 0.0, %v8122
      %v8124 = vpop.f32.mrb[0].mxu0
      %v8125 = vpop.f32.mrb[0].mxu0
      %v8126 = vadd.f32 0.0, %v8125
      %v8127 = vpop.f32.mrb[0].mxu0
      %8128 = vdwg.mxu0
      %v8129 = vadd.f32 %v7803, %v7987
      %v8130 = vadd.f32 %v7804, %v7990
      %v8131 = vadd.f32 %v7805, %v7995
      %v8132 = vadd.f32 %v7806, %v7998
      %v8133 = vadd.f32 %v7807, %v8003
      %v8134 = vadd.f32 %v7808, %v8006
      %v8135 = vadd.f32 %v7809, %v8011
      %v8136 = vadd.f32 %v7810, %v8014
      %v8137 = vadd.f32 %v7811, %v8019
      %v8138 = vadd.f32 %v7812, %v8022
      %v8139 = vadd.f32 %v7813, %v8027
      %v8140 = vadd.f32 %v7814, %v8030
      %v8141 = vadd.f32 %v7815, %v8035
      %v8142 = vadd.f32 %v7816, %v8038
      %v8143 = vadd.f32 %v7817, %v8043
      %v8144 = vadd.f32 %v7818, %v8046
      %v8145 = vadd.f32 %v7819, %v8051
      %v8146 = vadd.f32 %v7820, %v8054
      %v8147 = vadd.f32 %v7821, %v8059
      %v8148 = vadd.f32 %v7822, %v8062
      %v8149 = vadd.f32 %v7823, %v8067
      %v8150 = vadd.f32 %v7824, %v8070
      %v8151 = vadd.f32 %v7825, %v8075
      %v8152 = vadd.f32 %v7826, %v8078
      %v8153 = vadd.f32 %v7827, %v8083
      %v8154 = vadd.f32 %v7828, %v8086
      %v8155 = vadd.f32 %v7829, %v8091
      %v8156 = vadd.f32 %v7830, %v8094
      %v8157 = vadd.f32 %v7831, %v8099
      %v8158 = vadd.f32 %v7832, %v8102
      %v8159 = vadd.f32 %v7833, %v8107
      %v8160 = vadd.f32 %v7834, %v8110
      %v8161 = vadd.f32 %v7835, %v8115
      %v8162 = vadd.f32 %v7836, %v8118
      %v8163 = vadd.f32 %v7837, %v8123
      %v8164 = vadd.f32 %v7838, %v8126
      %v8165 = vld [vmem:[#allocation2 + $0x14] sm:$0xff]
      %v8166 = vld [vmem:[#allocation2 + $0x1c] sm:$0xff]
      %v8167 = vld [vmem:[#allocation2 + $0x24] sm:$0xff]
      %v8168 = vld [vmem:[#allocation2 + $0x2c] sm:$0xff]
      %v8169 = vld [vmem:[#allocation2 + $0x34] sm:$0xff]
      %v8170 = vld [vmem:[#allocation2 + $0x3c] sm:$0xff]
      %v8171 = vld [vmem:[#allocation2 + $0x44] sm:$0xff]
      %v8172 = vld [vmem:[#allocation2 + $0x4c] sm:$0xff]
      %v8173 = vld [vmem:[#allocation2 + $0x54] sm:$0xff]
      %v8174 = vld [vmem:[#allocation2 + $0x5c] sm:$0xff]
      %v8175 = vld [vmem:[#allocation2 + $0x64] sm:$0xff]
      %v8176 = vld [vmem:[#allocation2 + $0x6c] sm:$0xff]
      %v8177 = vld [vmem:[#allocation2 + $0x74] sm:$0xff]
      %v8178 = vld [vmem:[#allocation2 + $0x7c] sm:$0xff]
      %v8179 = vld [vmem:[#allocation2 + $0x84] sm:$0xff]
      %v8180 = vld [vmem:[#allocation2 + $0x8c] sm:$0xff]
      %v8181 = vld [vmem:[#allocation2 + $0x94] sm:$0xff]
      %v8182 = vld [vmem:[#allocation2 + $0x9c] sm:$0xff]
      %v8183 = vld [vmem:[#allocation2 + $0xa4] sm:$0xff]
      %v8184 = vld [vmem:[#allocation2 + $0xac] sm:$0xff]
      %v8185 = vld [vmem:[#allocation2 + $0xb4] sm:$0xff]
      %v8186 = vld [vmem:[#allocation2 + $0xbc] sm:$0xff]
      %v8187 = vld [vmem:[#allocation2 + $0xc4] sm:$0xff]
      %v8188 = vld [vmem:[#allocation2 + $0xcc] sm:$0xff]
      %v8189 = vld [vmem:[#allocation2 + $0xd4] sm:$0xff]
      %v8190 = vld [vmem:[#allocation2 + $0xdc] sm:$0xff]
      %v8191 = vld [vmem:[#allocation2 + $0xe4] sm:$0xff]
      %v8192 = vld [vmem:[#allocation2 + $0xec] sm:$0xff]
      %v8193 = vld [vmem:[#allocation2 + $0xf4] sm:$0xff]
      %v8194 = vld [vmem:[#allocation2 + $0xfc] sm:$0xff]
      %v8195 = vld [vmem:[#allocation2 + $0x104] sm:$0xff]
      %v8196 = vld [vmem:[#allocation2 + $0x10c] sm:$0xff]
      %v8197 = vld [vmem:[#allocation2 + $0x114] sm:$0xff]
      %v8198 = vld [vmem:[#allocation2 + $0x11c] sm:$0xff]
      %v8199 = vld [vmem:[#allocation2 + $0x124] sm:$0xff]
      %v8200 = vld [vmem:[#allocation2 + $0x12c] sm:$0xff]
      %v8201 = vpack.c.bf16 %v8166, %v8165
      %v8202 = vpack.c.bf16 %v8168, %v8167
      %v8203 = vpack.c.bf16 %v8170, %v8169
      %v8204 = vpack.c.bf16 %v8172, %v8171
      %v8205 = vpack.c.bf16 %v8174, %v8173
      %v8206 = vpack.c.bf16 %v8176, %v8175
      %v8207 = vpack.c.bf16 %v8178, %v8177
      %v8208 = vpack.c.bf16 %v8180, %v8179
      %v8209 = vpack.c.bf16 %v8182, %v8181
      %v8210 = vpack.c.bf16 %v8184, %v8183
      %v8211 = vpack.c.bf16 %v8186, %v8185
      %v8212 = vpack.c.bf16 %v8188, %v8187
      %v8213 = vpack.c.bf16 %v8190, %v8189
      %v8214 = vpack.c.bf16 %v8192, %v8191
      %v8215 = vpack.c.bf16 %v8194, %v8193
      %v8216 = vpack.c.bf16 %v8196, %v8195
      %v8217 = vpack.c.bf16 %v8198, %v8197
      %v8218 = vpack.c.bf16 %v8200, %v8199
      %s8219 = scalar_lea.vmem %s6, 20
      %v8220 = vld [vmem:[%s8219] sm:$0xf]
      %v8222 = vsel %vm6526, %v8201, 0
      %v8225 = vsel %vm6526, %v8202, 0
      %v8228 = vsel %vm6526, %v8203, 0
      %v8231 = vsel %vm6526, %v8204, 0
      %v8234 = vsel %vm6526, %v8205, 0
      %v8237 = vsel %vm6526, %v8206, 0
      %v8240 = vsel %vm6526, %v8207, 0
      %v8243 = vsel %vm6526, %v8208, 0
      %v8246 = vsel %vm6526, %v8209, 0
      %v8249 = vsel %vm6526, %v8210, 0
      %v8252 = vsel %vm6526, %v8211, 0
      %v8255 = vsel %vm6526, %v8212, 0
      %v8258 = vsel %vm6526, %v8213, 0
      %v8261 = vsel %vm6526, %v8214, 0
      %v8264 = vsel %vm6526, %v8215, 0
      %v8267 = vsel %vm6526, %v8216, 0
      %v8270 = vsel %vm6526, %v8217, 0
      %v8273 = vsel %vm6526, %v8218, 0
      %v8276 = vsel %vm6772, %v8220, 0
      %8278 = vmatprep.subr.bf16.mxu0 0
      %8279 = vmatpush1.bf16.msra.mxu0 %v8276
      %8280 = vmatprep.subr.bf16.mxu0 0
      %8281 = vmatpush1.bf16.msra.mxu0 0
      %8282 = vmatprep.subr.bf16.mxu0 0
      %8283 = vmatpush1.bf16.msra.mxu0 0
      %8284 = vmatprep.subr.bf16.mxu0 0
      %8285 = vmatpush1.bf16.msra.mxu0 0
      %8286 = vmatprep.subr.bf16.mxu0 0
      %8287 = vmatpush1.bf16.msra.mxu0 0
      %8288 = vmatprep.subr.bf16.mxu0 0
      %8289 = vmatpush1.bf16.msra.mxu0 0
      %8290 = vmatprep.subr.bf16.mxu0 0
      %8291 = vmatpush1.bf16.msra.mxu0 0
      %8292 = vmatprep.subr.bf16.mxu0 0
      %8293 = vmatpush1.bf16.msra.mxu0 0
      %8294 = vmatprep.subr.bf16.mxu0 0
      %8295 = vmatpush1.bf16.msra.mxu0 0
      %8296 = vmatprep.subr.bf16.mxu0 0
      %8297 = vmatpush1.bf16.msra.mxu0 0
      %8298 = vmatprep.subr.bf16.mxu0 0
      %8299 = vmatpush1.bf16.msra.mxu0 0
      %8300 = vmatprep.subr.bf16.mxu0 0
      %8301 = vmatpush1.bf16.msra.mxu0 0
      %8302 = vmatprep.subr.bf16.mxu0 0
      %8303 = vmatpush1.bf16.msra.mxu0 0
      %8304 = vmatprep.subr.bf16.mxu0 0
      %8305 = vmatpush1.bf16.msra.mxu0 0
      %8306 = vmatprep.subr.bf16.mxu0 0
      %8307 = vmatpush1.bf16.msra.mxu0 0
      %8308 = vmatprep.subr.bf16.mxu0 0
      %8309 = vmatpush1.bf16.msra.mxu0 0
      %8310 = vmatprep.mubr.bf16.mxu0 0
      %8311 = vmatmul.mubr.bf16.gmra.mrb[0].mxu0 %v8222
      %v8312 = vpop.f32.mrb[0].mxu0
      %v8313 = vadd.f32 0.0, %v8312
      %v8314 = vpop.f32.mrb[0].mxu0
      %v8315 = vpop.f32.mrb[0].mxu0
      %v8316 = vadd.f32 0.0, %v8315
      %v8317 = vpop.f32.mrb[0].mxu0
      %8318 = vmatprep.mubr.bf16.mxu0 0
      %8319 = vmatmul.mubr.bf16.gmra.mrb[0].mxu0 %v8225
      %v8320 = vpop.f32.mrb[0].mxu0
      %v8321 = vadd.f32 0.0, %v8320
      %v8322 = vpop.f32.mrb[0].mxu0
      %v8323 = vpop.f32.mrb[0].mxu0
      %v8324 = vadd.f32 0.0, %v8323
      %v8325 = vpop.f32.mrb[0].mxu0
      %8326 = vmatprep.mubr.bf16.mxu0 0
      %8327 = vmatmul.mubr.bf16.gmra.mrb[0].mxu0 %v8228
      %v8328 = vpop.f32.mrb[0].mxu0
      %v8329 = vadd.f32 0.0, %v8328
      %v8330 = vpop.f32.mrb[0].mxu0
      %v8331 = vpop.f32.mrb[0].mxu0
      %v8332 = vadd.f32 0.0, %v8331
      %v8333 = vpop.f32.mrb[0].mxu0
      %8334 = vmatprep.mubr.bf16.mxu0 0
      %8335 = vmatmul.mubr.bf16.gmra.mrb[0].mxu0 %v8231
      %v8336 = vpop.f32.mrb[0].mxu0
      %v8337 = vadd.f32 0.0, %v8336
      %v8338 = vpop.f32.mrb[0].mxu0
      %v8339 = vpop.f32.mrb[0].mxu0
      %v8340 = vadd.f32 0.0, %v8339
      %v8341 = vpop.f32.mrb[0].mxu0
      %8342 = vmatprep.mubr.bf16.mxu0 0
      %8343 = vmatmul.mubr.bf16.gmra.mrb[0].mxu0 %v8234
      %v8344 = vpop.f32.mrb[0].mxu0
      %v8345 = vadd.f32 0.0, %v8344
      %v8346 = vpop.f32.mrb[0].mxu0
      %v8347 = vpop.f32.mrb[0].mxu0
      %v8348 = vadd.f32 0.0, %v8347
      %v8349 = vpop.f32.mrb[0].mxu0
      %8350 = vmatprep.mubr.bf16.mxu0 0
      %8351 = vmatmul.mubr.bf16.gmra.mrb[0].mxu0 %v8237
      %v8352 = vpop.f32.mrb[0].mxu0
      %v8353 = vadd.f32 0.0, %v8352
      %v8354 = vpop.f32.mrb[0].mxu0
      %v8355 = vpop.f32.mrb[0].mxu0
      %v8356 = vadd.f32 0.0, %v8355
      %v8357 = vpop.f32.mrb[0].mxu0
      %8358 = vmatprep.mubr.bf16.mxu0 0
      %8359 = vmatmul.mubr.bf16.gmra.mrb[0].mxu0 %v8240
      %v8360 = vpop.f32.mrb[0].mxu0
      %v8361 = vadd.f32 0.0, %v8360
      %v8362 = vpop.f32.mrb[0].mxu0
      %v8363 = vpop.f32.mrb[0].mxu0
      %v8364 = vadd.f32 0.0, %v8363
      %v8365 = vpop.f32.mrb[0].mxu0
      %8366 = vmatprep.mubr.bf16.mxu0 0
      %8367 = vmatmul.mubr.bf16.gmra.mrb[0].mxu0 %v8243
      %v8368 = vpop.f32.mrb[0].mxu0
      %v8369 = vadd.f32 0.0, %v8368
      %v8370 = vpop.f32.mrb[0].mxu0
      %v8371 = vpop.f32.mrb[0].mxu0
      %v8372 = vadd.f32 0.0, %v8371
      %v8373 = vpop.f32.mrb[0].mxu0
      %8374 = vmatprep.mubr.bf16.mxu0 0
      %8375 = vmatmul.mubr.bf16.gmra.mrb[0].mxu0 %v8246
      %v8376 = vpop.f32.mrb[0].mxu0
      %v8377 = vadd.f32 0.0, %v8376
      %v8378 = vpop.f32.mrb[0].mxu0
      %v8379 = vpop.f32.mrb[0].mxu0
      %v8380 = vadd.f32 0.0, %v8379
      %v8381 = vpop.f32.mrb[0].mxu0
      %8382 = vmatprep.mubr.bf16.mxu0 0
      %8383 = vmatmul.mubr.bf16.gmra.mrb[0].mxu0 %v8249
      %v8384 = vpop.f32.mrb[0].mxu0
      %v8385 = vadd.f32 0.0, %v8384
      %v8386 = vpop.f32.mrb[0].mxu0
      %v8387 = vpop.f32.mrb[0].mxu0
      %v8388 = vadd.f32 0.0, %v8387
      %v8389 = vpop.f32.mrb[0].mxu0
      %8390 = vmatprep.mubr.bf16.mxu0 0
      %8391 = vmatmul.mubr.bf16.gmra.mrb[0].mxu0 %v8252
      %v8392 = vpop.f32.mrb[0].mxu0
      %v8393 = vadd.f32 0.0, %v8392
      %v8394 = vpop.f32.mrb[0].mxu0
      %v8395 = vpop.f32.mrb[0].mxu0
      %v8396 = vadd.f32 0.0, %v8395
      %v8397 = vpop.f32.mrb[0].mxu0
      %8398 = vmatprep.mubr.bf16.mxu0 0
      %8399 = vmatmul.mubr.bf16.gmra.mrb[0].mxu0 %v8255
      %v8400 = vpop.f32.mrb[0].mxu0
      %v8401 = vadd.f32 0.0, %v8400
      %v8402 = vpop.f32.mrb[0].mxu0
      %v8403 = vpop.f32.mrb[0].mxu0
      %v8404 = vadd.f32 0.0, %v8403
      %v8405 = vpop.f32.mrb[0].mxu0
      %8406 = vmatprep.mubr.bf16.mxu0 0
      %8407 = vmatmul.mubr.bf16.gmra.mrb[0].mxu0 %v8258
      %v8408 = vpop.f32.mrb[0].mxu0
      %v8409 = vadd.f32 0.0, %v8408
      %v8410 = vpop.f32.mrb[0].mxu0
      %v8411 = vpop.f32.mrb[0].mxu0
      %v8412 = vadd.f32 0.0, %v8411
      %v8413 = vpop.f32.mrb[0].mxu0
      %8414 = vmatprep.mubr.bf16.mxu0 0
      %8415 = vmatmul.mubr.bf16.gmra.mrb[0].mxu0 %v8261
      %v8416 = vpop.f32.mrb[0].mxu0
      %v8417 = vadd.f32 0.0, %v8416
      %v8418 = vpop.f32.mrb[0].mxu0
      %v8419 = vpop.f32.mrb[0].mxu0
      %v8420 = vadd.f32 0.0, %v8419
      %v8421 = vpop.f32.mrb[0].mxu0
      %8422 = vmatprep.mubr.bf16.mxu0 0
      %8423 = vmatmul.mubr.bf16.gmra.mrb[0].mxu0 %v8264
      %v8424 = vpop.f32.mrb[0].mxu0
      %v8425 = vadd.f32 0.0, %v8424
      %v8426 = vpop.f32.mrb[0].mxu0
      %v8427 = vpop.f32.mrb[0].mxu0
      %v8428 = vadd.f32 0.0, %v8427
      %v8429 = vpop.f32.mrb[0].mxu0
      %8430 = vmatprep.mubr.bf16.mxu0 0
      %8431 = vmatmul.mubr.bf16.gmra.mrb[0].mxu0 %v8267
      %v8432 = vpop.f32.mrb[0].mxu0
      %v8433 = vadd.f32 0.0, %v8432
      %v8434 = vpop.f32.mrb[0].mxu0
      %v8435 = vpop.f32.mrb[0].mxu0
      %v8436 = vadd.f32 0.0, %v8435
      %v8437 = vpop.f32.mrb[0].mxu0
      %8438 = vmatprep.mubr.bf16.mxu0 0
      %8439 = vmatmul.mubr.bf16.gmra.mrb[0].mxu0 %v8270
      %v8440 = vpop.f32.mrb[0].mxu0
      %v8441 = vadd.f32 0.0, %v8440
      %v8442 = vpop.f32.mrb[0].mxu0
      %v8443 = vpop.f32.mrb[0].mxu0
      %v8444 = vadd.f32 0.0, %v8443
      %v8445 = vpop.f32.mrb[0].mxu0
      %8446 = vmatprep.mubr.bf16.mxu0 0
      %8447 = vmatmul.mubr.bf16.gmra.mrb[0].mxu0 %v8273
      %v8448 = vpop.f32.mrb[0].mxu0
      %v8449 = vadd.f32 0.0, %v8448
      %v8450 = vpop.f32.mrb[0].mxu0
      %v8451 = vpop.f32.mrb[0].mxu0
      %v8452 = vadd.f32 0.0, %v8451
      %v8453 = vpop.f32.mrb[0].mxu0
      %8454 = vdwg.mxu0
      %v8455 = vadd.f32 %v8129, %v8313
      %v8456 = vadd.f32 %v8130, %v8316
      %v8457 = vadd.f32 %v8131, %v8321
      %v8458 = vadd.f32 %v8132, %v8324
      %v8459 = vadd.f32 %v8133, %v8329
      %v8460 = vadd.f32 %v8134, %v8332
      %v8461 = vadd.f32 %v8135, %v8337
      %v8462 = vadd.f32 %v8136, %v8340
      %v8463 = vadd.f32 %v8137, %v8345
      %v8464 = vadd.f32 %v8138, %v8348
      %v8465 = vadd.f32 %v8139, %v8353
      %v8466 = vadd.f32 %v8140, %v8356
      %v8467 = vadd.f32 %v8141, %v8361
      %v8468 = vadd.f32 %v8142, %v8364
      %v8469 = vadd.f32 %v8143, %v8369
      %v8470 = vadd.f32 %v8144, %v8372
      %v8471 = vadd.f32 %v8145, %v8377
      %v8472 = vadd.f32 %v8146, %v8380
      %v8473 = vadd.f32 %v8147, %v8385
      %v8474 = vadd.f32 %v8148, %v8388
      %v8475 = vadd.f32 %v8149, %v8393
      %v8476 = vadd.f32 %v8150, %v8396
      %v8477 = vadd.f32 %v8151, %v8401
      %v8478 = vadd.f32 %v8152, %v8404
      %v8479 = vadd.f32 %v8153, %v8409
      %v8480 = vadd.f32 %v8154, %v8412
      %v8481 = vadd.f32 %v8155, %v8417
      %v8482 = vadd.f32 %v8156, %v8420
      %v8483 = vadd.f32 %v8157, %v8425
      %v8484 = vadd.f32 %v8158, %v8428
      %v8485 = vadd.f32 %v8159, %v8433
      %v8486 = vadd.f32 %v8160, %v8436
      %v8487 = vadd.f32 %v8161, %v8441
      %v8488 = vadd.f32 %v8162, %v8444
      %v8489 = vadd.f32 %v8163, %v8449
      %v8490 = vadd.f32 %v8164, %v8452
      %v8491 = vld [vmem:[#allocation2 + $0x24] sm:$0xff]
      %v8492 = vld [vmem:[#allocation2 + $0x2c] sm:$0xff]
      %v8493 = vld [vmem:[#allocation2 + $0x34] sm:$0xff]
      %v8494 = vld [vmem:[#allocation2 + $0x3c] sm:$0xff]
      %v8495 = vld [vmem:[#allocation2 + $0x44] sm:$0xff]
      %v8496 = vld [vmem:[#allocation2 + $0x4c] sm:$0xff]
      %v8497 = vld [vmem:[#allocation2 + $0x54] sm:$0xff]
      %v8498 = vld [vmem:[#allocation2 + $0x5c] sm:$0xff]
      %v8499 = vld [vmem:[#allocation2 + $0x64] sm:$0xff]
      %v8500 = vld [vmem:[#allocation2 + $0x6c] sm:$0xff]
      %v8501 = vld [vmem:[#allocation2 + $0x74] sm:$0xff]
      %v8502 = vld [vmem:[#allocation2 + $0x7c] sm:$0xff]
      %v8503 = vld [vmem:[#allocation2 + $0x84] sm:$0xff]
      %v8504 = vld [vmem:[#allocation2 + $0x8c] sm:$0xff]
      %v8505 = vld [vmem:[#allocation2 + $0x94] sm:$0xff]
      %v8506 = vld [vmem:[#allocation2 + $0x9c] sm:$0xff]
      %v8507 = vld [vmem:[#allocation2 + $0xa4] sm:$0xff]
      %v8508 = vld [vmem:[#allocation2 + $0xac] sm:$0xff]
      %v8509 = vld [vmem:[#allocation2 + $0xb4] sm:$0xff]
      %v8510 = vld [vmem:[#allocation2 + $0xbc] sm:$0xff]
      %v8511 = vld [vmem:[#allocation2 + $0xc4] sm:$0xff]
      %v8512 = vld [vmem:[#allocation2 + $0xcc] sm:$0xff]
      %v8513 = vld [vmem:[#allocation2 + $0xd4] sm:$0xff]
      %v8514 = vld [vmem:[#allocation2 + $0xdc] sm:$0xff]
      %v8515 = vld [vmem:[#allocation2 + $0xe4] sm:$0xff]
      %v8516 = vld [vmem:[#allocation2 + $0xec] sm:$0xff]
      %v8517 = vld [vmem:[#allocation2 + $0xf4] sm:$0xff]
      %v8518 = vld [vmem:[#allocation2 + $0xfc] sm:$0xff]
      %v8519 = vld [vmem:[#allocation2 + $0x104] sm:$0xff]
      %v8520 = vld [vmem:[#allocation2 + $0x10c] sm:$0xff]
      %v8521 = vld [vmem:[#allocation2 + $0x114] sm:$0xff]
      %v8522 = vld [vmem:[#allocation2 + $0x11c] sm:$0xff]
      %v8523 = vld [vmem:[#allocation2 + $0x124] sm:$0xff]
      %v8524 = vld [vmem:[#allocation2 + $0x12c] sm:$0xff]
      %v8525 = vld [vmem:[#allocation2 + $0x134] sm:$0xff]
      %v8526 = vld [vmem:[#allocation2 + $0x13c] sm:$0xff]
      %v8527 = vpack.c.bf16 %v8492, %v8491
      %v8528 = vpack.c.bf16 %v8494, %v8493
      %v8529 = vpack.c.bf16 %v8496, %v8495
      %v8530 = vpack.c.bf16 %v8498, %v8497
      %v8531 = vpack.c.bf16 %v8500, %v8499
      %v8532 = vpack.c.bf16 %v8502, %v8501
      %v8533 = vpack.c.bf16 %v8504, %v8503
      %v8534 = vpack.c.bf16 %v8506, %v8505
      %v8535 = vpack.c.bf16 %v8508, %v8507
      %v8536 = vpack.c.bf16 %v8510, %v8509
      %v8537 = vpack.c.bf16 %v8512, %v8511
      %v8538 = vpack.c.bf16 %v8514, %v8513
      %v8539 = vpack.c.bf16 %v8516, %v8515
      %v8540 = vpack.c.bf16 %v8518, %v8517
      %v8541 = vpack.c.bf16 %v8520, %v8519
      %v8542 = vpack.c.bf16 %v8522, %v8521
      %v8543 = vpack.c.bf16 %v8524, %v8523
      %v8544 = vpack.c.bf16 %v8526, %v8525
      %s8545 = scalar_lea.vmem %s6, 24
      %v8546 = vld [vmem:[%s8545] sm:$0xf]
      %v8548 = vsel %vm6526, %v8527, 0
      %v8551 = vsel %vm6526, %v8528, 0
      %v8554 = vsel %vm6526, %v8529, 0
      %v8557 = vsel %vm6526, %v8530, 0
      %v8560 = vsel %vm6526, %v8531, 0
      %v8563 = vsel %vm6526, %v8532, 0
      %v8566 = vsel %vm6526, %v8533, 0
      %v8569 = vsel %vm6526, %v8534, 0
      %v8572 = vsel %vm6526, %v8535, 0
      %v8575 = vsel %vm6526, %v8536, 0
      %v8578 = vsel %vm6526, %v8537, 0
      %v8581 = vsel %vm6526, %v8538, 0
      %v8584 = vsel %vm6526, %v8539, 0
      %v8587 = vsel %vm6526, %v8540, 0
      %v8590 = vsel %vm6526, %v8541, 0
      %v8593 = vsel %vm6526, %v8542, 0
      %v8596 = vsel %vm6526, %v8543, 0
      %v8599 = vsel %vm6526, %v8544, 0
      %v8602 = vsel %vm6772, %v8546, 0
      %8604 = vmatprep.subr.bf16.mxu0 0
      %8605 = vmatpush1.bf16.msra.mxu0 %v8602
      %8606 = vmatprep.subr.bf16.mxu0 0
      %8607 = vmatpush1.bf16.msra.mxu0 0
      %8608 = vmatprep.subr.bf16.mxu0 0
      %8609 = vmatpush1.bf16.msra.mxu0 0
      %8610 = vmatprep.subr.bf16.mxu0 0
      %8611 = vmatpush1.bf16.msra.mxu0 0
      %8612 = vmatprep.subr.bf16.mxu0 0
      %8613 = vmatpush1.bf16.msra.mxu0 0
      %8614 = vmatprep.subr.bf16.mxu0 0
      %8615 = vmatpush1.bf16.msra.mxu0 0
      %8616 = vmatprep.subr.bf16.mxu0 0
      %8617 = vmatpush1.bf16.msra.mxu0 0
      %8618 = vmatprep.subr.bf16.mxu0 0
      %8619 = vmatpush1.bf16.msra.mxu0 0
      %8620 = vmatprep.subr.bf16.mxu0 0
      %8621 = vmatpush1.bf16.msra.mxu0 0
      %8622 = vmatprep.subr.bf16.mxu0 0
      %8623 = vmatpush1.bf16.msra.mxu0 0
      %8624 = vmatprep.subr.bf16.mxu0 0
      %8625 = vmatpush1.bf16.msra.mxu0 0
      %8626 = vmatprep.subr.bf16.mxu0 0
      %8627 = vmatpush1.bf16.msra.mxu0 0
      %8628 = vmatprep.subr.bf16.mxu0 0
      %8629 = vmatpush1.bf16.msra.mxu0 0
      %8630 = vmatprep.subr.bf16.mxu0 0
      %8631 = vmatpush1.bf16.msra.mxu0 0
      %8632 = vmatprep.subr.bf16.mxu0 0
      %8633 = vmatpush1.bf16.msra.mxu0 0
      %8634 = vmatprep.subr.bf16.mxu0 0
      %8635 = vmatpush1.bf16.msra.mxu0 0
      %8636 = vmatprep.mubr.bf16.mxu0 0
      %8637 = vmatmul.mubr.bf16.gmra.mrb[0].mxu0 %v8548
      %v8638 = vpop.f32.mrb[0].mxu0
      %v8639 = vadd.f32 0.0, %v8638
      %v8640 = vpop.f32.mrb[0].mxu0
      %v8641 = vpop.f32.mrb[0].mxu0
      %v8642 = vadd.f32 0.0, %v8641
      %v8643 = vpop.f32.mrb[0].mxu0
      %8644 = vmatprep.mubr.bf16.mxu0 0
      %8645 = vmatmul.mubr.bf16.gmra.mrb[0].mxu0 %v8551
      %v8646 = vpop.f32.mrb[0].mxu0
      %v8647 = vadd.f32 0.0, %v8646
      %v8648 = vpop.f32.mrb[0].mxu0
      %v8649 = vpop.f32.mrb[0].mxu0
      %v8650 = vadd.f32 0.0, %v8649
      %v8651 = vpop.f32.mrb[0].mxu0
      %8652 = vmatprep.mubr.bf16.mxu0 0
      %8653 = vmatmul.mubr.bf16.gmra.mrb[0].mxu0 %v8554
      %v8654 = vpop.f32.mrb[0].mxu0
      %v8655 = vadd.f32 0.0, %v8654
      %v8656 = vpop.f32.mrb[0].mxu0
      %v8657 = vpop.f32.mrb[0].mxu0
      %v8658 = vadd.f32 0.0, %v8657
      %v8659 = vpop.f32.mrb[0].mxu0
      %8660 = vmatprep.mubr.bf16.mxu0 0
      %8661 = vmatmul.mubr.bf16.gmra.mrb[0].mxu0 %v8557
      %v8662 = vpop.f32.mrb[0].mxu0
      %v8663 = vadd.f32 0.0, %v8662
      %v8664 = vpop.f32.mrb[0].mxu0
      %v8665 = vpop.f32.mrb[0].mxu0
      %v8666 = vadd.f32 0.0, %v8665
      %v8667 = vpop.f32.mrb[0].mxu0
      %8668 = vmatprep.mubr.bf16.mxu0 0
      %8669 = vmatmul.mubr.bf16.gmra.mrb[0].mxu0 %v8560
      %v8670 = vpop.f32.mrb[0].mxu0
      %v8671 = vadd.f32 0.0, %v8670
      %v8672 = vpop.f32.mrb[0].mxu0
      %v8673 = vpop.f32.mrb[0].mxu0
      %v8674 = vadd.f32 0.0, %v8673
      %v8675 = vpop.f32.mrb[0].mxu0
      %8676 = vmatprep.mubr.bf16.mxu0 0
      %8677 = vmatmul.mubr.bf16.gmra.mrb[0].mxu0 %v8563
      %v8678 = vpop.f32.mrb[0].mxu0
      %v8679 = vadd.f32 0.0, %v8678
      %v8680 = vpop.f32.mrb[0].mxu0
      %v8681 = vpop.f32.mrb[0].mxu0
      %v8682 = vadd.f32 0.0, %v8681
      %v8683 = vpop.f32.mrb[0].mxu0
      %8684 = vmatprep.mubr.bf16.mxu0 0
      %8685 = vmatmul.mubr.bf16.gmra.mrb[0].mxu0 %v8566
      %v8686 = vpop.f32.mrb[0].mxu0
      %v8687 = vadd.f32 0.0, %v8686
      %v8688 = vpop.f32.mrb[0].mxu0
      %v8689 = vpop.f32.mrb[0].mxu0
      %v8690 = vadd.f32 0.0, %v8689
      %v8691 = vpop.f32.mrb[0].mxu0
      %8692 = vmatprep.mubr.bf16.mxu0 0
      %8693 = vmatmul.mubr.bf16.gmra.mrb[0].mxu0 %v8569
      %v8694 = vpop.f32.mrb[0].mxu0
      %v8695 = vadd.f32 0.0, %v8694
      %v8696 = vpop.f32.mrb[0].mxu0
      %v8697 = vpop.f32.mrb[0].mxu0
      %v8698 = vadd.f32 0.0, %v8697
      %v8699 = vpop.f32.mrb[0].mxu0
      %8700 = vmatprep.mubr.bf16.mxu0 0
      %8701 = vmatmul.mubr.bf16.gmra.mrb[0].mxu0 %v8572
      %v8702 = vpop.f32.mrb[0].mxu0
      %v8703 = vadd.f32 0.0, %v8702
      %v8704 = vpop.f32.mrb[0].mxu0
      %v8705 = vpop.f32.mrb[0].mxu0
      %v8706 = vadd.f32 0.0, %v8705
      %v8707 = vpop.f32.mrb[0].mxu0
      %8708 = vmatprep.mubr.bf16.mxu0 0
      %8709 = vmatmul.mubr.bf16.gmra.mrb[0].mxu0 %v8575
      %v8710 = vpop.f32.mrb[0].mxu0
      %v8711 = vadd.f32 0.0, %v8710
      %v8712 = vpop.f32.mrb[0].mxu0
      %v8713 = vpop.f32.mrb[0].mxu0
      %v8714 = vadd.f32 0.0, %v8713
      %v8715 = vpop.f32.mrb[0].mxu0
      %8716 = vmatprep.mubr.bf16.mxu0 0
      %8717 = vmatmul.mubr.bf16.gmra.mrb[0].mxu0 %v8578
      %v8718 = vpop.f32.mrb[0].mxu0
      %v8719 = vadd.f32 0.0, %v8718
      %v8720 = vpop.f32.mrb[0].mxu0
      %v8721 = vpop.f32.mrb[0].mxu0
      %v8722 = vadd.f32 0.0, %v8721
      %v8723 = vpop.f32.mrb[0].mxu0
      %8724 = vmatprep.mubr.bf16.mxu0 0
      %8725 = vmatmul.mubr.bf16.gmra.mrb[0].mxu0 %v8581
      %v8726 = vpop.f32.mrb[0].mxu0
      %v8727 = vadd.f32 0.0, %v8726
      %v8728 = vpop.f32.mrb[0].mxu0
      %v8729 = vpop.f32.mrb[0].mxu0
      %v8730 = vadd.f32 0.0, %v8729
      %v8731 = vpop.f32.mrb[0].mxu0
      %8732 = vmatprep.mubr.bf16.mxu0 0
      %8733 = vmatmul.mubr.bf16.gmra.mrb[0].mxu0 %v8584
      %v8734 = vpop.f32.mrb[0].mxu0
      %v8735 = vadd.f32 0.0, %v8734
      %v8736 = vpop.f32.mrb[0].mxu0
      %v8737 = vpop.f32.mrb[0].mxu0
      %v8738 = vadd.f32 0.0, %v8737
      %v8739 = vpop.f32.mrb[0].mxu0
      %8740 = vmatprep.mubr.bf16.mxu0 0
      %8741 = vmatmul.mubr.bf16.gmra.mrb[0].mxu0 %v8587
      %v8742 = vpop.f32.mrb[0].mxu0
      %v8743 = vadd.f32 0.0, %v8742
      %v8744 = vpop.f32.mrb[0].mxu0
      %v8745 = vpop.f32.mrb[0].mxu0
      %v8746 = vadd.f32 0.0, %v8745
      %v8747 = vpop.f32.mrb[0].mxu0
      %8748 = vmatprep.mubr.bf16.mxu0 0
      %8749 = vmatmul.mubr.bf16.gmra.mrb[0].mxu0 %v8590
      %v8750 = vpop.f32.mrb[0].mxu0
      %v8751 = vadd.f32 0.0, %v8750
      %v8752 = vpop.f32.mrb[0].mxu0
      %v8753 = vpop.f32.mrb[0].mxu0
      %v8754 = vadd.f32 0.0, %v8753
      %v8755 = vpop.f32.mrb[0].mxu0
      %8756 = vmatprep.mubr.bf16.mxu0 0
      %8757 = vmatmul.mubr.bf16.gmra.mrb[0].mxu0 %v8593
      %v8758 = vpop.f32.mrb[0].mxu0
      %v8759 = vadd.f32 0.0, %v8758
      %v8760 = vpop.f32.mrb[0].mxu0
      %v8761 = vpop.f32.mrb[0].mxu0
      %v8762 = vadd.f32 0.0, %v8761
      %v8763 = vpop.f32.mrb[0].mxu0
      %8764 = vmatprep.mubr.bf16.mxu0 0
      %8765 = vmatmul.mubr.bf16.gmra.mrb[0].mxu0 %v8596
      %v8766 = vpop.f32.mrb[0].mxu0
      %v8767 = vadd.f32 0.0, %v8766
      %v8768 = vpop.f32.mrb[0].mxu0
      %v8769 = vpop.f32.mrb[0].mxu0
      %v8770 = vadd.f32 0.0, %v8769
      %v8771 = vpop.f32.mrb[0].mxu0
      %8772 = vmatprep.mubr.bf16.mxu0 0
      %8773 = vmatmul.mubr.bf16.gmra.mrb[0].mxu0 %v8599
      %v8774 = vpop.f32.mrb[0].mxu0
      %v8775 = vadd.f32 0.0, %v8774
      %v8776 = vpop.f32.mrb[0].mxu0
      %v8777 = vpop.f32.mrb[0].mxu0
      %v8778 = vadd.f32 0.0, %v8777
      %v8779 = vpop.f32.mrb[0].mxu0
      %8780 = vdwg.mxu0
      %v8781 = vadd.f32 %v8455, %v8639
      %v8782 = vadd.f32 %v8456, %v8642
      %v8783 = vadd.f32 %v8457, %v8647
      %v8784 = vadd.f32 %v8458, %v8650
      %v8785 = vadd.f32 %v8459, %v8655
      %v8786 = vadd.f32 %v8460, %v8658
      %v8787 = vadd.f32 %v8461, %v8663
      %v8788 = vadd.f32 %v8462, %v8666
      %v8789 = vadd.f32 %v8463, %v8671
      %v8790 = vadd.f32 %v8464, %v8674
      %v8791 = vadd.f32 %v8465, %v8679
      %v8792 = vadd.f32 %v8466, %v8682
      %v8793 = vadd.f32 %v8467, %v8687
      %v8794 = vadd.f32 %v8468, %v8690
      %v8795 = vadd.f32 %v8469, %v8695
      %v8796 = vadd.f32 %v8470, %v8698
      %v8797 = vadd.f32 %v8471, %v8703
      %v8798 = vadd.f32 %v8472, %v8706
      %v8799 = vadd.f32 %v8473, %v8711
      %v8800 = vadd.f32 %v8474, %v8714
      %v8801 = vadd.f32 %v8475, %v8719
      %v8802 = vadd.f32 %v8476, %v8722
      %v8803 = vadd.f32 %v8477, %v8727
      %v8804 = vadd.f32 %v8478, %v8730
      %v8805 = vadd.f32 %v8479, %v8735
      %v8806 = vadd.f32 %v8480, %v8738
      %v8807 = vadd.f32 %v8481, %v8743
      %v8808 = vadd.f32 %v8482, %v8746
      %v8809 = vadd.f32 %v8483, %v8751
      %v8810 = vadd.f32 %v8484, %v8754
      %v8811 = vadd.f32 %v8485, %v8759
      %v8812 = vadd.f32 %v8486, %v8762
      %v8813 = vadd.f32 %v8487, %v8767
      %v8814 = vadd.f32 %v8488, %v8770
      %v8815 = vadd.f32 %v8489, %v8775
      %v8816 = vadd.f32 %v8490, %v8778
      %v8817 = vld [vmem:[#allocation2 + $0x25] sm:$0xff]
      %v8818 = vld [vmem:[#allocation2 + $0x2d] sm:$0xff]
      %v8819 = vld [vmem:[#allocation2 + $0x35] sm:$0xff]
      %v8820 = vld [vmem:[#allocation2 + $0x3d] sm:$0xff]
      %v8821 = vld [vmem:[#allocation2 + $0x45] sm:$0xff]
      %v8822 = vld [vmem:[#allocation2 + $0x4d] sm:$0xff]
      %v8823 = vld [vmem:[#allocation2 + $0x55] sm:$0xff]
      %v8824 = vld [vmem:[#allocation2 + $0x5d] sm:$0xff]
      %v8825 = vld [vmem:[#allocation2 + $0x65] sm:$0xff]
      %v8826 = vld [vmem:[#allocation2 + $0x6d] sm:$0xff]
      %v8827 = vld [vmem:[#allocation2 + $0x75] sm:$0xff]
      %v8828 = vld [vmem:[#allocation2 + $0x7d] sm:$0xff]
      %v8829 = vld [vmem:[#allocation2 + $0x85] sm:$0xff]
      %v8830 = vld [vmem:[#allocation2 + $0x8d] sm:$0xff]
      %v8831 = vld [vmem:[#allocation2 + $0x95] sm:$0xff]
      %v8832 = vld [vmem:[#allocation2 + $0x9d] sm:$0xff]
      %v8833 = vld [vmem:[#allocation2 + $0xa5] sm:$0xff]
      %v8834 = vld [vmem:[#allocation2 + $0xad] sm:$0xff]
      %v8835 = vld [vmem:[#allocation2 + $0xb5] sm:$0xff]
      %v8836 = vld [vmem:[#allocation2 + $0xbd] sm:$0xff]
      %v8837 = vld [vmem:[#allocation2 + $0xc5] sm:$0xff]
      %v8838 = vld [vmem:[#allocation2 + $0xcd] sm:$0xff]
      %v8839 = vld [vmem:[#allocation2 + $0xd5] sm:$0xff]
      %v8840 = vld [vmem:[#allocation2 + $0xdd] sm:$0xff]
      %v8841 = vld [vmem:[#allocation2 + $0xe5] sm:$0xff]
      %v8842 = vld [vmem:[#allocation2 + $0xed] sm:$0xff]
      %v8843 = vld [vmem:[#allocation2 + $0xf5] sm:$0xff]
      %v8844 = vld [vmem:[#allocation2 + $0xfd] sm:$0xff]
      %v8845 = vld [vmem:[#allocation2 + $0x105] sm:$0xff]
      %v8846 = vld [vmem:[#allocation2 + $0x10d] sm:$0xff]
      %v8847 = vld [vmem:[#allocation2 + $0x115] sm:$0xff]
      %v8848 = vld [vmem:[#allocation2 + $0x11d] sm:$0xff]
      %v8849 = vld [vmem:[#allocation2 + $0x125] sm:$0xff]
      %v8850 = vld [vmem:[#allocation2 + $0x12d] sm:$0xff]
      %v8851 = vld [vmem:[#allocation2 + $0x135] sm:$0xff]
      %v8852 = vld [vmem:[#allocation2 + $0x13d] sm:$0xff]
      %v8853 = vpack.c.bf16 %v8818, %v8817
      %v8854 = vpack.c.bf16 %v8820, %v8819
      %v8855 = vpack.c.bf16 %v8822, %v8821
      %v8856 = vpack.c.bf16 %v8824, %v8823
      %v8857 = vpack.c.bf16 %v8826, %v8825
      %v8858 = vpack.c.bf16 %v8828, %v8827
      %v8859 = vpack.c.bf16 %v8830, %v8829
      %v8860 = vpack.c.bf16 %v8832, %v8831
      %v8861 = vpack.c.bf16 %v8834, %v8833
      %v8862 = vpack.c.bf16 %v8836, %v8835
      %v8863 = vpack.c.bf16 %v8838, %v8837
      %v8864 = vpack.c.bf16 %v8840, %v8839
      %v8865 = vpack.c.bf16 %v8842, %v8841
      %v8866 = vpack.c.bf16 %v8844, %v8843
      %v8867 = vpack.c.bf16 %v8846, %v8845
      %v8868 = vpack.c.bf16 %v8848, %v8847
      %v8869 = vpack.c.bf16 %v8850, %v8849
      %v8870 = vpack.c.bf16 %v8852, %v8851
      %s8871 = scalar_lea.vmem %s6, 28
      %v8872 = vld [vmem:[%s8871] sm:$0xf]
      %v8874 = vsel %vm6526, %v8853, 0
      %v8877 = vsel %vm6526, %v8854, 0
      %v8880 = vsel %vm6526, %v8855, 0
      %v8883 = vsel %vm6526, %v8856, 0
      %v8886 = vsel %vm6526, %v8857, 0
      %v8889 = vsel %vm6526, %v8858, 0
      %v8892 = vsel %vm6526, %v8859, 0
      %v8895 = vsel %vm6526, %v8860, 0
      %v8898 = vsel %vm6526, %v8861, 0
      %v8901 = vsel %vm6526, %v8862, 0
      %v8904 = vsel %vm6526, %v8863, 0
      %v8907 = vsel %vm6526, %v8864, 0
      %v8910 = vsel %vm6526, %v8865, 0
      %v8913 = vsel %vm6526, %v8866, 0
      %v8916 = vsel %vm6526, %v8867, 0
      %v8919 = vsel %vm6526, %v8868, 0
      %v8922 = vsel %vm6526, %v8869, 0
      %v8925 = vsel %vm6526, %v8870, 0
      %v8928 = vsel %vm6772, %v8872, 0
      %8930 = vmatprep.subr.bf16.mxu0 0
      %8931 = vmatpush1.bf16.msra.mxu0 %v8928
      %8932 = vmatprep.subr.bf16.mxu0 0
      %8933 = vmatpush1.bf16.msra.mxu0 0
      %8934 = vmatprep.subr.bf16.mxu0 0
      %8935 = vmatpush1.bf16.msra.mxu0 0
      %8936 = vmatprep.subr.bf16.mxu0 0
      %8937 = vmatpush1.bf16.msra.mxu0 0
      %8938 = vmatprep.subr.bf16.mxu0 0
      %8939 = vmatpush1.bf16.msra.mxu0 0
      %8940 = vmatprep.subr.bf16.mxu0 0
      %8941 = vmatpush1.bf16.msra.mxu0 0
      %8942 = vmatprep.subr.bf16.mxu0 0
      %8943 = vmatpush1.bf16.msra.mxu0 0
      %8944 = vmatprep.subr.bf16.mxu0 0
      %8945 = vmatpush1.bf16.msra.mxu0 0
      %8946 = vmatprep.subr.bf16.mxu0 0
      %8947 = vmatpush1.bf16.msra.mxu0 0
      %8948 = vmatprep.subr.bf16.mxu0 0
      %8949 = vmatpush1.bf16.msra.mxu0 0
      %8950 = vmatprep.subr.bf16.mxu0 0
      %8951 = vmatpush1.bf16.msra.mxu0 0
      %8952 = vmatprep.subr.bf16.mxu0 0
      %8953 = vmatpush1.bf16.msra.mxu0 0
      %8954 = vmatprep.subr.bf16.mxu0 0
      %8955 = vmatpush1.bf16.msra.mxu0 0
      %8956 = vmatprep.subr.bf16.mxu0 0
      %8957 = vmatpush1.bf16.msra.mxu0 0
      %8958 = vmatprep.subr.bf16.mxu0 0
      %8959 = vmatpush1.bf16.msra.mxu0 0
      %8960 = vmatprep.subr.bf16.mxu0 0
      %8961 = vmatpush1.bf16.msra.mxu0 0
      %8962 = vmatprep.mubr.bf16.mxu0 0
      %8963 = vmatmul.mubr.bf16.gmra.mrb[0].mxu0 %v8874
      %v8964 = vpop.f32.mrb[0].mxu0
      %v8965 = vadd.f32 0.0, %v8964
      %v8966 = vpop.f32.mrb[0].mxu0
      %v8967 = vpop.f32.mrb[0].mxu0
      %v8968 = vadd.f32 0.0, %v8967
      %v8969 = vpop.f32.mrb[0].mxu0
      %8970 = vmatprep.mubr.bf16.mxu0 0
      %8971 = vmatmul.mubr.bf16.gmra.mrb[0].mxu0 %v8877
      %v8972 = vpop.f32.mrb[0].mxu0
      %v8973 = vadd.f32 0.0, %v8972
      %v8974 = vpop.f32.mrb[0].mxu0
      %v8975 = vpop.f32.mrb[0].mxu0
      %v8976 = vadd.f32 0.0, %v8975
      %v8977 = vpop.f32.mrb[0].mxu0
      %8978 = vmatprep.mubr.bf16.mxu0 0
      %8979 = vmatmul.mubr.bf16.gmra.mrb[0].mxu0 %v8880
      %v8980 = vpop.f32.mrb[0].mxu0
      %v8981 = vadd.f32 0.0, %v8980
      %v8982 = vpop.f32.mrb[0].mxu0
      %v8983 = vpop.f32.mrb[0].mxu0
      %v8984 = vadd.f32 0.0, %v8983
      %v8985 = vpop.f32.mrb[0].mxu0
      %8986 = vmatprep.mubr.bf16.mxu0 0
      %8987 = vmatmul.mubr.bf16.gmra.mrb[0].mxu0 %v8883
      %v8988 = vpop.f32.mrb[0].mxu0
      %v8989 = vadd.f32 0.0, %v8988
      %v8990 = vpop.f32.mrb[0].mxu0
      %v8991 = vpop.f32.mrb[0].mxu0
      %v8992 = vadd.f32 0.0, %v8991
      %v8993 = vpop.f32.mrb[0].mxu0
      %8994 = vmatprep.mubr.bf16.mxu0 0
      %8995 = vmatmul.mubr.bf16.gmra.mrb[0].mxu0 %v8886
      %v8996 = vpop.f32.mrb[0].mxu0
      %v8997 = vadd.f32 0.0, %v8996
      %v8998 = vpop.f32.mrb[0].mxu0
      %v8999 = vpop.f32.mrb[0].mxu0
      %v9000 = vadd.f32 0.0, %v8999
      %v9001 = vpop.f32.mrb[0].mxu0
      %9002 = vmatprep.mubr.bf16.mxu0 0
      %9003 = vmatmul.mubr.bf16.gmra.mrb[0].mxu0 %v8889
      %v9004 = vpop.f32.mrb[0].mxu0
      %v9005 = vadd.f32 0.0, %v9004
      %v9006 = vpop.f32.mrb[0].mxu0
      %v9007 = vpop.f32.mrb[0].mxu0
      %v9008 = vadd.f32 0.0, %v9007
      %v9009 = vpop.f32.mrb[0].mxu0
      %9010 = vmatprep.mubr.bf16.mxu0 0
      %9011 = vmatmul.mubr.bf16.gmra.mrb[0].mxu0 %v8892
      %v9012 = vpop.f32.mrb[0].mxu0
      %v9013 = vadd.f32 0.0, %v9012
      %v9014 = vpop.f32.mrb[0].mxu0
      %v9015 = vpop.f32.mrb[0].mxu0
      %v9016 = vadd.f32 0.0, %v9015
      %v9017 = vpop.f32.mrb[0].mxu0
      %9018 = vmatprep.mubr.bf16.mxu0 0
      %9019 = vmatmul.mubr.bf16.gmra.mrb[0].mxu0 %v8895
      %v9020 = vpop.f32.mrb[0].mxu0
      %v9021 = vadd.f32 0.0, %v9020
      %v9022 = vpop.f32.mrb[0].mxu0
      %v9023 = vpop.f32.mrb[0].mxu0
      %v9024 = vadd.f32 0.0, %v9023
      %v9025 = vpop.f32.mrb[0].mxu0
      %9026 = vmatprep.mubr.bf16.mxu0 0
      %9027 = vmatmul.mubr.bf16.gmra.mrb[0].mxu0 %v8898
      %v9028 = vpop.f32.mrb[0].mxu0
      %v9029 = vadd.f32 0.0, %v9028
      %v9030 = vpop.f32.mrb[0].mxu0
      %v9031 = vpop.f32.mrb[0].mxu0
      %v9032 = vadd.f32 0.0, %v9031
      %v9033 = vpop.f32.mrb[0].mxu0
      %9034 = vmatprep.mubr.bf16.mxu0 0
      %9035 = vmatmul.mubr.bf16.gmra.mrb[0].mxu0 %v8901
      %v9036 = vpop.f32.mrb[0].mxu0
      %v9037 = vadd.f32 0.0, %v9036
      %v9038 = vpop.f32.mrb[0].mxu0
      %v9039 = vpop.f32.mrb[0].mxu0
      %v9040 = vadd.f32 0.0, %v9039
      %v9041 = vpop.f32.mrb[0].mxu0
      %9042 = vmatprep.mubr.bf16.mxu0 0
      %9043 = vmatmul.mubr.bf16.gmra.mrb[0].mxu0 %v8904
      %v9044 = vpop.f32.mrb[0].mxu0
      %v9045 = vadd.f32 0.0, %v9044
      %v9046 = vpop.f32.mrb[0].mxu0
      %v9047 = vpop.f32.mrb[0].mxu0
      %v9048 = vadd.f32 0.0, %v9047
      %v9049 = vpop.f32.mrb[0].mxu0
      %9050 = vmatprep.mubr.bf16.mxu0 0
      %9051 = vmatmul.mubr.bf16.gmra.mrb[0].mxu0 %v8907
      %v9052 = vpop.f32.mrb[0].mxu0
      %v9053 = vadd.f32 0.0, %v9052
      %v9054 = vpop.f32.mrb[0].mxu0
      %v9055 = vpop.f32.mrb[0].mxu0
      %v9056 = vadd.f32 0.0, %v9055
      %v9057 = vpop.f32.mrb[0].mxu0
      %9058 = vmatprep.mubr.bf16.mxu0 0
      %9059 = vmatmul.mubr.bf16.gmra.mrb[0].mxu0 %v8910
      %v9060 = vpop.f32.mrb[0].mxu0
      %v9061 = vadd.f32 0.0, %v9060
      %v9062 = vpop.f32.mrb[0].mxu0
      %v9063 = vpop.f32.mrb[0].mxu0
      %v9064 = vadd.f32 0.0, %v9063
      %v9065 = vpop.f32.mrb[0].mxu0
      %9066 = vmatprep.mubr.bf16.mxu0 0
      %9067 = vmatmul.mubr.bf16.gmra.mrb[0].mxu0 %v8913
      %v9068 = vpop.f32.mrb[0].mxu0
      %v9069 = vadd.f32 0.0, %v9068
      %v9070 = vpop.f32.mrb[0].mxu0
      %v9071 = vpop.f32.mrb[0].mxu0
      %v9072 = vadd.f32 0.0, %v9071
      %v9073 = vpop.f32.mrb[0].mxu0
      %9074 = vmatprep.mubr.bf16.mxu0 0
      %9075 = vmatmul.mubr.bf16.gmra.mrb[0].mxu0 %v8916
      %v9076 = vpop.f32.mrb[0].mxu0
      %v9077 = vadd.f32 0.0, %v9076
      %v9078 = vpop.f32.mrb[0].mxu0
      %v9079 = vpop.f32.mrb[0].mxu0
      %v9080 = vadd.f32 0.0, %v9079
      %v9081 = vpop.f32.mrb[0].mxu0
      %9082 = vmatprep.mubr.bf16.mxu0 0
      %9083 = vmatmul.mubr.bf16.gmra.mrb[0].mxu0 %v8919
      %v9084 = vpop.f32.mrb[0].mxu0
      %v9085 = vadd.f32 0.0, %v9084
      %v9086 = vpop.f32.mrb[0].mxu0
      %v9087 = vpop.f32.mrb[0].mxu0
      %v9088 = vadd.f32 0.0, %v9087
      %v9089 = vpop.f32.mrb[0].mxu0
      %9090 = vmatprep.mubr.bf16.mxu0 0
      %9091 = vmatmul.mubr.bf16.gmra.mrb[0].mxu0 %v8922
      %v9092 = vpop.f32.mrb[0].mxu0
      %v9093 = vadd.f32 0.0, %v9092
      %v9094 = vpop.f32.mrb[0].mxu0
      %v9095 = vpop.f32.mrb[0].mxu0
      %v9096 = vadd.f32 0.0, %v9095
      %v9097 = vpop.f32.mrb[0].mxu0
      %9098 = vmatprep.mubr.bf16.mxu0 0
      %9099 = vmatmul.mubr.bf16.gmra.mrb[0].mxu0 %v8925
      %v9100 = vpop.f32.mrb[0].mxu0
      %v9101 = vadd.f32 0.0, %v9100
      %v9102 = vpop.f32.mrb[0].mxu0
      %v9103 = vpop.f32.mrb[0].mxu0
      %v9104 = vadd.f32 0.0, %v9103
      %v9105 = vpop.f32.mrb[0].mxu0
      %9106 = vdwg.mxu0
      %v9107 = vadd.f32 %v8781, %v8965
      %v9108 = vadd.f32 %v8782, %v8968
      %v9109 = vadd.f32 %v8783, %v8973
      %v9110 = vadd.f32 %v8784, %v8976
      %v9111 = vadd.f32 %v8785, %v8981
      %v9112 = vadd.f32 %v8786, %v8984
      %v9113 = vadd.f32 %v8787, %v8989
      %v9114 = vadd.f32 %v8788, %v8992
      %v9115 = vadd.f32 %v8789, %v8997
      %v9116 = vadd.f32 %v8790, %v9000
      %v9117 = vadd.f32 %v8791, %v9005
      %v9118 = vadd.f32 %v8792, %v9008
      %v9119 = vadd.f32 %v8793, %v9013
      %v9120 = vadd.f32 %v8794, %v9016
      %v9121 = vadd.f32 %v8795, %v9021
      %v9122 = vadd.f32 %v8796, %v9024
      %v9123 = vadd.f32 %v8797, %v9029
      %v9124 = vadd.f32 %v8798, %v9032
      %v9125 = vadd.f32 %v8799, %v9037
      %v9126 = vadd.f32 %v8800, %v9040
      %v9127 = vadd.f32 %v8801, %v9045
      %v9128 = vadd.f32 %v8802, %v9048
      %v9129 = vadd.f32 %v8803, %v9053
      %v9130 = vadd.f32 %v8804, %v9056
      %v9131 = vadd.f32 %v8805, %v9061
      %v9132 = vadd.f32 %v8806, %v9064
      %v9133 = vadd.f32 %v8807, %v9069
      %v9134 = vadd.f32 %v8808, %v9072
      %v9135 = vadd.f32 %v8809, %v9077
      %v9136 = vadd.f32 %v8810, %v9080
      %v9137 = vadd.f32 %v8811, %v9085
      %v9138 = vadd.f32 %v8812, %v9088
      %v9139 = vadd.f32 %v8813, %v9093
      %v9140 = vadd.f32 %v8814, %v9096
      %v9141 = vadd.f32 %v8815, %v9101
      %v9142 = vadd.f32 %v8816, %v9104
      %v9143 = vld [vmem:[#allocation2 + $0x26] sm:$0xff]
      %v9144 = vld [vmem:[#allocation2 + $0x2e] sm:$0xff]
      %v9145 = vld [vmem:[#allocation2 + $0x36] sm:$0xff]
      %v9146 = vld [vmem:[#allocation2 + $0x3e] sm:$0xff]
      %v9147 = vld [vmem:[#allocation2 + $0x46] sm:$0xff]
      %v9148 = vld [vmem:[#allocation2 + $0x4e] sm:$0xff]
      %v9149 = vld [vmem:[#allocation2 + $0x56] sm:$0xff]
      %v9150 = vld [vmem:[#allocation2 + $0x5e] sm:$0xff]
      %v9151 = vld [vmem:[#allocation2 + $0x66] sm:$0xff]
      %v9152 = vld [vmem:[#allocation2 + $0x6e] sm:$0xff]
      %v9153 = vld [vmem:[#allocation2 + $0x76] sm:$0xff]
      %v9154 = vld [vmem:[#allocation2 + $0x7e] sm:$0xff]
      %v9155 = vld [vmem:[#allocation2 + $0x86] sm:$0xff]
      %v9156 = vld [vmem:[#allocation2 + $0x8e] sm:$0xff]
      %v9157 = vld [vmem:[#allocation2 + $0x96] sm:$0xff]
      %v9158 = vld [vmem:[#allocation2 + $0x9e] sm:$0xff]
      %v9159 = vld [vmem:[#allocation2 + $0xa6] sm:$0xff]
      %v9160 = vld [vmem:[#allocation2 + $0xae] sm:$0xff]
      %v9161 = vld [vmem:[#allocation2 + $0xb6] sm:$0xff]
      %v9162 = vld [vmem:[#allocation2 + $0xbe] sm:$0xff]
      %v9163 = vld [vmem:[#allocation2 + $0xc6] sm:$0xff]
      %v9164 = vld [vmem:[#allocation2 + $0xce] sm:$0xff]
      %v9165 = vld [vmem:[#allocation2 + $0xd6] sm:$0xff]
      %v9166 = vld [vmem:[#allocation2 + $0xde] sm:$0xff]
      %v9167 = vld [vmem:[#allocation2 + $0xe6] sm:$0xff]
      %v9168 = vld [vmem:[#allocation2 + $0xee] sm:$0xff]
      %v9169 = vld [vmem:[#allocation2 + $0xf6] sm:$0xff]
      %v9170 = vld [vmem:[#allocation2 + $0xfe] sm:$0xff]
      %v9171 = vld [vmem:[#allocation2 + $0x106] sm:$0xff]
      %v9172 = vld [vmem:[#allocation2 + $0x10e] sm:$0xff]
      %v9173 = vld [vmem:[#allocation2 + $0x116] sm:$0xff]
      %v9174 = vld [vmem:[#allocation2 + $0x11e] sm:$0xff]
      %v9175 = vld [vmem:[#allocation2 + $0x126] sm:$0xff]
      %v9176 = vld [vmem:[#allocation2 + $0x12e] sm:$0xff]
      %v9177 = vld [vmem:[#allocation2 + $0x136] sm:$0xff]
      %v9178 = vld [vmem:[#allocation2 + $0x13e] sm:$0xff]
      %v9179 = vpack.c.bf16 %v9144, %v9143
      %v9180 = vpack.c.bf16 %v9146, %v9145
      %v9181 = vpack.c.bf16 %v9148, %v9147
      %v9182 = vpack.c.bf16 %v9150, %v9149
      %v9183 = vpack.c.bf16 %v9152, %v9151
      %v9184 = vpack.c.bf16 %v9154, %v9153
      %v9185 = vpack.c.bf16 %v9156, %v9155
      %v9186 = vpack.c.bf16 %v9158, %v9157
      %v9187 = vpack.c.bf16 %v9160, %v9159
      %v9188 = vpack.c.bf16 %v9162, %v9161
      %v9189 = vpack.c.bf16 %v9164, %v9163
      %v9190 = vpack.c.bf16 %v9166, %v9165
      %v9191 = vpack.c.bf16 %v9168, %v9167
      %v9192 = vpack.c.bf16 %v9170, %v9169
      %v9193 = vpack.c.bf16 %v9172, %v9171
      %v9194 = vpack.c.bf16 %v9174, %v9173
      %v9195 = vpack.c.bf16 %v9176, %v9175
      %v9196 = vpack.c.bf16 %v9178, %v9177
      %s9197 = scalar_lea.vmem %s6, 32
      %v9198 = vld [vmem:[%s9197] sm:$0xf]
      %v9200 = vsel %vm6526, %v9179, 0
      %v9203 = vsel %vm6526, %v9180, 0
      %v9206 = vsel %vm6526, %v9181, 0
      %v9209 = vsel %vm6526, %v9182, 0
      %v9212 = vsel %vm6526, %v9183, 0
      %v9215 = vsel %vm6526, %v9184, 0
      %v9218 = vsel %vm6526, %v9185, 0
      %v9221 = vsel %vm6526, %v9186, 0
      %v9224 = vsel %vm6526, %v9187, 0
      %v9227 = vsel %vm6526, %v9188, 0
      %v9230 = vsel %vm6526, %v9189, 0
      %v9233 = vsel %vm6526, %v9190, 0
      %v9236 = vsel %vm6526, %v9191, 0
      %v9239 = vsel %vm6526, %v9192, 0
      %v9242 = vsel %vm6526, %v9193, 0
      %v9245 = vsel %vm6526, %v9194, 0
      %v9248 = vsel %vm6526, %v9195, 0
      %v9251 = vsel %vm6526, %v9196, 0
      %v9254 = vsel %vm6772, %v9198, 0
      %9256 = vmatprep.subr.bf16.mxu0 0
      %9257 = vmatpush1.bf16.msra.mxu0 %v9254
      %9258 = vmatprep.subr.bf16.mxu0 0
      %9259 = vmatpush1.bf16.msra.mxu0 0
      %9260 = vmatprep.subr.bf16.mxu0 0
      %9261 = vmatpush1.bf16.msra.mxu0 0
      %9262 = vmatprep.subr.bf16.mxu0 0
      %9263 = vmatpush1.bf16.msra.mxu0 0
      %9264 = vmatprep.subr.bf16.mxu0 0
      %9265 = vmatpush1.bf16.msra.mxu0 0
      %9266 = vmatprep.subr.bf16.mxu0 0
      %9267 = vmatpush1.bf16.msra.mxu0 0
      %9268 = vmatprep.subr.bf16.mxu0 0
      %9269 = vmatpush1.bf16.msra.mxu0 0
      %9270 = vmatprep.subr.bf16.mxu0 0
      %9271 = vmatpush1.bf16.msra.mxu0 0
      %9272 = vmatprep.subr.bf16.mxu0 0
      %9273 = vmatpush1.bf16.msra.mxu0 0
      %9274 = vmatprep.subr.bf16.mxu0 0
      %9275 = vmatpush1.bf16.msra.mxu0 0
      %9276 = vmatprep.subr.bf16.mxu0 0
      %9277 = vmatpush1.bf16.msra.mxu0 0
      %9278 = vmatprep.subr.bf16.mxu0 0
      %9279 = vmatpush1.bf16.msra.mxu0 0
      %9280 = vmatprep.subr.bf16.mxu0 0
      %9281 = vmatpush1.bf16.msra.mxu0 0
      %9282 = vmatprep.subr.bf16.mxu0 0
      %9283 = vmatpush1.bf16.msra.mxu0 0
      %9284 = vmatprep.subr.bf16.mxu0 0
      %9285 = vmatpush1.bf16.msra.mxu0 0
      %9286 = vmatprep.subr.bf16.mxu0 0
      %9287 = vmatpush1.bf16.msra.mxu0 0
      %9288 = vmatprep.mubr.bf16.mxu0 0
      %9289 = vmatmul.mubr.bf16.gmra.mrb[0].mxu0 %v9200
      %v9290 = vpop.f32.mrb[0].mxu0
      %v9291 = vadd.f32 0.0, %v9290
      %v9292 = vpop.f32.mrb[0].mxu0
      %v9293 = vpop.f32.mrb[0].mxu0
      %v9294 = vadd.f32 0.0, %v9293
      %v9295 = vpop.f32.mrb[0].mxu0
      %9296 = vmatprep.mubr.bf16.mxu0 0
      %9297 = vmatmul.mubr.bf16.gmra.mrb[0].mxu0 %v9203
      %v9298 = vpop.f32.mrb[0].mxu0
      %v9299 = vadd.f32 0.0, %v9298
      %v9300 = vpop.f32.mrb[0].mxu0
      %v9301 = vpop.f32.mrb[0].mxu0
      %v9302 = vadd.f32 0.0, %v9301
      %v9303 = vpop.f32.mrb[0].mxu0
      %9304 = vmatprep.mubr.bf16.mxu0 0
      %9305 = vmatmul.mubr.bf16.gmra.mrb[0].mxu0 %v9206
      %v9306 = vpop.f32.mrb[0].mxu0
      %v9307 = vadd.f32 0.0, %v9306
      %v9308 = vpop.f32.mrb[0].mxu0
      %v9309 = vpop.f32.mrb[0].mxu0
      %v9310 = vadd.f32 0.0, %v9309
      %v9311 = vpop.f32.mrb[0].mxu0
      %9312 = vmatprep.mubr.bf16.mxu0 0
      %9313 = vmatmul.mubr.bf16.gmra.mrb[0].mxu0 %v9209
      %v9314 = vpop.f32.mrb[0].mxu0
      %v9315 = vadd.f32 0.0, %v9314
      %v9316 = vpop.f32.mrb[0].mxu0
      %v9317 = vpop.f32.mrb[0].mxu0
      %v9318 = vadd.f32 0.0, %v9317
      %v9319 = vpop.f32.mrb[0].mxu0
      %9320 = vmatprep.mubr.bf16.mxu0 0
      %9321 = vmatmul.mubr.bf16.gmra.mrb[0].mxu0 %v9212
      %v9322 = vpop.f32.mrb[0].mxu0
      %v9323 = vadd.f32 0.0, %v9322
      %v9324 = vpop.f32.mrb[0].mxu0
      %v9325 = vpop.f32.mrb[0].mxu0
      %v9326 = vadd.f32 0.0, %v9325
      %v9327 = vpop.f32.mrb[0].mxu0
      %9328 = vmatprep.mubr.bf16.mxu0 0
      %9329 = vmatmul.mubr.bf16.gmra.mrb[0].mxu0 %v9215
      %v9330 = vpop.f32.mrb[0].mxu0
      %v9331 = vadd.f32 0.0, %v9330
      %v9332 = vpop.f32.mrb[0].mxu0
      %v9333 = vpop.f32.mrb[0].mxu0
      %v9334 = vadd.f32 0.0, %v9333
      %v9335 = vpop.f32.mrb[0].mxu0
      %9336 = vmatprep.mubr.bf16.mxu0 0
      %9337 = vmatmul.mubr.bf16.gmra.mrb[0].mxu0 %v9218
      %v9338 = vpop.f32.mrb[0].mxu0
      %v9339 = vadd.f32 0.0, %v9338
      %v9340 = vpop.f32.mrb[0].mxu0
      %v9341 = vpop.f32.mrb[0].mxu0
      %v9342 = vadd.f32 0.0, %v9341
      %v9343 = vpop.f32.mrb[0].mxu0
      %9344 = vmatprep.mubr.bf16.mxu0 0
      %9345 = vmatmul.mubr.bf16.gmra.mrb[0].mxu0 %v9221
      %v9346 = vpop.f32.mrb[0].mxu0
      %v9347 = vadd.f32 0.0, %v9346
      %v9348 = vpop.f32.mrb[0].mxu0
      %v9349 = vpop.f32.mrb[0].mxu0
      %v9350 = vadd.f32 0.0, %v9349
      %v9351 = vpop.f32.mrb[0].mxu0
      %9352 = vmatprep.mubr.bf16.mxu0 0
      %9353 = vmatmul.mubr.bf16.gmra.mrb[0].mxu0 %v9224
      %v9354 = vpop.f32.mrb[0].mxu0
      %v9355 = vadd.f32 0.0, %v9354
      %v9356 = vpop.f32.mrb[0].mxu0
      %v9357 = vpop.f32.mrb[0].mxu0
      %v9358 = vadd.f32 0.0, %v9357
      %v9359 = vpop.f32.mrb[0].mxu0
      %9360 = vmatprep.mubr.bf16.mxu0 0
      %9361 = vmatmul.mubr.bf16.gmra.mrb[0].mxu0 %v9227
      %v9362 = vpop.f32.mrb[0].mxu0
      %v9363 = vadd.f32 0.0, %v9362
      %v9364 = vpop.f32.mrb[0].mxu0
      %v9365 = vpop.f32.mrb[0].mxu0
      %v9366 = vadd.f32 0.0, %v9365
      %v9367 = vpop.f32.mrb[0].mxu0
      %9368 = vmatprep.mubr.bf16.mxu0 0
      %9369 = vmatmul.mubr.bf16.gmra.mrb[0].mxu0 %v9230
      %v9370 = vpop.f32.mrb[0].mxu0
      %v9371 = vadd.f32 0.0, %v9370
      %v9372 = vpop.f32.mrb[0].mxu0
      %v9373 = vpop.f32.mrb[0].mxu0
      %v9374 = vadd.f32 0.0, %v9373
      %v9375 = vpop.f32.mrb[0].mxu0
      %9376 = vmatprep.mubr.bf16.mxu0 0
      %9377 = vmatmul.mubr.bf16.gmra.mrb[0].mxu0 %v9233
      %v9378 = vpop.f32.mrb[0].mxu0
      %v9379 = vadd.f32 0.0, %v9378
      %v9380 = vpop.f32.mrb[0].mxu0
      %v9381 = vpop.f32.mrb[0].mxu0
      %v9382 = vadd.f32 0.0, %v9381
      %v9383 = vpop.f32.mrb[0].mxu0
      %9384 = vmatprep.mubr.bf16.mxu0 0
      %9385 = vmatmul.mubr.bf16.gmra.mrb[0].mxu0 %v9236
      %v9386 = vpop.f32.mrb[0].mxu0
      %v9387 = vadd.f32 0.0, %v9386
      %v9388 = vpop.f32.mrb[0].mxu0
      %v9389 = vpop.f32.mrb[0].mxu0
      %v9390 = vadd.f32 0.0, %v9389
      %v9391 = vpop.f32.mrb[0].mxu0
      %9392 = vmatprep.mubr.bf16.mxu0 0
      %9393 = vmatmul.mubr.bf16.gmra.mrb[0].mxu0 %v9239
      %v9394 = vpop.f32.mrb[0].mxu0
      %v9395 = vadd.f32 0.0, %v9394
      %v9396 = vpop.f32.mrb[0].mxu0
      %v9397 = vpop.f32.mrb[0].mxu0
      %v9398 = vadd.f32 0.0, %v9397
      %v9399 = vpop.f32.mrb[0].mxu0
      %9400 = vmatprep.mubr.bf16.mxu0 0
      %9401 = vmatmul.mubr.bf16.gmra.mrb[0].mxu0 %v9242
      %v9402 = vpop.f32.mrb[0].mxu0
      %v9403 = vadd.f32 0.0, %v9402
      %v9404 = vpop.f32.mrb[0].mxu0
      %v9405 = vpop.f32.mrb[0].mxu0
      %v9406 = vadd.f32 0.0, %v9405
      %v9407 = vpop.f32.mrb[0].mxu0
      %9408 = vmatprep.mubr.bf16.mxu0 0
      %9409 = vmatmul.mubr.bf16.gmra.mrb[0].mxu0 %v9245
      %v9410 = vpop.f32.mrb[0].mxu0
      %v9411 = vadd.f32 0.0, %v9410
      %v9412 = vpop.f32.mrb[0].mxu0
      %v9413 = vpop.f32.mrb[0].mxu0
      %v9414 = vadd.f32 0.0, %v9413
      %v9415 = vpop.f32.mrb[0].mxu0
      %9416 = vmatprep.mubr.bf16.mxu0 0
      %9417 = vmatmul.mubr.bf16.gmra.mrb[0].mxu0 %v9248
      %v9418 = vpop.f32.mrb[0].mxu0
      %v9419 = vadd.f32 0.0, %v9418
      %v9420 = vpop.f32.mrb[0].mxu0
      %v9421 = vpop.f32.mrb[0].mxu0
      %v9422 = vadd.f32 0.0, %v9421
      %v9423 = vpop.f32.mrb[0].mxu0
      %9424 = vmatprep.mubr.bf16.mxu0 0
      %9425 = vmatmul.mubr.bf16.gmra.mrb[0].mxu0 %v9251
      %v9426 = vpop.f32.mrb[0].mxu0
      %v9427 = vadd.f32 0.0, %v9426
      %v9428 = vpop.f32.mrb[0].mxu0
      %v9429 = vpop.f32.mrb[0].mxu0
      %v9430 = vadd.f32 0.0, %v9429
      %v9431 = vpop.f32.mrb[0].mxu0
      %9432 = vdwg.mxu0
      %v9433 = vadd.f32 %v9107, %v9291
      %v9434 = vadd.f32 %v9108, %v9294
      %v9435 = vadd.f32 %v9109, %v9299
      %v9436 = vadd.f32 %v9110, %v9302
      %v9437 = vadd.f32 %v9111, %v9307
      %v9438 = vadd.f32 %v9112, %v9310
      %v9439 = vadd.f32 %v9113, %v9315
      %v9440 = vadd.f32 %v9114, %v9318
      %v9441 = vadd.f32 %v9115, %v9323
      %v9442 = vadd.f32 %v9116, %v9326
      %v9443 = vadd.f32 %v9117, %v9331
      %v9444 = vadd.f32 %v9118, %v9334
      %v9445 = vadd.f32 %v9119, %v9339
      %v9446 = vadd.f32 %v9120, %v9342
      %v9447 = vadd.f32 %v9121, %v9347
      %v9448 = vadd.f32 %v9122, %v9350
      %v9449 = vadd.f32 %v9123, %v9355
      %v9450 = vadd.f32 %v9124, %v9358
      %v9451 = vadd.f32 %v9125, %v9363
      %v9452 = vadd.f32 %v9126, %v9366
      %v9453 = vadd.f32 %v9127, %v9371
      %v9454 = vadd.f32 %v9128, %v9374
      %v9455 = vadd.f32 %v9129, %v9379
      %v9456 = vadd.f32 %v9130, %v9382
      %v9457 = vadd.f32 %v9131, %v9387
      %v9458 = vadd.f32 %v9132, %v9390
      %v9459 = vadd.f32 %v9133, %v9395
      %v9460 = vadd.f32 %v9134, %v9398
      %v9461 = vadd.f32 %v9135, %v9403
      %v9462 = vadd.f32 %v9136, %v9406
      %v9463 = vadd.f32 %v9137, %v9411
      %v9464 = vadd.f32 %v9138, %v9414
      %v9465 = vadd.f32 %v9139, %v9419
      %v9466 = vadd.f32 %v9140, %v9422
      %v9467 = vadd.f32 %v9141, %v9427
      %v9468 = vadd.f32 %v9142, %v9430
      %v9469 = vld [vmem:[%s7] sm:$0x1]
      %v9471 = vlaneseq
      %v9472 = vshrl.u32 %v9471, 7
      %v9473 = vsub.s32 0, %v9472
      %v9474 = vrot.slane %v9469, %v9473
      %v9476 = vadd.f32 %v9433, %v9474
      %v9477 = vadd.f32 %v9434, %v9474
      %v9478 = vadd.f32 %v9435, %v9474
      %v9479 = vadd.f32 %v9436, %v9474
      %v9480 = vadd.f32 %v9437, %v9474
      %v9481 = vadd.f32 %v9438, %v9474
      %v9482 = vadd.f32 %v9439, %v9474
      %v9483 = vadd.f32 %v9440, %v9474
      %v9484 = vadd.f32 %v9441, %v9474
      %v9485 = vadd.f32 %v9442, %v9474
      %v9486 = vadd.f32 %v9443, %v9474
      %v9487 = vadd.f32 %v9444, %v9474
      %v9488 = vadd.f32 %v9445, %v9474
      %v9489 = vadd.f32 %v9446, %v9474
      %v9490 = vadd.f32 %v9447, %v9474
      %v9491 = vadd.f32 %v9448, %v9474
      %v9492 = vadd.f32 %v9449, %v9474
      %v9493 = vadd.f32 %v9450, %v9474
      %v9494 = vadd.f32 %v9451, %v9474
      %v9495 = vadd.f32 %v9452, %v9474
      %v9496 = vadd.f32 %v9453, %v9474
      %v9497 = vadd.f32 %v9454, %v9474
      %v9498 = vadd.f32 %v9455, %v9474
      %v9499 = vadd.f32 %v9456, %v9474
      %v9500 = vadd.f32 %v9457, %v9474
      %v9501 = vadd.f32 %v9458, %v9474
      %v9502 = vadd.f32 %v9459, %v9474
      %v9503 = vadd.f32 %v9460, %v9474
      %v9504 = vadd.f32 %v9461, %v9474
      %v9505 = vadd.f32 %v9462, %v9474
      %v9506 = vadd.f32 %v9463, %v9474
      %v9507 = vadd.f32 %v9464, %v9474
      %v9508 = vadd.f32 %v9465, %v9474
      %v9509 = vadd.f32 %v9466, %v9474
      %v9510 = vadd.f32 %v9467, %v9474
      %v9511 = vadd.f32 %v9468, %v9474
      %vm9512 = vcmp.ge.f32.partialorder %v9476, 0.0
      %vm9513 = vcmp.ge.f32.partialorder %v9477, 0.0
      %vm9514 = vcmp.ge.f32.partialorder %v9478, 0.0
      %vm9515 = vcmp.ge.f32.partialorder %v9479, 0.0
      %vm9516 = vcmp.ge.f32.partialorder %v9480, 0.0
      %vm9517 = vcmp.ge.f32.partialorder %v9481, 0.0
      %vm9518 = vcmp.ge.f32.partialorder %v9482, 0.0
      %vm9519 = vcmp.ge.f32.partialorder %v9483, 0.0
      %vm9520 = vcmp.ge.f32.partialorder %v9484, 0.0
      %vm9521 = vcmp.ge.f32.partialorder %v9485, 0.0
      %vm9522 = vcmp.ge.f32.partialorder %v9486, 0.0
      %vm9523 = vcmp.ge.f32.partialorder %v9487, 0.0
      %vm9524 = vcmp.ge.f32.partialorder %v9488, 0.0
      %vm9525 = vcmp.ge.f32.partialorder %v9489, 0.0
      %vm9526 = vcmp.ge.f32.partialorder %v9490, 0.0
      %vm9527 = vcmp.ge.f32.partialorder %v9491, 0.0
      %vm9528 = vcmp.ge.f32.partialorder %v9492, 0.0
      %vm9529 = vcmp.ge.f32.partialorder %v9493, 0.0
      %vm9530 = vcmp.ge.f32.partialorder %v9494, 0.0
      %vm9531 = vcmp.ge.f32.partialorder %v9495, 0.0
      %vm9532 = vcmp.ge.f32.partialorder %v9496, 0.0
      %vm9533 = vcmp.ge.f32.partialorder %v9497, 0.0
      %vm9534 = vcmp.ge.f32.partialorder %v9498, 0.0
      %vm9535 = vcmp.ge.f32.partialorder %v9499, 0.0
      %vm9536 = vcmp.ge.f32.partialorder %v9500, 0.0
      %vm9537 = vcmp.ge.f32.partialorder %v9501, 0.0
      %vm9538 = vcmp.ge.f32.partialorder %v9502, 0.0
      %vm9539 = vcmp.ge.f32.partialorder %v9503, 0.0
      %vm9540 = vcmp.ge.f32.partialorder %v9504, 0.0
      %vm9541 = vcmp.ge.f32.partialorder %v9505, 0.0
      %vm9542 = vcmp.ge.f32.partialorder %v9506, 0.0
      %vm9543 = vcmp.ge.f32.partialorder %v9507, 0.0
      %vm9544 = vcmp.ge.f32.partialorder %v9508, 0.0
      %vm9545 = vcmp.ge.f32.partialorder %v9509, 0.0
      %vm9546 = vcmp.ge.f32.partialorder %v9510, 0.0
      %vm9547 = vcmp.ge.f32.partialorder %v9511, 0.0
      %v9548 = vmul.f32 %v9476, 0.2
      %v9549 = vmul.f32 %v9477, 0.2
      %v9550 = vmul.f32 %v9478, 0.2
      %v9551 = vmul.f32 %v9479, 0.2
      %v9552 = vmul.f32 %v9480, 0.2
      %v9553 = vmul.f32 %v9481, 0.2
      %v9554 = vmul.f32 %v9482, 0.2
      %v9555 = vmul.f32 %v9483, 0.2
      %v9556 = vmul.f32 %v9484, 0.2
      %v9557 = vmul.f32 %v9485, 0.2
      %v9558 = vmul.f32 %v9486, 0.2
      %v9559 = vmul.f32 %v9487, 0.2
      %v9560 = vmul.f32 %v9488, 0.2
      %v9561 = vmul.f32 %v9489, 0.2
      %v9562 = vmul.f32 %v9490, 0.2
      %v9563 = vmul.f32 %v9491, 0.2
      %v9564 = vmul.f32 %v9492, 0.2
      %v9565 = vmul.f32 %v9493, 0.2
      %v9566 = vmul.f32 %v9494, 0.2
      %v9567 = vmul.f32 %v9495, 0.2
      %v9568 = vmul.f32 %v9496, 0.2
      %v9569 = vmul.f32 %v9497, 0.2
      %v9570 = vmul.f32 %v9498, 0.2
      %v9571 = vmul.f32 %v9499, 0.2
      %v9572 = vmul.f32 %v9500, 0.2
      %v9573 = vmul.f32 %v9501, 0.2
      %v9574 = vmul.f32 %v9502, 0.2
      %v9575 = vmul.f32 %v9503, 0.2
      %v9576 = vmul.f32 %v9504, 0.2
      %v9577 = vmul.f32 %v9505, 0.2
      %v9578 = vmul.f32 %v9506, 0.2
      %v9579 = vmul.f32 %v9507, 0.2
      %v9580 = vmul.f32 %v9508, 0.2
      %v9581 = vmul.f32 %v9509, 0.2
      %v9582 = vmul.f32 %v9510, 0.2
      %v9583 = vmul.f32 %v9511, 0.2
      %v9584 = vsel %vm9512, %v9476, %v9548
      %v9585 = vsel %vm9513, %v9477, %v9549
      %v9586 = vsel %vm9514, %v9478, %v9550
      %v9587 = vsel %vm9515, %v9479, %v9551
      %v9588 = vsel %vm9516, %v9480, %v9552
      %v9589 = vsel %vm9517, %v9481, %v9553
      %v9590 = vsel %vm9518, %v9482, %v9554
      %v9591 = vsel %vm9519, %v9483, %v9555
      %v9592 = vsel %vm9520, %v9484, %v9556
      %v9593 = vsel %vm9521, %v9485, %v9557
      %v9594 = vsel %vm9522, %v9486, %v9558
      %v9595 = vsel %vm9523, %v9487, %v9559
      %v9596 = vsel %vm9524, %v9488, %v9560
      %v9597 = vsel %vm9525, %v9489, %v9561
      %v9598 = vsel %vm9526, %v9490, %v9562
      %v9599 = vsel %vm9527, %v9491, %v9563
      %v9600 = vsel %vm9528, %v9492, %v9564
      %v9601 = vsel %vm9529, %v9493, %v9565
      %v9602 = vsel %vm9530, %v9494, %v9566
      %v9603 = vsel %vm9531, %v9495, %v9567
      %v9604 = vsel %vm9532, %v9496, %v9568
      %v9605 = vsel %vm9533, %v9497, %v9569
      %v9606 = vsel %vm9534, %v9498, %v9570
      %v9607 = vsel %vm9535, %v9499, %v9571
      %v9608 = vsel %vm9536, %v9500, %v9572
      %v9609 = vsel %vm9537, %v9501, %v9573
      %v9610 = vsel %vm9538, %v9502, %v9574
      %v9611 = vsel %vm9539, %v9503, %v9575
      %v9612 = vsel %vm9540, %v9504, %v9576
      %v9613 = vsel %vm9541, %v9505, %v9577
      %v9614 = vsel %vm9542, %v9506, %v9578
      %v9615 = vsel %vm9543, %v9507, %v9579
      %v9616 = vsel %vm9544, %v9508, %v9580
      %v9617 = vsel %vm9545, %v9509, %v9581
      %v9618 = vsel %vm9546, %v9510, %v9582
      %v9619 = vsel %vm9547, %v9511, %v9583
      %9620 = vxpose.xlu0.b32.start [1/16] %v9584, 128
      %9621 = vxpose.xlu0.b32.cont [2/16] %v9585, 128
      %9622 = vxpose.xlu0.b32.cont [3/16] %v9586, 128
      %9623 = vxpose.xlu0.b32.cont [4/16] %v9587, 128
      %9624 = vxpose.xlu0.b32.cont [5/16] %v9588, 128
      %9625 = vxpose.xlu0.b32.cont [6/16] %v9589, 128
      %9626 = vxpose.xlu0.b32.cont [7/16] %v9590, 128
      %9627 = vxpose.xlu0.b32.cont [8/16] %v9591, 128
      %9628 = vxpose.xlu0.b32.cont [9/16] %v9592, 128
      %9629 = vxpose.xlu0.b32.cont [10/16] %v9593, 128
      %9630 = vxpose.xlu0.b32.cont [11/16] %v9594, 128
      %9631 = vxpose.xlu0.b32.cont [12/16] %v9595, 128
      %9632 = vxpose.xlu0.b32.cont [13/16] %v9596, 128
      %9633 = vxpose.xlu0.b32.cont [14/16] %v9597, 128
      %9634 = vxpose.xlu0.b32.cont [15/16] %v9598, 128
      %9635 = vxpose.xlu0.b32.end [16/16] %v9599, 128
      %v9636 = vpop.trf.xlu0
      %v9637 = vpop.trf.xlu0
      %v9638 = vpop.trf.xlu0
      %v9639 = vpop.trf.xlu0
      %v9640 = vpop.trf.xlu0
      %v9641 = vpop.trf.xlu0
      %v9642 = vpop.trf.xlu0
      %v9643 = vpop.trf.xlu0
      %v9644 = vpop.trf.xlu0
      %v9645 = vpop.trf.xlu0
      %v9646 = vpop.trf.xlu0
      %v9647 = vpop.trf.xlu0
      %v9648 = vpop.trf.xlu0
      %v9649 = vpop.trf.xlu0
      %v9650 = vpop.trf.xlu0
      %v9651 = vpop.trf.xlu0
      %9652 = vxpose.xlu0.b32.start [1/16] %v9600, 128
      %9653 = vxpose.xlu0.b32.cont [2/16] %v9601, 128
      %9654 = vxpose.xlu0.b32.cont [3/16] %v9602, 128
      %9655 = vxpose.xlu0.b32.cont [4/16] %v9603, 128
      %9656 = vxpose.xlu0.b32.cont [5/16] %v9604, 128
      %9657 = vxpose.xlu0.b32.cont [6/16] %v9605, 128
      %9658 = vxpose.xlu0.b32.cont [7/16] %v9606, 128
      %9659 = vxpose.xlu0.b32.cont [8/16] %v9607, 128
      %9660 = vxpose.xlu0.b32.cont [9/16] %v9608, 128
      %9661 = vxpose.xlu0.b32.cont [10/16] %v9609, 128
      %9662 = vxpose.xlu0.b32.cont [11/16] %v9610, 128
      %9663 = vxpose.xlu0.b32.cont [12/16] %v9611, 128
      %9664 = vxpose.xlu0.b32.cont [13/16] %v9612, 128
      %9665 = vxpose.xlu0.b32.cont [14/16] %v9613, 128
      %9666 = vxpose.xlu0.b32.cont [15/16] %v9614, 128
      %9667 = vxpose.xlu0.b32.end [16/16] %v9615, 128
      %v9668 = vpop.trf.xlu0
      %v9669 = vpop.trf.xlu0
      %v9670 = vpop.trf.xlu0
      %v9671 = vpop.trf.xlu0
      %v9672 = vpop.trf.xlu0
      %v9673 = vpop.trf.xlu0
      %v9674 = vpop.trf.xlu0
      %v9675 = vpop.trf.xlu0
      %v9676 = vpop.trf.xlu0
      %v9677 = vpop.trf.xlu0
      %v9678 = vpop.trf.xlu0
      %v9679 = vpop.trf.xlu0
      %v9680 = vpop.trf.xlu0
      %v9681 = vpop.trf.xlu0
      %v9682 = vpop.trf.xlu0
      %v9683 = vpop.trf.xlu0
      %9684 = vxpose.xlu0.b32.start [1/16] %v9616, 128
      %9685 = vxpose.xlu0.b32.cont [2/16] %v9617, 128
      %9686 = vxpose.xlu0.b32.cont [3/16] %v9618, 128
      %9687 = vxpose.xlu0.b32.cont [4/16] %v9619, 128
      %9688 = vxpose.xlu0.b32.cont [5/16] 0.0, 128
      %9689 = vxpose.xlu0.b32.cont [6/16] 0.0, 128
      %9690 = vxpose.xlu0.b32.cont [7/16] 0.0, 128
      %9691 = vxpose.xlu0.b32.cont [8/16] 0.0, 128
      %9692 = vxpose.xlu0.b32.cont [9/16] 0.0, 128
      %9693 = vxpose.xlu0.b32.cont [10/16] 0.0, 128
      %9694 = vxpose.xlu0.b32.cont [11/16] 0.0, 128
      %9695 = vxpose.xlu0.b32.cont [12/16] 0.0, 128
      %9696 = vxpose.xlu0.b32.cont [13/16] 0.0, 128
      %9697 = vxpose.xlu0.b32.cont [14/16] 0.0, 128
      %9698 = vxpose.xlu0.b32.cont [15/16] 0.0, 128
      %9699 = vxpose.xlu0.b32.end [16/16] 0.0, 128
      %v9700 = vpop.trf.xlu0
      %v9701 = vpop.trf.xlu0
      %v9702 = vpop.trf.xlu0
      %v9703 = vpop.trf.xlu0
      %v9704 = vpop.trf.xlu0
      %v9705 = vpop.trf.xlu0
      %v9706 = vpop.trf.xlu0
      %v9707 = vpop.trf.xlu0
      %v9708 = vpop.trf.xlu0
      %v9709 = vpop.trf.xlu0
      %v9710 = vpop.trf.xlu0
      %v9711 = vpop.trf.xlu0
      %v9712 = vpop.trf.xlu0
      %v9713 = vpop.trf.xlu0
      %v9714 = vpop.trf.xlu0
      %v9715 = vpop.trf.xlu0
      %9716 = vst [vmem:[%s325] sm:$0xff] %v9636
      %9717 = vst [vmem:[%s325 + $0x8] sm:$0xff] %v9668
      %vm9718 = vcmask 261120
      %9719 = vst.msk [vmem:[%s325 + $0x10] sm:$0xff] %vm9718, %v9700
      %p9720 = scmp.lt.s32.totalorder %s19, 1
      %s9721 = scalar_select %p9720, %s19, 1
      %s9722 = smul.addr %s9721, 3
      %s9723 = smul.addr %s9722, 8
      %s9724 = scalar_lea.vmem %s8, %s9723
      // Predicated region
      $region53: #{upconv_forward.3} parent=51 // pred_check
        %p9725 = pneg %p215
      $region54: #{upconv_forward.3} parent=51 // pred_check_branch
        %9727 = sbr.rel (%p9725) target = $region56
      $region55: #{upconv_forward.3} parent=51 // pred_region
        _
      $region56: #{upconv_forward.3} parent=51 // pred_fallthru
        _
    $region52: #{upconv_forward.3} parent=5 // pred_fallthru
      _
    %p9728 = scmp.le.s32.totalorder 2, %s14
    // Predicated region
    $region57: #{upconv_forward.3} parent=5 // pred_check
      %p9729 = pneg %p9728
    $region58: #{upconv_forward.3} parent=5 // pred_check_branch
      %9731 = sbr.rel (%p9729) target = $region60
    $region59: #{upconv_forward.3} parent=5 // pred_region
      %s9732 = ssub.s32 %s14, 2
      // Predicated region
      $region61: #{upconv_forward.3} parent=59 // pred_check
        %p9733 = pneg %p221
      $region62: #{upconv_forward.3} parent=59 // pred_check_branch
        %9735 = sbr.rel (%p9733) target = $region64
      $region63: #{upconv_forward.3} parent=59 // pred_region
        %p9736 = scmp.lt.s32.totalorder %s20, 1
        %s9737 = scalar_select %p9736, %s20, 1
        %s9738 = smul.addr %s9737, 3
        %s9739 = smul.addr %s9738, 8
        %s9740 = scalar_lea.vmem %s8, %s9739
      $region64: #{upconv_forward.3} parent=59 // pred_fallthru
        _
    $region60: #{upconv_forward.3} parent=5 // pred_fallthru
      _
  $region6: #{upconv_forward.3} parent=0 // loop_footer
    %s18 = sadd.s32 1, %s14
  $region7: #{upconv_forward.3} parent=0 // loop_footer_branch
    %13 = sbr.rel target = $region3
  $region8: #{upconv_forward.3} parent=0 // loop_exit
    _

</llo_original>
